<compile_context>
chip_gen: v7x
topology: tpu7x:2x2x1
jax: 0.10.0
libtpu: 0.0.40
codegen_flags: <defaults>
</compile_context>

<pallas_src>
import jax
import jax.numpy as jnp
import numpy as np
from jax.experimental import pallas as pl
from jax.experimental.pallas import tpu as pltpu


def build_decrnn_kernel(*, vocab_size, embed_dim, hidden_dim, n_layers, T, B, S):
    E, H, L, V = embed_dim, hidden_dim, n_layers, vocab_size
    PER_LAYER = 10  # wir, wiz, win, whr, whz, whn, br, bz, bni, bnh

    def kernel(embs_ref, h0_ref, enc_ref, *rest):
        layer_refs = rest[:PER_LAYER * L]
        (w_cat1_ref, w_cat2_ref, b_cat_ref,
         w_predT_ref, b_pred_ref) = rest[PER_LAYER * L:PER_LAYER * L + 5]
        pred_ref, hid_ref, cwt_ref = rest[PER_LAYER * L + 5:]

        f32 = jnp.float32

        # ---------------- GRU stack (PyTorch gate order: r, z, n) ----------------
        x_flat = embs_ref[...]                        # (T*B, E), time-major rows t*B + b
        hid_finals = []
        dec_steps = None
        for layer in range(L):
            refs = layer_refs[PER_LAYER * layer:PER_LAYER * (layer + 1)]
            wir, wiz, win = refs[0][...], refs[1][...], refs[2][...]   # (in_dim, H)
            whr, whz, whn = refs[3][...], refs[4][...], refs[5][...]   # (H, H)
            br, bz = refs[6][...], refs[7][...]        # (1, H) folded b_ih + b_hh
            bni, bnh = refs[8][...], refs[9][...]      # (1, H)

            # Hoisted input projection: one matmul per gate for all T steps.
            gi_r = jnp.dot(x_flat, wir, preferred_element_type=f32) + br   # (T*B, H)
            gi_z = jnp.dot(x_flat, wiz, preferred_element_type=f32) + bz
            gi_n = jnp.dot(x_flat, win, preferred_element_type=f32) + bni

            h = h0_ref[layer]                          # (B, H)
            hs = []
            for t in range(T):                         # static, fully unrolled
                lo = t * B
                gh_r = jnp.dot(h, whr, preferred_element_type=f32)
                gh_z = jnp.dot(h, whz, preferred_element_type=f32)
                gh_n = jnp.dot(h, whn, preferred_element_type=f32) + bnh
                r = jax.nn.sigmoid(gi_r[lo:lo + B, :] + gh_r)
                z = jax.nn.sigmoid(gi_z[lo:lo + B, :] + gh_z)
                n = jnp.tanh(gi_n[lo:lo + B, :] + r * gh_n)
                h = (1.0 - z) * n + z * h
                hs.append(h)
            hid_finals.append(h)
            if layer < L - 1:
                x_flat = jnp.concatenate(hs, axis=0)   # (T*B, H) next layer's input
            else:
                dec_steps = hs

        hid_ref[...] = jnp.stack(hid_finals, axis=0)   # (L, B, H), one bulk store

        # ------------- batched dot-attention + linear heads (epilogue) -------------
        dec_bth = jnp.stack(dec_steps, axis=1)         # (B, T, H)
        enc = enc_ref[...]                             # (B, S, H)
        energy = jnp.einsum('bth,bsh->bts', dec_bth, enc,
                            preferred_element_type=f32)           # (B, T, S)
        m = jnp.max(energy, axis=-1, keepdims=True)
        p = jnp.exp(energy - m)
        denom = jnp.sum(p, axis=-1, keepdims=True)
        attn = p * pl.reciprocal(denom, approx=True)
        ctx = jnp.einsum('bts,bsh->bth', attn, enc,
                         preferred_element_type=f32)              # (B, T, H)

        dec_flat = dec_bth.reshape(B * T, H)
        ctx_flat = ctx.reshape(B * T, H)
        # Linear on concat([dec_out, context], -1) == dec @ W1 + ctx @ W2 + b
        cwt = (jnp.dot(dec_flat, w_cat1_ref[...], preferred_element_type=f32)
               + jnp.dot(ctx_flat, w_cat2_ref[...], preferred_element_type=f32)
               + b_cat_ref[...])                                  # (B*T, H)
        co = jnp.tanh(cwt)
        pred = (jnp.dot(co, w_predT_ref[...], preferred_element_type=f32)
                + b_pred_ref[...])                                # (B*T, V)
        cwt_ref[...] = cwt                                        # single bulk stores
        pred_ref[...] = pred

    return kernel


def decrnn_forward(inputs, hidden, enc_outs, params, *, n_layers):
    embed_w = params["embed"]
    B, T = inputs.shape
    L, _, H = hidden.shape
    S = enc_outs.shape[1]
    V, E = embed_w.shape

    # glue: embedding gather; dropout is identity in inference.
    # TODO(synk): train-mode dropout masking omitted (eval semantics reproduced).
    embs = embed_w[inputs]                                        # (B, T, E)
    embs_flat = jnp.transpose(embs, (1, 0, 2)).reshape(T * B, E)  # rows = t*B + b

    args = [embs_flat, hidden, enc_outs]
    for l in range(n_layers):
        w_ih, w_hh, b_ih, b_hh = params["gru"][l]   # (3H,in), (3H,H), (3H,), (3H,)
        args += [
            w_ih[:H].T, w_ih[H:2 * H].T, w_ih[2 * H:].T,   # (in_dim, H) per gate
            w_hh[:H].T, w_hh[H:2 * H].T, w_hh[2 * H:].T,   # (H, H) per gate
            (b_ih[:H] + b_hh[:H])[None, :],                # folded r bias
            (b_ih[H:2 * H] + b_hh[H:2 * H])[None, :],      # folded z bias
            b_ih[2 * H:][None, :],                         # input-side n bias
            b_hh[2 * H:][None, :],                         # hidden-side n bias
        ]
    w_cat, b_cat = params["w"]                      # (H, 2H), (H,)
    w_pred, b_pred = params["pred"]                 # (V, H), (V,)
    args += [w_cat[:, :H].T, w_cat[:, H:].T, b_cat[None, :],
             w_pred.T, b_pred[None, :]]

    kernel = build_decrnn_kernel(vocab_size=V, embed_dim=E, hidden_dim=H,
                                 n_layers=n_layers, T=T, B=B, S=S)
    out_shape = (
        jax.ShapeDtypeStruct((B * T, V), jnp.float32),   # pred (flat; reshaped below)
        jax.ShapeDtypeStruct((L, B, H), jnp.float32),    # hidden
        jax.ShapeDtypeStruct((B * T, H), jnp.float32),   # concat_output_wo_tanh (flat)
    )
    vmem = pl.BlockSpec(memory_space=pltpu.MemorySpace.VMEM)
    pred_flat, hid, cwt_flat = pl.pallas_call(
        kernel,
        out_shape=out_shape,
        in_specs=[vmem] * len(args),
        out_specs=(vmem, vmem, vmem),
    )(*args)
    return pred_flat.reshape(B, T, V), hid, cwt_flat.reshape(B, T, H)


# ---------------- pure-JAX reference (mirrors the PyTorch forward) ----------------
def ref_forward(inputs, hidden, enc_outs, params, *, n_layers):
    embed_w = params["embed"]
    B, T = inputs.shape
    H = hidden.shape[-1]
    x = embed_w[inputs]                              # (B, T, E)
    hs = []
    for l in range(n_layers):
        w_ih, w_hh, b_ih, b_hh = params["gru"][l]
        h = hidden[l]
        outs = []
        for t in range(T):
            xt = x[:, t, :]
            gi = xt @ w_ih.T + b_ih
            gh = h @ w_hh.T + b_hh
            r = jax.nn.sigmoid(gi[:, :H] + gh[:, :H])
            z = jax.nn.sigmoid(gi[:, H:2 * H] + gh[:, H:2 * H])
            n = jnp.tanh(gi[:, 2 * H:] + r * gh[:, 2 * H:])
            h = (1.0 - z) * n + z * h
            outs.append(h)
        x = jnp.stack(outs, axis=1)
        hs.append(h)
    dec_out = x
    hidden_out = jnp.stack(hs, 0)
    energy = jnp.einsum('bth,bsh->bts', dec_out, enc_outs)
    attn = jax.nn.softmax(energy, axis=-1)
    ctx = jnp.einsum('bts,bsh->bth', attn, enc_outs)
    cat = jnp.concatenate([dec_out, ctx], axis=-1)
    w_cat, b_cat = params["w"]
    cwt = cat @ w_cat.T + b_cat
    co = jnp.tanh(cwt)
    w_pred, b_pred = params["pred"]
    pred = co @ w_pred.T + b_pred
    return pred, hidden_out, cwt


def init_params(key, vocab, E, H, L):
    def uni(k, shape, fan):
        s = 1.0 / np.sqrt(fan)
        return jax.random.uniform(k, shape, jnp.float32, -s, s)

    keys = iter(jax.random.split(key, 1 + 4 * L + 4))
    params = {}
    params["embed"] = jax.random.normal(next(keys), (vocab, E), jnp.float32) * 0.1
    gru = []
    for l in range(L):
        in_dim = E if l == 0 else H
        gru.append((uni(next(keys), (3 * H, in_dim), H),
                    uni(next(keys), (3 * H, H), H),
                    uni(next(keys), (3 * H,), H),
                    uni(next(keys), (3 * H,), H)))
    params["gru"] = gru
    params["w"] = (uni(next(keys), (H, 2 * H), 2 * H), uni(next(keys), (H,), 2 * H))
    params["pred"] = (uni(next(keys), (vocab, H), H), uni(next(keys), (vocab,), H))
    return params


if __name__ == "__main__":
    # module hyper-params (as in DecRNN.__init__)
    vocab_size, embed_dim, hidden_dim, n_layers = 64, 16, 32, 2
    use_birnn, dout = False, 0.1
    H = hidden_dim * 2 if use_birnn else hidden_dim

    B, T, S = 2, 8, 10   # batch, decoder steps, encoder steps

    key = jax.random.PRNGKey(0)
    kp, ki, kh, ke = jax.random.split(key, 4)
    params = init_params(kp, vocab_size, embed_dim, H, n_layers)
    inputs = jax.random.randint(ki, (B, T), 0, vocab_size, dtype=jnp.int32)
    hidden = jax.random.normal(kh, (n_layers, B, H), dtype=jnp.float32) * 0.5
    enc_outs = jax.random.normal(ke, (B, S, H), dtype=jnp.float32) * 0.5

    pred, hid, cwt = decrnn_forward(inputs, hidden, enc_outs, params, n_layers=n_layers)
    jax.block_until_ready((pred, hid, cwt))

    r_pred, r_hid, r_cwt = ref_forward(inputs, hidden, enc_outs, params, n_layers=n_layers)
    np.testing.assert_allclose(np.asarray(pred), np.asarray(r_pred), rtol=5e-2, atol=5e-2)
    np.testing.assert_allclose(np.asarray(hid), np.asarray(r_hid), rtol=5e-2, atol=5e-2)
    np.testing.assert_allclose(np.asarray(cwt), np.asarray(r_cwt), rtol=5e-2, atol=5e-2)

    print("KERNEL_OK")
</pallas_src>

<mosaic_0001>
module attributes {stable_mosaic.version = 11 : i64} {
  func.func @kernel(%arg0: memref<16x16xf32, #tpu.memory_space<vmem>>, %arg1: memref<2x2x32xf32, #tpu.memory_space<vmem>>, %arg2: memref<2x10x32xf32, #tpu.memory_space<vmem>>, %arg3: memref<16x32xf32, #tpu.memory_space<vmem>>, %arg4: memref<16x32xf32, #tpu.memory_space<vmem>>, %arg5: memref<16x32xf32, #tpu.memory_space<vmem>>, %arg6: memref<32x32xf32, #tpu.memory_space<vmem>>, %arg7: memref<32x32xf32, #tpu.memory_space<vmem>>, %arg8: memref<32x32xf32, #tpu.memory_space<vmem>>, %arg9: memref<1x32xf32, #tpu.memory_space<vmem>>, %arg10: memref<1x32xf32, #tpu.memory_space<vmem>>, %arg11: memref<1x32xf32, #tpu.memory_space<vmem>>, %arg12: memref<1x32xf32, #tpu.memory_space<vmem>>, %arg13: memref<32x32xf32, #tpu.memory_space<vmem>>, %arg14: memref<32x32xf32, #tpu.memory_space<vmem>>, %arg15: memref<32x32xf32, #tpu.memory_space<vmem>>, %arg16: memref<32x32xf32, #tpu.memory_space<vmem>>, %arg17: memref<32x32xf32, #tpu.memory_space<vmem>>, %arg18: memref<32x32xf32, #tpu.memory_space<vmem>>, %arg19: memref<1x32xf32, #tpu.memory_space<vmem>>, %arg20: memref<1x32xf32, #tpu.memory_space<vmem>>, %arg21: memref<1x32xf32, #tpu.memory_space<vmem>>, %arg22: memref<1x32xf32, #tpu.memory_space<vmem>>, %arg23: memref<32x32xf32, #tpu.memory_space<vmem>>, %arg24: memref<32x32xf32, #tpu.memory_space<vmem>>, %arg25: memref<1x32xf32, #tpu.memory_space<vmem>>, %arg26: memref<32x64xf32, #tpu.memory_space<vmem>>, %arg27: memref<1x64xf32, #tpu.memory_space<vmem>>, %arg28: memref<16x64xf32, #tpu.memory_space<vmem>>, %arg29: memref<2x2x32xf32, #tpu.memory_space<vmem>>, %arg30: memref<16x32xf32, #tpu.memory_space<vmem>>) attributes {dimension_semantics = [], scalar_prefetch = 0 : i64, scratch_operands = 0 : i64, tpu.core_type = #tpu.core_type<tc>} {
    %c0 = arith.constant 0 : index
    %c0_0 = arith.constant 0 : index
    %0 = vector.load %arg0[%c0, %c0_0] : memref<16x16xf32, #tpu.memory_space<vmem>>, vector<16x16xf32>
    %c0_1 = arith.constant 0 : index
    %c0_2 = arith.constant 0 : index
    %1 = vector.load %arg3[%c0_1, %c0_2] : memref<16x32xf32, #tpu.memory_space<vmem>>, vector<16x32xf32>
    %c0_3 = arith.constant 0 : index
    %c0_4 = arith.constant 0 : index
    %2 = vector.load %arg4[%c0_3, %c0_4] : memref<16x32xf32, #tpu.memory_space<vmem>>, vector<16x32xf32>
    %c0_5 = arith.constant 0 : index
    %c0_6 = arith.constant 0 : index
    %3 = vector.load %arg5[%c0_5, %c0_6] : memref<16x32xf32, #tpu.memory_space<vmem>>, vector<16x32xf32>
    %c0_7 = arith.constant 0 : index
    %c0_8 = arith.constant 0 : index
    %4 = vector.load %arg6[%c0_7, %c0_8] : memref<32x32xf32, #tpu.memory_space<vmem>>, vector<32x32xf32>
    %c0_9 = arith.constant 0 : index
    %c0_10 = arith.constant 0 : index
    %5 = vector.load %arg7[%c0_9, %c0_10] : memref<32x32xf32, #tpu.memory_space<vmem>>, vector<32x32xf32>
    %c0_11 = arith.constant 0 : index
    %c0_12 = arith.constant 0 : index
    %6 = vector.load %arg8[%c0_11, %c0_12] : memref<32x32xf32, #tpu.memory_space<vmem>>, vector<32x32xf32>
    %c0_13 = arith.constant 0 : index
    %c0_14 = arith.constant 0 : index
    %7 = vector.load %arg9[%c0_13, %c0_14] : memref<1x32xf32, #tpu.memory_space<vmem>>, vector<1x32xf32>
    %c0_15 = arith.constant 0 : index
    %c0_16 = arith.constant 0 : index
    %8 = vector.load %arg10[%c0_15, %c0_16] : memref<1x32xf32, #tpu.memory_space<vmem>>, vector<1x32xf32>
    %c0_17 = arith.constant 0 : index
    %c0_18 = arith.constant 0 : index
    %9 = vector.load %arg11[%c0_17, %c0_18] : memref<1x32xf32, #tpu.memory_space<vmem>>, vector<1x32xf32>
    %c0_19 = arith.constant 0 : index
    %c0_20 = arith.constant 0 : index
    %10 = vector.load %arg12[%c0_19, %c0_20] : memref<1x32xf32, #tpu.memory_space<vmem>>, vector<1x32xf32>
    %cst = arith.constant dense<0.000000e+00> : vector<16x32xf32>
    %11 = tpu.matmul %0, %1, %cst {dimension_numbers = #tpu.dot_dimension_numbers<[1], [0], [0], [1], [0, 0, 1, 1], [], []>} : vector<16x16xf32>, vector<16x32xf32>, vector<16x32xf32> -> vector<16x32xf32>
    %12 = vector.broadcast %7 : vector<1x32xf32> to vector<16x32xf32>
    %13 = arith.addf %11, %12 : vector<16x32xf32>
    %cst_21 = arith.constant dense<0.000000e+00> : vector<16x32xf32>
    %14 = tpu.matmul %0, %2, %cst_21 {dimension_numbers = #tpu.dot_dimension_numbers<[1], [0], [0], [1], [0, 0, 1, 1], [], []>} : vector<16x16xf32>, vector<16x32xf32>, vector<16x32xf32> -> vector<16x32xf32>
    %15 = vector.broadcast %8 : vector<1x32xf32> to vector<16x32xf32>
    %16 = arith.addf %14, %15 : vector<16x32xf32>
    %cst_22 = arith.constant dense<0.000000e+00> : vector<16x32xf32>
    %17 = tpu.matmul %0, %3, %cst_22 {dimension_numbers = #tpu.dot_dimension_numbers<[1], [0], [0], [1], [0, 0, 1, 1], [], []>} : vector<16x16xf32>, vector<16x32xf32>, vector<16x32xf32> -> vector<16x32xf32>
    %18 = vector.broadcast %9 : vector<1x32xf32> to vector<16x32xf32>
    %19 = arith.addf %17, %18 : vector<16x32xf32>
    %c0_23 = arith.constant 0 : index
    %c0_24 = arith.constant 0 : index
    %c0_25 = arith.constant 0 : index
    %20 = vector.load %arg1[%c0_23, %c0_24, %c0_25] : memref<2x2x32xf32, #tpu.memory_space<vmem>>, vector<1x2x32xf32>
    %21 = vector.shape_cast %20 : vector<1x2x32xf32> to vector<2x32xf32>
    %cst_26 = arith.constant dense<0.000000e+00> : vector<2x32xf32>
    %22 = tpu.matmul %21, %4, %cst_26 {dimension_numbers = #tpu.dot_dimension_numbers<[1], [0], [0], [1], [0, 0, 1, 1], [], []>} : vector<2x32xf32>, vector<32x32xf32>, vector<2x32xf32> -> vector<2x32xf32>
    %cst_27 = arith.constant dense<0.000000e+00> : vector<2x32xf32>
    %23 = tpu.matmul %21, %5, %cst_27 {dimension_numbers = #tpu.dot_dimension_numbers<[1], [0], [0], [1], [0, 0, 1, 1], [], []>} : vector<2x32xf32>, vector<32x32xf32>, vector<2x32xf32> -> vector<2x32xf32>
    %cst_28 = arith.constant dense<0.000000e+00> : vector<2x32xf32>
    %24 = tpu.matmul %21, %6, %cst_28 {dimension_numbers = #tpu.dot_dimension_numbers<[1], [0], [0], [1], [0, 0, 1, 1], [], []>} : vector<2x32xf32>, vector<32x32xf32>, vector<2x32xf32> -> vector<2x32xf32>
    %25 = vector.broadcast %10 : vector<1x32xf32> to vector<2x32xf32>
    %26 = arith.addf %24, %25 : vector<2x32xf32>
    %27 = vector.extract_strided_slice %13 {offsets = [0, 0], sizes = [2, 32], strides = [1, 1]} : vector<16x32xf32> to vector<2x32xf32>
    %28 = arith.addf %27, %22 : vector<2x32xf32>
    %29 = arith.negf %28 : vector<2x32xf32>
    %30 = math.exp %29 : vector<2x32xf32>
    %cst_29 = arith.constant 1.000000e+00 : f32
    %31 = vector.broadcast %cst_29 : f32 to vector<2x32xf32>
    %32 = arith.addf %31, %30 : vector<2x32xf32>
    %33 = arith.divf %31, %32 : vector<2x32xf32>
    %34 = vector.extract_strided_slice %16 {offsets = [0, 0], sizes = [2, 32], strides = [1, 1]} : vector<16x32xf32> to vector<2x32xf32>
    %35 = arith.addf %34, %23 : vector<2x32xf32>
    %36 = arith.negf %35 : vector<2x32xf32>
    %37 = math.exp %36 : vector<2x32xf32>
    %cst_30 = arith.constant 1.000000e+00 : f32
    %38 = vector.broadcast %cst_30 : f32 to vector<2x32xf32>
    %39 = arith.addf %38, %37 : vector<2x32xf32>
    %40 = arith.divf %38, %39 : vector<2x32xf32>
    %41 = vector.extract_strided_slice %19 {offsets = [0, 0], sizes = [2, 32], strides = [1, 1]} : vector<16x32xf32> to vector<2x32xf32>
    %42 = arith.mulf %33, %26 : vector<2x32xf32>
    %43 = arith.addf %41, %42 : vector<2x32xf32>
    %44 = math.tanh %43 : vector<2x32xf32>
    %cst_31 = arith.constant 1.000000e+00 : f32
    %45 = vector.broadcast %cst_31 : f32 to vector<2x32xf32>
    %46 = arith.subf %45, %40 : vector<2x32xf32>
    %47 = arith.mulf %46, %44 : vector<2x32xf32>
    %48 = arith.mulf %40, %21 : vector<2x32xf32>
    %49 = arith.addf %47, %48 : vector<2x32xf32>
    %cst_32 = arith.constant dense<0.000000e+00> : vector<2x32xf32>
    %50 = tpu.matmul %49, %4, %cst_32 {dimension_numbers = #tpu.dot_dimension_numbers<[1], [0], [0], [1], [0, 0, 1, 1], [], []>} : vector<2x32xf32>, vector<32x32xf32>, vector<2x32xf32> -> vector<2x32xf32>
    %cst_33 = arith.constant dense<0.000000e+00> : vector<2x32xf32>
    %51 = tpu.matmul %49, %5, %cst_33 {dimension_numbers = #tpu.dot_dimension_numbers<[1], [0], [0], [1], [0, 0, 1, 1], [], []>} : vector<2x32xf32>, vector<32x32xf32>, vector<2x32xf32> -> vector<2x32xf32>
    %cst_34 = arith.constant dense<0.000000e+00> : vector<2x32xf32>
    %52 = tpu.matmul %49, %6, %cst_34 {dimension_numbers = #tpu.dot_dimension_numbers<[1], [0], [0], [1], [0, 0, 1, 1], [], []>} : vector<2x32xf32>, vector<32x32xf32>, vector<2x32xf32> -> vector<2x32xf32>
    %53 = vector.broadcast %10 : vector<1x32xf32> to vector<2x32xf32>
    %54 = arith.addf %52, %53 : vector<2x32xf32>
    %55 = vector.extract_strided_slice %13 {offsets = [2, 0], sizes = [2, 32], strides = [1, 1]} : vector<16x32xf32> to vector<2x32xf32>
    %56 = arith.addf %55, %50 : vector<2x32xf32>
    %57 = arith.negf %56 : vector<2x32xf32>
    %58 = math.exp %57 : vector<2x32xf32>
    %cst_35 = arith.constant 1.000000e+00 : f32
    %59 = vector.broadcast %cst_35 : f32 to vector<2x32xf32>
    %60 = arith.addf %59, %58 : vector<2x32xf32>
    %61 = arith.divf %59, %60 : vector<2x32xf32>
    %62 = vector.extract_strided_slice %16 {offsets = [2, 0], sizes = [2, 32], strides = [1, 1]} : vector<16x32xf32> to vector<2x32xf32>
    %63 = arith.addf %62, %51 : vector<2x32xf32>
    %64 = arith.negf %63 : vector<2x32xf32>
    %65 = math.exp %64 : vector<2x32xf32>
    %cst_36 = arith.constant 1.000000e+00 : f32
    %66 = vector.broadcast %cst_36 : f32 to vector<2x32xf32>
    %67 = arith.addf %66, %65 : vector<2x32xf32>
    %68 = arith.divf %66, %67 : vector<2x32xf32>
    %69 = vector.extract_strided_slice %19 {offsets = [2, 0], sizes = [2, 32], strides = [1, 1]} : vector<16x32xf32> to vector<2x32xf32>
    %70 = arith.mulf %61, %54 : vector<2x32xf32>
    %71 = arith.addf %69, %70 : vector<2x32xf32>
    %72 = math.tanh %71 : vector<2x32xf32>
    %cst_37 = arith.constant 1.000000e+00 : f32
    %73 = vector.broadcast %cst_37 : f32 to vector<2x32xf32>
    %74 = arith.subf %73, %68 : vector<2x32xf32>
    %75 = arith.mulf %74, %72 : vector<2x32xf32>
    %76 = arith.mulf %68, %49 : vector<2x32xf32>
    %77 = arith.addf %75, %76 : vector<2x32xf32>
    %cst_38 = arith.constant dense<0.000000e+00> : vector<2x32xf32>
    %78 = tpu.matmul %77, %4, %cst_38 {dimension_numbers = #tpu.dot_dimension_numbers<[1], [0], [0], [1], [0, 0, 1, 1], [], []>} : vector<2x32xf32>, vector<32x32xf32>, vector<2x32xf32> -> vector<2x32xf32>
    %cst_39 = arith.constant dense<0.000000e+00> : vector<2x32xf32>
    %79 = tpu.matmul %77, %5, %cst_39 {dimension_numbers = #tpu.dot_dimension_numbers<[1], [0], [0], [1], [0, 0, 1, 1], [], []>} : vector<2x32xf32>, vector<32x32xf32>, vector<2x32xf32> -> vector<2x32xf32>
    %cst_40 = arith.constant dense<0.000000e+00> : vector<2x32xf32>
    %80 = tpu.matmul %77, %6, %cst_40 {dimension_numbers = #tpu.dot_dimension_numbers<[1], [0], [0], [1], [0, 0, 1, 1], [], []>} : vector<2x32xf32>, vector<32x32xf32>, vector<2x32xf32> -> vector<2x32xf32>
    %81 = vector.broadcast %10 : vector<1x32xf32> to vector<2x32xf32>
    %82 = arith.addf %80, %81 : vector<2x32xf32>
    %83 = vector.extract_strided_slice %13 {offsets = [4, 0], sizes = [2, 32], strides = [1, 1]} : vector<16x32xf32> to vector<2x32xf32>
    %84 = arith.addf %83, %78 : vector<2x32xf32>
    %85 = arith.negf %84 : vector<2x32xf32>
    %86 = math.exp %85 : vector<2x32xf32>
    %cst_41 = arith.constant 1.000000e+00 : f32
    %87 = vector.broadcast %cst_41 : f32 to vector<2x32xf32>
    %88 = arith.addf %87, %86 : vector<2x32xf32>
    %89 = arith.divf %87, %88 : vector<2x32xf32>
    %90 = vector.extract_strided_slice %16 {offsets = [4, 0], sizes = [2, 32], strides = [1, 1]} : vector<16x32xf32> to vector<2x32xf32>
    %91 = arith.addf %90, %79 : vector<2x32xf32>
    %92 = arith.negf %91 : vector<2x32xf32>
    %93 = math.exp %92 : vector<2x32xf32>
    %cst_42 = arith.constant 1.000000e+00 : f32
    %94 = vector.broadcast %cst_42 : f32 to vector<2x32xf32>
    %95 = arith.addf %94, %93 : vector<2x32xf32>
    %96 = arith.divf %94, %95 : vector<2x32xf32>
    %97 = vector.extract_strided_slice %19 {offsets = [4, 0], sizes = [2, 32], strides = [1, 1]} : vector<16x32xf32> to vector<2x32xf32>
    %98 = arith.mulf %89, %82 : vector<2x32xf32>
    %99 = arith.addf %97, %98 : vector<2x32xf32>
    %100 = math.tanh %99 : vector<2x32xf32>
    %cst_43 = arith.constant 1.000000e+00 : f32
    %101 = vector.broadcast %cst_43 : f32 to vector<2x32xf32>
    %102 = arith.subf %101, %96 : vector<2x32xf32>
    %103 = arith.mulf %102, %100 : vector<2x32xf32>
    %104 = arith.mulf %96, %77 : vector<2x32xf32>
    %105 = arith.addf %103, %104 : vector<2x32xf32>
    %cst_44 = arith.constant dense<0.000000e+00> : vector<2x32xf32>
    %106 = tpu.matmul %105, %4, %cst_44 {dimension_numbers = #tpu.dot_dimension_numbers<[1], [0], [0], [1], [0, 0, 1, 1], [], []>} : vector<2x32xf32>, vector<32x32xf32>, vector<2x32xf32> -> vector<2x32xf32>
    %cst_45 = arith.constant dense<0.000000e+00> : vector<2x32xf32>
    %107 = tpu.matmul %105, %5, %cst_45 {dimension_numbers = #tpu.dot_dimension_numbers<[1], [0], [0], [1], [0, 0, 1, 1], [], []>} : vector<2x32xf32>, vector<32x32xf32>, vector<2x32xf32> -> vector<2x32xf32>
    %cst_46 = arith.constant dense<0.000000e+00> : vector<2x32xf32>
    %108 = tpu.matmul %105, %6, %cst_46 {dimension_numbers = #tpu.dot_dimension_numbers<[1], [0], [0], [1], [0, 0, 1, 1], [], []>} : vector<2x32xf32>, vector<32x32xf32>, vector<2x32xf32> -> vector<2x32xf32>
    %109 = vector.broadcast %10 : vector<1x32xf32> to vector<2x32xf32>
    %110 = arith.addf %108, %109 : vector<2x32xf32>
    %111 = vector.extract_strided_slice %13 {offsets = [6, 0], sizes = [2, 32], strides = [1, 1]} : vector<16x32xf32> to vector<2x32xf32>
    %112 = arith.addf %111, %106 : vector<2x32xf32>
    %113 = arith.negf %112 : vector<2x32xf32>
    %114 = math.exp %113 : vector<2x32xf32>
    %cst_47 = arith.constant 1.000000e+00 : f32
    %115 = vector.broadcast %cst_47 : f32 to vector<2x32xf32>
    %116 = arith.addf %115, %114 : vector<2x32xf32>
    %117 = arith.divf %115, %116 : vector<2x32xf32>
    %118 = vector.extract_strided_slice %16 {offsets = [6, 0], sizes = [2, 32], strides = [1, 1]} : vector<16x32xf32> to vector<2x32xf32>
    %119 = arith.addf %118, %107 : vector<2x32xf32>
    %120 = arith.negf %119 : vector<2x32xf32>
    %121 = math.exp %120 : vector<2x32xf32>
    %cst_48 = arith.constant 1.000000e+00 : f32
    %122 = vector.broadcast %cst_48 : f32 to vector<2x32xf32>
    %123 = arith.addf %122, %121 : vector<2x32xf32>
    %124 = arith.divf %122, %123 : vector<2x32xf32>
    %125 = vector.extract_strided_slice %19 {offsets = [6, 0], sizes = [2, 32], strides = [1, 1]} : vector<16x32xf32> to vector<2x32xf32>
    %126 = arith.mulf %117, %110 : vector<2x32xf32>
    %127 = arith.addf %125, %126 : vector<2x32xf32>
    %128 = math.tanh %127 : vector<2x32xf32>
    %cst_49 = arith.constant 1.000000e+00 : f32
    %129 = vector.broadcast %cst_49 : f32 to vector<2x32xf32>
    %130 = arith.subf %129, %124 : vector<2x32xf32>
    %131 = arith.mulf %130, %128 : vector<2x32xf32>
    %132 = arith.mulf %124, %105 : vector<2x32xf32>
    %133 = arith.addf %131, %132 : vector<2x32xf32>
    %cst_50 = arith.constant dense<0.000000e+00> : vector<2x32xf32>
    %134 = tpu.matmul %133, %4, %cst_50 {dimension_numbers = #tpu.dot_dimension_numbers<[1], [0], [0], [1], [0, 0, 1, 1], [], []>} : vector<2x32xf32>, vector<32x32xf32>, vector<2x32xf32> -> vector<2x32xf32>
    %cst_51 = arith.constant dense<0.000000e+00> : vector<2x32xf32>
    %135 = tpu.matmul %133, %5, %cst_51 {dimension_numbers = #tpu.dot_dimension_numbers<[1], [0], [0], [1], [0, 0, 1, 1], [], []>} : vector<2x32xf32>, vector<32x32xf32>, vector<2x32xf32> -> vector<2x32xf32>
    %cst_52 = arith.constant dense<0.000000e+00> : vector<2x32xf32>
    %136 = tpu.matmul %133, %6, %cst_52 {dimension_numbers = #tpu.dot_dimension_numbers<[1], [0], [0], [1], [0, 0, 1, 1], [], []>} : vector<2x32xf32>, vector<32x32xf32>, vector<2x32xf32> -> vector<2x32xf32>
    %137 = vector.broadcast %10 : vector<1x32xf32> to vector<2x32xf32>
    %138 = arith.addf %136, %137 : vector<2x32xf32>
    %139 = vector.extract_strided_slice %13 {offsets = [8, 0], sizes = [2, 32], strides = [1, 1]} : vector<16x32xf32> to vector<2x32xf32>
    %140 = arith.addf %139, %134 : vector<2x32xf32>
    %141 = arith.negf %140 : vector<2x32xf32>
    %142 = math.exp %141 : vector<2x32xf32>
    %cst_53 = arith.constant 1.000000e+00 : f32
    %143 = vector.broadcast %cst_53 : f32 to vector<2x32xf32>
    %144 = arith.addf %143, %142 : vector<2x32xf32>
    %145 = arith.divf %143, %144 : vector<2x32xf32>
    %146 = vector.extract_strided_slice %16 {offsets = [8, 0], sizes = [2, 32], strides = [1, 1]} : vector<16x32xf32> to vector<2x32xf32>
    %147 = arith.addf %146, %135 : vector<2x32xf32>
    %148 = arith.negf %147 : vector<2x32xf32>
    %149 = math.exp %148 : vector<2x32xf32>
    %cst_54 = arith.constant 1.000000e+00 : f32
    %150 = vector.broadcast %cst_54 : f32 to vector<2x32xf32>
    %151 = arith.addf %150, %149 : vector<2x32xf32>
    %152 = arith.divf %150, %151 : vector<2x32xf32>
    %153 = vector.extract_strided_slice %19 {offsets = [8, 0], sizes = [2, 32], strides = [1, 1]} : vector<16x32xf32> to vector<2x32xf32>
    %154 = arith.mulf %145, %138 : vector<2x32xf32>
    %155 = arith.addf %153, %154 : vector<2x32xf32>
    %156 = math.tanh %155 : vector<2x32xf32>
    %cst_55 = arith.constant 1.000000e+00 : f32
    %157 = vector.broadcast %cst_55 : f32 to vector<2x32xf32>
    %158 = arith.subf %157, %152 : vector<2x32xf32>
    %159 = arith.mulf %158, %156 : vector<2x32xf32>
    %160 = arith.mulf %152, %133 : vector<2x32xf32>
    %161 = arith.addf %159, %160 : vector<2x32xf32>
    %cst_56 = arith.constant dense<0.000000e+00> : vector<2x32xf32>
    %162 = tpu.matmul %161, %4, %cst_56 {dimension_numbers = #tpu.dot_dimension_numbers<[1], [0], [0], [1], [0, 0, 1, 1], [], []>} : vector<2x32xf32>, vector<32x32xf32>, vector<2x32xf32> -> vector<2x32xf32>
    %cst_57 = arith.constant dense<0.000000e+00> : vector<2x32xf32>
    %163 = tpu.matmul %161, %5, %cst_57 {dimension_numbers = #tpu.dot_dimension_numbers<[1], [0], [0], [1], [0, 0, 1, 1], [], []>} : vector<2x32xf32>, vector<32x32xf32>, vector<2x32xf32> -> vector<2x32xf32>
    %cst_58 = arith.constant dense<0.000000e+00> : vector<2x32xf32>
    %164 = tpu.matmul %161, %6, %cst_58 {dimension_numbers = #tpu.dot_dimension_numbers<[1], [0], [0], [1], [0, 0, 1, 1], [], []>} : vector<2x32xf32>, vector<32x32xf32>, vector<2x32xf32> -> vector<2x32xf32>
    %165 = vector.broadcast %10 : vector<1x32xf32> to vector<2x32xf32>
    %166 = arith.addf %164, %165 : vector<2x32xf32>
    %167 = vector.extract_strided_slice %13 {offsets = [10, 0], sizes = [2, 32], strides = [1, 1]} : vector<16x32xf32> to vector<2x32xf32>
    %168 = arith.addf %167, %162 : vector<2x32xf32>
    %169 = arith.negf %168 : vector<2x32xf32>
    %170 = math.exp %169 : vector<2x32xf32>
    %cst_59 = arith.constant 1.000000e+00 : f32
    %171 = vector.broadcast %cst_59 : f32 to vector<2x32xf32>
    %172 = arith.addf %171, %170 : vector<2x32xf32>
    %173 = arith.divf %171, %172 : vector<2x32xf32>
    %174 = vector.extract_strided_slice %16 {offsets = [10, 0], sizes = [2, 32], strides = [1, 1]} : vector<16x32xf32> to vector<2x32xf32>
    %175 = arith.addf %174, %163 : vector<2x32xf32>
    %176 = arith.negf %175 : vector<2x32xf32>
    %177 = math.exp %176 : vector<2x32xf32>
    %cst_60 = arith.constant 1.000000e+00 : f32
    %178 = vector.broadcast %cst_60 : f32 to vector<2x32xf32>
    %179 = arith.addf %178, %177 : vector<2x32xf32>
    %180 = arith.divf %178, %179 : vector<2x32xf32>
    %181 = vector.extract_strided_slice %19 {offsets = [10, 0], sizes = [2, 32], strides = [1, 1]} : vector<16x32xf32> to vector<2x32xf32>
    %182 = arith.mulf %173, %166 : vector<2x32xf32>
    %183 = arith.addf %181, %182 : vector<2x32xf32>
    %184 = math.tanh %183 : vector<2x32xf32>
    %cst_61 = arith.constant 1.000000e+00 : f32
    %185 = vector.broadcast %cst_61 : f32 to vector<2x32xf32>
    %186 = arith.subf %185, %180 : vector<2x32xf32>
    %187 = arith.mulf %186, %184 : vector<2x32xf32>
    %188 = arith.mulf %180, %161 : vector<2x32xf32>
    %189 = arith.addf %187, %188 : vector<2x32xf32>
    %cst_62 = arith.constant dense<0.000000e+00> : vector<2x32xf32>
    %190 = tpu.matmul %189, %4, %cst_62 {dimension_numbers = #tpu.dot_dimension_numbers<[1], [0], [0], [1], [0, 0, 1, 1], [], []>} : vector<2x32xf32>, vector<32x32xf32>, vector<2x32xf32> -> vector<2x32xf32>
    %cst_63 = arith.constant dense<0.000000e+00> : vector<2x32xf32>
    %191 = tpu.matmul %189, %5, %cst_63 {dimension_numbers = #tpu.dot_dimension_numbers<[1], [0], [0], [1], [0, 0, 1, 1], [], []>} : vector<2x32xf32>, vector<32x32xf32>, vector<2x32xf32> -> vector<2x32xf32>
    %cst_64 = arith.constant dense<0.000000e+00> : vector<2x32xf32>
    %192 = tpu.matmul %189, %6, %cst_64 {dimension_numbers = #tpu.dot_dimension_numbers<[1], [0], [0], [1], [0, 0, 1, 1], [], []>} : vector<2x32xf32>, vector<32x32xf32>, vector<2x32xf32> -> vector<2x32xf32>
    %193 = vector.broadcast %10 : vector<1x32xf32> to vector<2x32xf32>
    %194 = arith.addf %192, %193 : vector<2x32xf32>
    %195 = vector.extract_strided_slice %13 {offsets = [12, 0], sizes = [2, 32], strides = [1, 1]} : vector<16x32xf32> to vector<2x32xf32>
    %196 = arith.addf %195, %190 : vector<2x32xf32>
    %197 = arith.negf %196 : vector<2x32xf32>
    %198 = math.exp %197 : vector<2x32xf32>
    %cst_65 = arith.constant 1.000000e+00 : f32
    %199 = vector.broadcast %cst_65 : f32 to vector<2x32xf32>
    %200 = arith.addf %199, %198 : vector<2x32xf32>
    %201 = arith.divf %199, %200 : vector<2x32xf32>
    %202 = vector.extract_strided_slice %16 {offsets = [12, 0], sizes = [2, 32], strides = [1, 1]} : vector<16x32xf32> to vector<2x32xf32>
    %203 = arith.addf %202, %191 : vector<2x32xf32>
    %204 = arith.negf %203 : vector<2x32xf32>
    %205 = math.exp %204 : vector<2x32xf32>
    %cst_66 = arith.constant 1.000000e+00 : f32
    %206 = vector.broadcast %cst_66 : f32 to vector<2x32xf32>
    %207 = arith.addf %206, %205 : vector<2x32xf32>
    %208 = arith.divf %206, %207 : vector<2x32xf32>
    %209 = vector.extract_strided_slice %19 {offsets = [12, 0], sizes = [2, 32], strides = [1, 1]} : vector<16x32xf32> to vector<2x32xf32>
    %210 = arith.mulf %201, %194 : vector<2x32xf32>
    %211 = arith.addf %209, %210 : vector<2x32xf32>
    %212 = math.tanh %211 : vector<2x32xf32>
    %cst_67 = arith.constant 1.000000e+00 : f32
    %213 = vector.broadcast %cst_67 : f32 to vector<2x32xf32>
    %214 = arith.subf %213, %208 : vector<2x32xf32>
    %215 = arith.mulf %214, %212 : vector<2x32xf32>
    %216 = arith.mulf %208, %189 : vector<2x32xf32>
    %217 = arith.addf %215, %216 : vector<2x32xf32>
    %cst_68 = arith.constant dense<0.000000e+00> : vector<2x32xf32>
    %218 = tpu.matmul %217, %4, %cst_68 {dimension_numbers = #tpu.dot_dimension_numbers<[1], [0], [0], [1], [0, 0, 1, 1], [], []>} : vector<2x32xf32>, vector<32x32xf32>, vector<2x32xf32> -> vector<2x32xf32>
    %cst_69 = arith.constant dense<0.000000e+00> : vector<2x32xf32>
    %219 = tpu.matmul %217, %5, %cst_69 {dimension_numbers = #tpu.dot_dimension_numbers<[1], [0], [0], [1], [0, 0, 1, 1], [], []>} : vector<2x32xf32>, vector<32x32xf32>, vector<2x32xf32> -> vector<2x32xf32>
    %cst_70 = arith.constant dense<0.000000e+00> : vector<2x32xf32>
    %220 = tpu.matmul %217, %6, %cst_70 {dimension_numbers = #tpu.dot_dimension_numbers<[1], [0], [0], [1], [0, 0, 1, 1], [], []>} : vector<2x32xf32>, vector<32x32xf32>, vector<2x32xf32> -> vector<2x32xf32>
    %221 = vector.broadcast %10 : vector<1x32xf32> to vector<2x32xf32>
    %222 = arith.addf %220, %221 : vector<2x32xf32>
    %223 = vector.extract_strided_slice %13 {offsets = [14, 0], sizes = [2, 32], strides = [1, 1]} : vector<16x32xf32> to vector<2x32xf32>
    %224 = arith.addf %223, %218 : vector<2x32xf32>
    %225 = arith.negf %224 : vector<2x32xf32>
    %226 = math.exp %225 : vector<2x32xf32>
    %cst_71 = arith.constant 1.000000e+00 : f32
    %227 = vector.broadcast %cst_71 : f32 to vector<2x32xf32>
    %228 = arith.addf %227, %226 : vector<2x32xf32>
    %229 = arith.divf %227, %228 : vector<2x32xf32>
    %230 = vector.extract_strided_slice %16 {offsets = [14, 0], sizes = [2, 32], strides = [1, 1]} : vector<16x32xf32> to vector<2x32xf32>
    %231 = arith.addf %230, %219 : vector<2x32xf32>
    %232 = arith.negf %231 : vector<2x32xf32>
    %233 = math.exp %232 : vector<2x32xf32>
    %cst_72 = arith.constant 1.000000e+00 : f32
    %234 = vector.broadcast %cst_72 : f32 to vector<2x32xf32>
    %235 = arith.addf %234, %233 : vector<2x32xf32>
    %236 = arith.divf %234, %235 : vector<2x32xf32>
    %237 = vector.extract_strided_slice %19 {offsets = [14, 0], sizes = [2, 32], strides = [1, 1]} : vector<16x32xf32> to vector<2x32xf32>
    %238 = arith.mulf %229, %222 : vector<2x32xf32>
    %239 = arith.addf %237, %238 : vector<2x32xf32>
    %240 = math.tanh %239 : vector<2x32xf32>
    %cst_73 = arith.constant 1.000000e+00 : f32
    %241 = vector.broadcast %cst_73 : f32 to vector<2x32xf32>
    %242 = arith.subf %241, %236 : vector<2x32xf32>
    %243 = arith.mulf %242, %240 : vector<2x32xf32>
    %244 = arith.mulf %236, %217 : vector<2x32xf32>
    %245 = arith.addf %243, %244 : vector<2x32xf32>
    %246 = tpu.concatenate %49, %77, %105, %133, %161, %189, %217, %245 in 0 : vector<2x32xf32>, vector<2x32xf32>, vector<2x32xf32>, vector<2x32xf32>, vector<2x32xf32>, vector<2x32xf32>, vector<2x32xf32>, vector<2x32xf32> -> vector<16x32xf32>
    %c0_74 = arith.constant 0 : index
    %c0_75 = arith.constant 0 : index
    %247 = vector.load %arg13[%c0_74, %c0_75] : memref<32x32xf32, #tpu.memory_space<vmem>>, vector<32x32xf32>
    %c0_76 = arith.constant 0 : index
    %c0_77 = arith.constant 0 : index
    %248 = vector.load %arg14[%c0_76, %c0_77] : memref<32x32xf32, #tpu.memory_space<vmem>>, vector<32x32xf32>
    %c0_78 = arith.constant 0 : index
    %c0_79 = arith.constant 0 : index
    %249 = vector.load %arg15[%c0_78, %c0_79] : memref<32x32xf32, #tpu.memory_space<vmem>>, vector<32x32xf32>
    %c0_80 = arith.constant 0 : index
    %c0_81 = arith.constant 0 : index
    %250 = vector.load %arg16[%c0_80, %c0_81] : memref<32x32xf32, #tpu.memory_space<vmem>>, vector<32x32xf32>
    %c0_82 = arith.constant 0 : index
    %c0_83 = arith.constant 0 : index
    %251 = vector.load %arg17[%c0_82, %c0_83] : memref<32x32xf32, #tpu.memory_space<vmem>>, vector<32x32xf32>
    %c0_84 = arith.constant 0 : index
    %c0_85 = arith.constant 0 : index
    %252 = vector.load %arg18[%c0_84, %c0_85] : memref<32x32xf32, #tpu.memory_space<vmem>>, vector<32x32xf32>
    %c0_86 = arith.constant 0 : index
    %c0_87 = arith.constant 0 : index
    %253 = vector.load %arg19[%c0_86, %c0_87] : memref<1x32xf32, #tpu.memory_space<vmem>>, vector<1x32xf32>
    %c0_88 = arith.constant 0 : index
    %c0_89 = arith.constant 0 : index
    %254 = vector.load %arg20[%c0_88, %c0_89] : memref<1x32xf32, #tpu.memory_space<vmem>>, vector<1x32xf32>
    %c0_90 = arith.constant 0 : index
    %c0_91 = arith.constant 0 : index
    %255 = vector.load %arg21[%c0_90, %c0_91] : memref<1x32xf32, #tpu.memory_space<vmem>>, vector<1x32xf32>
    %c0_92 = arith.constant 0 : index
    %c0_93 = arith.constant 0 : index
    %256 = vector.load %arg22[%c0_92, %c0_93] : memref<1x32xf32, #tpu.memory_space<vmem>>, vector<1x32xf32>
    %cst_94 = arith.constant dense<0.000000e+00> : vector<16x32xf32>
    %257 = tpu.matmul %246, %247, %cst_94 {dimension_numbers = #tpu.dot_dimension_numbers<[1], [0], [0], [1], [0, 0, 1, 1], [], []>} : vector<16x32xf32>, vector<32x32xf32>, vector<16x32xf32> -> vector<16x32xf32>
    %258 = vector.broadcast %253 : vector<1x32xf32> to vector<16x32xf32>
    %259 = arith.addf %257, %258 : vector<16x32xf32>
    %cst_95 = arith.constant dense<0.000000e+00> : vector<16x32xf32>
    %260 = tpu.matmul %246, %248, %cst_95 {dimension_numbers = #tpu.dot_dimension_numbers<[1], [0], [0], [1], [0, 0, 1, 1], [], []>} : vector<16x32xf32>, vector<32x32xf32>, vector<16x32xf32> -> vector<16x32xf32>
    %261 = vector.broadcast %254 : vector<1x32xf32> to vector<16x32xf32>
    %262 = arith.addf %260, %261 : vector<16x32xf32>
    %cst_96 = arith.constant dense<0.000000e+00> : vector<16x32xf32>
    %263 = tpu.matmul %246, %249, %cst_96 {dimension_numbers = #tpu.dot_dimension_numbers<[1], [0], [0], [1], [0, 0, 1, 1], [], []>} : vector<16x32xf32>, vector<32x32xf32>, vector<16x32xf32> -> vector<16x32xf32>
    %264 = vector.broadcast %255 : vector<1x32xf32> to vector<16x32xf32>
    %265 = arith.addf %263, %264 : vector<16x32xf32>
    %c1 = arith.constant 1 : index
    %c0_97 = arith.constant 0 : index
    %c0_98 = arith.constant 0 : index
    %266 = vector.load %arg1[%c1, %c0_97, %c0_98] : memref<2x2x32xf32, #tpu.memory_space<vmem>>, vector<1x2x32xf32>
    %267 = vector.shape_cast %266 : vector<1x2x32xf32> to vector<2x32xf32>
    %cst_99 = arith.constant dense<0.000000e+00> : vector<2x32xf32>
    %268 = tpu.matmul %267, %250, %cst_99 {dimension_numbers = #tpu.dot_dimension_numbers<[1], [0], [0], [1], [0, 0, 1, 1], [], []>} : vector<2x32xf32>, vector<32x32xf32>, vector<2x32xf32> -> vector<2x32xf32>
    %cst_100 = arith.constant dense<0.000000e+00> : vector<2x32xf32>
    %269 = tpu.matmul %267, %251, %cst_100 {dimension_numbers = #tpu.dot_dimension_numbers<[1], [0], [0], [1], [0, 0, 1, 1], [], []>} : vector<2x32xf32>, vector<32x32xf32>, vector<2x32xf32> -> vector<2x32xf32>
    %cst_101 = arith.constant dense<0.000000e+00> : vector<2x32xf32>
    %270 = tpu.matmul %267, %252, %cst_101 {dimension_numbers = #tpu.dot_dimension_numbers<[1], [0], [0], [1], [0, 0, 1, 1], [], []>} : vector<2x32xf32>, vector<32x32xf32>, vector<2x32xf32> -> vector<2x32xf32>
    %271 = vector.broadcast %256 : vector<1x32xf32> to vector<2x32xf32>
    %272 = arith.addf %270, %271 : vector<2x32xf32>
    %273 = vector.extract_strided_slice %259 {offsets = [0, 0], sizes = [2, 32], strides = [1, 1]} : vector<16x32xf32> to vector<2x32xf32>
    %274 = arith.addf %273, %268 : vector<2x32xf32>
    %275 = arith.negf %274 : vector<2x32xf32>
    %276 = math.exp %275 : vector<2x32xf32>
    %cst_102 = arith.constant 1.000000e+00 : f32
    %277 = vector.broadcast %cst_102 : f32 to vector<2x32xf32>
    %278 = arith.addf %277, %276 : vector<2x32xf32>
    %279 = arith.divf %277, %278 : vector<2x32xf32>
    %280 = vector.extract_strided_slice %262 {offsets = [0, 0], sizes = [2, 32], strides = [1, 1]} : vector<16x32xf32> to vector<2x32xf32>
    %281 = arith.addf %280, %269 : vector<2x32xf32>
    %282 = arith.negf %281 : vector<2x32xf32>
    %283 = math.exp %282 : vector<2x32xf32>
    %cst_103 = arith.constant 1.000000e+00 : f32
    %284 = vector.broadcast %cst_103 : f32 to vector<2x32xf32>
    %285 = arith.addf %284, %283 : vector<2x32xf32>
    %286 = arith.divf %284, %285 : vector<2x32xf32>
    %287 = vector.extract_strided_slice %265 {offsets = [0, 0], sizes = [2, 32], strides = [1, 1]} : vector<16x32xf32> to vector<2x32xf32>
    %288 = arith.mulf %279, %272 : vector<2x32xf32>
    %289 = arith.addf %287, %288 : vector<2x32xf32>
    %290 = math.tanh %289 : vector<2x32xf32>
    %cst_104 = arith.constant 1.000000e+00 : f32
    %291 = vector.broadcast %cst_104 : f32 to vector<2x32xf32>
    %292 = arith.subf %291, %286 : vector<2x32xf32>
    %293 = arith.mulf %292, %290 : vector<2x32xf32>
    %294 = arith.mulf %286, %267 : vector<2x32xf32>
    %295 = arith.addf %293, %294 : vector<2x32xf32>
    %cst_105 = arith.constant dense<0.000000e+00> : vector<2x32xf32>
    %296 = tpu.matmul %295, %250, %cst_105 {dimension_numbers = #tpu.dot_dimension_numbers<[1], [0], [0], [1], [0, 0, 1, 1], [], []>} : vector<2x32xf32>, vector<32x32xf32>, vector<2x32xf32> -> vector<2x32xf32>
    %cst_106 = arith.constant dense<0.000000e+00> : vector<2x32xf32>
    %297 = tpu.matmul %295, %251, %cst_106 {dimension_numbers = #tpu.dot_dimension_numbers<[1], [0], [0], [1], [0, 0, 1, 1], [], []>} : vector<2x32xf32>, vector<32x32xf32>, vector<2x32xf32> -> vector<2x32xf32>
    %cst_107 = arith.constant dense<0.000000e+00> : vector<2x32xf32>
    %298 = tpu.matmul %295, %252, %cst_107 {dimension_numbers = #tpu.dot_dimension_numbers<[1], [0], [0], [1], [0, 0, 1, 1], [], []>} : vector<2x32xf32>, vector<32x32xf32>, vector<2x32xf32> -> vector<2x32xf32>
    %299 = vector.broadcast %256 : vector<1x32xf32> to vector<2x32xf32>
    %300 = arith.addf %298, %299 : vector<2x32xf32>
    %301 = vector.extract_strided_slice %259 {offsets = [2, 0], sizes = [2, 32], strides = [1, 1]} : vector<16x32xf32> to vector<2x32xf32>
    %302 = arith.addf %301, %296 : vector<2x32xf32>
    %303 = arith.negf %302 : vector<2x32xf32>
    %304 = math.exp %303 : vector<2x32xf32>
    %cst_108 = arith.constant 1.000000e+00 : f32
    %305 = vector.broadcast %cst_108 : f32 to vector<2x32xf32>
    %306 = arith.addf %305, %304 : vector<2x32xf32>
    %307 = arith.divf %305, %306 : vector<2x32xf32>
    %308 = vector.extract_strided_slice %262 {offsets = [2, 0], sizes = [2, 32], strides = [1, 1]} : vector<16x32xf32> to vector<2x32xf32>
    %309 = arith.addf %308, %297 : vector<2x32xf32>
    %310 = arith.negf %309 : vector<2x32xf32>
    %311 = math.exp %310 : vector<2x32xf32>
    %cst_109 = arith.constant 1.000000e+00 : f32
    %312 = vector.broadcast %cst_109 : f32 to vector<2x32xf32>
    %313 = arith.addf %312, %311 : vector<2x32xf32>
    %314 = arith.divf %312, %313 : vector<2x32xf32>
    %315 = vector.extract_strided_slice %265 {offsets = [2, 0], sizes = [2, 32], strides = [1, 1]} : vector<16x32xf32> to vector<2x32xf32>
    %316 = arith.mulf %307, %300 : vector<2x32xf32>
    %317 = arith.addf %315, %316 : vector<2x32xf32>
    %318 = math.tanh %317 : vector<2x32xf32>
    %cst_110 = arith.constant 1.000000e+00 : f32
    %319 = vector.broadcast %cst_110 : f32 to vector<2x32xf32>
    %320 = arith.subf %319, %314 : vector<2x32xf32>
    %321 = arith.mulf %320, %318 : vector<2x32xf32>
    %322 = arith.mulf %314, %295 : vector<2x32xf32>
    %323 = arith.addf %321, %322 : vector<2x32xf32>
    %cst_111 = arith.constant dense<0.000000e+00> : vector<2x32xf32>
    %324 = tpu.matmul %323, %250, %cst_111 {dimension_numbers = #tpu.dot_dimension_numbers<[1], [0], [0], [1], [0, 0, 1, 1], [], []>} : vector<2x32xf32>, vector<32x32xf32>, vector<2x32xf32> -> vector<2x32xf32>
    %cst_112 = arith.constant dense<0.000000e+00> : vector<2x32xf32>
    %325 = tpu.matmul %323, %251, %cst_112 {dimension_numbers = #tpu.dot_dimension_numbers<[1], [0], [0], [1], [0, 0, 1, 1], [], []>} : vector<2x32xf32>, vector<32x32xf32>, vector<2x32xf32> -> vector<2x32xf32>
    %cst_113 = arith.constant dense<0.000000e+00> : vector<2x32xf32>
    %326 = tpu.matmul %323, %252, %cst_113 {dimension_numbers = #tpu.dot_dimension_numbers<[1], [0], [0], [1], [0, 0, 1, 1], [], []>} : vector<2x32xf32>, vector<32x32xf32>, vector<2x32xf32> -> vector<2x32xf32>
    %327 = vector.broadcast %256 : vector<1x32xf32> to vector<2x32xf32>
    %328 = arith.addf %326, %327 : vector<2x32xf32>
    %329 = vector.extract_strided_slice %259 {offsets = [4, 0], sizes = [2, 32], strides = [1, 1]} : vector<16x32xf32> to vector<2x32xf32>
    %330 = arith.addf %329, %324 : vector<2x32xf32>
    %331 = arith.negf %330 : vector<2x32xf32>
    %332 = math.exp %331 : vector<2x32xf32>
    %cst_114 = arith.constant 1.000000e+00 : f32
    %333 = vector.broadcast %cst_114 : f32 to vector<2x32xf32>
    %334 = arith.addf %333, %332 : vector<2x32xf32>
    %335 = arith.divf %333, %334 : vector<2x32xf32>
    %336 = vector.extract_strided_slice %262 {offsets = [4, 0], sizes = [2, 32], strides = [1, 1]} : vector<16x32xf32> to vector<2x32xf32>
    %337 = arith.addf %336, %325 : vector<2x32xf32>
    %338 = arith.negf %337 : vector<2x32xf32>
    %339 = math.exp %338 : vector<2x32xf32>
    %cst_115 = arith.constant 1.000000e+00 : f32
    %340 = vector.broadcast %cst_115 : f32 to vector<2x32xf32>
    %341 = arith.addf %340, %339 : vector<2x32xf32>
    %342 = arith.divf %340, %341 : vector<2x32xf32>
    %343 = vector.extract_strided_slice %265 {offsets = [4, 0], sizes = [2, 32], strides = [1, 1]} : vector<16x32xf32> to vector<2x32xf32>
    %344 = arith.mulf %335, %328 : vector<2x32xf32>
    %345 = arith.addf %343, %344 : vector<2x32xf32>
    %346 = math.tanh %345 : vector<2x32xf32>
    %cst_116 = arith.constant 1.000000e+00 : f32
    %347 = vector.broadcast %cst_116 : f32 to vector<2x32xf32>
    %348 = arith.subf %347, %342 : vector<2x32xf32>
    %349 = arith.mulf %348, %346 : vector<2x32xf32>
    %350 = arith.mulf %342, %323 : vector<2x32xf32>
    %351 = arith.addf %349, %350 : vector<2x32xf32>
    %cst_117 = arith.constant dense<0.000000e+00> : vector<2x32xf32>
    %352 = tpu.matmul %351, %250, %cst_117 {dimension_numbers = #tpu.dot_dimension_numbers<[1], [0], [0], [1], [0, 0, 1, 1], [], []>} : vector<2x32xf32>, vector<32x32xf32>, vector<2x32xf32> -> vector<2x32xf32>
    %cst_118 = arith.constant dense<0.000000e+00> : vector<2x32xf32>
    %353 = tpu.matmul %351, %251, %cst_118 {dimension_numbers = #tpu.dot_dimension_numbers<[1], [0], [0], [1], [0, 0, 1, 1], [], []>} : vector<2x32xf32>, vector<32x32xf32>, vector<2x32xf32> -> vector<2x32xf32>
    %cst_119 = arith.constant dense<0.000000e+00> : vector<2x32xf32>
    %354 = tpu.matmul %351, %252, %cst_119 {dimension_numbers = #tpu.dot_dimension_numbers<[1], [0], [0], [1], [0, 0, 1, 1], [], []>} : vector<2x32xf32>, vector<32x32xf32>, vector<2x32xf32> -> vector<2x32xf32>
    %355 = vector.broadcast %256 : vector<1x32xf32> to vector<2x32xf32>
    %356 = arith.addf %354, %355 : vector<2x32xf32>
    %357 = vector.extract_strided_slice %259 {offsets = [6, 0], sizes = [2, 32], strides = [1, 1]} : vector<16x32xf32> to vector<2x32xf32>
    %358 = arith.addf %357, %352 : vector<2x32xf32>
    %359 = arith.negf %358 : vector<2x32xf32>
    %360 = math.exp %359 : vector<2x32xf32>
    %cst_120 = arith.constant 1.000000e+00 : f32
    %361 = vector.broadcast %cst_120 : f32 to vector<2x32xf32>
    %362 = arith.addf %361, %360 : vector<2x32xf32>
    %363 = arith.divf %361, %362 : vector<2x32xf32>
    %364 = vector.extract_strided_slice %262 {offsets = [6, 0], sizes = [2, 32], strides = [1, 1]} : vector<16x32xf32> to vector<2x32xf32>
    %365 = arith.addf %364, %353 : vector<2x32xf32>
    %366 = arith.negf %365 : vector<2x32xf32>
    %367 = math.exp %366 : vector<2x32xf32>
    %cst_121 = arith.constant 1.000000e+00 : f32
    %368 = vector.broadcast %cst_121 : f32 to vector<2x32xf32>
    %369 = arith.addf %368, %367 : vector<2x32xf32>
    %370 = arith.divf %368, %369 : vector<2x32xf32>
    %371 = vector.extract_strided_slice %265 {offsets = [6, 0], sizes = [2, 32], strides = [1, 1]} : vector<16x32xf32> to vector<2x32xf32>
    %372 = arith.mulf %363, %356 : vector<2x32xf32>
    %373 = arith.addf %371, %372 : vector<2x32xf32>
    %374 = math.tanh %373 : vector<2x32xf32>
    %cst_122 = arith.constant 1.000000e+00 : f32
    %375 = vector.broadcast %cst_122 : f32 to vector<2x32xf32>
    %376 = arith.subf %375, %370 : vector<2x32xf32>
    %377 = arith.mulf %376, %374 : vector<2x32xf32>
    %378 = arith.mulf %370, %351 : vector<2x32xf32>
    %379 = arith.addf %377, %378 : vector<2x32xf32>
    %cst_123 = arith.constant dense<0.000000e+00> : vector<2x32xf32>
    %380 = tpu.matmul %379, %250, %cst_123 {dimension_numbers = #tpu.dot_dimension_numbers<[1], [0], [0], [1], [0, 0, 1, 1], [], []>} : vector<2x32xf32>, vector<32x32xf32>, vector<2x32xf32> -> vector<2x32xf32>
    %cst_124 = arith.constant dense<0.000000e+00> : vector<2x32xf32>
    %381 = tpu.matmul %379, %251, %cst_124 {dimension_numbers = #tpu.dot_dimension_numbers<[1], [0], [0], [1], [0, 0, 1, 1], [], []>} : vector<2x32xf32>, vector<32x32xf32>, vector<2x32xf32> -> vector<2x32xf32>
    %cst_125 = arith.constant dense<0.000000e+00> : vector<2x32xf32>
    %382 = tpu.matmul %379, %252, %cst_125 {dimension_numbers = #tpu.dot_dimension_numbers<[1], [0], [0], [1], [0, 0, 1, 1], [], []>} : vector<2x32xf32>, vector<32x32xf32>, vector<2x32xf32> -> vector<2x32xf32>
    %383 = vector.broadcast %256 : vector<1x32xf32> to vector<2x32xf32>
    %384 = arith.addf %382, %383 : vector<2x32xf32>
    %385 = vector.extract_strided_slice %259 {offsets = [8, 0], sizes = [2, 32], strides = [1, 1]} : vector<16x32xf32> to vector<2x32xf32>
    %386 = arith.addf %385, %380 : vector<2x32xf32>
    %387 = arith.negf %386 : vector<2x32xf32>
    %388 = math.exp %387 : vector<2x32xf32>
    %cst_126 = arith.constant 1.000000e+00 : f32
    %389 = vector.broadcast %cst_126 : f32 to vector<2x32xf32>
    %390 = arith.addf %389, %388 : vector<2x32xf32>
    %391 = arith.divf %389, %390 : vector<2x32xf32>
    %392 = vector.extract_strided_slice %262 {offsets = [8, 0], sizes = [2, 32], strides = [1, 1]} : vector<16x32xf32> to vector<2x32xf32>
    %393 = arith.addf %392, %381 : vector<2x32xf32>
    %394 = arith.negf %393 : vector<2x32xf32>
    %395 = math.exp %394 : vector<2x32xf32>
    %cst_127 = arith.constant 1.000000e+00 : f32
    %396 = vector.broadcast %cst_127 : f32 to vector<2x32xf32>
    %397 = arith.addf %396, %395 : vector<2x32xf32>
    %398 = arith.divf %396, %397 : vector<2x32xf32>
    %399 = vector.extract_strided_slice %265 {offsets = [8, 0], sizes = [2, 32], strides = [1, 1]} : vector<16x32xf32> to vector<2x32xf32>
    %400 = arith.mulf %391, %384 : vector<2x32xf32>
    %401 = arith.addf %399, %400 : vector<2x32xf32>
    %402 = math.tanh %401 : vector<2x32xf32>
    %cst_128 = arith.constant 1.000000e+00 : f32
    %403 = vector.broadcast %cst_128 : f32 to vector<2x32xf32>
    %404 = arith.subf %403, %398 : vector<2x32xf32>
    %405 = arith.mulf %404, %402 : vector<2x32xf32>
    %406 = arith.mulf %398, %379 : vector<2x32xf32>
    %407 = arith.addf %405, %406 : vector<2x32xf32>
    %cst_129 = arith.constant dense<0.000000e+00> : vector<2x32xf32>
    %408 = tpu.matmul %407, %250, %cst_129 {dimension_numbers = #tpu.dot_dimension_numbers<[1], [0], [0], [1], [0, 0, 1, 1], [], []>} : vector<2x32xf32>, vector<32x32xf32>, vector<2x32xf32> -> vector<2x32xf32>
    %cst_130 = arith.constant dense<0.000000e+00> : vector<2x32xf32>
    %409 = tpu.matmul %407, %251, %cst_130 {dimension_numbers = #tpu.dot_dimension_numbers<[1], [0], [0], [1], [0, 0, 1, 1], [], []>} : vector<2x32xf32>, vector<32x32xf32>, vector<2x32xf32> -> vector<2x32xf32>
    %cst_131 = arith.constant dense<0.000000e+00> : vector<2x32xf32>
    %410 = tpu.matmul %407, %252, %cst_131 {dimension_numbers = #tpu.dot_dimension_numbers<[1], [0], [0], [1], [0, 0, 1, 1], [], []>} : vector<2x32xf32>, vector<32x32xf32>, vector<2x32xf32> -> vector<2x32xf32>
    %411 = vector.broadcast %256 : vector<1x32xf32> to vector<2x32xf32>
    %412 = arith.addf %410, %411 : vector<2x32xf32>
    %413 = vector.extract_strided_slice %259 {offsets = [10, 0], sizes = [2, 32], strides = [1, 1]} : vector<16x32xf32> to vector<2x32xf32>
    %414 = arith.addf %413, %408 : vector<2x32xf32>
    %415 = arith.negf %414 : vector<2x32xf32>
    %416 = math.exp %415 : vector<2x32xf32>
    %cst_132 = arith.constant 1.000000e+00 : f32
    %417 = vector.broadcast %cst_132 : f32 to vector<2x32xf32>
    %418 = arith.addf %417, %416 : vector<2x32xf32>
    %419 = arith.divf %417, %418 : vector<2x32xf32>
    %420 = vector.extract_strided_slice %262 {offsets = [10, 0], sizes = [2, 32], strides = [1, 1]} : vector<16x32xf32> to vector<2x32xf32>
    %421 = arith.addf %420, %409 : vector<2x32xf32>
    %422 = arith.negf %421 : vector<2x32xf32>
    %423 = math.exp %422 : vector<2x32xf32>
    %cst_133 = arith.constant 1.000000e+00 : f32
    %424 = vector.broadcast %cst_133 : f32 to vector<2x32xf32>
    %425 = arith.addf %424, %423 : vector<2x32xf32>
    %426 = arith.divf %424, %425 : vector<2x32xf32>
    %427 = vector.extract_strided_slice %265 {offsets = [10, 0], sizes = [2, 32], strides = [1, 1]} : vector<16x32xf32> to vector<2x32xf32>
    %428 = arith.mulf %419, %412 : vector<2x32xf32>
    %429 = arith.addf %427, %428 : vector<2x32xf32>
    %430 = math.tanh %429 : vector<2x32xf32>
    %cst_134 = arith.constant 1.000000e+00 : f32
    %431 = vector.broadcast %cst_134 : f32 to vector<2x32xf32>
    %432 = arith.subf %431, %426 : vector<2x32xf32>
    %433 = arith.mulf %432, %430 : vector<2x32xf32>
    %434 = arith.mulf %426, %407 : vector<2x32xf32>
    %435 = arith.addf %433, %434 : vector<2x32xf32>
    %cst_135 = arith.constant dense<0.000000e+00> : vector<2x32xf32>
    %436 = tpu.matmul %435, %250, %cst_135 {dimension_numbers = #tpu.dot_dimension_numbers<[1], [0], [0], [1], [0, 0, 1, 1], [], []>} : vector<2x32xf32>, vector<32x32xf32>, vector<2x32xf32> -> vector<2x32xf32>
    %cst_136 = arith.constant dense<0.000000e+00> : vector<2x32xf32>
    %437 = tpu.matmul %435, %251, %cst_136 {dimension_numbers = #tpu.dot_dimension_numbers<[1], [0], [0], [1], [0, 0, 1, 1], [], []>} : vector<2x32xf32>, vector<32x32xf32>, vector<2x32xf32> -> vector<2x32xf32>
    %cst_137 = arith.constant dense<0.000000e+00> : vector<2x32xf32>
    %438 = tpu.matmul %435, %252, %cst_137 {dimension_numbers = #tpu.dot_dimension_numbers<[1], [0], [0], [1], [0, 0, 1, 1], [], []>} : vector<2x32xf32>, vector<32x32xf32>, vector<2x32xf32> -> vector<2x32xf32>
    %439 = vector.broadcast %256 : vector<1x32xf32> to vector<2x32xf32>
    %440 = arith.addf %438, %439 : vector<2x32xf32>
    %441 = vector.extract_strided_slice %259 {offsets = [12, 0], sizes = [2, 32], strides = [1, 1]} : vector<16x32xf32> to vector<2x32xf32>
    %442 = arith.addf %441, %436 : vector<2x32xf32>
    %443 = arith.negf %442 : vector<2x32xf32>
    %444 = math.exp %443 : vector<2x32xf32>
    %cst_138 = arith.constant 1.000000e+00 : f32
    %445 = vector.broadcast %cst_138 : f32 to vector<2x32xf32>
    %446 = arith.addf %445, %444 : vector<2x32xf32>
    %447 = arith.divf %445, %446 : vector<2x32xf32>
    %448 = vector.extract_strided_slice %262 {offsets = [12, 0], sizes = [2, 32], strides = [1, 1]} : vector<16x32xf32> to vector<2x32xf32>
    %449 = arith.addf %448, %437 : vector<2x32xf32>
    %450 = arith.negf %449 : vector<2x32xf32>
    %451 = math.exp %450 : vector<2x32xf32>
    %cst_139 = arith.constant 1.000000e+00 : f32
    %452 = vector.broadcast %cst_139 : f32 to vector<2x32xf32>
    %453 = arith.addf %452, %451 : vector<2x32xf32>
    %454 = arith.divf %452, %453 : vector<2x32xf32>
    %455 = vector.extract_strided_slice %265 {offsets = [12, 0], sizes = [2, 32], strides = [1, 1]} : vector<16x32xf32> to vector<2x32xf32>
    %456 = arith.mulf %447, %440 : vector<2x32xf32>
    %457 = arith.addf %455, %456 : vector<2x32xf32>
    %458 = math.tanh %457 : vector<2x32xf32>
    %cst_140 = arith.constant 1.000000e+00 : f32
    %459 = vector.broadcast %cst_140 : f32 to vector<2x32xf32>
    %460 = arith.subf %459, %454 : vector<2x32xf32>
    %461 = arith.mulf %460, %458 : vector<2x32xf32>
    %462 = arith.mulf %454, %435 : vector<2x32xf32>
    %463 = arith.addf %461, %462 : vector<2x32xf32>
    %cst_141 = arith.constant dense<0.000000e+00> : vector<2x32xf32>
    %464 = tpu.matmul %463, %250, %cst_141 {dimension_numbers = #tpu.dot_dimension_numbers<[1], [0], [0], [1], [0, 0, 1, 1], [], []>} : vector<2x32xf32>, vector<32x32xf32>, vector<2x32xf32> -> vector<2x32xf32>
    %cst_142 = arith.constant dense<0.000000e+00> : vector<2x32xf32>
    %465 = tpu.matmul %463, %251, %cst_142 {dimension_numbers = #tpu.dot_dimension_numbers<[1], [0], [0], [1], [0, 0, 1, 1], [], []>} : vector<2x32xf32>, vector<32x32xf32>, vector<2x32xf32> -> vector<2x32xf32>
    %cst_143 = arith.constant dense<0.000000e+00> : vector<2x32xf32>
    %466 = tpu.matmul %463, %252, %cst_143 {dimension_numbers = #tpu.dot_dimension_numbers<[1], [0], [0], [1], [0, 0, 1, 1], [], []>} : vector<2x32xf32>, vector<32x32xf32>, vector<2x32xf32> -> vector<2x32xf32>
    %467 = vector.broadcast %256 : vector<1x32xf32> to vector<2x32xf32>
    %468 = arith.addf %466, %467 : vector<2x32xf32>
    %469 = vector.extract_strided_slice %259 {offsets = [14, 0], sizes = [2, 32], strides = [1, 1]} : vector<16x32xf32> to vector<2x32xf32>
    %470 = arith.addf %469, %464 : vector<2x32xf32>
    %471 = arith.negf %470 : vector<2x32xf32>
    %472 = math.exp %471 : vector<2x32xf32>
    %cst_144 = arith.constant 1.000000e+00 : f32
    %473 = vector.broadcast %cst_144 : f32 to vector<2x32xf32>
    %474 = arith.addf %473, %472 : vector<2x32xf32>
    %475 = arith.divf %473, %474 : vector<2x32xf32>
    %476 = vector.extract_strided_slice %262 {offsets = [14, 0], sizes = [2, 32], strides = [1, 1]} : vector<16x32xf32> to vector<2x32xf32>
    %477 = arith.addf %476, %465 : vector<2x32xf32>
    %478 = arith.negf %477 : vector<2x32xf32>
    %479 = math.exp %478 : vector<2x32xf32>
    %cst_145 = arith.constant 1.000000e+00 : f32
    %480 = vector.broadcast %cst_145 : f32 to vector<2x32xf32>
    %481 = arith.addf %480, %479 : vector<2x32xf32>
    %482 = arith.divf %480, %481 : vector<2x32xf32>
    %483 = vector.extract_strided_slice %265 {offsets = [14, 0], sizes = [2, 32], strides = [1, 1]} : vector<16x32xf32> to vector<2x32xf32>
    %484 = arith.mulf %475, %468 : vector<2x32xf32>
    %485 = arith.addf %483, %484 : vector<2x32xf32>
    %486 = math.tanh %485 : vector<2x32xf32>
    %cst_146 = arith.constant 1.000000e+00 : f32
    %487 = vector.broadcast %cst_146 : f32 to vector<2x32xf32>
    %488 = arith.subf %487, %482 : vector<2x32xf32>
    %489 = arith.mulf %488, %486 : vector<2x32xf32>
    %490 = arith.mulf %482, %463 : vector<2x32xf32>
    %491 = arith.addf %489, %490 : vector<2x32xf32>
    %492 = vector.shape_cast %245 : vector<2x32xf32> to vector<1x2x32xf32>
    %493 = vector.shape_cast %491 : vector<2x32xf32> to vector<1x2x32xf32>
    %494 = tpu.concatenate %492, %493 in 0 : vector<1x2x32xf32>, vector<1x2x32xf32> -> vector<2x2x32xf32>
    %c0_147 = arith.constant 0 : index
    %c0_148 = arith.constant 0 : index
    %c0_149 = arith.constant 0 : index
    %495 = vector.load %arg29[%c0_147, %c0_148, %c0_149] : memref<2x2x32xf32, #tpu.memory_space<vmem>>, vector<2x2x32xf32>
    tpu.vector_store %arg29[%c0_147, %c0_148, %c0_149], %494 {strides = array<i32>} : memref<2x2x32xf32, #tpu.memory_space<vmem>>, vector<2x2x32xf32>,
    %496 = vector.shape_cast %295 : vector<2x32xf32> to vector<2x1x32xf32>
    %497 = vector.shape_cast %323 : vector<2x32xf32> to vector<2x1x32xf32>
    %498 = vector.shape_cast %351 : vector<2x32xf32> to vector<2x1x32xf32>
    %499 = vector.shape_cast %379 : vector<2x32xf32> to vector<2x1x32xf32>
    %500 = vector.shape_cast %407 : vector<2x32xf32> to vector<2x1x32xf32>
    %501 = vector.shape_cast %435 : vector<2x32xf32> to vector<2x1x32xf32>
    %502 = vector.shape_cast %463 : vector<2x32xf32> to vector<2x1x32xf32>
    %503 = vector.shape_cast %491 : vector<2x32xf32> to vector<2x1x32xf32>
    %504 = tpu.concatenate %496, %497, %498, %499, %500, %501, %502, %503 in 1 : vector<2x1x32xf32>, vector<2x1x32xf32>, vector<2x1x32xf32>, vector<2x1x32xf32>, vector<2x1x32xf32>, vector<2x1x32xf32>, vector<2x1x32xf32>, vector<2x1x32xf32> -> vector<2x8x32xf32>
    %c0_150 = arith.constant 0 : index
    %c0_151 = arith.constant 0 : index
    %c0_152 = arith.constant 0 : index
    %505 = vector.load %arg2[%c0_150, %c0_151, %c0_152] : memref<2x10x32xf32, #tpu.memory_space<vmem>>, vector<2x10x32xf32>
    "tpu.trace_start"() <{level = 10 : i32, message = "bth,bsh->bts"}> : () -> ()
    %cst_153 = arith.constant dense<0.000000e+00> : vector<2x8x10xf32>
    %506 = tpu.matmul %504, %505, %cst_153 {dimension_numbers = #tpu.dot_dimension_numbers<[2], [2], [1], [1], [0, 0, 0, 1, 1, 1], [0], [0]>} : vector<2x8x32xf32>, vector<2x10x32xf32>, vector<2x8x10xf32> -> vector<2x8x10xf32>
    "tpu.trace_stop"() : () -> ()
    %cst_154 = arith.constant dense<0xFF800000> : vector<2x8xf32>
    %507 = vector.multi_reduction <maximumf>, %506, %cst_154 [2] : vector<2x8x10xf32> to vector<2x8xf32>
    %508 = vector.shape_cast %507 : vector<2x8xf32> to vector<2x8x1xf32>
    %509 = vector.broadcast %508 : vector<2x8x1xf32> to vector<2x8x10xf32>
    %510 = arith.subf %506, %509 : vector<2x8x10xf32>
    %511 = math.exp %510 : vector<2x8x10xf32>
    %cst_155 = arith.constant dense<0.000000e+00> : vector<2x8xf32>
    %512 = vector.multi_reduction <add>, %511, %cst_155 [2] : vector<2x8x10xf32> to vector<2x8xf32>
    %513 = vector.shape_cast %512 : vector<2x8xf32> to vector<2x8x1xf32>
    %514 = tpu.reciprocal %513 {approx = true} : vector<2x8x1xf32> -> vector<2x8x1xf32>
    %515 = vector.broadcast %514 : vector<2x8x1xf32> to vector<2x8x10xf32>
    %516 = arith.mulf %511, %515 : vector<2x8x10xf32>
    "tpu.trace_start"() <{level = 10 : i32, message = "bts,bsh->bth"}> : () -> ()
    %cst_156 = arith.constant dense<0.000000e+00> : vector<2x8x32xf32>
    %517 = tpu.matmul %516, %505, %cst_156 {dimension_numbers = #tpu.dot_dimension_numbers<[2], [1], [1], [2], [0, 0, 0, 1, 1, 2], [0], [0]>} : vector<2x8x10xf32>, vector<2x10x32xf32>, vector<2x8x32xf32> -> vector<2x8x32xf32>
    "tpu.trace_stop"() : () -> ()
    %518 = vector.shape_cast %504 : vector<2x8x32xf32> to vector<16x32xf32>
    %519 = vector.shape_cast %517 : vector<2x8x32xf32> to vector<16x32xf32>
    %c0_157 = arith.constant 0 : index
    %c0_158 = arith.constant 0 : index
    %520 = vector.load %arg23[%c0_157, %c0_158] : memref<32x32xf32, #tpu.memory_space<vmem>>, vector<32x32xf32>
    %cst_159 = arith.constant dense<0.000000e+00> : vector<16x32xf32>
    %521 = tpu.matmul %518, %520, %cst_159 {dimension_numbers = #tpu.dot_dimension_numbers<[1], [0], [0], [1], [0, 0, 1, 1], [], []>} : vector<16x32xf32>, vector<32x32xf32>, vector<16x32xf32> -> vector<16x32xf32>
    %c0_160 = arith.constant 0 : index
    %c0_161 = arith.constant 0 : index
    %522 = vector.load %arg24[%c0_160, %c0_161] : memref<32x32xf32, #tpu.memory_space<vmem>>, vector<32x32xf32>
    %cst_162 = arith.constant dense<0.000000e+00> : vector<16x32xf32>
    %523 = tpu.matmul %519, %522, %cst_162 {dimension_numbers = #tpu.dot_dimension_numbers<[1], [0], [0], [1], [0, 0, 1, 1], [], []>} : vector<16x32xf32>, vector<32x32xf32>, vector<16x32xf32> -> vector<16x32xf32>
    %524 = arith.addf %521, %523 : vector<16x32xf32>
    %c0_163 = arith.constant 0 : index
    %c0_164 = arith.constant 0 : index
    %525 = vector.load %arg25[%c0_163, %c0_164] : memref<1x32xf32, #tpu.memory_space<vmem>>, vector<1x32xf32>
    %526 = vector.broadcast %525 : vector<1x32xf32> to vector<16x32xf32>
    %527 = arith.addf %524, %526 : vector<16x32xf32>
    %528 = math.tanh %527 : vector<16x32xf32>
    %c0_165 = arith.constant 0 : index
    %c0_166 = arith.constant 0 : index
    %529 = vector.load %arg26[%c0_165, %c0_166] : memref<32x64xf32, #tpu.memory_space<vmem>>, vector<32x64xf32>
    %cst_167 = arith.constant dense<0.000000e+00> : vector<16x64xf32>
    %530 = tpu.matmul %528, %529, %cst_167 {dimension_numbers = #tpu.dot_dimension_numbers<[1], [0], [0], [1], [0, 0, 1, 1], [], []>} : vector<16x32xf32>, vector<32x64xf32>, vector<16x64xf32> -> vector<16x64xf32>
    %c0_168 = arith.constant 0 : index
    %c0_169 = arith.constant 0 : index
    %531 = vector.load %arg27[%c0_168, %c0_169] : memref<1x64xf32, #tpu.memory_space<vmem>>, vector<1x64xf32>
    %532 = vector.broadcast %531 : vector<1x64xf32> to vector<16x64xf32>
    %533 = arith.addf %530, %532 : vector<16x64xf32>
    %c0_170 = arith.constant 0 : index
    %c0_171 = arith.constant 0 : index
    %534 = vector.load %arg30[%c0_170, %c0_171] : memref<16x32xf32, #tpu.memory_space<vmem>>, vector<16x32xf32>
    tpu.vector_store %arg30[%c0_170, %c0_171], %527 {strides = array<i32>} : memref<16x32xf32, #tpu.memory_space<vmem>>, vector<16x32xf32>,
    %c0_172 = arith.constant 0 : index
    %c0_173 = arith.constant 0 : index
    %535 = vector.load %arg28[%c0_172, %c0_173] : memref<16x64xf32, #tpu.memory_space<vmem>>, vector<16x64xf32>
    tpu.vector_store %arg28[%c0_172, %c0_173], %533 {strides = array<i32>} : memref<16x64xf32, #tpu.memory_space<vmem>>, vector<16x64xf32>,
    return
  }
}

</mosaic_0001>

<llo_original>
// kernel: tpu_custom_call.1
$region0: #{tpu_custom_call.1}
  #allocation0 [shape = 'u32[]', space=smem, size = 0x4, offset = 0x4, fixed_abs, tag = 'smem constant byte address 0x4 - core index']
  #allocation1 [shape = 'u32[144,128]{1,0:T(1,128)}', space=vmem, size = 0x12000, scoped, tag = 'internal scratch']
  %s0 = inlined_call_operand.smem [shape: u32[31], index: -1, kind: input, shape index: {}]
  %s1 = sld [smem:[%s0]]
  %s2 = scalar_lea.smem %s0, 1
  %s3 = sld [smem:[%s2]]
  %s4 = scalar_lea.smem %s0, 2
  %s5 = sld [smem:[%s4]]
  %s6 = scalar_lea.smem %s0, 3
  %s7 = sld [smem:[%s6]]
  %s8 = scalar_lea.smem %s0, 4
  %s9 = sld [smem:[%s8]]
  %s10 = scalar_lea.smem %s0, 5
  %s11 = sld [smem:[%s10]]
  %s12 = scalar_lea.smem %s0, 6
  %s13 = sld [smem:[%s12]]
  %s14 = scalar_lea.smem %s0, 7
  %s15 = sld [smem:[%s14]]
  %s16 = scalar_lea.smem %s0, 8
  %s17 = sld [smem:[%s16]]
  %s18 = scalar_lea.smem %s0, 9
  %s19 = sld [smem:[%s18]]
  %s20 = scalar_lea.smem %s0, 10
  %s21 = sld [smem:[%s20]]
  %s22 = scalar_lea.smem %s0, 11
  %s23 = sld [smem:[%s22]]
  %s24 = scalar_lea.smem %s0, 12
  %s25 = sld [smem:[%s24]]
  %s26 = scalar_lea.smem %s0, 13
  %s27 = sld [smem:[%s26]]
  %s28 = scalar_lea.smem %s0, 14
  %s29 = sld [smem:[%s28]]
  %s30 = scalar_lea.smem %s0, 15
  %s31 = sld [smem:[%s30]]
  %s32 = scalar_lea.smem %s0, 16
  %s33 = sld [smem:[%s32]]
  %s34 = scalar_lea.smem %s0, 17
  %s35 = sld [smem:[%s34]]
  %s36 = scalar_lea.smem %s0, 18
  %s37 = sld [smem:[%s36]]
  %s38 = scalar_lea.smem %s0, 19
  %s39 = sld [smem:[%s38]]
  %s40 = scalar_lea.smem %s0, 20
  %s41 = sld [smem:[%s40]]
  %s42 = scalar_lea.smem %s0, 21
  %s43 = sld [smem:[%s42]]
  %s44 = scalar_lea.smem %s0, 22
  %s45 = sld [smem:[%s44]]
  %s46 = scalar_lea.smem %s0, 23
  %s47 = sld [smem:[%s46]]
  %s48 = scalar_lea.smem %s0, 24
  %s49 = sld [smem:[%s48]]
  %s50 = scalar_lea.smem %s0, 25
  %s51 = sld [smem:[%s50]]
  %s52 = scalar_lea.smem %s0, 26
  %s53 = sld [smem:[%s52]]
  %s54 = scalar_lea.smem %s0, 27
  %s55 = sld [smem:[%s54]]
  %s56 = scalar_lea.smem %s0, 28
  %s57 = sld [smem:[%s56]]
  %s58 = scalar_lea.smem %s0, 29
  %s59 = sld [smem:[%s58]]
  %s60 = scalar_lea.smem %s0, 30
  %s61 = sld [smem:[%s60]]
  %62 = xla_tuple %s57, %s59, %s61
  %s63 = sld [smem:[#allocation0]]
  $region206: #{tpu_custom_call.1} parent=0
    _
  %s65 = ssub.s32 1, %s63
  %s66 = scalar_select 0, %s65, %s63
  $region1: #{tpu_custom_call.1} parent=0
    #allocation2 [shape = 'u8[8192]{0}', space=vmem, size = 0x2000, scoped, tag = 'input window, operand 0, single buffered']
    #allocation3 [shape = 's32[1]{0}', space=sflag, size = 0x4, scoped, tag = 'scoped memory for tpu_custom_call.1']
    #allocation4 [shape = 's32[1]{0}', space=sflag, size = 0x4, scoped, tag = 'scoped memory for tpu_custom_call.1']
    #allocation5 [shape = 'u8[2048]{0}', space=vmem, size = 0x800, scoped, tag = 'input window, operand 1, single buffered']
    #allocation6 [shape = 's32[1]{0}', space=sflag, size = 0x4, scoped, tag = 'scoped memory for tpu_custom_call.1']
    #allocation7 [shape = 'u8[8192]{0}', space=vmem, size = 0x2000, scoped, tag = 'input window, operand 3, single buffered']
    #allocation8 [shape = 'u8[8192]{0}', space=vmem, size = 0x2000, scoped, tag = 'input window, operand 4, single buffered']
    #allocation9 [shape = 's32[1]{0}', space=sflag, size = 0x4, scoped, tag = 'scoped memory for tpu_custom_call.1']
    #allocation10 [shape = 'u8[8192]{0}', space=vmem, size = 0x2000, scoped, tag = 'input window, operand 5, single buffered']
    #allocation11 [shape = 'u8[16384]{0}', space=vmem, size = 0x4000, scoped, tag = 'input window, operand 8, single buffered']
    #allocation12 [shape = 's32[1]{0}', space=sflag, size = 0x4, scoped, tag = 'scoped memory for tpu_custom_call.1']
    #allocation13 [shape = 'u8[512]{0}', space=vmem, size = 0x400, scoped, tag = 'input window, operand 10, single buffered']
    #allocation14 [shape = 'u8[512]{0}', space=vmem, size = 0x400, scoped, tag = 'input window, operand 11, single buffered']
    #allocation15 [shape = 's32[1]{0}', space=sflag, size = 0x4, scoped, tag = 'scoped memory for tpu_custom_call.1']
    #allocation16 [shape = 'u8[512]{0}', space=vmem, size = 0x400, scoped, tag = 'input window, operand 12, single buffered']
    #allocation17 [shape = 'u8[16384]{0}', space=vmem, size = 0x4000, scoped, tag = 'input window, operand 14, single buffered']
    #allocation18 [shape = 's32[1]{0}', space=sflag, size = 0x4, scoped, tag = 'scoped memory for tpu_custom_call.1']
    #allocation19 [shape = 'u8[16384]{0}', space=vmem, size = 0x4000, scoped, tag = 'input window, operand 15, single buffered']
    #allocation20 [shape = 'u8[16384]{0}', space=vmem, size = 0x4000, scoped, tag = 'input window, operand 16, single buffered']
    #allocation21 [shape = 's32[1]{0}', space=sflag, size = 0x4, scoped, tag = 'scoped memory for tpu_custom_call.1']
    #allocation22 [shape = 'u8[16384]{0}', space=vmem, size = 0x4000, scoped, tag = 'input window, operand 17, single buffered']
    #allocation23 [shape = 'u8[16384]{0}', space=vmem, size = 0x4000, scoped, tag = 'input window, operand 18, single buffered']
    #allocation24 [shape = 's32[1]{0}', space=sflag, size = 0x4, scoped, tag = 'scoped memory for tpu_custom_call.1']
    #allocation25 [shape = 'u8[512]{0}', space=vmem, size = 0x400, scoped, tag = 'input window, operand 21, single buffered']
    #allocation26 [shape = 'u8[16384]{0}', space=vmem, size = 0x4000, scoped, tag = 'input window, operand 24, single buffered']
    #allocation27 [shape = 's32[1]{0}', space=sflag, size = 0x4, scoped, tag = 'scoped memory for tpu_custom_call.1']
    #allocation28 [shape = 'u8[16384]{0}', space=vmem, size = 0x4000, scoped, tag = 'input window, operand 26, single buffered']
    #allocation29 [shape = 'u8[8192]{0}', space=vmem, size = 0x2000, scoped, tag = 'output window, operand 0, single buffered']
    #allocation30 [shape = 'u8[2048]{0}', space=vmem, size = 0x800, scoped, tag = 'output window, operand 1, single buffered']
    #allocation31 [shape = 's32[1]{0}', space=sflag, size = 0x4, scoped, tag = 'scoped memory for tpu_custom_call.1']
    #allocation32 [shape = 'u8[8192]{0}', space=vmem, size = 0x2000, scoped, tag = 'output window, operand 2, single buffered']
    %67 = vsyncpa [#allocation3], 0
    %68 = vsyncpa [#allocation6], 0
    %69 = vsyncpa [#allocation9], 0
    %70 = vsyncpa [#allocation12], 0
    %71 = vsyncpa [#allocation15], 0
    %72 = vsyncpa [#allocation18], 0
    %73 = vsyncpa [#allocation21], 0
    %74 = vsyncpa [#allocation24], 0
    %75 = vsyncpa [#allocation27], 0
    %76 = vsyncpa [#allocation4], 0
    %77 = vsyncpa [#allocation31], 0
    // Predicated region
    $region2: #{tpu_custom_call.1} parent=1 // pred_check
      _
    $region3: #{tpu_custom_call.1} parent=1 // pred_check_branch
      %79 = sbr.rel (0) target = $region5
    $region4: #{tpu_custom_call.1} parent=1 // pred_region
      %s81 = ssub.s32 256, 256
      %82 = vsyncadd [#allocation3], %s81
      %s83 = sshll.u32 [#allocation2], 4
      %s84 = int_to_ptr.vmem [resolvable:$true] %s83
      %89 = dma.hbm_to_vmem [thread:$0]  %s1, 256, %s84, [#allocation3], 128, 128, 8
    $region5: #{tpu_custom_call.1} parent=1 // pred_fallthru
      _
    // Predicated region
    $region6: #{tpu_custom_call.1} parent=1 // pred_check
      _
    $region7: #{tpu_custom_call.1} parent=1 // pred_check_branch
      %91 = sbr.rel (0) target = $region9
    $region8: #{tpu_custom_call.1} parent=1 // pred_region
      %s93 = ssub.s32 64, 64
      %94 = vsyncadd [#allocation6], %s93
      %s95 = sshll.u32 [#allocation5], 4
      %s96 = int_to_ptr.vmem [resolvable:$true] %s95
      %101 = dma.hbm_to_vmem [thread:$0]  %s3, 64, %s96, [#allocation6], 32, 32, 2
    $region9: #{tpu_custom_call.1} parent=1 // pred_fallthru
      _
    // Predicated region
    $region10: #{tpu_custom_call.1} parent=1 // pred_check
      _
    $region11: #{tpu_custom_call.1} parent=1 // pred_check_branch
      %103 = sbr.rel (0) target = $region13
    $region12: #{tpu_custom_call.1} parent=1 // pred_region
      _
    $region13: #{tpu_custom_call.1} parent=1 // pred_fallthru
      _
    // Predicated region
    $region14: #{tpu_custom_call.1} parent=1 // pred_check
      _
    $region15: #{tpu_custom_call.1} parent=1 // pred_check_branch
      %105 = sbr.rel (0) target = $region17
    $region16: #{tpu_custom_call.1} parent=1 // pred_region
      %s107 = ssub.s32 256, 256
      %108 = vsyncadd [#allocation6], %s107
      %s109 = sshll.u32 [#allocation7], 4
      %s110 = int_to_ptr.vmem [resolvable:$true] %s109
      %115 = dma.hbm_to_vmem [thread:$0]  %s7, 256, %s110, [#allocation6], 128, 128, 8
    $region17: #{tpu_custom_call.1} parent=1 // pred_fallthru
      _
    // Predicated region
    $region18: #{tpu_custom_call.1} parent=1 // pred_check
      _
    $region19: #{tpu_custom_call.1} parent=1 // pred_check_branch
      %117 = sbr.rel (0) target = $region21
    $region20: #{tpu_custom_call.1} parent=1 // pred_region
      %s119 = ssub.s32 256, 256
      %120 = vsyncadd [#allocation9], %s119
      %s121 = sshll.u32 [#allocation8], 4
      %s122 = int_to_ptr.vmem [resolvable:$true] %s121
      %127 = dma.hbm_to_vmem [thread:$0]  %s9, 256, %s122, [#allocation9], 128, 128, 8
    $region21: #{tpu_custom_call.1} parent=1 // pred_fallthru
      _
    // Predicated region
    $region22: #{tpu_custom_call.1} parent=1 // pred_check
      _
    $region23: #{tpu_custom_call.1} parent=1 // pred_check_branch
      %129 = sbr.rel (0) target = $region25
    $region24: #{tpu_custom_call.1} parent=1 // pred_region
      %s131 = ssub.s32 256, 256
      %132 = vsyncadd [#allocation9], %s131
      %s133 = sshll.u32 [#allocation10], 4
      %s134 = int_to_ptr.vmem [resolvable:$true] %s133
      %139 = dma.hbm_to_vmem [thread:$0]  %s11, 256, %s134, [#allocation9], 128, 128, 8
    $region25: #{tpu_custom_call.1} parent=1 // pred_fallthru
      _
    // Predicated region
    $region26: #{tpu_custom_call.1} parent=1 // pred_check
      _
    $region27: #{tpu_custom_call.1} parent=1 // pred_check_branch
      %141 = sbr.rel (0) target = $region29
    $region28: #{tpu_custom_call.1} parent=1 // pred_region
      _
    $region29: #{tpu_custom_call.1} parent=1 // pred_fallthru
      _
    // Predicated region
    $region30: #{tpu_custom_call.1} parent=1 // pred_check
      _
    $region31: #{tpu_custom_call.1} parent=1 // pred_check_branch
      %143 = sbr.rel (0) target = $region33
    $region32: #{tpu_custom_call.1} parent=1 // pred_region
      _
    $region33: #{tpu_custom_call.1} parent=1 // pred_fallthru
      _
    // Predicated region
    $region34: #{tpu_custom_call.1} parent=1 // pred_check
      _
    $region35: #{tpu_custom_call.1} parent=1 // pred_check_branch
      %145 = sbr.rel (0) target = $region37
    $region36: #{tpu_custom_call.1} parent=1 // pred_region
      %s147 = ssub.s32 512, 512
      %148 = vsyncadd [#allocation12], %s147
      %s149 = sshll.u32 [#allocation11], 4
      %s150 = int_to_ptr.vmem [resolvable:$true] %s149
      %155 = dma.hbm_to_vmem [thread:$0]  %s17, 512, %s150, [#allocation12], 128, 128, 8
    $region37: #{tpu_custom_call.1} parent=1 // pred_fallthru
      _
    // Predicated region
    $region38: #{tpu_custom_call.1} parent=1 // pred_check
      _
    $region39: #{tpu_custom_call.1} parent=1 // pred_check_branch
      %157 = sbr.rel (0) target = $region41
    $region40: #{tpu_custom_call.1} parent=1 // pred_region
      _
    $region41: #{tpu_custom_call.1} parent=1 // pred_fallthru
      _
    // Predicated region
    $region42: #{tpu_custom_call.1} parent=1 // pred_check
      _
    $region43: #{tpu_custom_call.1} parent=1 // pred_check_branch
      %159 = sbr.rel (0) target = $region45
    $region44: #{tpu_custom_call.1} parent=1 // pred_region
      %s161 = ssub.s32 16, 16
      %162 = vsyncadd [#allocation12], %s161
      %s164 = sshll.u32 [#allocation13], 4
      %s165 = int_to_ptr.vmem [resolvable:$true] %s164
      %167 = dma.hbm_to_vmem [thread:$0]  %s21, 16, %s165, [#allocation12]
    $region45: #{tpu_custom_call.1} parent=1 // pred_fallthru
      _
    // Predicated region
    $region46: #{tpu_custom_call.1} parent=1 // pred_check
      _
    $region47: #{tpu_custom_call.1} parent=1 // pred_check_branch
      %169 = sbr.rel (0) target = $region49
    $region48: #{tpu_custom_call.1} parent=1 // pred_region
      %s171 = ssub.s32 16, 16
      %172 = vsyncadd [#allocation15], %s171
      %s174 = sshll.u32 [#allocation14], 4
      %s175 = int_to_ptr.vmem [resolvable:$true] %s174
      %177 = dma.hbm_to_vmem [thread:$0]  %s23, 16, %s175, [#allocation15]
    $region49: #{tpu_custom_call.1} parent=1 // pred_fallthru
      _
    // Predicated region
    $region50: #{tpu_custom_call.1} parent=1 // pred_check
      _
    $region51: #{tpu_custom_call.1} parent=1 // pred_check_branch
      %179 = sbr.rel (0) target = $region53
    $region52: #{tpu_custom_call.1} parent=1 // pred_region
      %s181 = ssub.s32 16, 16
      %182 = vsyncadd [#allocation15], %s181
      %s184 = sshll.u32 [#allocation16], 4
      %s185 = int_to_ptr.vmem [resolvable:$true] %s184
      %187 = dma.hbm_to_vmem [thread:$0]  %s25, 16, %s185, [#allocation15]
    $region53: #{tpu_custom_call.1} parent=1 // pred_fallthru
      _
    // Predicated region
    $region54: #{tpu_custom_call.1} parent=1 // pred_check
      _
    $region55: #{tpu_custom_call.1} parent=1 // pred_check_branch
      %189 = sbr.rel (0) target = $region57
    $region56: #{tpu_custom_call.1} parent=1 // pred_region
      _
    $region57: #{tpu_custom_call.1} parent=1 // pred_fallthru
      _
    // Predicated region
    $region58: #{tpu_custom_call.1} parent=1 // pred_check
      _
    $region59: #{tpu_custom_call.1} parent=1 // pred_check_branch
      %191 = sbr.rel (0) target = $region61
    $region60: #{tpu_custom_call.1} parent=1 // pred_region
      %s193 = ssub.s32 512, 512
      %194 = vsyncadd [#allocation18], %s193
      %s195 = sshll.u32 [#allocation17], 4
      %s196 = int_to_ptr.vmem [resolvable:$true] %s195
      %201 = dma.hbm_to_vmem [thread:$0]  %s29, 512, %s196, [#allocation18], 128, 128, 8
    $region61: #{tpu_custom_call.1} parent=1 // pred_fallthru
      _
    // Predicated region
    $region62: #{tpu_custom_call.1} parent=1 // pred_check
      _
    $region63: #{tpu_custom_call.1} parent=1 // pred_check_branch
      %203 = sbr.rel (0) target = $region65
    $region64: #{tpu_custom_call.1} parent=1 // pred_region
      %s205 = ssub.s32 512, 512
      %206 = vsyncadd [#allocation18], %s205
      %s207 = sshll.u32 [#allocation19], 4
      %s208 = int_to_ptr.vmem [resolvable:$true] %s207
      %213 = dma.hbm_to_vmem [thread:$0]  %s31, 512, %s208, [#allocation18], 128, 128, 8
    $region65: #{tpu_custom_call.1} parent=1 // pred_fallthru
      _
    // Predicated region
    $region66: #{tpu_custom_call.1} parent=1 // pred_check
      _
    $region67: #{tpu_custom_call.1} parent=1 // pred_check_branch
      %215 = sbr.rel (0) target = $region69
    $region68: #{tpu_custom_call.1} parent=1 // pred_region
      %s217 = ssub.s32 512, 512
      %218 = vsyncadd [#allocation21], %s217
      %s219 = sshll.u32 [#allocation20], 4
      %s220 = int_to_ptr.vmem [resolvable:$true] %s219
      %225 = dma.hbm_to_vmem [thread:$0]  %s33, 512, %s220, [#allocation21], 128, 128, 8
    $region69: #{tpu_custom_call.1} parent=1 // pred_fallthru
      _
    // Predicated region
    $region70: #{tpu_custom_call.1} parent=1 // pred_check
      _
    $region71: #{tpu_custom_call.1} parent=1 // pred_check_branch
      %227 = sbr.rel (0) target = $region73
    $region72: #{tpu_custom_call.1} parent=1 // pred_region
      %s229 = ssub.s32 512, 512
      %230 = vsyncadd [#allocation21], %s229
      %s231 = sshll.u32 [#allocation22], 4
      %s232 = int_to_ptr.vmem [resolvable:$true] %s231
      %237 = dma.hbm_to_vmem [thread:$0]  %s35, 512, %s232, [#allocation21], 128, 128, 8
    $region73: #{tpu_custom_call.1} parent=1 // pred_fallthru
      _
    // Predicated region
    $region74: #{tpu_custom_call.1} parent=1 // pred_check
      _
    $region75: #{tpu_custom_call.1} parent=1 // pred_check_branch
      %239 = sbr.rel (0) target = $region77
    $region76: #{tpu_custom_call.1} parent=1 // pred_region
      %s241 = ssub.s32 512, 512
      %242 = vsyncadd [#allocation24], %s241
      %s243 = sshll.u32 [#allocation23], 4
      %s244 = int_to_ptr.vmem [resolvable:$true] %s243
      %249 = dma.hbm_to_vmem [thread:$0]  %s37, 512, %s244, [#allocation24], 128, 128, 8
    $region77: #{tpu_custom_call.1} parent=1 // pred_fallthru
      _
    // Predicated region
    $region78: #{tpu_custom_call.1} parent=1 // pred_check
      _
    $region79: #{tpu_custom_call.1} parent=1 // pred_check_branch
      %251 = sbr.rel (0) target = $region81
    $region80: #{tpu_custom_call.1} parent=1 // pred_region
      _
    $region81: #{tpu_custom_call.1} parent=1 // pred_fallthru
      _
    // Predicated region
    $region82: #{tpu_custom_call.1} parent=1 // pred_check
      _
    $region83: #{tpu_custom_call.1} parent=1 // pred_check_branch
      %253 = sbr.rel (0) target = $region85
    $region84: #{tpu_custom_call.1} parent=1 // pred_region
      _
    $region85: #{tpu_custom_call.1} parent=1 // pred_fallthru
      _
    // Predicated region
    $region86: #{tpu_custom_call.1} parent=1 // pred_check
      _
    $region87: #{tpu_custom_call.1} parent=1 // pred_check_branch
      %255 = sbr.rel (0) target = $region89
    $region88: #{tpu_custom_call.1} parent=1 // pred_region
      %s257 = ssub.s32 16, 16
      %258 = vsyncadd [#allocation24], %s257
      %s260 = sshll.u32 [#allocation25], 4
      %s261 = int_to_ptr.vmem [resolvable:$true] %s260
      %263 = dma.hbm_to_vmem [thread:$0]  %s43, 16, %s261, [#allocation24]
    $region89: #{tpu_custom_call.1} parent=1 // pred_fallthru
      _
    // Predicated region
    $region90: #{tpu_custom_call.1} parent=1 // pred_check
      _
    $region91: #{tpu_custom_call.1} parent=1 // pred_check_branch
      %265 = sbr.rel (0) target = $region93
    $region92: #{tpu_custom_call.1} parent=1 // pred_region
      _
    $region93: #{tpu_custom_call.1} parent=1 // pred_fallthru
      _
    // Predicated region
    $region94: #{tpu_custom_call.1} parent=1 // pred_check
      _
    $region95: #{tpu_custom_call.1} parent=1 // pred_check_branch
      %267 = sbr.rel (0) target = $region97
    $region96: #{tpu_custom_call.1} parent=1 // pred_region
      _
    $region97: #{tpu_custom_call.1} parent=1 // pred_fallthru
      _
    // Predicated region
    $region98: #{tpu_custom_call.1} parent=1 // pred_check
      _
    $region99: #{tpu_custom_call.1} parent=1 // pred_check_branch
      %269 = sbr.rel (0) target = $region101
    $region100: #{tpu_custom_call.1} parent=1 // pred_region
      %s271 = ssub.s32 512, 512
      %272 = vsyncadd [#allocation27], %s271
      %s273 = sshll.u32 [#allocation26], 4
      %s274 = int_to_ptr.vmem [resolvable:$true] %s273
      %279 = dma.hbm_to_vmem [thread:$0]  %s49, 512, %s274, [#allocation27], 128, 128, 8
    $region101: #{tpu_custom_call.1} parent=1 // pred_fallthru
      _
    // Predicated region
    $region102: #{tpu_custom_call.1} parent=1 // pred_check
      _
    $region103: #{tpu_custom_call.1} parent=1 // pred_check_branch
      %281 = sbr.rel (0) target = $region105
    $region104: #{tpu_custom_call.1} parent=1 // pred_region
      _
    $region105: #{tpu_custom_call.1} parent=1 // pred_fallthru
      _
    // Predicated region
    $region106: #{tpu_custom_call.1} parent=1 // pred_check
      _
    $region107: #{tpu_custom_call.1} parent=1 // pred_check_branch
      %283 = sbr.rel (0) target = $region109
    $region108: #{tpu_custom_call.1} parent=1 // pred_region
      %s285 = ssub.s32 512, 512
      %286 = vsyncadd [#allocation27], %s285
      %s287 = sshll.u32 [#allocation28], 4
      %s288 = int_to_ptr.vmem [resolvable:$true] %s287
      %293 = dma.hbm_to_vmem [thread:$0]  %s53, 512, %s288, [#allocation27], 128, 128, 8
    $region109: #{tpu_custom_call.1} parent=1 // pred_fallthru
      _
    // Predicated region
    $region110: #{tpu_custom_call.1} parent=1 // pred_check
      _
    $region111: #{tpu_custom_call.1} parent=1 // pred_check_branch
      %295 = sbr.rel (0) target = $region113
    $region112: #{tpu_custom_call.1} parent=1 // pred_region
      _
    $region113: #{tpu_custom_call.1} parent=1 // pred_fallthru
      _
    // Predicated region
    $region114: #{tpu_custom_call.1} parent=1 // pred_check
      _
    $region115: #{tpu_custom_call.1} parent=1 // pred_check_branch
      %297 = sbr.rel (0) target = $region117
    $region116: #{tpu_custom_call.1} parent=1 // pred_region
      %298 = dma.done [#allocation3], 256
    $region117: #{tpu_custom_call.1} parent=1 // pred_fallthru
      _
    // Predicated region
    $region118: #{tpu_custom_call.1} parent=1 // pred_check
      _
    $region119: #{tpu_custom_call.1} parent=1 // pred_check_branch
      %300 = sbr.rel (0) target = $region121
    $region120: #{tpu_custom_call.1} parent=1 // pred_region
      %301 = dma.done [#allocation6], 64
    $region121: #{tpu_custom_call.1} parent=1 // pred_fallthru
      _
    // Predicated region
    $region122: #{tpu_custom_call.1} parent=1 // pred_check
      _
    $region123: #{tpu_custom_call.1} parent=1 // pred_check_branch
      %303 = sbr.rel (0) target = $region125
    $region124: #{tpu_custom_call.1} parent=1 // pred_region
      %304 = dma.done [#allocation6], 256
    $region125: #{tpu_custom_call.1} parent=1 // pred_fallthru
      _
    // Predicated region
    $region126: #{tpu_custom_call.1} parent=1 // pred_check
      _
    $region127: #{tpu_custom_call.1} parent=1 // pred_check_branch
      %306 = sbr.rel (0) target = $region129
    $region128: #{tpu_custom_call.1} parent=1 // pred_region
      %307 = dma.done [#allocation9], 256
    $region129: #{tpu_custom_call.1} parent=1 // pred_fallthru
      _
    // Predicated region
    $region130: #{tpu_custom_call.1} parent=1 // pred_check
      _
    $region131: #{tpu_custom_call.1} parent=1 // pred_check_branch
      %309 = sbr.rel (0) target = $region133
    $region132: #{tpu_custom_call.1} parent=1 // pred_region
      %310 = dma.done [#allocation9], 256
    $region133: #{tpu_custom_call.1} parent=1 // pred_fallthru
      _
    // Predicated region
    $region134: #{tpu_custom_call.1} parent=1 // pred_check
      _
    $region135: #{tpu_custom_call.1} parent=1 // pred_check_branch
      %312 = sbr.rel (0) target = $region137
    $region136: #{tpu_custom_call.1} parent=1 // pred_region
      %313 = dma.done [#allocation12], 512
    $region137: #{tpu_custom_call.1} parent=1 // pred_fallthru
      _
    // Predicated region
    $region138: #{tpu_custom_call.1} parent=1 // pred_check
      _
    $region139: #{tpu_custom_call.1} parent=1 // pred_check_branch
      %315 = sbr.rel (0) target = $region141
    $region140: #{tpu_custom_call.1} parent=1 // pred_region
      %316 = dma.done [#allocation12], 16
    $region141: #{tpu_custom_call.1} parent=1 // pred_fallthru
      _
    // Predicated region
    $region142: #{tpu_custom_call.1} parent=1 // pred_check
      _
    $region143: #{tpu_custom_call.1} parent=1 // pred_check_branch
      %318 = sbr.rel (0) target = $region145
    $region144: #{tpu_custom_call.1} parent=1 // pred_region
      %319 = dma.done [#allocation15], 16
    $region145: #{tpu_custom_call.1} parent=1 // pred_fallthru
      _
    // Predicated region
    $region146: #{tpu_custom_call.1} parent=1 // pred_check
      _
    $region147: #{tpu_custom_call.1} parent=1 // pred_check_branch
      %321 = sbr.rel (0) target = $region149
    $region148: #{tpu_custom_call.1} parent=1 // pred_region
      %322 = dma.done [#allocation15], 16
    $region149: #{tpu_custom_call.1} parent=1 // pred_fallthru
      _
    // Predicated region
    $region150: #{tpu_custom_call.1} parent=1 // pred_check
      _
    $region151: #{tpu_custom_call.1} parent=1 // pred_check_branch
      %324 = sbr.rel (0) target = $region153
    $region152: #{tpu_custom_call.1} parent=1 // pred_region
      %325 = dma.done [#allocation18], 512
    $region153: #{tpu_custom_call.1} parent=1 // pred_fallthru
      _
    // Predicated region
    $region154: #{tpu_custom_call.1} parent=1 // pred_check
      _
    $region155: #{tpu_custom_call.1} parent=1 // pred_check_branch
      %327 = sbr.rel (0) target = $region157
    $region156: #{tpu_custom_call.1} parent=1 // pred_region
      %328 = dma.done [#allocation18], 512
    $region157: #{tpu_custom_call.1} parent=1 // pred_fallthru
      _
    // Predicated region
    $region158: #{tpu_custom_call.1} parent=1 // pred_check
      _
    $region159: #{tpu_custom_call.1} parent=1 // pred_check_branch
      %330 = sbr.rel (0) target = $region161
    $region160: #{tpu_custom_call.1} parent=1 // pred_region
      %331 = dma.done [#allocation21], 512
    $region161: #{tpu_custom_call.1} parent=1 // pred_fallthru
      _
    // Predicated region
    $region162: #{tpu_custom_call.1} parent=1 // pred_check
      _
    $region163: #{tpu_custom_call.1} parent=1 // pred_check_branch
      %333 = sbr.rel (0) target = $region165
    $region164: #{tpu_custom_call.1} parent=1 // pred_region
      %334 = dma.done [#allocation21], 512
    $region165: #{tpu_custom_call.1} parent=1 // pred_fallthru
      _
    // Predicated region
    $region166: #{tpu_custom_call.1} parent=1 // pred_check
      _
    $region167: #{tpu_custom_call.1} parent=1 // pred_check_branch
      %336 = sbr.rel (0) target = $region169
    $region168: #{tpu_custom_call.1} parent=1 // pred_region
      %337 = dma.done [#allocation24], 512
    $region169: #{tpu_custom_call.1} parent=1 // pred_fallthru
      _
    // Predicated region
    $region170: #{tpu_custom_call.1} parent=1 // pred_check
      _
    $region171: #{tpu_custom_call.1} parent=1 // pred_check_branch
      %339 = sbr.rel (0) target = $region173
    $region172: #{tpu_custom_call.1} parent=1 // pred_region
      %340 = dma.done [#allocation24], 16
    $region173: #{tpu_custom_call.1} parent=1 // pred_fallthru
      _
    // Predicated region
    $region174: #{tpu_custom_call.1} parent=1 // pred_check
      _
    $region175: #{tpu_custom_call.1} parent=1 // pred_check_branch
      %342 = sbr.rel (0) target = $region177
    $region176: #{tpu_custom_call.1} parent=1 // pred_region
      %343 = dma.done [#allocation27], 512
    $region177: #{tpu_custom_call.1} parent=1 // pred_fallthru
      _
    // Predicated region
    $region178: #{tpu_custom_call.1} parent=1 // pred_check
      _
    $region179: #{tpu_custom_call.1} parent=1 // pred_check_branch
      %345 = sbr.rel (0) target = $region181
    $region180: #{tpu_custom_call.1} parent=1 // pred_region
      %346 = dma.done [#allocation27], 512
    $region181: #{tpu_custom_call.1} parent=1 // pred_fallthru
      _
    %v347 = vld [vmem:[#allocation2] sm:$0xff]
    %v348 = vld [vmem:[#allocation2 + $0x8] sm:$0xff]
    %v349 = vld [vmem:[#allocation7] sm:$0xff]
    %v350 = vld [vmem:[#allocation7 + $0x8] sm:$0xff]
    %v351 = vld [vmem:[#allocation8] sm:$0xff]
    %v352 = vld [vmem:[#allocation8 + $0x8] sm:$0xff]
    %v353 = vld [vmem:[#allocation10] sm:$0xff]
    %v354 = vld [vmem:[#allocation10 + $0x8] sm:$0xff]
    %v355 = vld [vmem:[%s13] sm:$0xff]
    %v356 = vld [vmem:[%s13 + $0x8] sm:$0xff]
    %v357 = vld [vmem:[%s13 + $0x10] sm:$0xff]
    %v358 = vld [vmem:[%s13 + $0x18] sm:$0xff]
    %v359 = vld [vmem:[%s15] sm:$0xff]
    %v360 = vld [vmem:[%s15 + $0x8] sm:$0xff]
    %v361 = vld [vmem:[%s15 + $0x10] sm:$0xff]
    %v362 = vld [vmem:[%s15 + $0x18] sm:$0xff]
    %v363 = vld [vmem:[#allocation11] sm:$0xff]
    %v364 = vld [vmem:[#allocation11 + $0x8] sm:$0xff]
    %v365 = vld [vmem:[#allocation11 + $0x10] sm:$0xff]
    %v366 = vld [vmem:[#allocation11 + $0x18] sm:$0xff]
    %v367 = vld [vmem:[%s19] sm:$0x1]
    %v368 = vld [vmem:[#allocation13] sm:$0x1]
    %v369 = vld [vmem:[#allocation14] sm:$0x1]
    %v370 = vld [vmem:[#allocation16] sm:$0x1]
    %v372 = vlaneseq
    %v373 = vshrl.u32 %v372, 7
    %v374 = vsub.s32 0, %v373
    %v375 = vrot.slane %v367, %v374
    %vm377 = vcmask 130048
    %v379 = vsel %vm377, %v347, 0
    %v382 = vsel %vm377, %v348, 0
    %384 = vmatprep.subr.mxu0 0.0
    %385 = vmatpush1.msra.mxu0 %v349
    %386 = vmatprep.subr.mxu0 0.0
    %387 = vmatpush1.msra.mxu0 %v350
    %388 = vmatprep.subr.mxu0 0.0
    %389 = vmatpush1.msra.mxu0 0.0
    %390 = vmatprep.subr.mxu0 0.0
    %391 = vmatpush1.msra.mxu0 0.0
    %392 = vmatprep.subr.mxu0 0.0
    %393 = vmatpush1.msra.mxu0 0.0
    %394 = vmatprep.subr.mxu0 0.0
    %395 = vmatpush1.msra.mxu0 0.0
    %396 = vmatprep.subr.mxu0 0.0
    %397 = vmatpush1.msra.mxu0 0.0
    %398 = vmatprep.subr.mxu0 0.0
    %399 = vmatpush1.msra.mxu0 0.0
    %400 = vmatprep.subr.mxu0 0.0
    %401 = vmatpush1.msra.mxu0 0.0
    %402 = vmatprep.subr.mxu0 0.0
    %403 = vmatpush1.msra.mxu0 0.0
    %404 = vmatprep.subr.mxu0 0.0
    %405 = vmatpush1.msra.mxu0 0.0
    %406 = vmatprep.subr.mxu0 0.0
    %407 = vmatpush1.msra.mxu0 0.0
    %408 = vmatprep.subr.mxu0 0.0
    %409 = vmatpush1.msra.mxu0 0.0
    %410 = vmatprep.subr.mxu0 0.0
    %411 = vmatpush1.msra.mxu0 0.0
    %412 = vmatprep.subr.mxu0 0.0
    %413 = vmatpush1.msra.mxu0 0.0
    %414 = vmatprep.subr.mxu0 0.0
    %415 = vmatpush1.msra.mxu0 0.0
    %416 = vmatprep.subr.mxu0 0.0
    %417 = vmatpush1.msra.mxu0 0.0
    %418 = vmatprep.subr.mxu0 0.0
    %419 = vmatpush1.msra.mxu0 0.0
    %420 = vmatprep.subr.mxu0 0.0
    %421 = vmatpush1.msra.mxu0 0.0
    %422 = vmatprep.subr.mxu0 0.0
    %423 = vmatpush1.msra.mxu0 0.0
    %424 = vmatprep.subr.mxu0 0.0
    %425 = vmatpush1.msra.mxu0 0.0
    %426 = vmatprep.subr.mxu0 0.0
    %427 = vmatpush1.msra.mxu0 0.0
    %428 = vmatprep.subr.mxu0 0.0
    %429 = vmatpush1.msra.mxu0 0.0
    %430 = vmatprep.subr.mxu0 0.0
    %431 = vmatpush1.msra.mxu0 0.0
    %432 = vmatprep.subr.mxu0 0.0
    %433 = vmatpush1.msra.mxu0 0.0
    %434 = vmatprep.subr.mxu0 0.0
    %435 = vmatpush1.msra.mxu0 0.0
    %436 = vmatprep.subr.mxu0 0.0
    %437 = vmatpush1.msra.mxu0 0.0
    %438 = vmatprep.subr.mxu0 0.0
    %439 = vmatpush1.msra.mxu0 0.0
    %440 = vmatprep.subr.mxu0 0.0
    %441 = vmatpush1.msra.mxu0 0.0
    %442 = vmatprep.subr.mxu0 0.0
    %443 = vmatpush1.msra.mxu0 0.0
    %444 = vmatprep.subr.mxu0 0.0
    %445 = vmatpush1.msra.mxu0 0.0
    %446 = vmatprep.subr.mxu0 0.0
    %447 = vmatpush1.msra.mxu0 0.0
    %448 = vmatprep.mubr.f32.mxu0 0.0
    %449 = vmatmul.mubr.f32.gmra.mrb[0].mxu0 %v379
    %v450 = vpop.f32.mrb[0].mxu0
    %v451 = vadd.f32 %v375, %v450
    %v452 = vpop.f32.mrb[0].mxu0
    %453 = vmatprep.mubr.f32.mxu0 0.0
    %454 = vmatmul.mubr.f32.gmra.mrb[0].mxu0 %v382
    %v455 = vpop.f32.mrb[0].mxu0
    %v456 = vadd.f32 %v375, %v455
    %v457 = vpop.f32.mrb[0].mxu0
    %458 = vdwg.mxu0
    %v460 = vlaneseq
    %v461 = vshrl.u32 %v460, 7
    %v462 = vsub.s32 0, %v461
    %v463 = vrot.slane %v368, %v462
    %465 = vmatprep.subr.mxu0 0.0
    %466 = vmatpush1.msra.mxu0 %v351
    %467 = vmatprep.subr.mxu0 0.0
    %468 = vmatpush1.msra.mxu0 %v352
    %469 = vmatprep.subr.mxu0 0.0
    %470 = vmatpush1.msra.mxu0 0.0
    %471 = vmatprep.subr.mxu0 0.0
    %472 = vmatpush1.msra.mxu0 0.0
    %473 = vmatprep.subr.mxu0 0.0
    %474 = vmatpush1.msra.mxu0 0.0
    %475 = vmatprep.subr.mxu0 0.0
    %476 = vmatpush1.msra.mxu0 0.0
    %477 = vmatprep.subr.mxu0 0.0
    %478 = vmatpush1.msra.mxu0 0.0
    %479 = vmatprep.subr.mxu0 0.0
    %480 = vmatpush1.msra.mxu0 0.0
    %481 = vmatprep.subr.mxu0 0.0
    %482 = vmatpush1.msra.mxu0 0.0
    %483 = vmatprep.subr.mxu0 0.0
    %484 = vmatpush1.msra.mxu0 0.0
    %485 = vmatprep.subr.mxu0 0.0
    %486 = vmatpush1.msra.mxu0 0.0
    %487 = vmatprep.subr.mxu0 0.0
    %488 = vmatpush1.msra.mxu0 0.0
    %489 = vmatprep.subr.mxu0 0.0
    %490 = vmatpush1.msra.mxu0 0.0
    %491 = vmatprep.subr.mxu0 0.0
    %492 = vmatpush1.msra.mxu0 0.0
    %493 = vmatprep.subr.mxu0 0.0
    %494 = vmatpush1.msra.mxu0 0.0
    %495 = vmatprep.subr.mxu0 0.0
    %496 = vmatpush1.msra.mxu0 0.0
    %497 = vmatprep.subr.mxu0 0.0
    %498 = vmatpush1.msra.mxu0 0.0
    %499 = vmatprep.subr.mxu0 0.0
    %500 = vmatpush1.msra.mxu0 0.0
    %501 = vmatprep.subr.mxu0 0.0
    %502 = vmatpush1.msra.mxu0 0.0
    %503 = vmatprep.subr.mxu0 0.0
    %504 = vmatpush1.msra.mxu0 0.0
    %505 = vmatprep.subr.mxu0 0.0
    %506 = vmatpush1.msra.mxu0 0.0
    %507 = vmatprep.subr.mxu0 0.0
    %508 = vmatpush1.msra.mxu0 0.0
    %509 = vmatprep.subr.mxu0 0.0
    %510 = vmatpush1.msra.mxu0 0.0
    %511 = vmatprep.subr.mxu0 0.0
    %512 = vmatpush1.msra.mxu0 0.0
    %513 = vmatprep.subr.mxu0 0.0
    %514 = vmatpush1.msra.mxu0 0.0
    %515 = vmatprep.subr.mxu0 0.0
    %516 = vmatpush1.msra.mxu0 0.0
    %517 = vmatprep.subr.mxu0 0.0
    %518 = vmatpush1.msra.mxu0 0.0
    %519 = vmatprep.subr.mxu0 0.0
    %520 = vmatpush1.msra.mxu0 0.0
    %521 = vmatprep.subr.mxu0 0.0
    %522 = vmatpush1.msra.mxu0 0.0
    %523 = vmatprep.subr.mxu0 0.0
    %524 = vmatpush1.msra.mxu0 0.0
    %525 = vmatprep.subr.mxu0 0.0
    %526 = vmatpush1.msra.mxu0 0.0
    %527 = vmatprep.subr.mxu0 0.0
    %528 = vmatpush1.msra.mxu0 0.0
    %529 = vmatprep.mubr.f32.mxu0 0.0
    %530 = vmatmul.mubr.f32.gmra.mrb[0].mxu0 %v379
    %v531 = vpop.f32.mrb[0].mxu0
    %v532 = vadd.f32 %v463, %v531
    %v533 = vpop.f32.mrb[0].mxu0
    %534 = vmatprep.mubr.f32.mxu0 0.0
    %535 = vmatmul.mubr.f32.gmra.mrb[0].mxu0 %v382
    %v536 = vpop.f32.mrb[0].mxu0
    %v537 = vadd.f32 %v463, %v536
    %v538 = vpop.f32.mrb[0].mxu0
    %539 = vdwg.mxu0
    %v541 = vlaneseq
    %v542 = vshrl.u32 %v541, 7
    %v543 = vsub.s32 0, %v542
    %v544 = vrot.slane %v369, %v543
    %546 = vmatprep.subr.mxu0 0.0
    %547 = vmatpush1.msra.mxu0 %v353
    %548 = vmatprep.subr.mxu0 0.0
    %549 = vmatpush1.msra.mxu0 %v354
    %550 = vmatprep.subr.mxu0 0.0
    %551 = vmatpush1.msra.mxu0 0.0
    %552 = vmatprep.subr.mxu0 0.0
    %553 = vmatpush1.msra.mxu0 0.0
    %554 = vmatprep.subr.mxu0 0.0
    %555 = vmatpush1.msra.mxu0 0.0
    %556 = vmatprep.subr.mxu0 0.0
    %557 = vmatpush1.msra.mxu0 0.0
    %558 = vmatprep.subr.mxu0 0.0
    %559 = vmatpush1.msra.mxu0 0.0
    %560 = vmatprep.subr.mxu0 0.0
    %561 = vmatpush1.msra.mxu0 0.0
    %562 = vmatprep.subr.mxu0 0.0
    %563 = vmatpush1.msra.mxu0 0.0
    %564 = vmatprep.subr.mxu0 0.0
    %565 = vmatpush1.msra.mxu0 0.0
    %566 = vmatprep.subr.mxu0 0.0
    %567 = vmatpush1.msra.mxu0 0.0
    %568 = vmatprep.subr.mxu0 0.0
    %569 = vmatpush1.msra.mxu0 0.0
    %570 = vmatprep.subr.mxu0 0.0
    %571 = vmatpush1.msra.mxu0 0.0
    %572 = vmatprep.subr.mxu0 0.0
    %573 = vmatpush1.msra.mxu0 0.0
    %574 = vmatprep.subr.mxu0 0.0
    %575 = vmatpush1.msra.mxu0 0.0
    %576 = vmatprep.subr.mxu0 0.0
    %577 = vmatpush1.msra.mxu0 0.0
    %578 = vmatprep.subr.mxu0 0.0
    %579 = vmatpush1.msra.mxu0 0.0
    %580 = vmatprep.subr.mxu0 0.0
    %581 = vmatpush1.msra.mxu0 0.0
    %582 = vmatprep.subr.mxu0 0.0
    %583 = vmatpush1.msra.mxu0 0.0
    %584 = vmatprep.subr.mxu0 0.0
    %585 = vmatpush1.msra.mxu0 0.0
    %586 = vmatprep.subr.mxu0 0.0
    %587 = vmatpush1.msra.mxu0 0.0
    %588 = vmatprep.subr.mxu0 0.0
    %589 = vmatpush1.msra.mxu0 0.0
    %590 = vmatprep.subr.mxu0 0.0
    %591 = vmatpush1.msra.mxu0 0.0
    %592 = vmatprep.subr.mxu0 0.0
    %593 = vmatpush1.msra.mxu0 0.0
    %594 = vmatprep.subr.mxu0 0.0
    %595 = vmatpush1.msra.mxu0 0.0
    %596 = vmatprep.subr.mxu0 0.0
    %597 = vmatpush1.msra.mxu0 0.0
    %598 = vmatprep.subr.mxu0 0.0
    %599 = vmatpush1.msra.mxu0 0.0
    %600 = vmatprep.subr.mxu0 0.0
    %601 = vmatpush1.msra.mxu0 0.0
    %602 = vmatprep.subr.mxu0 0.0
    %603 = vmatpush1.msra.mxu0 0.0
    %604 = vmatprep.subr.mxu0 0.0
    %605 = vmatpush1.msra.mxu0 0.0
    %606 = vmatprep.subr.mxu0 0.0
    %607 = vmatpush1.msra.mxu0 0.0
    %608 = vmatprep.subr.mxu0 0.0
    %609 = vmatpush1.msra.mxu0 0.0
    %610 = vmatprep.mubr.f32.mxu0 0.0
    %611 = vmatmul.mubr.f32.gmra.mrb[0].mxu0 %v379
    %v612 = vpop.f32.mrb[0].mxu0
    %v613 = vadd.f32 %v544, %v612
    %v614 = vpop.f32.mrb[0].mxu0
    %615 = vmatprep.mubr.f32.mxu0 0.0
    %616 = vmatmul.mubr.f32.gmra.mrb[0].mxu0 %v382
    %v617 = vpop.f32.mrb[0].mxu0
    %v618 = vadd.f32 %v544, %v617
    %v619 = vpop.f32.mrb[0].mxu0
    %620 = vdwg.mxu0
    %v621 = vld [vmem:[#allocation5] sm:$0x3]
    %vm622 = vcmask 261120
    %v624 = vsel %vm622, %v621, 0
    %626 = vmatprep.subr.mxu0 0.0
    %627 = vmatpush1.msra.mxu0 %v355
    %628 = vmatprep.subr.mxu0 0.0
    %629 = vmatpush1.msra.mxu0 %v356
    %630 = vmatprep.subr.mxu0 0.0
    %631 = vmatpush1.msra.mxu0 %v357
    %632 = vmatprep.subr.mxu0 0.0
    %633 = vmatpush1.msra.mxu0 %v358
    %634 = vmatprep.subr.mxu0 0.0
    %635 = vmatpush1.msra.mxu0 0.0
    %636 = vmatprep.subr.mxu0 0.0
    %637 = vmatpush1.msra.mxu0 0.0
    %638 = vmatprep.subr.mxu0 0.0
    %639 = vmatpush1.msra.mxu0 0.0
    %640 = vmatprep.subr.mxu0 0.0
    %641 = vmatpush1.msra.mxu0 0.0
    %642 = vmatprep.subr.mxu0 0.0
    %643 = vmatpush1.msra.mxu0 0.0
    %644 = vmatprep.subr.mxu0 0.0
    %645 = vmatpush1.msra.mxu0 0.0
    %646 = vmatprep.subr.mxu0 0.0
    %647 = vmatpush1.msra.mxu0 0.0
    %648 = vmatprep.subr.mxu0 0.0
    %649 = vmatpush1.msra.mxu0 0.0
    %650 = vmatprep.subr.mxu0 0.0
    %651 = vmatpush1.msra.mxu0 0.0
    %652 = vmatprep.subr.mxu0 0.0
    %653 = vmatpush1.msra.mxu0 0.0
    %654 = vmatprep.subr.mxu0 0.0
    %655 = vmatpush1.msra.mxu0 0.0
    %656 = vmatprep.subr.mxu0 0.0
    %657 = vmatpush1.msra.mxu0 0.0
    %658 = vmatprep.subr.mxu0 0.0
    %659 = vmatpush1.msra.mxu0 0.0
    %660 = vmatprep.subr.mxu0 0.0
    %661 = vmatpush1.msra.mxu0 0.0
    %662 = vmatprep.subr.mxu0 0.0
    %663 = vmatpush1.msra.mxu0 0.0
    %664 = vmatprep.subr.mxu0 0.0
    %665 = vmatpush1.msra.mxu0 0.0
    %666 = vmatprep.subr.mxu0 0.0
    %667 = vmatpush1.msra.mxu0 0.0
    %668 = vmatprep.subr.mxu0 0.0
    %669 = vmatpush1.msra.mxu0 0.0
    %670 = vmatprep.subr.mxu0 0.0
    %671 = vmatpush1.msra.mxu0 0.0
    %672 = vmatprep.subr.mxu0 0.0
    %673 = vmatpush1.msra.mxu0 0.0
    %674 = vmatprep.subr.mxu0 0.0
    %675 = vmatpush1.msra.mxu0 0.0
    %676 = vmatprep.subr.mxu0 0.0
    %677 = vmatpush1.msra.mxu0 0.0
    %678 = vmatprep.subr.mxu0 0.0
    %679 = vmatpush1.msra.mxu0 0.0
    %680 = vmatprep.subr.mxu0 0.0
    %681 = vmatpush1.msra.mxu0 0.0
    %682 = vmatprep.subr.mxu0 0.0
    %683 = vmatpush1.msra.mxu0 0.0
    %684 = vmatprep.subr.mxu0 0.0
    %685 = vmatpush1.msra.mxu0 0.0
    %686 = vmatprep.subr.mxu0 0.0
    %687 = vmatpush1.msra.mxu0 0.0
    %688 = vmatprep.subr.mxu0 0.0
    %689 = vmatpush1.msra.mxu0 0.0
    %690 = vmatprep.mubr.f32.mxu0 0.0
    %691 = vmatmul.mubr.f32.gmra.mrb[0].mxu0 %v624
    %v692 = vpop.f32.mrb[0].mxu0
    %v693 = vadd.f32 0.0, %v692
    %v694 = vpop.f32.mrb[0].mxu0
    %695 = vdwg.mxu0
    %696 = vmatprep.subr.mxu0 0.0
    %697 = vmatpush1.msra.mxu0 %v359
    %698 = vmatprep.subr.mxu0 0.0
    %699 = vmatpush1.msra.mxu0 %v360
    %700 = vmatprep.subr.mxu0 0.0
    %701 = vmatpush1.msra.mxu0 %v361
    %702 = vmatprep.subr.mxu0 0.0
    %703 = vmatpush1.msra.mxu0 %v362
    %704 = vmatprep.subr.mxu0 0.0
    %705 = vmatpush1.msra.mxu0 0.0
    %706 = vmatprep.subr.mxu0 0.0
    %707 = vmatpush1.msra.mxu0 0.0
    %708 = vmatprep.subr.mxu0 0.0
    %709 = vmatpush1.msra.mxu0 0.0
    %710 = vmatprep.subr.mxu0 0.0
    %711 = vmatpush1.msra.mxu0 0.0
    %712 = vmatprep.subr.mxu0 0.0
    %713 = vmatpush1.msra.mxu0 0.0
    %714 = vmatprep.subr.mxu0 0.0
    %715 = vmatpush1.msra.mxu0 0.0
    %716 = vmatprep.subr.mxu0 0.0
    %717 = vmatpush1.msra.mxu0 0.0
    %718 = vmatprep.subr.mxu0 0.0
    %719 = vmatpush1.msra.mxu0 0.0
    %720 = vmatprep.subr.mxu0 0.0
    %721 = vmatpush1.msra.mxu0 0.0
    %722 = vmatprep.subr.mxu0 0.0
    %723 = vmatpush1.msra.mxu0 0.0
    %724 = vmatprep.subr.mxu0 0.0
    %725 = vmatpush1.msra.mxu0 0.0
    %726 = vmatprep.subr.mxu0 0.0
    %727 = vmatpush1.msra.mxu0 0.0
    %728 = vmatprep.subr.mxu0 0.0
    %729 = vmatpush1.msra.mxu0 0.0
    %730 = vmatprep.subr.mxu0 0.0
    %731 = vmatpush1.msra.mxu0 0.0
    %732 = vmatprep.subr.mxu0 0.0
    %733 = vmatpush1.msra.mxu0 0.0
    %734 = vmatprep.subr.mxu0 0.0
    %735 = vmatpush1.msra.mxu0 0.0
    %736 = vmatprep.subr.mxu0 0.0
    %737 = vmatpush1.msra.mxu0 0.0
    %738 = vmatprep.subr.mxu0 0.0
    %739 = vmatpush1.msra.mxu0 0.0
    %740 = vmatprep.subr.mxu0 0.0
    %741 = vmatpush1.msra.mxu0 0.0
    %742 = vmatprep.subr.mxu0 0.0
    %743 = vmatpush1.msra.mxu0 0.0
    %744 = vmatprep.subr.mxu0 0.0
    %745 = vmatpush1.msra.mxu0 0.0
    %746 = vmatprep.subr.mxu0 0.0
    %747 = vmatpush1.msra.mxu0 0.0
    %748 = vmatprep.subr.mxu0 0.0
    %749 = vmatpush1.msra.mxu0 0.0
    %750 = vmatprep.subr.mxu0 0.0
    %751 = vmatpush1.msra.mxu0 0.0
    %752 = vmatprep.subr.mxu0 0.0
    %753 = vmatpush1.msra.mxu0 0.0
    %754 = vmatprep.subr.mxu0 0.0
    %755 = vmatpush1.msra.mxu0 0.0
    %756 = vmatprep.subr.mxu0 0.0
    %757 = vmatpush1.msra.mxu0 0.0
    %758 = vmatprep.subr.mxu0 0.0
    %759 = vmatpush1.msra.mxu0 0.0
    %760 = vmatprep.mubr.f32.mxu0 0.0
    %761 = vmatmul.mubr.f32.gmra.mrb[0].mxu0 %v624
    %v762 = vpop.f32.mrb[0].mxu0
    %v763 = vadd.f32 0.0, %v762
    %v764 = vpop.f32.mrb[0].mxu0
    %765 = vdwg.mxu0
    %v767 = vlaneseq
    %v768 = vshrl.u32 %v767, 7
    %v769 = vsub.s32 0, %v768
    %v770 = vrot.slane %v370, %v769
    %772 = vmatprep.subr.mxu0 0.0
    %773 = vmatpush1.msra.mxu0 %v363
    %774 = vmatprep.subr.mxu0 0.0
    %775 = vmatpush1.msra.mxu0 %v364
    %776 = vmatprep.subr.mxu0 0.0
    %777 = vmatpush1.msra.mxu0 %v365
    %778 = vmatprep.subr.mxu0 0.0
    %779 = vmatpush1.msra.mxu0 %v366
    %780 = vmatprep.subr.mxu0 0.0
    %781 = vmatpush1.msra.mxu0 0.0
    %782 = vmatprep.subr.mxu0 0.0
    %783 = vmatpush1.msra.mxu0 0.0
    %784 = vmatprep.subr.mxu0 0.0
    %785 = vmatpush1.msra.mxu0 0.0
    %786 = vmatprep.subr.mxu0 0.0
    %787 = vmatpush1.msra.mxu0 0.0
    %788 = vmatprep.subr.mxu0 0.0
    %789 = vmatpush1.msra.mxu0 0.0
    %790 = vmatprep.subr.mxu0 0.0
    %791 = vmatpush1.msra.mxu0 0.0
    %792 = vmatprep.subr.mxu0 0.0
    %793 = vmatpush1.msra.mxu0 0.0
    %794 = vmatprep.subr.mxu0 0.0
    %795 = vmatpush1.msra.mxu0 0.0
    %796 = vmatprep.subr.mxu0 0.0
    %797 = vmatpush1.msra.mxu0 0.0
    %798 = vmatprep.subr.mxu0 0.0
    %799 = vmatpush1.msra.mxu0 0.0
    %800 = vmatprep.subr.mxu0 0.0
    %801 = vmatpush1.msra.mxu0 0.0
    %802 = vmatprep.subr.mxu0 0.0
    %803 = vmatpush1.msra.mxu0 0.0
    %804 = vmatprep.subr.mxu0 0.0
    %805 = vmatpush1.msra.mxu0 0.0
    %806 = vmatprep.subr.mxu0 0.0
    %807 = vmatpush1.msra.mxu0 0.0
    %808 = vmatprep.subr.mxu0 0.0
    %809 = vmatpush1.msra.mxu0 0.0
    %810 = vmatprep.subr.mxu0 0.0
    %811 = vmatpush1.msra.mxu0 0.0
    %812 = vmatprep.subr.mxu0 0.0
    %813 = vmatpush1.msra.mxu0 0.0
    %814 = vmatprep.subr.mxu0 0.0
    %815 = vmatpush1.msra.mxu0 0.0
    %816 = vmatprep.subr.mxu0 0.0
    %817 = vmatpush1.msra.mxu0 0.0
    %818 = vmatprep.subr.mxu0 0.0
    %819 = vmatpush1.msra.mxu0 0.0
    %820 = vmatprep.subr.mxu0 0.0
    %821 = vmatpush1.msra.mxu0 0.0
    %822 = vmatprep.subr.mxu0 0.0
    %823 = vmatpush1.msra.mxu0 0.0
    %824 = vmatprep.subr.mxu0 0.0
    %825 = vmatpush1.msra.mxu0 0.0
    %826 = vmatprep.subr.mxu0 0.0
    %827 = vmatpush1.msra.mxu0 0.0
    %828 = vmatprep.subr.mxu0 0.0
    %829 = vmatpush1.msra.mxu0 0.0
    %830 = vmatprep.subr.mxu0 0.0
    %831 = vmatpush1.msra.mxu0 0.0
    %832 = vmatprep.subr.mxu0 0.0
    %833 = vmatpush1.msra.mxu0 0.0
    %834 = vmatprep.subr.mxu0 0.0
    %835 = vmatpush1.msra.mxu0 0.0
    %836 = vmatprep.mubr.f32.mxu0 0.0
    %837 = vmatmul.mubr.f32.gmra.mrb[0].mxu0 %v624
    %v838 = vpop.f32.mrb[0].mxu0
    %v839 = vadd.f32 %v770, %v838
    %v840 = vpop.f32.mrb[0].mxu0
    %841 = vdwg.mxu0
    %v842 = vadd.f32 %v451, %v693
    %v843 = vxor.u32 %v842, 2147483648
    %v844 = vmul.f32 %v843, 1.442695
    %v845 = vpow.pop %v844
    %v846 = vadd.f32 %v845, 1.0
    %v847 = vrcp.pop %v846
    %v848 = vmul.f32 1.0, %v847
    %v849 = vadd.f32 %v532, %v763
    %v850 = vxor.u32 %v849, 2147483648
    %v851 = vmul.f32 %v850, 1.442695
    %v852 = vpow.pop %v851
    %v853 = vadd.f32 %v852, 1.0
    %v854 = vrcp.pop %v853
    %v855 = vmul.f32 1.0, %v854
    %v856 = vmul.f32 %v848, %v839
    %v857 = vadd.f32 %v613, %v856
    %v858 = vtanh.pop %v857
    %v859 = vsub.f32 1.0, %v855
    %v860 = vmul.f32 %v859, %v858
    %v861 = vmul.f32 %v855, %v621
    %v862 = vadd.f32 %v860, %v861
    %v864 = vsel %vm622, %v862, 0
    %866 = vmatprep.subr.mxu0 0.0
    %867 = vmatpush1.msra.mxu0 %v355
    %868 = vmatprep.subr.mxu0 0.0
    %869 = vmatpush1.msra.mxu0 %v356
    %870 = vmatprep.subr.mxu0 0.0
    %871 = vmatpush1.msra.mxu0 %v357
    %872 = vmatprep.subr.mxu0 0.0
    %873 = vmatpush1.msra.mxu0 %v358
    %874 = vmatprep.subr.mxu0 0.0
    %875 = vmatpush1.msra.mxu0 0.0
    %876 = vmatprep.subr.mxu0 0.0
    %877 = vmatpush1.msra.mxu0 0.0
    %878 = vmatprep.subr.mxu0 0.0
    %879 = vmatpush1.msra.mxu0 0.0
    %880 = vmatprep.subr.mxu0 0.0
    %881 = vmatpush1.msra.mxu0 0.0
    %882 = vmatprep.subr.mxu0 0.0
    %883 = vmatpush1.msra.mxu0 0.0
    %884 = vmatprep.subr.mxu0 0.0
    %885 = vmatpush1.msra.mxu0 0.0
    %886 = vmatprep.subr.mxu0 0.0
    %887 = vmatpush1.msra.mxu0 0.0
    %888 = vmatprep.subr.mxu0 0.0
    %889 = vmatpush1.msra.mxu0 0.0
    %890 = vmatprep.subr.mxu0 0.0
    %891 = vmatpush1.msra.mxu0 0.0
    %892 = vmatprep.subr.mxu0 0.0
    %893 = vmatpush1.msra.mxu0 0.0
    %894 = vmatprep.subr.mxu0 0.0
    %895 = vmatpush1.msra.mxu0 0.0
    %896 = vmatprep.subr.mxu0 0.0
    %897 = vmatpush1.msra.mxu0 0.0
    %898 = vmatprep.subr.mxu0 0.0
    %899 = vmatpush1.msra.mxu0 0.0
    %900 = vmatprep.subr.mxu0 0.0
    %901 = vmatpush1.msra.mxu0 0.0
    %902 = vmatprep.subr.mxu0 0.0
    %903 = vmatpush1.msra.mxu0 0.0
    %904 = vmatprep.subr.mxu0 0.0
    %905 = vmatpush1.msra.mxu0 0.0
    %906 = vmatprep.subr.mxu0 0.0
    %907 = vmatpush1.msra.mxu0 0.0
    %908 = vmatprep.subr.mxu0 0.0
    %909 = vmatpush1.msra.mxu0 0.0
    %910 = vmatprep.subr.mxu0 0.0
    %911 = vmatpush1.msra.mxu0 0.0
    %912 = vmatprep.subr.mxu0 0.0
    %913 = vmatpush1.msra.mxu0 0.0
    %914 = vmatprep.subr.mxu0 0.0
    %915 = vmatpush1.msra.mxu0 0.0
    %916 = vmatprep.subr.mxu0 0.0
    %917 = vmatpush1.msra.mxu0 0.0
    %918 = vmatprep.subr.mxu0 0.0
    %919 = vmatpush1.msra.mxu0 0.0
    %920 = vmatprep.subr.mxu0 0.0
    %921 = vmatpush1.msra.mxu0 0.0
    %922 = vmatprep.subr.mxu0 0.0
    %923 = vmatpush1.msra.mxu0 0.0
    %924 = vmatprep.subr.mxu0 0.0
    %925 = vmatpush1.msra.mxu0 0.0
    %926 = vmatprep.subr.mxu0 0.0
    %927 = vmatpush1.msra.mxu0 0.0
    %928 = vmatprep.subr.mxu0 0.0
    %929 = vmatpush1.msra.mxu0 0.0
    %930 = vmatprep.mubr.f32.mxu0 0.0
    %931 = vmatmul.mubr.f32.gmra.mrb[0].mxu0 %v864
    %v932 = vpop.f32.mrb[0].mxu0
    %v933 = vadd.f32 0.0, %v932
    %v934 = vpop.f32.mrb[0].mxu0
    %935 = vdwg.mxu0
    %936 = vmatprep.subr.mxu0 0.0
    %937 = vmatpush1.msra.mxu0 %v359
    %938 = vmatprep.subr.mxu0 0.0
    %939 = vmatpush1.msra.mxu0 %v360
    %940 = vmatprep.subr.mxu0 0.0
    %941 = vmatpush1.msra.mxu0 %v361
    %942 = vmatprep.subr.mxu0 0.0
    %943 = vmatpush1.msra.mxu0 %v362
    %944 = vmatprep.subr.mxu0 0.0
    %945 = vmatpush1.msra.mxu0 0.0
    %946 = vmatprep.subr.mxu0 0.0
    %947 = vmatpush1.msra.mxu0 0.0
    %948 = vmatprep.subr.mxu0 0.0
    %949 = vmatpush1.msra.mxu0 0.0
    %950 = vmatprep.subr.mxu0 0.0
    %951 = vmatpush1.msra.mxu0 0.0
    %952 = vmatprep.subr.mxu0 0.0
    %953 = vmatpush1.msra.mxu0 0.0
    %954 = vmatprep.subr.mxu0 0.0
    %955 = vmatpush1.msra.mxu0 0.0
    %956 = vmatprep.subr.mxu0 0.0
    %957 = vmatpush1.msra.mxu0 0.0
    %958 = vmatprep.subr.mxu0 0.0
    %959 = vmatpush1.msra.mxu0 0.0
    %960 = vmatprep.subr.mxu0 0.0
    %961 = vmatpush1.msra.mxu0 0.0
    %962 = vmatprep.subr.mxu0 0.0
    %963 = vmatpush1.msra.mxu0 0.0
    %964 = vmatprep.subr.mxu0 0.0
    %965 = vmatpush1.msra.mxu0 0.0
    %966 = vmatprep.subr.mxu0 0.0
    %967 = vmatpush1.msra.mxu0 0.0
    %968 = vmatprep.subr.mxu0 0.0
    %969 = vmatpush1.msra.mxu0 0.0
    %970 = vmatprep.subr.mxu0 0.0
    %971 = vmatpush1.msra.mxu0 0.0
    %972 = vmatprep.subr.mxu0 0.0
    %973 = vmatpush1.msra.mxu0 0.0
    %974 = vmatprep.subr.mxu0 0.0
    %975 = vmatpush1.msra.mxu0 0.0
    %976 = vmatprep.subr.mxu0 0.0
    %977 = vmatpush1.msra.mxu0 0.0
    %978 = vmatprep.subr.mxu0 0.0
    %979 = vmatpush1.msra.mxu0 0.0
    %980 = vmatprep.subr.mxu0 0.0
    %981 = vmatpush1.msra.mxu0 0.0
    %982 = vmatprep.subr.mxu0 0.0
    %983 = vmatpush1.msra.mxu0 0.0
    %984 = vmatprep.subr.mxu0 0.0
    %985 = vmatpush1.msra.mxu0 0.0
    %986 = vmatprep.subr.mxu0 0.0
    %987 = vmatpush1.msra.mxu0 0.0
    %988 = vmatprep.subr.mxu0 0.0
    %989 = vmatpush1.msra.mxu0 0.0
    %990 = vmatprep.subr.mxu0 0.0
    %991 = vmatpush1.msra.mxu0 0.0
    %992 = vmatprep.subr.mxu0 0.0
    %993 = vmatpush1.msra.mxu0 0.0
    %994 = vmatprep.subr.mxu0 0.0
    %995 = vmatpush1.msra.mxu0 0.0
    %996 = vmatprep.subr.mxu0 0.0
    %997 = vmatpush1.msra.mxu0 0.0
    %998 = vmatprep.subr.mxu0 0.0
    %999 = vmatpush1.msra.mxu0 0.0
    %1000 = vmatprep.mubr.f32.mxu0 0.0
    %1001 = vmatmul.mubr.f32.gmra.mrb[0].mxu0 %v864
    %v1002 = vpop.f32.mrb[0].mxu0
    %v1003 = vadd.f32 0.0, %v1002
    %v1004 = vpop.f32.mrb[0].mxu0
    %1005 = vdwg.mxu0
    %1006 = vmatprep.subr.mxu0 0.0
    %1007 = vmatpush1.msra.mxu0 %v363
    %1008 = vmatprep.subr.mxu0 0.0
    %1009 = vmatpush1.msra.mxu0 %v364
    %1010 = vmatprep.subr.mxu0 0.0
    %1011 = vmatpush1.msra.mxu0 %v365
    %1012 = vmatprep.subr.mxu0 0.0
    %1013 = vmatpush1.msra.mxu0 %v366
    %1014 = vmatprep.subr.mxu0 0.0
    %1015 = vmatpush1.msra.mxu0 0.0
    %1016 = vmatprep.subr.mxu0 0.0
    %1017 = vmatpush1.msra.mxu0 0.0
    %1018 = vmatprep.subr.mxu0 0.0
    %1019 = vmatpush1.msra.mxu0 0.0
    %1020 = vmatprep.subr.mxu0 0.0
    %1021 = vmatpush1.msra.mxu0 0.0
    %1022 = vmatprep.subr.mxu0 0.0
    %1023 = vmatpush1.msra.mxu0 0.0
    %1024 = vmatprep.subr.mxu0 0.0
    %1025 = vmatpush1.msra.mxu0 0.0
    %1026 = vmatprep.subr.mxu0 0.0
    %1027 = vmatpush1.msra.mxu0 0.0
    %1028 = vmatprep.subr.mxu0 0.0
    %1029 = vmatpush1.msra.mxu0 0.0
    %1030 = vmatprep.subr.mxu0 0.0
    %1031 = vmatpush1.msra.mxu0 0.0
    %1032 = vmatprep.subr.mxu0 0.0
    %1033 = vmatpush1.msra.mxu0 0.0
    %1034 = vmatprep.subr.mxu0 0.0
    %1035 = vmatpush1.msra.mxu0 0.0
    %1036 = vmatprep.subr.mxu0 0.0
    %1037 = vmatpush1.msra.mxu0 0.0
    %1038 = vmatprep.subr.mxu0 0.0
    %1039 = vmatpush1.msra.mxu0 0.0
    %1040 = vmatprep.subr.mxu0 0.0
    %1041 = vmatpush1.msra.mxu0 0.0
    %1042 = vmatprep.subr.mxu0 0.0
    %1043 = vmatpush1.msra.mxu0 0.0
    %1044 = vmatprep.subr.mxu0 0.0
    %1045 = vmatpush1.msra.mxu0 0.0
    %1046 = vmatprep.subr.mxu0 0.0
    %1047 = vmatpush1.msra.mxu0 0.0
    %1048 = vmatprep.subr.mxu0 0.0
    %1049 = vmatpush1.msra.mxu0 0.0
    %1050 = vmatprep.subr.mxu0 0.0
    %1051 = vmatpush1.msra.mxu0 0.0
    %1052 = vmatprep.subr.mxu0 0.0
    %1053 = vmatpush1.msra.mxu0 0.0
    %1054 = vmatprep.subr.mxu0 0.0
    %1055 = vmatpush1.msra.mxu0 0.0
    %1056 = vmatprep.subr.mxu0 0.0
    %1057 = vmatpush1.msra.mxu0 0.0
    %1058 = vmatprep.subr.mxu0 0.0
    %1059 = vmatpush1.msra.mxu0 0.0
    %1060 = vmatprep.subr.mxu0 0.0
    %1061 = vmatpush1.msra.mxu0 0.0
    %1062 = vmatprep.subr.mxu0 0.0
    %1063 = vmatpush1.msra.mxu0 0.0
    %1064 = vmatprep.subr.mxu0 0.0
    %1065 = vmatpush1.msra.mxu0 0.0
    %1066 = vmatprep.subr.mxu0 0.0
    %1067 = vmatpush1.msra.mxu0 0.0
    %1068 = vmatprep.subr.mxu0 0.0
    %1069 = vmatpush1.msra.mxu0 0.0
    %1070 = vmatprep.mubr.f32.mxu0 0.0
    %1071 = vmatmul.mubr.f32.gmra.mrb[0].mxu0 %v864
    %v1072 = vpop.f32.mrb[0].mxu0
    %v1073 = vadd.f32 %v770, %v1072
    %v1074 = vpop.f32.mrb[0].mxu0
    %1075 = vdwg.mxu0
    %v1077 = vrot.slane %v933, 6
    %v1079 = vadd.f32 %v451, %v1077
    %v1080 = vxor.u32 %v1079, 2147483648
    %v1081 = vmul.f32 %v1080, 1.442695
    %v1082 = vpow.pop %v1081
    %v1083 = vadd.f32 %v1082, 1.0
    %v1084 = vrcp.pop %v1083
    %v1085 = vmul.f32 1.0, %v1084
    %v1087 = vrot.slane %v1003, 6
    %v1089 = vadd.f32 %v532, %v1087
    %v1090 = vxor.u32 %v1089, 2147483648
    %v1091 = vmul.f32 %v1090, 1.442695
    %v1092 = vpow.pop %v1091
    %v1093 = vadd.f32 %v1092, 1.0
    %v1094 = vrcp.pop %v1093
    %v1095 = vmul.f32 1.0, %v1094
    %v1097 = vrot.slane %v1073, 6
    %v1099 = vmul.f32 %v1085, %v1097
    %v1100 = vadd.f32 %v613, %v1099
    %v1101 = vtanh.pop %v1100
    %v1102 = vsub.f32 1.0, %v1095
    %v1103 = vmul.f32 %v1102, %v1101
    %v1104 = vrot.slane %v862, 6
    %v1106 = vmul.f32 %v1095, %v1104
    %v1107 = vadd.f32 %v1103, %v1106
    %v1109 = vrot.slane %v1107, 2
    %v1110 = vsel %vm622, %v1109, 0
    %1112 = vmatprep.subr.mxu0 0.0
    %1113 = vmatpush1.msra.mxu0 %v355
    %1114 = vmatprep.subr.mxu0 0.0
    %1115 = vmatpush1.msra.mxu0 %v356
    %1116 = vmatprep.subr.mxu0 0.0
    %1117 = vmatpush1.msra.mxu0 %v357
    %1118 = vmatprep.subr.mxu0 0.0
    %1119 = vmatpush1.msra.mxu0 %v358
    %1120 = vmatprep.subr.mxu0 0.0
    %1121 = vmatpush1.msra.mxu0 0.0
    %1122 = vmatprep.subr.mxu0 0.0
    %1123 = vmatpush1.msra.mxu0 0.0
    %1124 = vmatprep.subr.mxu0 0.0
    %1125 = vmatpush1.msra.mxu0 0.0
    %1126 = vmatprep.subr.mxu0 0.0
    %1127 = vmatpush1.msra.mxu0 0.0
    %1128 = vmatprep.subr.mxu0 0.0
    %1129 = vmatpush1.msra.mxu0 0.0
    %1130 = vmatprep.subr.mxu0 0.0
    %1131 = vmatpush1.msra.mxu0 0.0
    %1132 = vmatprep.subr.mxu0 0.0
    %1133 = vmatpush1.msra.mxu0 0.0
    %1134 = vmatprep.subr.mxu0 0.0
    %1135 = vmatpush1.msra.mxu0 0.0
    %1136 = vmatprep.subr.mxu0 0.0
    %1137 = vmatpush1.msra.mxu0 0.0
    %1138 = vmatprep.subr.mxu0 0.0
    %1139 = vmatpush1.msra.mxu0 0.0
    %1140 = vmatprep.subr.mxu0 0.0
    %1141 = vmatpush1.msra.mxu0 0.0
    %1142 = vmatprep.subr.mxu0 0.0
    %1143 = vmatpush1.msra.mxu0 0.0
    %1144 = vmatprep.subr.mxu0 0.0
    %1145 = vmatpush1.msra.mxu0 0.0
    %1146 = vmatprep.subr.mxu0 0.0
    %1147 = vmatpush1.msra.mxu0 0.0
    %1148 = vmatprep.subr.mxu0 0.0
    %1149 = vmatpush1.msra.mxu0 0.0
    %1150 = vmatprep.subr.mxu0 0.0
    %1151 = vmatpush1.msra.mxu0 0.0
    %1152 = vmatprep.subr.mxu0 0.0
    %1153 = vmatpush1.msra.mxu0 0.0
    %1154 = vmatprep.subr.mxu0 0.0
    %1155 = vmatpush1.msra.mxu0 0.0
    %1156 = vmatprep.subr.mxu0 0.0
    %1157 = vmatpush1.msra.mxu0 0.0
    %1158 = vmatprep.subr.mxu0 0.0
    %1159 = vmatpush1.msra.mxu0 0.0
    %1160 = vmatprep.subr.mxu0 0.0
    %1161 = vmatpush1.msra.mxu0 0.0
    %1162 = vmatprep.subr.mxu0 0.0
    %1163 = vmatpush1.msra.mxu0 0.0
    %1164 = vmatprep.subr.mxu0 0.0
    %1165 = vmatpush1.msra.mxu0 0.0
    %1166 = vmatprep.subr.mxu0 0.0
    %1167 = vmatpush1.msra.mxu0 0.0
    %1168 = vmatprep.subr.mxu0 0.0
    %1169 = vmatpush1.msra.mxu0 0.0
    %1170 = vmatprep.subr.mxu0 0.0
    %1171 = vmatpush1.msra.mxu0 0.0
    %1172 = vmatprep.subr.mxu0 0.0
    %1173 = vmatpush1.msra.mxu0 0.0
    %1174 = vmatprep.subr.mxu0 0.0
    %1175 = vmatpush1.msra.mxu0 0.0
    %1176 = vmatprep.mubr.f32.mxu0 0.0
    %1177 = vmatmul.mubr.f32.gmra.mrb[0].mxu0 %v1110
    %v1178 = vpop.f32.mrb[0].mxu0
    %v1179 = vadd.f32 0.0, %v1178
    %v1180 = vpop.f32.mrb[0].mxu0
    %1181 = vdwg.mxu0
    %1182 = vmatprep.subr.mxu0 0.0
    %1183 = vmatpush1.msra.mxu0 %v359
    %1184 = vmatprep.subr.mxu0 0.0
    %1185 = vmatpush1.msra.mxu0 %v360
    %1186 = vmatprep.subr.mxu0 0.0
    %1187 = vmatpush1.msra.mxu0 %v361
    %1188 = vmatprep.subr.mxu0 0.0
    %1189 = vmatpush1.msra.mxu0 %v362
    %1190 = vmatprep.subr.mxu0 0.0
    %1191 = vmatpush1.msra.mxu0 0.0
    %1192 = vmatprep.subr.mxu0 0.0
    %1193 = vmatpush1.msra.mxu0 0.0
    %1194 = vmatprep.subr.mxu0 0.0
    %1195 = vmatpush1.msra.mxu0 0.0
    %1196 = vmatprep.subr.mxu0 0.0
    %1197 = vmatpush1.msra.mxu0 0.0
    %1198 = vmatprep.subr.mxu0 0.0
    %1199 = vmatpush1.msra.mxu0 0.0
    %1200 = vmatprep.subr.mxu0 0.0
    %1201 = vmatpush1.msra.mxu0 0.0
    %1202 = vmatprep.subr.mxu0 0.0
    %1203 = vmatpush1.msra.mxu0 0.0
    %1204 = vmatprep.subr.mxu0 0.0
    %1205 = vmatpush1.msra.mxu0 0.0
    %1206 = vmatprep.subr.mxu0 0.0
    %1207 = vmatpush1.msra.mxu0 0.0
    %1208 = vmatprep.subr.mxu0 0.0
    %1209 = vmatpush1.msra.mxu0 0.0
    %1210 = vmatprep.subr.mxu0 0.0
    %1211 = vmatpush1.msra.mxu0 0.0
    %1212 = vmatprep.subr.mxu0 0.0
    %1213 = vmatpush1.msra.mxu0 0.0
    %1214 = vmatprep.subr.mxu0 0.0
    %1215 = vmatpush1.msra.mxu0 0.0
    %1216 = vmatprep.subr.mxu0 0.0
    %1217 = vmatpush1.msra.mxu0 0.0
    %1218 = vmatprep.subr.mxu0 0.0
    %1219 = vmatpush1.msra.mxu0 0.0
    %1220 = vmatprep.subr.mxu0 0.0
    %1221 = vmatpush1.msra.mxu0 0.0
    %1222 = vmatprep.subr.mxu0 0.0
    %1223 = vmatpush1.msra.mxu0 0.0
    %1224 = vmatprep.subr.mxu0 0.0
    %1225 = vmatpush1.msra.mxu0 0.0
    %1226 = vmatprep.subr.mxu0 0.0
    %1227 = vmatpush1.msra.mxu0 0.0
    %1228 = vmatprep.subr.mxu0 0.0
    %1229 = vmatpush1.msra.mxu0 0.0
    %1230 = vmatprep.subr.mxu0 0.0
    %1231 = vmatpush1.msra.mxu0 0.0
    %1232 = vmatprep.subr.mxu0 0.0
    %1233 = vmatpush1.msra.mxu0 0.0
    %1234 = vmatprep.subr.mxu0 0.0
    %1235 = vmatpush1.msra.mxu0 0.0
    %1236 = vmatprep.subr.mxu0 0.0
    %1237 = vmatpush1.msra.mxu0 0.0
    %1238 = vmatprep.subr.mxu0 0.0
    %1239 = vmatpush1.msra.mxu0 0.0
    %1240 = vmatprep.subr.mxu0 0.0
    %1241 = vmatpush1.msra.mxu0 0.0
    %1242 = vmatprep.subr.mxu0 0.0
    %1243 = vmatpush1.msra.mxu0 0.0
    %1244 = vmatprep.subr.mxu0 0.0
    %1245 = vmatpush1.msra.mxu0 0.0
    %1246 = vmatprep.mubr.f32.mxu0 0.0
    %1247 = vmatmul.mubr.f32.gmra.mrb[0].mxu0 %v1110
    %v1248 = vpop.f32.mrb[0].mxu0
    %v1249 = vadd.f32 0.0, %v1248
    %v1250 = vpop.f32.mrb[0].mxu0
    %1251 = vdwg.mxu0
    %1252 = vmatprep.subr.mxu0 0.0
    %1253 = vmatpush1.msra.mxu0 %v363
    %1254 = vmatprep.subr.mxu0 0.0
    %1255 = vmatpush1.msra.mxu0 %v364
    %1256 = vmatprep.subr.mxu0 0.0
    %1257 = vmatpush1.msra.mxu0 %v365
    %1258 = vmatprep.subr.mxu0 0.0
    %1259 = vmatpush1.msra.mxu0 %v366
    %1260 = vmatprep.subr.mxu0 0.0
    %1261 = vmatpush1.msra.mxu0 0.0
    %1262 = vmatprep.subr.mxu0 0.0
    %1263 = vmatpush1.msra.mxu0 0.0
    %1264 = vmatprep.subr.mxu0 0.0
    %1265 = vmatpush1.msra.mxu0 0.0
    %1266 = vmatprep.subr.mxu0 0.0
    %1267 = vmatpush1.msra.mxu0 0.0
    %1268 = vmatprep.subr.mxu0 0.0
    %1269 = vmatpush1.msra.mxu0 0.0
    %1270 = vmatprep.subr.mxu0 0.0
    %1271 = vmatpush1.msra.mxu0 0.0
    %1272 = vmatprep.subr.mxu0 0.0
    %1273 = vmatpush1.msra.mxu0 0.0
    %1274 = vmatprep.subr.mxu0 0.0
    %1275 = vmatpush1.msra.mxu0 0.0
    %1276 = vmatprep.subr.mxu0 0.0
    %1277 = vmatpush1.msra.mxu0 0.0
    %1278 = vmatprep.subr.mxu0 0.0
    %1279 = vmatpush1.msra.mxu0 0.0
    %1280 = vmatprep.subr.mxu0 0.0
    %1281 = vmatpush1.msra.mxu0 0.0
    %1282 = vmatprep.subr.mxu0 0.0
    %1283 = vmatpush1.msra.mxu0 0.0
    %1284 = vmatprep.subr.mxu0 0.0
    %1285 = vmatpush1.msra.mxu0 0.0
    %1286 = vmatprep.subr.mxu0 0.0
    %1287 = vmatpush1.msra.mxu0 0.0
    %1288 = vmatprep.subr.mxu0 0.0
    %1289 = vmatpush1.msra.mxu0 0.0
    %1290 = vmatprep.subr.mxu0 0.0
    %1291 = vmatpush1.msra.mxu0 0.0
    %1292 = vmatprep.subr.mxu0 0.0
    %1293 = vmatpush1.msra.mxu0 0.0
    %1294 = vmatprep.subr.mxu0 0.0
    %1295 = vmatpush1.msra.mxu0 0.0
    %1296 = vmatprep.subr.mxu0 0.0
    %1297 = vmatpush1.msra.mxu0 0.0
    %1298 = vmatprep.subr.mxu0 0.0
    %1299 = vmatpush1.msra.mxu0 0.0
    %1300 = vmatprep.subr.mxu0 0.0
    %1301 = vmatpush1.msra.mxu0 0.0
    %1302 = vmatprep.subr.mxu0 0.0
    %1303 = vmatpush1.msra.mxu0 0.0
    %1304 = vmatprep.subr.mxu0 0.0
    %1305 = vmatpush1.msra.mxu0 0.0
    %1306 = vmatprep.subr.mxu0 0.0
    %1307 = vmatpush1.msra.mxu0 0.0
    %1308 = vmatprep.subr.mxu0 0.0
    %1309 = vmatpush1.msra.mxu0 0.0
    %1310 = vmatprep.subr.mxu0 0.0
    %1311 = vmatpush1.msra.mxu0 0.0
    %1312 = vmatprep.subr.mxu0 0.0
    %1313 = vmatpush1.msra.mxu0 0.0
    %1314 = vmatprep.subr.mxu0 0.0
    %1315 = vmatpush1.msra.mxu0 0.0
    %1316 = vmatprep.mubr.f32.mxu0 0.0
    %1317 = vmatmul.mubr.f32.gmra.mrb[0].mxu0 %v1110
    %v1318 = vpop.f32.mrb[0].mxu0
    %v1319 = vadd.f32 %v770, %v1318
    %v1320 = vpop.f32.mrb[0].mxu0
    %1321 = vdwg.mxu0
    %v1323 = vrot.slane %v1179, 4
    %v1325 = vadd.f32 %v451, %v1323
    %v1326 = vxor.u32 %v1325, 2147483648
    %v1327 = vmul.f32 %v1326, 1.442695
    %v1328 = vpow.pop %v1327
    %v1329 = vadd.f32 %v1328, 1.0
    %v1330 = vrcp.pop %v1329
    %v1331 = vmul.f32 1.0, %v1330
    %v1333 = vrot.slane %v1249, 4
    %v1335 = vadd.f32 %v532, %v1333
    %v1336 = vxor.u32 %v1335, 2147483648
    %v1337 = vmul.f32 %v1336, 1.442695
    %v1338 = vpow.pop %v1337
    %v1339 = vadd.f32 %v1338, 1.0
    %v1340 = vrcp.pop %v1339
    %v1341 = vmul.f32 1.0, %v1340
    %v1343 = vrot.slane %v1319, 4
    %v1345 = vmul.f32 %v1331, %v1343
    %v1346 = vadd.f32 %v613, %v1345
    %v1347 = vtanh.pop %v1346
    %v1348 = vsub.f32 1.0, %v1341
    %v1349 = vmul.f32 %v1348, %v1347
    %v1350 = vrot.slane %v1107, 6
    %v1352 = vmul.f32 %v1341, %v1350
    %v1353 = vadd.f32 %v1349, %v1352
    %v1355 = vrot.slane %v1353, 4
    %v1356 = vsel %vm622, %v1355, 0
    %1358 = vmatprep.subr.mxu0 0.0
    %1359 = vmatpush1.msra.mxu0 %v355
    %1360 = vmatprep.subr.mxu0 0.0
    %1361 = vmatpush1.msra.mxu0 %v356
    %1362 = vmatprep.subr.mxu0 0.0
    %1363 = vmatpush1.msra.mxu0 %v357
    %1364 = vmatprep.subr.mxu0 0.0
    %1365 = vmatpush1.msra.mxu0 %v358
    %1366 = vmatprep.subr.mxu0 0.0
    %1367 = vmatpush1.msra.mxu0 0.0
    %1368 = vmatprep.subr.mxu0 0.0
    %1369 = vmatpush1.msra.mxu0 0.0
    %1370 = vmatprep.subr.mxu0 0.0
    %1371 = vmatpush1.msra.mxu0 0.0
    %1372 = vmatprep.subr.mxu0 0.0
    %1373 = vmatpush1.msra.mxu0 0.0
    %1374 = vmatprep.subr.mxu0 0.0
    %1375 = vmatpush1.msra.mxu0 0.0
    %1376 = vmatprep.subr.mxu0 0.0
    %1377 = vmatpush1.msra.mxu0 0.0
    %1378 = vmatprep.subr.mxu0 0.0
    %1379 = vmatpush1.msra.mxu0 0.0
    %1380 = vmatprep.subr.mxu0 0.0
    %1381 = vmatpush1.msra.mxu0 0.0
    %1382 = vmatprep.subr.mxu0 0.0
    %1383 = vmatpush1.msra.mxu0 0.0
    %1384 = vmatprep.subr.mxu0 0.0
    %1385 = vmatpush1.msra.mxu0 0.0
    %1386 = vmatprep.subr.mxu0 0.0
    %1387 = vmatpush1.msra.mxu0 0.0
    %1388 = vmatprep.subr.mxu0 0.0
    %1389 = vmatpush1.msra.mxu0 0.0
    %1390 = vmatprep.subr.mxu0 0.0
    %1391 = vmatpush1.msra.mxu0 0.0
    %1392 = vmatprep.subr.mxu0 0.0
    %1393 = vmatpush1.msra.mxu0 0.0
    %1394 = vmatprep.subr.mxu0 0.0
    %1395 = vmatpush1.msra.mxu0 0.0
    %1396 = vmatprep.subr.mxu0 0.0
    %1397 = vmatpush1.msra.mxu0 0.0
    %1398 = vmatprep.subr.mxu0 0.0
    %1399 = vmatpush1.msra.mxu0 0.0
    %1400 = vmatprep.subr.mxu0 0.0
    %1401 = vmatpush1.msra.mxu0 0.0
    %1402 = vmatprep.subr.mxu0 0.0
    %1403 = vmatpush1.msra.mxu0 0.0
    %1404 = vmatprep.subr.mxu0 0.0
    %1405 = vmatpush1.msra.mxu0 0.0
    %1406 = vmatprep.subr.mxu0 0.0
    %1407 = vmatpush1.msra.mxu0 0.0
    %1408 = vmatprep.subr.mxu0 0.0
    %1409 = vmatpush1.msra.mxu0 0.0
    %1410 = vmatprep.subr.mxu0 0.0
    %1411 = vmatpush1.msra.mxu0 0.0
    %1412 = vmatprep.subr.mxu0 0.0
    %1413 = vmatpush1.msra.mxu0 0.0
    %1414 = vmatprep.subr.mxu0 0.0
    %1415 = vmatpush1.msra.mxu0 0.0
    %1416 = vmatprep.subr.mxu0 0.0
    %1417 = vmatpush1.msra.mxu0 0.0
    %1418 = vmatprep.subr.mxu0 0.0
    %1419 = vmatpush1.msra.mxu0 0.0
    %1420 = vmatprep.subr.mxu0 0.0
    %1421 = vmatpush1.msra.mxu0 0.0
    %1422 = vmatprep.mubr.f32.mxu0 0.0
    %1423 = vmatmul.mubr.f32.gmra.mrb[0].mxu0 %v1356
    %v1424 = vpop.f32.mrb[0].mxu0
    %v1425 = vadd.f32 0.0, %v1424
    %v1426 = vpop.f32.mrb[0].mxu0
    %1427 = vdwg.mxu0
    %1428 = vmatprep.subr.mxu0 0.0
    %1429 = vmatpush1.msra.mxu0 %v359
    %1430 = vmatprep.subr.mxu0 0.0
    %1431 = vmatpush1.msra.mxu0 %v360
    %1432 = vmatprep.subr.mxu0 0.0
    %1433 = vmatpush1.msra.mxu0 %v361
    %1434 = vmatprep.subr.mxu0 0.0
    %1435 = vmatpush1.msra.mxu0 %v362
    %1436 = vmatprep.subr.mxu0 0.0
    %1437 = vmatpush1.msra.mxu0 0.0
    %1438 = vmatprep.subr.mxu0 0.0
    %1439 = vmatpush1.msra.mxu0 0.0
    %1440 = vmatprep.subr.mxu0 0.0
    %1441 = vmatpush1.msra.mxu0 0.0
    %1442 = vmatprep.subr.mxu0 0.0
    %1443 = vmatpush1.msra.mxu0 0.0
    %1444 = vmatprep.subr.mxu0 0.0
    %1445 = vmatpush1.msra.mxu0 0.0
    %1446 = vmatprep.subr.mxu0 0.0
    %1447 = vmatpush1.msra.mxu0 0.0
    %1448 = vmatprep.subr.mxu0 0.0
    %1449 = vmatpush1.msra.mxu0 0.0
    %1450 = vmatprep.subr.mxu0 0.0
    %1451 = vmatpush1.msra.mxu0 0.0
    %1452 = vmatprep.subr.mxu0 0.0
    %1453 = vmatpush1.msra.mxu0 0.0
    %1454 = vmatprep.subr.mxu0 0.0
    %1455 = vmatpush1.msra.mxu0 0.0
    %1456 = vmatprep.subr.mxu0 0.0
    %1457 = vmatpush1.msra.mxu0 0.0
    %1458 = vmatprep.subr.mxu0 0.0
    %1459 = vmatpush1.msra.mxu0 0.0
    %1460 = vmatprep.subr.mxu0 0.0
    %1461 = vmatpush1.msra.mxu0 0.0
    %1462 = vmatprep.subr.mxu0 0.0
    %1463 = vmatpush1.msra.mxu0 0.0
    %1464 = vmatprep.subr.mxu0 0.0
    %1465 = vmatpush1.msra.mxu0 0.0
    %1466 = vmatprep.subr.mxu0 0.0
    %1467 = vmatpush1.msra.mxu0 0.0
    %1468 = vmatprep.subr.mxu0 0.0
    %1469 = vmatpush1.msra.mxu0 0.0
    %1470 = vmatprep.subr.mxu0 0.0
    %1471 = vmatpush1.msra.mxu0 0.0
    %1472 = vmatprep.subr.mxu0 0.0
    %1473 = vmatpush1.msra.mxu0 0.0
    %1474 = vmatprep.subr.mxu0 0.0
    %1475 = vmatpush1.msra.mxu0 0.0
    %1476 = vmatprep.subr.mxu0 0.0
    %1477 = vmatpush1.msra.mxu0 0.0
    %1478 = vmatprep.subr.mxu0 0.0
    %1479 = vmatpush1.msra.mxu0 0.0
    %1480 = vmatprep.subr.mxu0 0.0
    %1481 = vmatpush1.msra.mxu0 0.0
    %1482 = vmatprep.subr.mxu0 0.0
    %1483 = vmatpush1.msra.mxu0 0.0
    %1484 = vmatprep.subr.mxu0 0.0
    %1485 = vmatpush1.msra.mxu0 0.0
    %1486 = vmatprep.subr.mxu0 0.0
    %1487 = vmatpush1.msra.mxu0 0.0
    %1488 = vmatprep.subr.mxu0 0.0
    %1489 = vmatpush1.msra.mxu0 0.0
    %1490 = vmatprep.subr.mxu0 0.0
    %1491 = vmatpush1.msra.mxu0 0.0
    %1492 = vmatprep.mubr.f32.mxu0 0.0
    %1493 = vmatmul.mubr.f32.gmra.mrb[0].mxu0 %v1356
    %v1494 = vpop.f32.mrb[0].mxu0
    %v1495 = vadd.f32 0.0, %v1494
    %v1496 = vpop.f32.mrb[0].mxu0
    %1497 = vdwg.mxu0
    %1498 = vmatprep.subr.mxu0 0.0
    %1499 = vmatpush1.msra.mxu0 %v363
    %1500 = vmatprep.subr.mxu0 0.0
    %1501 = vmatpush1.msra.mxu0 %v364
    %1502 = vmatprep.subr.mxu0 0.0
    %1503 = vmatpush1.msra.mxu0 %v365
    %1504 = vmatprep.subr.mxu0 0.0
    %1505 = vmatpush1.msra.mxu0 %v366
    %1506 = vmatprep.subr.mxu0 0.0
    %1507 = vmatpush1.msra.mxu0 0.0
    %1508 = vmatprep.subr.mxu0 0.0
    %1509 = vmatpush1.msra.mxu0 0.0
    %1510 = vmatprep.subr.mxu0 0.0
    %1511 = vmatpush1.msra.mxu0 0.0
    %1512 = vmatprep.subr.mxu0 0.0
    %1513 = vmatpush1.msra.mxu0 0.0
    %1514 = vmatprep.subr.mxu0 0.0
    %1515 = vmatpush1.msra.mxu0 0.0
    %1516 = vmatprep.subr.mxu0 0.0
    %1517 = vmatpush1.msra.mxu0 0.0
    %1518 = vmatprep.subr.mxu0 0.0
    %1519 = vmatpush1.msra.mxu0 0.0
    %1520 = vmatprep.subr.mxu0 0.0
    %1521 = vmatpush1.msra.mxu0 0.0
    %1522 = vmatprep.subr.mxu0 0.0
    %1523 = vmatpush1.msra.mxu0 0.0
    %1524 = vmatprep.subr.mxu0 0.0
    %1525 = vmatpush1.msra.mxu0 0.0
    %1526 = vmatprep.subr.mxu0 0.0
    %1527 = vmatpush1.msra.mxu0 0.0
    %1528 = vmatprep.subr.mxu0 0.0
    %1529 = vmatpush1.msra.mxu0 0.0
    %1530 = vmatprep.subr.mxu0 0.0
    %1531 = vmatpush1.msra.mxu0 0.0
    %1532 = vmatprep.subr.mxu0 0.0
    %1533 = vmatpush1.msra.mxu0 0.0
    %1534 = vmatprep.subr.mxu0 0.0
    %1535 = vmatpush1.msra.mxu0 0.0
    %1536 = vmatprep.subr.mxu0 0.0
    %1537 = vmatpush1.msra.mxu0 0.0
    %1538 = vmatprep.subr.mxu0 0.0
    %1539 = vmatpush1.msra.mxu0 0.0
    %1540 = vmatprep.subr.mxu0 0.0
    %1541 = vmatpush1.msra.mxu0 0.0
    %1542 = vmatprep.subr.mxu0 0.0
    %1543 = vmatpush1.msra.mxu0 0.0
    %1544 = vmatprep.subr.mxu0 0.0
    %1545 = vmatpush1.msra.mxu0 0.0
    %1546 = vmatprep.subr.mxu0 0.0
    %1547 = vmatpush1.msra.mxu0 0.0
    %1548 = vmatprep.subr.mxu0 0.0
    %1549 = vmatpush1.msra.mxu0 0.0
    %1550 = vmatprep.subr.mxu0 0.0
    %1551 = vmatpush1.msra.mxu0 0.0
    %1552 = vmatprep.subr.mxu0 0.0
    %1553 = vmatpush1.msra.mxu0 0.0
    %1554 = vmatprep.subr.mxu0 0.0
    %1555 = vmatpush1.msra.mxu0 0.0
    %1556 = vmatprep.subr.mxu0 0.0
    %1557 = vmatpush1.msra.mxu0 0.0
    %1558 = vmatprep.subr.mxu0 0.0
    %1559 = vmatpush1.msra.mxu0 0.0
    %1560 = vmatprep.subr.mxu0 0.0
    %1561 = vmatpush1.msra.mxu0 0.0
    %1562 = vmatprep.mubr.f32.mxu0 0.0
    %1563 = vmatmul.mubr.f32.gmra.mrb[0].mxu0 %v1356
    %v1564 = vpop.f32.mrb[0].mxu0
    %v1565 = vadd.f32 %v770, %v1564
    %v1566 = vpop.f32.mrb[0].mxu0
    %1567 = vdwg.mxu0
    %v1569 = vrot.slane %v1425, 2
    %v1571 = vadd.f32 %v451, %v1569
    %v1572 = vxor.u32 %v1571, 2147483648
    %v1573 = vmul.f32 %v1572, 1.442695
    %v1574 = vpow.pop %v1573
    %v1575 = vadd.f32 %v1574, 1.0
    %v1576 = vrcp.pop %v1575
    %v1577 = vmul.f32 1.0, %v1576
    %v1579 = vrot.slane %v1495, 2
    %v1581 = vadd.f32 %v532, %v1579
    %v1582 = vxor.u32 %v1581, 2147483648
    %v1583 = vmul.f32 %v1582, 1.442695
    %v1584 = vpow.pop %v1583
    %v1585 = vadd.f32 %v1584, 1.0
    %v1586 = vrcp.pop %v1585
    %v1587 = vmul.f32 1.0, %v1586
    %v1589 = vrot.slane %v1565, 2
    %v1591 = vmul.f32 %v1577, %v1589
    %v1592 = vadd.f32 %v613, %v1591
    %v1593 = vtanh.pop %v1592
    %v1594 = vsub.f32 1.0, %v1587
    %v1595 = vmul.f32 %v1594, %v1593
    %v1596 = vrot.slane %v1353, 6
    %v1598 = vmul.f32 %v1587, %v1596
    %v1599 = vadd.f32 %v1595, %v1598
    %v1601 = vrot.slane %v1599, 6
    %v1602 = vsel %vm622, %v1601, 0
    %1604 = vmatprep.subr.mxu0 0.0
    %1605 = vmatpush1.msra.mxu0 %v355
    %1606 = vmatprep.subr.mxu0 0.0
    %1607 = vmatpush1.msra.mxu0 %v356
    %1608 = vmatprep.subr.mxu0 0.0
    %1609 = vmatpush1.msra.mxu0 %v357
    %1610 = vmatprep.subr.mxu0 0.0
    %1611 = vmatpush1.msra.mxu0 %v358
    %1612 = vmatprep.subr.mxu0 0.0
    %1613 = vmatpush1.msra.mxu0 0.0
    %1614 = vmatprep.subr.mxu0 0.0
    %1615 = vmatpush1.msra.mxu0 0.0
    %1616 = vmatprep.subr.mxu0 0.0
    %1617 = vmatpush1.msra.mxu0 0.0
    %1618 = vmatprep.subr.mxu0 0.0
    %1619 = vmatpush1.msra.mxu0 0.0
    %1620 = vmatprep.subr.mxu0 0.0
    %1621 = vmatpush1.msra.mxu0 0.0
    %1622 = vmatprep.subr.mxu0 0.0
    %1623 = vmatpush1.msra.mxu0 0.0
    %1624 = vmatprep.subr.mxu0 0.0
    %1625 = vmatpush1.msra.mxu0 0.0
    %1626 = vmatprep.subr.mxu0 0.0
    %1627 = vmatpush1.msra.mxu0 0.0
    %1628 = vmatprep.subr.mxu0 0.0
    %1629 = vmatpush1.msra.mxu0 0.0
    %1630 = vmatprep.subr.mxu0 0.0
    %1631 = vmatpush1.msra.mxu0 0.0
    %1632 = vmatprep.subr.mxu0 0.0
    %1633 = vmatpush1.msra.mxu0 0.0
    %1634 = vmatprep.subr.mxu0 0.0
    %1635 = vmatpush1.msra.mxu0 0.0
    %1636 = vmatprep.subr.mxu0 0.0
    %1637 = vmatpush1.msra.mxu0 0.0
    %1638 = vmatprep.subr.mxu0 0.0
    %1639 = vmatpush1.msra.mxu0 0.0
    %1640 = vmatprep.subr.mxu0 0.0
    %1641 = vmatpush1.msra.mxu0 0.0
    %1642 = vmatprep.subr.mxu0 0.0
    %1643 = vmatpush1.msra.mxu0 0.0
    %1644 = vmatprep.subr.mxu0 0.0
    %1645 = vmatpush1.msra.mxu0 0.0
    %1646 = vmatprep.subr.mxu0 0.0
    %1647 = vmatpush1.msra.mxu0 0.0
    %1648 = vmatprep.subr.mxu0 0.0
    %1649 = vmatpush1.msra.mxu0 0.0
    %1650 = vmatprep.subr.mxu0 0.0
    %1651 = vmatpush1.msra.mxu0 0.0
    %1652 = vmatprep.subr.mxu0 0.0
    %1653 = vmatpush1.msra.mxu0 0.0
    %1654 = vmatprep.subr.mxu0 0.0
    %1655 = vmatpush1.msra.mxu0 0.0
    %1656 = vmatprep.subr.mxu0 0.0
    %1657 = vmatpush1.msra.mxu0 0.0
    %1658 = vmatprep.subr.mxu0 0.0
    %1659 = vmatpush1.msra.mxu0 0.0
    %1660 = vmatprep.subr.mxu0 0.0
    %1661 = vmatpush1.msra.mxu0 0.0
    %1662 = vmatprep.subr.mxu0 0.0
    %1663 = vmatpush1.msra.mxu0 0.0
    %1664 = vmatprep.subr.mxu0 0.0
    %1665 = vmatpush1.msra.mxu0 0.0
    %1666 = vmatprep.subr.mxu0 0.0
    %1667 = vmatpush1.msra.mxu0 0.0
    %1668 = vmatprep.mubr.f32.mxu0 0.0
    %1669 = vmatmul.mubr.f32.gmra.mrb[0].mxu0 %v1602
    %v1670 = vpop.f32.mrb[0].mxu0
    %v1671 = vadd.f32 0.0, %v1670
    %v1672 = vpop.f32.mrb[0].mxu0
    %1673 = vdwg.mxu0
    %1674 = vmatprep.subr.mxu0 0.0
    %1675 = vmatpush1.msra.mxu0 %v359
    %1676 = vmatprep.subr.mxu0 0.0
    %1677 = vmatpush1.msra.mxu0 %v360
    %1678 = vmatprep.subr.mxu0 0.0
    %1679 = vmatpush1.msra.mxu0 %v361
    %1680 = vmatprep.subr.mxu0 0.0
    %1681 = vmatpush1.msra.mxu0 %v362
    %1682 = vmatprep.subr.mxu0 0.0
    %1683 = vmatpush1.msra.mxu0 0.0
    %1684 = vmatprep.subr.mxu0 0.0
    %1685 = vmatpush1.msra.mxu0 0.0
    %1686 = vmatprep.subr.mxu0 0.0
    %1687 = vmatpush1.msra.mxu0 0.0
    %1688 = vmatprep.subr.mxu0 0.0
    %1689 = vmatpush1.msra.mxu0 0.0
    %1690 = vmatprep.subr.mxu0 0.0
    %1691 = vmatpush1.msra.mxu0 0.0
    %1692 = vmatprep.subr.mxu0 0.0
    %1693 = vmatpush1.msra.mxu0 0.0
    %1694 = vmatprep.subr.mxu0 0.0
    %1695 = vmatpush1.msra.mxu0 0.0
    %1696 = vmatprep.subr.mxu0 0.0
    %1697 = vmatpush1.msra.mxu0 0.0
    %1698 = vmatprep.subr.mxu0 0.0
    %1699 = vmatpush1.msra.mxu0 0.0
    %1700 = vmatprep.subr.mxu0 0.0
    %1701 = vmatpush1.msra.mxu0 0.0
    %1702 = vmatprep.subr.mxu0 0.0
    %1703 = vmatpush1.msra.mxu0 0.0
    %1704 = vmatprep.subr.mxu0 0.0
    %1705 = vmatpush1.msra.mxu0 0.0
    %1706 = vmatprep.subr.mxu0 0.0
    %1707 = vmatpush1.msra.mxu0 0.0
    %1708 = vmatprep.subr.mxu0 0.0
    %1709 = vmatpush1.msra.mxu0 0.0
    %1710 = vmatprep.subr.mxu0 0.0
    %1711 = vmatpush1.msra.mxu0 0.0
    %1712 = vmatprep.subr.mxu0 0.0
    %1713 = vmatpush1.msra.mxu0 0.0
    %1714 = vmatprep.subr.mxu0 0.0
    %1715 = vmatpush1.msra.mxu0 0.0
    %1716 = vmatprep.subr.mxu0 0.0
    %1717 = vmatpush1.msra.mxu0 0.0
    %1718 = vmatprep.subr.mxu0 0.0
    %1719 = vmatpush1.msra.mxu0 0.0
    %1720 = vmatprep.subr.mxu0 0.0
    %1721 = vmatpush1.msra.mxu0 0.0
    %1722 = vmatprep.subr.mxu0 0.0
    %1723 = vmatpush1.msra.mxu0 0.0
    %1724 = vmatprep.subr.mxu0 0.0
    %1725 = vmatpush1.msra.mxu0 0.0
    %1726 = vmatprep.subr.mxu0 0.0
    %1727 = vmatpush1.msra.mxu0 0.0
    %1728 = vmatprep.subr.mxu0 0.0
    %1729 = vmatpush1.msra.mxu0 0.0
    %1730 = vmatprep.subr.mxu0 0.0
    %1731 = vmatpush1.msra.mxu0 0.0
    %1732 = vmatprep.subr.mxu0 0.0
    %1733 = vmatpush1.msra.mxu0 0.0
    %1734 = vmatprep.subr.mxu0 0.0
    %1735 = vmatpush1.msra.mxu0 0.0
    %1736 = vmatprep.subr.mxu0 0.0
    %1737 = vmatpush1.msra.mxu0 0.0
    %1738 = vmatprep.mubr.f32.mxu0 0.0
    %1739 = vmatmul.mubr.f32.gmra.mrb[0].mxu0 %v1602
    %v1740 = vpop.f32.mrb[0].mxu0
    %v1741 = vadd.f32 0.0, %v1740
    %v1742 = vpop.f32.mrb[0].mxu0
    %1743 = vdwg.mxu0
    %1744 = vmatprep.subr.mxu0 0.0
    %1745 = vmatpush1.msra.mxu0 %v363
    %1746 = vmatprep.subr.mxu0 0.0
    %1747 = vmatpush1.msra.mxu0 %v364
    %1748 = vmatprep.subr.mxu0 0.0
    %1749 = vmatpush1.msra.mxu0 %v365
    %1750 = vmatprep.subr.mxu0 0.0
    %1751 = vmatpush1.msra.mxu0 %v366
    %1752 = vmatprep.subr.mxu0 0.0
    %1753 = vmatpush1.msra.mxu0 0.0
    %1754 = vmatprep.subr.mxu0 0.0
    %1755 = vmatpush1.msra.mxu0 0.0
    %1756 = vmatprep.subr.mxu0 0.0
    %1757 = vmatpush1.msra.mxu0 0.0
    %1758 = vmatprep.subr.mxu0 0.0
    %1759 = vmatpush1.msra.mxu0 0.0
    %1760 = vmatprep.subr.mxu0 0.0
    %1761 = vmatpush1.msra.mxu0 0.0
    %1762 = vmatprep.subr.mxu0 0.0
    %1763 = vmatpush1.msra.mxu0 0.0
    %1764 = vmatprep.subr.mxu0 0.0
    %1765 = vmatpush1.msra.mxu0 0.0
    %1766 = vmatprep.subr.mxu0 0.0
    %1767 = vmatpush1.msra.mxu0 0.0
    %1768 = vmatprep.subr.mxu0 0.0
    %1769 = vmatpush1.msra.mxu0 0.0
    %1770 = vmatprep.subr.mxu0 0.0
    %1771 = vmatpush1.msra.mxu0 0.0
    %1772 = vmatprep.subr.mxu0 0.0
    %1773 = vmatpush1.msra.mxu0 0.0
    %1774 = vmatprep.subr.mxu0 0.0
    %1775 = vmatpush1.msra.mxu0 0.0
    %1776 = vmatprep.subr.mxu0 0.0
    %1777 = vmatpush1.msra.mxu0 0.0
    %1778 = vmatprep.subr.mxu0 0.0
    %1779 = vmatpush1.msra.mxu0 0.0
    %1780 = vmatprep.subr.mxu0 0.0
    %1781 = vmatpush1.msra.mxu0 0.0
    %1782 = vmatprep.subr.mxu0 0.0
    %1783 = vmatpush1.msra.mxu0 0.0
    %1784 = vmatprep.subr.mxu0 0.0
    %1785 = vmatpush1.msra.mxu0 0.0
    %1786 = vmatprep.subr.mxu0 0.0
    %1787 = vmatpush1.msra.mxu0 0.0
    %1788 = vmatprep.subr.mxu0 0.0
    %1789 = vmatpush1.msra.mxu0 0.0
    %1790 = vmatprep.subr.mxu0 0.0
    %1791 = vmatpush1.msra.mxu0 0.0
    %1792 = vmatprep.subr.mxu0 0.0
    %1793 = vmatpush1.msra.mxu0 0.0
    %1794 = vmatprep.subr.mxu0 0.0
    %1795 = vmatpush1.msra.mxu0 0.0
    %1796 = vmatprep.subr.mxu0 0.0
    %1797 = vmatpush1.msra.mxu0 0.0
    %1798 = vmatprep.subr.mxu0 0.0
    %1799 = vmatpush1.msra.mxu0 0.0
    %1800 = vmatprep.subr.mxu0 0.0
    %1801 = vmatpush1.msra.mxu0 0.0
    %1802 = vmatprep.subr.mxu0 0.0
    %1803 = vmatpush1.msra.mxu0 0.0
    %1804 = vmatprep.subr.mxu0 0.0
    %1805 = vmatpush1.msra.mxu0 0.0
    %1806 = vmatprep.subr.mxu0 0.0
    %1807 = vmatpush1.msra.mxu0 0.0
    %1808 = vmatprep.mubr.f32.mxu0 0.0
    %1809 = vmatmul.mubr.f32.gmra.mrb[0].mxu0 %v1602
    %v1810 = vpop.f32.mrb[0].mxu0
    %v1811 = vadd.f32 %v770, %v1810
    %v1812 = vpop.f32.mrb[0].mxu0
    %1813 = vdwg.mxu0
    %v1814 = vadd.f32 %v456, %v1671
    %v1815 = vxor.u32 %v1814, 2147483648
    %v1816 = vmul.f32 %v1815, 1.442695
    %v1817 = vpow.pop %v1816
    %v1818 = vadd.f32 %v1817, 1.0
    %v1819 = vrcp.pop %v1818
    %v1820 = vmul.f32 1.0, %v1819
    %v1821 = vadd.f32 %v537, %v1741
    %v1822 = vxor.u32 %v1821, 2147483648
    %v1823 = vmul.f32 %v1822, 1.442695
    %v1824 = vpow.pop %v1823
    %v1825 = vadd.f32 %v1824, 1.0
    %v1826 = vrcp.pop %v1825
    %v1827 = vmul.f32 1.0, %v1826
    %v1828 = vmul.f32 %v1820, %v1811
    %v1829 = vadd.f32 %v618, %v1828
    %v1830 = vtanh.pop %v1829
    %v1831 = vsub.f32 1.0, %v1827
    %v1832 = vmul.f32 %v1831, %v1830
    %v1834 = vmul.f32 %v1827, %v1601
    %v1835 = vadd.f32 %v1832, %v1834
    %v1837 = vsel %vm622, %v1835, 0
    %1839 = vmatprep.subr.mxu0 0.0
    %1840 = vmatpush1.msra.mxu0 %v355
    %1841 = vmatprep.subr.mxu0 0.0
    %1842 = vmatpush1.msra.mxu0 %v356
    %1843 = vmatprep.subr.mxu0 0.0
    %1844 = vmatpush1.msra.mxu0 %v357
    %1845 = vmatprep.subr.mxu0 0.0
    %1846 = vmatpush1.msra.mxu0 %v358
    %1847 = vmatprep.subr.mxu0 0.0
    %1848 = vmatpush1.msra.mxu0 0.0
    %1849 = vmatprep.subr.mxu0 0.0
    %1850 = vmatpush1.msra.mxu0 0.0
    %1851 = vmatprep.subr.mxu0 0.0
    %1852 = vmatpush1.msra.mxu0 0.0
    %1853 = vmatprep.subr.mxu0 0.0
    %1854 = vmatpush1.msra.mxu0 0.0
    %1855 = vmatprep.subr.mxu0 0.0
    %1856 = vmatpush1.msra.mxu0 0.0
    %1857 = vmatprep.subr.mxu0 0.0
    %1858 = vmatpush1.msra.mxu0 0.0
    %1859 = vmatprep.subr.mxu0 0.0
    %1860 = vmatpush1.msra.mxu0 0.0
    %1861 = vmatprep.subr.mxu0 0.0
    %1862 = vmatpush1.msra.mxu0 0.0
    %1863 = vmatprep.subr.mxu0 0.0
    %1864 = vmatpush1.msra.mxu0 0.0
    %1865 = vmatprep.subr.mxu0 0.0
    %1866 = vmatpush1.msra.mxu0 0.0
    %1867 = vmatprep.subr.mxu0 0.0
    %1868 = vmatpush1.msra.mxu0 0.0
    %1869 = vmatprep.subr.mxu0 0.0
    %1870 = vmatpush1.msra.mxu0 0.0
    %1871 = vmatprep.subr.mxu0 0.0
    %1872 = vmatpush1.msra.mxu0 0.0
    %1873 = vmatprep.subr.mxu0 0.0
    %1874 = vmatpush1.msra.mxu0 0.0
    %1875 = vmatprep.subr.mxu0 0.0
    %1876 = vmatpush1.msra.mxu0 0.0
    %1877 = vmatprep.subr.mxu0 0.0
    %1878 = vmatpush1.msra.mxu0 0.0
    %1879 = vmatprep.subr.mxu0 0.0
    %1880 = vmatpush1.msra.mxu0 0.0
    %1881 = vmatprep.subr.mxu0 0.0
    %1882 = vmatpush1.msra.mxu0 0.0
    %1883 = vmatprep.subr.mxu0 0.0
    %1884 = vmatpush1.msra.mxu0 0.0
    %1885 = vmatprep.subr.mxu0 0.0
    %1886 = vmatpush1.msra.mxu0 0.0
    %1887 = vmatprep.subr.mxu0 0.0
    %1888 = vmatpush1.msra.mxu0 0.0
    %1889 = vmatprep.subr.mxu0 0.0
    %1890 = vmatpush1.msra.mxu0 0.0
    %1891 = vmatprep.subr.mxu0 0.0
    %1892 = vmatpush1.msra.mxu0 0.0
    %1893 = vmatprep.subr.mxu0 0.0
    %1894 = vmatpush1.msra.mxu0 0.0
    %1895 = vmatprep.subr.mxu0 0.0
    %1896 = vmatpush1.msra.mxu0 0.0
    %1897 = vmatprep.subr.mxu0 0.0
    %1898 = vmatpush1.msra.mxu0 0.0
    %1899 = vmatprep.subr.mxu0 0.0
    %1900 = vmatpush1.msra.mxu0 0.0
    %1901 = vmatprep.subr.mxu0 0.0
    %1902 = vmatpush1.msra.mxu0 0.0
    %1903 = vmatprep.mubr.f32.mxu0 0.0
    %1904 = vmatmul.mubr.f32.gmra.mrb[0].mxu0 %v1837
    %v1905 = vpop.f32.mrb[0].mxu0
    %v1906 = vadd.f32 0.0, %v1905
    %v1907 = vpop.f32.mrb[0].mxu0
    %1908 = vdwg.mxu0
    %1909 = vmatprep.subr.mxu0 0.0
    %1910 = vmatpush1.msra.mxu0 %v359
    %1911 = vmatprep.subr.mxu0 0.0
    %1912 = vmatpush1.msra.mxu0 %v360
    %1913 = vmatprep.subr.mxu0 0.0
    %1914 = vmatpush1.msra.mxu0 %v361
    %1915 = vmatprep.subr.mxu0 0.0
    %1916 = vmatpush1.msra.mxu0 %v362
    %1917 = vmatprep.subr.mxu0 0.0
    %1918 = vmatpush1.msra.mxu0 0.0
    %1919 = vmatprep.subr.mxu0 0.0
    %1920 = vmatpush1.msra.mxu0 0.0
    %1921 = vmatprep.subr.mxu0 0.0
    %1922 = vmatpush1.msra.mxu0 0.0
    %1923 = vmatprep.subr.mxu0 0.0
    %1924 = vmatpush1.msra.mxu0 0.0
    %1925 = vmatprep.subr.mxu0 0.0
    %1926 = vmatpush1.msra.mxu0 0.0
    %1927 = vmatprep.subr.mxu0 0.0
    %1928 = vmatpush1.msra.mxu0 0.0
    %1929 = vmatprep.subr.mxu0 0.0
    %1930 = vmatpush1.msra.mxu0 0.0
    %1931 = vmatprep.subr.mxu0 0.0
    %1932 = vmatpush1.msra.mxu0 0.0
    %1933 = vmatprep.subr.mxu0 0.0
    %1934 = vmatpush1.msra.mxu0 0.0
    %1935 = vmatprep.subr.mxu0 0.0
    %1936 = vmatpush1.msra.mxu0 0.0
    %1937 = vmatprep.subr.mxu0 0.0
    %1938 = vmatpush1.msra.mxu0 0.0
    %1939 = vmatprep.subr.mxu0 0.0
    %1940 = vmatpush1.msra.mxu0 0.0
    %1941 = vmatprep.subr.mxu0 0.0
    %1942 = vmatpush1.msra.mxu0 0.0
    %1943 = vmatprep.subr.mxu0 0.0
    %1944 = vmatpush1.msra.mxu0 0.0
    %1945 = vmatprep.subr.mxu0 0.0
    %1946 = vmatpush1.msra.mxu0 0.0
    %1947 = vmatprep.subr.mxu0 0.0
    %1948 = vmatpush1.msra.mxu0 0.0
    %1949 = vmatprep.subr.mxu0 0.0
    %1950 = vmatpush1.msra.mxu0 0.0
    %1951 = vmatprep.subr.mxu0 0.0
    %1952 = vmatpush1.msra.mxu0 0.0
    %1953 = vmatprep.subr.mxu0 0.0
    %1954 = vmatpush1.msra.mxu0 0.0
    %1955 = vmatprep.subr.mxu0 0.0
    %1956 = vmatpush1.msra.mxu0 0.0
    %1957 = vmatprep.subr.mxu0 0.0
    %1958 = vmatpush1.msra.mxu0 0.0
    %1959 = vmatprep.subr.mxu0 0.0
    %1960 = vmatpush1.msra.mxu0 0.0
    %1961 = vmatprep.subr.mxu0 0.0
    %1962 = vmatpush1.msra.mxu0 0.0
    %1963 = vmatprep.subr.mxu0 0.0
    %1964 = vmatpush1.msra.mxu0 0.0
    %1965 = vmatprep.subr.mxu0 0.0
    %1966 = vmatpush1.msra.mxu0 0.0
    %1967 = vmatprep.subr.mxu0 0.0
    %1968 = vmatpush1.msra.mxu0 0.0
    %1969 = vmatprep.subr.mxu0 0.0
    %1970 = vmatpush1.msra.mxu0 0.0
    %1971 = vmatprep.subr.mxu0 0.0
    %1972 = vmatpush1.msra.mxu0 0.0
    %1973 = vmatprep.mubr.f32.mxu0 0.0
    %1974 = vmatmul.mubr.f32.gmra.mrb[0].mxu0 %v1837
    %v1975 = vpop.f32.mrb[0].mxu0
    %v1976 = vadd.f32 0.0, %v1975
    %v1977 = vpop.f32.mrb[0].mxu0
    %1978 = vdwg.mxu0
    %1979 = vmatprep.subr.mxu0 0.0
    %1980 = vmatpush1.msra.mxu0 %v363
    %1981 = vmatprep.subr.mxu0 0.0
    %1982 = vmatpush1.msra.mxu0 %v364
    %1983 = vmatprep.subr.mxu0 0.0
    %1984 = vmatpush1.msra.mxu0 %v365
    %1985 = vmatprep.subr.mxu0 0.0
    %1986 = vmatpush1.msra.mxu0 %v366
    %1987 = vmatprep.subr.mxu0 0.0
    %1988 = vmatpush1.msra.mxu0 0.0
    %1989 = vmatprep.subr.mxu0 0.0
    %1990 = vmatpush1.msra.mxu0 0.0
    %1991 = vmatprep.subr.mxu0 0.0
    %1992 = vmatpush1.msra.mxu0 0.0
    %1993 = vmatprep.subr.mxu0 0.0
    %1994 = vmatpush1.msra.mxu0 0.0
    %1995 = vmatprep.subr.mxu0 0.0
    %1996 = vmatpush1.msra.mxu0 0.0
    %1997 = vmatprep.subr.mxu0 0.0
    %1998 = vmatpush1.msra.mxu0 0.0
    %1999 = vmatprep.subr.mxu0 0.0
    %2000 = vmatpush1.msra.mxu0 0.0
    %2001 = vmatprep.subr.mxu0 0.0
    %2002 = vmatpush1.msra.mxu0 0.0
    %2003 = vmatprep.subr.mxu0 0.0
    %2004 = vmatpush1.msra.mxu0 0.0
    %2005 = vmatprep.subr.mxu0 0.0
    %2006 = vmatpush1.msra.mxu0 0.0
    %2007 = vmatprep.subr.mxu0 0.0
    %2008 = vmatpush1.msra.mxu0 0.0
    %2009 = vmatprep.subr.mxu0 0.0
    %2010 = vmatpush1.msra.mxu0 0.0
    %2011 = vmatprep.subr.mxu0 0.0
    %2012 = vmatpush1.msra.mxu0 0.0
    %2013 = vmatprep.subr.mxu0 0.0
    %2014 = vmatpush1.msra.mxu0 0.0
    %2015 = vmatprep.subr.mxu0 0.0
    %2016 = vmatpush1.msra.mxu0 0.0
    %2017 = vmatprep.subr.mxu0 0.0
    %2018 = vmatpush1.msra.mxu0 0.0
    %2019 = vmatprep.subr.mxu0 0.0
    %2020 = vmatpush1.msra.mxu0 0.0
    %2021 = vmatprep.subr.mxu0 0.0
    %2022 = vmatpush1.msra.mxu0 0.0
    %2023 = vmatprep.subr.mxu0 0.0
    %2024 = vmatpush1.msra.mxu0 0.0
    %2025 = vmatprep.subr.mxu0 0.0
    %2026 = vmatpush1.msra.mxu0 0.0
    %2027 = vmatprep.subr.mxu0 0.0
    %2028 = vmatpush1.msra.mxu0 0.0
    %2029 = vmatprep.subr.mxu0 0.0
    %2030 = vmatpush1.msra.mxu0 0.0
    %2031 = vmatprep.subr.mxu0 0.0
    %2032 = vmatpush1.msra.mxu0 0.0
    %2033 = vmatprep.subr.mxu0 0.0
    %2034 = vmatpush1.msra.mxu0 0.0
    %2035 = vmatprep.subr.mxu0 0.0
    %2036 = vmatpush1.msra.mxu0 0.0
    %2037 = vmatprep.subr.mxu0 0.0
    %2038 = vmatpush1.msra.mxu0 0.0
    %2039 = vmatprep.subr.mxu0 0.0
    %2040 = vmatpush1.msra.mxu0 0.0
    %2041 = vmatprep.subr.mxu0 0.0
    %2042 = vmatpush1.msra.mxu0 0.0
    %2043 = vmatprep.mubr.f32.mxu0 0.0
    %2044 = vmatmul.mubr.f32.gmra.mrb[0].mxu0 %v1837
    %v2045 = vpop.f32.mrb[0].mxu0
    %v2046 = vadd.f32 %v770, %v2045
    %v2047 = vpop.f32.mrb[0].mxu0
    %2048 = vdwg.mxu0
    %v2050 = vrot.slane %v1906, 6
    %v2052 = vadd.f32 %v456, %v2050
    %v2053 = vxor.u32 %v2052, 2147483648
    %v2054 = vmul.f32 %v2053, 1.442695
    %v2055 = vpow.pop %v2054
    %v2056 = vadd.f32 %v2055, 1.0
    %v2057 = vrcp.pop %v2056
    %v2058 = vmul.f32 1.0, %v2057
    %v2060 = vrot.slane %v1976, 6
    %v2062 = vadd.f32 %v537, %v2060
    %v2063 = vxor.u32 %v2062, 2147483648
    %v2064 = vmul.f32 %v2063, 1.442695
    %v2065 = vpow.pop %v2064
    %v2066 = vadd.f32 %v2065, 1.0
    %v2067 = vrcp.pop %v2066
    %v2068 = vmul.f32 1.0, %v2067
    %v2070 = vrot.slane %v2046, 6
    %v2072 = vmul.f32 %v2058, %v2070
    %v2073 = vadd.f32 %v618, %v2072
    %v2074 = vtanh.pop %v2073
    %v2075 = vsub.f32 1.0, %v2068
    %v2076 = vmul.f32 %v2075, %v2074
    %v2077 = vrot.slane %v1835, 6
    %v2079 = vmul.f32 %v2068, %v2077
    %v2080 = vadd.f32 %v2076, %v2079
    %v2082 = vrot.slane %v2080, 2
    %v2083 = vsel %vm622, %v2082, 0
    %2085 = vmatprep.subr.mxu0 0.0
    %2086 = vmatpush1.msra.mxu0 %v355
    %2087 = vmatprep.subr.mxu0 0.0
    %2088 = vmatpush1.msra.mxu0 %v356
    %2089 = vmatprep.subr.mxu0 0.0
    %2090 = vmatpush1.msra.mxu0 %v357
    %2091 = vmatprep.subr.mxu0 0.0
    %2092 = vmatpush1.msra.mxu0 %v358
    %2093 = vmatprep.subr.mxu0 0.0
    %2094 = vmatpush1.msra.mxu0 0.0
    %2095 = vmatprep.subr.mxu0 0.0
    %2096 = vmatpush1.msra.mxu0 0.0
    %2097 = vmatprep.subr.mxu0 0.0
    %2098 = vmatpush1.msra.mxu0 0.0
    %2099 = vmatprep.subr.mxu0 0.0
    %2100 = vmatpush1.msra.mxu0 0.0
    %2101 = vmatprep.subr.mxu0 0.0
    %2102 = vmatpush1.msra.mxu0 0.0
    %2103 = vmatprep.subr.mxu0 0.0
    %2104 = vmatpush1.msra.mxu0 0.0
    %2105 = vmatprep.subr.mxu0 0.0
    %2106 = vmatpush1.msra.mxu0 0.0
    %2107 = vmatprep.subr.mxu0 0.0
    %2108 = vmatpush1.msra.mxu0 0.0
    %2109 = vmatprep.subr.mxu0 0.0
    %2110 = vmatpush1.msra.mxu0 0.0
    %2111 = vmatprep.subr.mxu0 0.0
    %2112 = vmatpush1.msra.mxu0 0.0
    %2113 = vmatprep.subr.mxu0 0.0
    %2114 = vmatpush1.msra.mxu0 0.0
    %2115 = vmatprep.subr.mxu0 0.0
    %2116 = vmatpush1.msra.mxu0 0.0
    %2117 = vmatprep.subr.mxu0 0.0
    %2118 = vmatpush1.msra.mxu0 0.0
    %2119 = vmatprep.subr.mxu0 0.0
    %2120 = vmatpush1.msra.mxu0 0.0
    %2121 = vmatprep.subr.mxu0 0.0
    %2122 = vmatpush1.msra.mxu0 0.0
    %2123 = vmatprep.subr.mxu0 0.0
    %2124 = vmatpush1.msra.mxu0 0.0
    %2125 = vmatprep.subr.mxu0 0.0
    %2126 = vmatpush1.msra.mxu0 0.0
    %2127 = vmatprep.subr.mxu0 0.0
    %2128 = vmatpush1.msra.mxu0 0.0
    %2129 = vmatprep.subr.mxu0 0.0
    %2130 = vmatpush1.msra.mxu0 0.0
    %2131 = vmatprep.subr.mxu0 0.0
    %2132 = vmatpush1.msra.mxu0 0.0
    %2133 = vmatprep.subr.mxu0 0.0
    %2134 = vmatpush1.msra.mxu0 0.0
    %2135 = vmatprep.subr.mxu0 0.0
    %2136 = vmatpush1.msra.mxu0 0.0
    %2137 = vmatprep.subr.mxu0 0.0
    %2138 = vmatpush1.msra.mxu0 0.0
    %2139 = vmatprep.subr.mxu0 0.0
    %2140 = vmatpush1.msra.mxu0 0.0
    %2141 = vmatprep.subr.mxu0 0.0
    %2142 = vmatpush1.msra.mxu0 0.0
    %2143 = vmatprep.subr.mxu0 0.0
    %2144 = vmatpush1.msra.mxu0 0.0
    %2145 = vmatprep.subr.mxu0 0.0
    %2146 = vmatpush1.msra.mxu0 0.0
    %2147 = vmatprep.subr.mxu0 0.0
    %2148 = vmatpush1.msra.mxu0 0.0
    %2149 = vmatprep.mubr.f32.mxu0 0.0
    %2150 = vmatmul.mubr.f32.gmra.mrb[0].mxu0 %v2083
    %v2151 = vpop.f32.mrb[0].mxu0
    %v2152 = vadd.f32 0.0, %v2151
    %v2153 = vpop.f32.mrb[0].mxu0
    %2154 = vdwg.mxu0
    %2155 = vmatprep.subr.mxu0 0.0
    %2156 = vmatpush1.msra.mxu0 %v359
    %2157 = vmatprep.subr.mxu0 0.0
    %2158 = vmatpush1.msra.mxu0 %v360
    %2159 = vmatprep.subr.mxu0 0.0
    %2160 = vmatpush1.msra.mxu0 %v361
    %2161 = vmatprep.subr.mxu0 0.0
    %2162 = vmatpush1.msra.mxu0 %v362
    %2163 = vmatprep.subr.mxu0 0.0
    %2164 = vmatpush1.msra.mxu0 0.0
    %2165 = vmatprep.subr.mxu0 0.0
    %2166 = vmatpush1.msra.mxu0 0.0
    %2167 = vmatprep.subr.mxu0 0.0
    %2168 = vmatpush1.msra.mxu0 0.0
    %2169 = vmatprep.subr.mxu0 0.0
    %2170 = vmatpush1.msra.mxu0 0.0
    %2171 = vmatprep.subr.mxu0 0.0
    %2172 = vmatpush1.msra.mxu0 0.0
    %2173 = vmatprep.subr.mxu0 0.0
    %2174 = vmatpush1.msra.mxu0 0.0
    %2175 = vmatprep.subr.mxu0 0.0
    %2176 = vmatpush1.msra.mxu0 0.0
    %2177 = vmatprep.subr.mxu0 0.0
    %2178 = vmatpush1.msra.mxu0 0.0
    %2179 = vmatprep.subr.mxu0 0.0
    %2180 = vmatpush1.msra.mxu0 0.0
    %2181 = vmatprep.subr.mxu0 0.0
    %2182 = vmatpush1.msra.mxu0 0.0
    %2183 = vmatprep.subr.mxu0 0.0
    %2184 = vmatpush1.msra.mxu0 0.0
    %2185 = vmatprep.subr.mxu0 0.0
    %2186 = vmatpush1.msra.mxu0 0.0
    %2187 = vmatprep.subr.mxu0 0.0
    %2188 = vmatpush1.msra.mxu0 0.0
    %2189 = vmatprep.subr.mxu0 0.0
    %2190 = vmatpush1.msra.mxu0 0.0
    %2191 = vmatprep.subr.mxu0 0.0
    %2192 = vmatpush1.msra.mxu0 0.0
    %2193 = vmatprep.subr.mxu0 0.0
    %2194 = vmatpush1.msra.mxu0 0.0
    %2195 = vmatprep.subr.mxu0 0.0
    %2196 = vmatpush1.msra.mxu0 0.0
    %2197 = vmatprep.subr.mxu0 0.0
    %2198 = vmatpush1.msra.mxu0 0.0
    %2199 = vmatprep.subr.mxu0 0.0
    %2200 = vmatpush1.msra.mxu0 0.0
    %2201 = vmatprep.subr.mxu0 0.0
    %2202 = vmatpush1.msra.mxu0 0.0
    %2203 = vmatprep.subr.mxu0 0.0
    %2204 = vmatpush1.msra.mxu0 0.0
    %2205 = vmatprep.subr.mxu0 0.0
    %2206 = vmatpush1.msra.mxu0 0.0
    %2207 = vmatprep.subr.mxu0 0.0
    %2208 = vmatpush1.msra.mxu0 0.0
    %2209 = vmatprep.subr.mxu0 0.0
    %2210 = vmatpush1.msra.mxu0 0.0
    %2211 = vmatprep.subr.mxu0 0.0
    %2212 = vmatpush1.msra.mxu0 0.0
    %2213 = vmatprep.subr.mxu0 0.0
    %2214 = vmatpush1.msra.mxu0 0.0
    %2215 = vmatprep.subr.mxu0 0.0
    %2216 = vmatpush1.msra.mxu0 0.0
    %2217 = vmatprep.subr.mxu0 0.0
    %2218 = vmatpush1.msra.mxu0 0.0
    %2219 = vmatprep.mubr.f32.mxu0 0.0
    %2220 = vmatmul.mubr.f32.gmra.mrb[0].mxu0 %v2083
    %v2221 = vpop.f32.mrb[0].mxu0
    %v2222 = vadd.f32 0.0, %v2221
    %v2223 = vpop.f32.mrb[0].mxu0
    %2224 = vdwg.mxu0
    %2225 = vmatprep.subr.mxu0 0.0
    %2226 = vmatpush1.msra.mxu0 %v363
    %2227 = vmatprep.subr.mxu0 0.0
    %2228 = vmatpush1.msra.mxu0 %v364
    %2229 = vmatprep.subr.mxu0 0.0
    %2230 = vmatpush1.msra.mxu0 %v365
    %2231 = vmatprep.subr.mxu0 0.0
    %2232 = vmatpush1.msra.mxu0 %v366
    %2233 = vmatprep.subr.mxu0 0.0
    %2234 = vmatpush1.msra.mxu0 0.0
    %2235 = vmatprep.subr.mxu0 0.0
    %2236 = vmatpush1.msra.mxu0 0.0
    %2237 = vmatprep.subr.mxu0 0.0
    %2238 = vmatpush1.msra.mxu0 0.0
    %2239 = vmatprep.subr.mxu0 0.0
    %2240 = vmatpush1.msra.mxu0 0.0
    %2241 = vmatprep.subr.mxu0 0.0
    %2242 = vmatpush1.msra.mxu0 0.0
    %2243 = vmatprep.subr.mxu0 0.0
    %2244 = vmatpush1.msra.mxu0 0.0
    %2245 = vmatprep.subr.mxu0 0.0
    %2246 = vmatpush1.msra.mxu0 0.0
    %2247 = vmatprep.subr.mxu0 0.0
    %2248 = vmatpush1.msra.mxu0 0.0
    %2249 = vmatprep.subr.mxu0 0.0
    %2250 = vmatpush1.msra.mxu0 0.0
    %2251 = vmatprep.subr.mxu0 0.0
    %2252 = vmatpush1.msra.mxu0 0.0
    %2253 = vmatprep.subr.mxu0 0.0
    %2254 = vmatpush1.msra.mxu0 0.0
    %2255 = vmatprep.subr.mxu0 0.0
    %2256 = vmatpush1.msra.mxu0 0.0
    %2257 = vmatprep.subr.mxu0 0.0
    %2258 = vmatpush1.msra.mxu0 0.0
    %2259 = vmatprep.subr.mxu0 0.0
    %2260 = vmatpush1.msra.mxu0 0.0
    %2261 = vmatprep.subr.mxu0 0.0
    %2262 = vmatpush1.msra.mxu0 0.0
    %2263 = vmatprep.subr.mxu0 0.0
    %2264 = vmatpush1.msra.mxu0 0.0
    %2265 = vmatprep.subr.mxu0 0.0
    %2266 = vmatpush1.msra.mxu0 0.0
    %2267 = vmatprep.subr.mxu0 0.0
    %2268 = vmatpush1.msra.mxu0 0.0
    %2269 = vmatprep.subr.mxu0 0.0
    %2270 = vmatpush1.msra.mxu0 0.0
    %2271 = vmatprep.subr.mxu0 0.0
    %2272 = vmatpush1.msra.mxu0 0.0
    %2273 = vmatprep.subr.mxu0 0.0
    %2274 = vmatpush1.msra.mxu0 0.0
    %2275 = vmatprep.subr.mxu0 0.0
    %2276 = vmatpush1.msra.mxu0 0.0
    %2277 = vmatprep.subr.mxu0 0.0
    %2278 = vmatpush1.msra.mxu0 0.0
    %2279 = vmatprep.subr.mxu0 0.0
    %2280 = vmatpush1.msra.mxu0 0.0
    %2281 = vmatprep.subr.mxu0 0.0
    %2282 = vmatpush1.msra.mxu0 0.0
    %2283 = vmatprep.subr.mxu0 0.0
    %2284 = vmatpush1.msra.mxu0 0.0
    %2285 = vmatprep.subr.mxu0 0.0
    %2286 = vmatpush1.msra.mxu0 0.0
    %2287 = vmatprep.subr.mxu0 0.0
    %2288 = vmatpush1.msra.mxu0 0.0
    %2289 = vmatprep.mubr.f32.mxu0 0.0
    %2290 = vmatmul.mubr.f32.gmra.mrb[0].mxu0 %v2083
    %v2291 = vpop.f32.mrb[0].mxu0
    %v2292 = vadd.f32 %v770, %v2291
    %v2293 = vpop.f32.mrb[0].mxu0
    %2294 = vdwg.mxu0
    %v2296 = vrot.slane %v2152, 4
    %v2298 = vadd.f32 %v456, %v2296
    %v2299 = vxor.u32 %v2298, 2147483648
    %v2300 = vmul.f32 %v2299, 1.442695
    %v2301 = vpow.pop %v2300
    %v2302 = vadd.f32 %v2301, 1.0
    %v2303 = vrcp.pop %v2302
    %v2304 = vmul.f32 1.0, %v2303
    %v2306 = vrot.slane %v2222, 4
    %v2308 = vadd.f32 %v537, %v2306
    %v2309 = vxor.u32 %v2308, 2147483648
    %v2310 = vmul.f32 %v2309, 1.442695
    %v2311 = vpow.pop %v2310
    %v2312 = vadd.f32 %v2311, 1.0
    %v2313 = vrcp.pop %v2312
    %v2314 = vmul.f32 1.0, %v2313
    %v2316 = vrot.slane %v2292, 4
    %v2318 = vmul.f32 %v2304, %v2316
    %v2319 = vadd.f32 %v618, %v2318
    %v2320 = vtanh.pop %v2319
    %v2321 = vsub.f32 1.0, %v2314
    %v2322 = vmul.f32 %v2321, %v2320
    %v2323 = vrot.slane %v2080, 6
    %v2325 = vmul.f32 %v2314, %v2323
    %v2326 = vadd.f32 %v2322, %v2325
    %v2328 = vrot.slane %v2326, 4
    %v2329 = vsel %vm622, %v2328, 0
    %2331 = vmatprep.subr.mxu0 0.0
    %2332 = vmatpush1.msra.mxu0 %v355
    %2333 = vmatprep.subr.mxu0 0.0
    %2334 = vmatpush1.msra.mxu0 %v356
    %2335 = vmatprep.subr.mxu0 0.0
    %2336 = vmatpush1.msra.mxu0 %v357
    %2337 = vmatprep.subr.mxu0 0.0
    %2338 = vmatpush1.msra.mxu0 %v358
    %2339 = vmatprep.subr.mxu0 0.0
    %2340 = vmatpush1.msra.mxu0 0.0
    %2341 = vmatprep.subr.mxu0 0.0
    %2342 = vmatpush1.msra.mxu0 0.0
    %2343 = vmatprep.subr.mxu0 0.0
    %2344 = vmatpush1.msra.mxu0 0.0
    %2345 = vmatprep.subr.mxu0 0.0
    %2346 = vmatpush1.msra.mxu0 0.0
    %2347 = vmatprep.subr.mxu0 0.0
    %2348 = vmatpush1.msra.mxu0 0.0
    %2349 = vmatprep.subr.mxu0 0.0
    %2350 = vmatpush1.msra.mxu0 0.0
    %2351 = vmatprep.subr.mxu0 0.0
    %2352 = vmatpush1.msra.mxu0 0.0
    %2353 = vmatprep.subr.mxu0 0.0
    %2354 = vmatpush1.msra.mxu0 0.0
    %2355 = vmatprep.subr.mxu0 0.0
    %2356 = vmatpush1.msra.mxu0 0.0
    %2357 = vmatprep.subr.mxu0 0.0
    %2358 = vmatpush1.msra.mxu0 0.0
    %2359 = vmatprep.subr.mxu0 0.0
    %2360 = vmatpush1.msra.mxu0 0.0
    %2361 = vmatprep.subr.mxu0 0.0
    %2362 = vmatpush1.msra.mxu0 0.0
    %2363 = vmatprep.subr.mxu0 0.0
    %2364 = vmatpush1.msra.mxu0 0.0
    %2365 = vmatprep.subr.mxu0 0.0
    %2366 = vmatpush1.msra.mxu0 0.0
    %2367 = vmatprep.subr.mxu0 0.0
    %2368 = vmatpush1.msra.mxu0 0.0
    %2369 = vmatprep.subr.mxu0 0.0
    %2370 = vmatpush1.msra.mxu0 0.0
    %2371 = vmatprep.subr.mxu0 0.0
    %2372 = vmatpush1.msra.mxu0 0.0
    %2373 = vmatprep.subr.mxu0 0.0
    %2374 = vmatpush1.msra.mxu0 0.0
    %2375 = vmatprep.subr.mxu0 0.0
    %2376 = vmatpush1.msra.mxu0 0.0
    %2377 = vmatprep.subr.mxu0 0.0
    %2378 = vmatpush1.msra.mxu0 0.0
    %2379 = vmatprep.subr.mxu0 0.0
    %2380 = vmatpush1.msra.mxu0 0.0
    %2381 = vmatprep.subr.mxu0 0.0
    %2382 = vmatpush1.msra.mxu0 0.0
    %2383 = vmatprep.subr.mxu0 0.0
    %2384 = vmatpush1.msra.mxu0 0.0
    %2385 = vmatprep.subr.mxu0 0.0
    %2386 = vmatpush1.msra.mxu0 0.0
    %2387 = vmatprep.subr.mxu0 0.0
    %2388 = vmatpush1.msra.mxu0 0.0
    %2389 = vmatprep.subr.mxu0 0.0
    %2390 = vmatpush1.msra.mxu0 0.0
    %2391 = vmatprep.subr.mxu0 0.0
    %2392 = vmatpush1.msra.mxu0 0.0
    %2393 = vmatprep.subr.mxu0 0.0
    %2394 = vmatpush1.msra.mxu0 0.0
    %2395 = vmatprep.mubr.f32.mxu0 0.0
    %2396 = vmatmul.mubr.f32.gmra.mrb[0].mxu0 %v2329
    %v2397 = vpop.f32.mrb[0].mxu0
    %v2398 = vadd.f32 0.0, %v2397
    %v2399 = vpop.f32.mrb[0].mxu0
    %2400 = vdwg.mxu0
    %2401 = vmatprep.subr.mxu0 0.0
    %2402 = vmatpush1.msra.mxu0 %v359
    %2403 = vmatprep.subr.mxu0 0.0
    %2404 = vmatpush1.msra.mxu0 %v360
    %2405 = vmatprep.subr.mxu0 0.0
    %2406 = vmatpush1.msra.mxu0 %v361
    %2407 = vmatprep.subr.mxu0 0.0
    %2408 = vmatpush1.msra.mxu0 %v362
    %2409 = vmatprep.subr.mxu0 0.0
    %2410 = vmatpush1.msra.mxu0 0.0
    %2411 = vmatprep.subr.mxu0 0.0
    %2412 = vmatpush1.msra.mxu0 0.0
    %2413 = vmatprep.subr.mxu0 0.0
    %2414 = vmatpush1.msra.mxu0 0.0
    %2415 = vmatprep.subr.mxu0 0.0
    %2416 = vmatpush1.msra.mxu0 0.0
    %2417 = vmatprep.subr.mxu0 0.0
    %2418 = vmatpush1.msra.mxu0 0.0
    %2419 = vmatprep.subr.mxu0 0.0
    %2420 = vmatpush1.msra.mxu0 0.0
    %2421 = vmatprep.subr.mxu0 0.0
    %2422 = vmatpush1.msra.mxu0 0.0
    %2423 = vmatprep.subr.mxu0 0.0
    %2424 = vmatpush1.msra.mxu0 0.0
    %2425 = vmatprep.subr.mxu0 0.0
    %2426 = vmatpush1.msra.mxu0 0.0
    %2427 = vmatprep.subr.mxu0 0.0
    %2428 = vmatpush1.msra.mxu0 0.0
    %2429 = vmatprep.subr.mxu0 0.0
    %2430 = vmatpush1.msra.mxu0 0.0
    %2431 = vmatprep.subr.mxu0 0.0
    %2432 = vmatpush1.msra.mxu0 0.0
    %2433 = vmatprep.subr.mxu0 0.0
    %2434 = vmatpush1.msra.mxu0 0.0
    %2435 = vmatprep.subr.mxu0 0.0
    %2436 = vmatpush1.msra.mxu0 0.0
    %2437 = vmatprep.subr.mxu0 0.0
    %2438 = vmatpush1.msra.mxu0 0.0
    %2439 = vmatprep.subr.mxu0 0.0
    %2440 = vmatpush1.msra.mxu0 0.0
    %2441 = vmatprep.subr.mxu0 0.0
    %2442 = vmatpush1.msra.mxu0 0.0
    %2443 = vmatprep.subr.mxu0 0.0
    %2444 = vmatpush1.msra.mxu0 0.0
    %2445 = vmatprep.subr.mxu0 0.0
    %2446 = vmatpush1.msra.mxu0 0.0
    %2447 = vmatprep.subr.mxu0 0.0
    %2448 = vmatpush1.msra.mxu0 0.0
    %2449 = vmatprep.subr.mxu0 0.0
    %2450 = vmatpush1.msra.mxu0 0.0
    %2451 = vmatprep.subr.mxu0 0.0
    %2452 = vmatpush1.msra.mxu0 0.0
    %2453 = vmatprep.subr.mxu0 0.0
    %2454 = vmatpush1.msra.mxu0 0.0
    %2455 = vmatprep.subr.mxu0 0.0
    %2456 = vmatpush1.msra.mxu0 0.0
    %2457 = vmatprep.subr.mxu0 0.0
    %2458 = vmatpush1.msra.mxu0 0.0
    %2459 = vmatprep.subr.mxu0 0.0
    %2460 = vmatpush1.msra.mxu0 0.0
    %2461 = vmatprep.subr.mxu0 0.0
    %2462 = vmatpush1.msra.mxu0 0.0
    %2463 = vmatprep.subr.mxu0 0.0
    %2464 = vmatpush1.msra.mxu0 0.0
    %2465 = vmatprep.mubr.f32.mxu0 0.0
    %2466 = vmatmul.mubr.f32.gmra.mrb[0].mxu0 %v2329
    %v2467 = vpop.f32.mrb[0].mxu0
    %v2468 = vadd.f32 0.0, %v2467
    %v2469 = vpop.f32.mrb[0].mxu0
    %2470 = vdwg.mxu0
    %2471 = vmatprep.subr.mxu0 0.0
    %2472 = vmatpush1.msra.mxu0 %v363
    %2473 = vmatprep.subr.mxu0 0.0
    %2474 = vmatpush1.msra.mxu0 %v364
    %2475 = vmatprep.subr.mxu0 0.0
    %2476 = vmatpush1.msra.mxu0 %v365
    %2477 = vmatprep.subr.mxu0 0.0
    %2478 = vmatpush1.msra.mxu0 %v366
    %2479 = vmatprep.subr.mxu0 0.0
    %2480 = vmatpush1.msra.mxu0 0.0
    %2481 = vmatprep.subr.mxu0 0.0
    %2482 = vmatpush1.msra.mxu0 0.0
    %2483 = vmatprep.subr.mxu0 0.0
    %2484 = vmatpush1.msra.mxu0 0.0
    %2485 = vmatprep.subr.mxu0 0.0
    %2486 = vmatpush1.msra.mxu0 0.0
    %2487 = vmatprep.subr.mxu0 0.0
    %2488 = vmatpush1.msra.mxu0 0.0
    %2489 = vmatprep.subr.mxu0 0.0
    %2490 = vmatpush1.msra.mxu0 0.0
    %2491 = vmatprep.subr.mxu0 0.0
    %2492 = vmatpush1.msra.mxu0 0.0
    %2493 = vmatprep.subr.mxu0 0.0
    %2494 = vmatpush1.msra.mxu0 0.0
    %2495 = vmatprep.subr.mxu0 0.0
    %2496 = vmatpush1.msra.mxu0 0.0
    %2497 = vmatprep.subr.mxu0 0.0
    %2498 = vmatpush1.msra.mxu0 0.0
    %2499 = vmatprep.subr.mxu0 0.0
    %2500 = vmatpush1.msra.mxu0 0.0
    %2501 = vmatprep.subr.mxu0 0.0
    %2502 = vmatpush1.msra.mxu0 0.0
    %2503 = vmatprep.subr.mxu0 0.0
    %2504 = vmatpush1.msra.mxu0 0.0
    %2505 = vmatprep.subr.mxu0 0.0
    %2506 = vmatpush1.msra.mxu0 0.0
    %2507 = vmatprep.subr.mxu0 0.0
    %2508 = vmatpush1.msra.mxu0 0.0
    %2509 = vmatprep.subr.mxu0 0.0
    %2510 = vmatpush1.msra.mxu0 0.0
    %2511 = vmatprep.subr.mxu0 0.0
    %2512 = vmatpush1.msra.mxu0 0.0
    %2513 = vmatprep.subr.mxu0 0.0
    %2514 = vmatpush1.msra.mxu0 0.0
    %2515 = vmatprep.subr.mxu0 0.0
    %2516 = vmatpush1.msra.mxu0 0.0
    %2517 = vmatprep.subr.mxu0 0.0
    %2518 = vmatpush1.msra.mxu0 0.0
    %2519 = vmatprep.subr.mxu0 0.0
    %2520 = vmatpush1.msra.mxu0 0.0
    %2521 = vmatprep.subr.mxu0 0.0
    %2522 = vmatpush1.msra.mxu0 0.0
    %2523 = vmatprep.subr.mxu0 0.0
    %2524 = vmatpush1.msra.mxu0 0.0
    %2525 = vmatprep.subr.mxu0 0.0
    %2526 = vmatpush1.msra.mxu0 0.0
    %2527 = vmatprep.subr.mxu0 0.0
    %2528 = vmatpush1.msra.mxu0 0.0
    %2529 = vmatprep.subr.mxu0 0.0
    %2530 = vmatpush1.msra.mxu0 0.0
    %2531 = vmatprep.subr.mxu0 0.0
    %2532 = vmatpush1.msra.mxu0 0.0
    %2533 = vmatprep.subr.mxu0 0.0
    %2534 = vmatpush1.msra.mxu0 0.0
    %2535 = vmatprep.mubr.f32.mxu0 0.0
    %2536 = vmatmul.mubr.f32.gmra.mrb[0].mxu0 %v2329
    %v2537 = vpop.f32.mrb[0].mxu0
    %v2538 = vadd.f32 %v770, %v2537
    %v2539 = vpop.f32.mrb[0].mxu0
    %2540 = vdwg.mxu0
    %v2542 = vrot.slane %v2398, 2
    %v2544 = vadd.f32 %v456, %v2542
    %v2545 = vxor.u32 %v2544, 2147483648
    %v2546 = vmul.f32 %v2545, 1.442695
    %v2547 = vpow.pop %v2546
    %v2548 = vadd.f32 %v2547, 1.0
    %v2549 = vrcp.pop %v2548
    %v2550 = vmul.f32 1.0, %v2549
    %v2552 = vrot.slane %v2468, 2
    %v2554 = vadd.f32 %v537, %v2552
    %v2555 = vxor.u32 %v2554, 2147483648
    %v2556 = vmul.f32 %v2555, 1.442695
    %v2557 = vpow.pop %v2556
    %v2558 = vadd.f32 %v2557, 1.0
    %v2559 = vrcp.pop %v2558
    %v2560 = vmul.f32 1.0, %v2559
    %v2562 = vrot.slane %v2538, 2
    %v2564 = vmul.f32 %v2550, %v2562
    %v2565 = vadd.f32 %v618, %v2564
    %v2566 = vtanh.pop %v2565
    %v2567 = vsub.f32 1.0, %v2560
    %v2568 = vmul.f32 %v2567, %v2566
    %v2569 = vrot.slane %v2326, 6
    %v2571 = vmul.f32 %v2560, %v2569
    %v2572 = vadd.f32 %v2568, %v2571
    %vm2573 = vcmask 1041408
    %v2574 = vsel %vm2573, %v862, %v1107
    %vm2575 = vcmask 1043456
    %v2576 = vsel %vm2575, %v2574, %v1353
    %vm2577 = vcmask 1045504
    %v2578 = vsel %vm2577, %v2576, %v1599
    %v2579 = vsel %vm2573, %v1835, %v2080
    %v2580 = vsel %vm2575, %v2579, %v2326
    %v2581 = vsel %vm2577, %v2580, %v2572
    %v2582 = vld [vmem:[%s27] sm:$0xff]
    %v2583 = vld [vmem:[%s27 + $0x8] sm:$0xff]
    %v2584 = vld [vmem:[%s27 + $0x10] sm:$0xff]
    %v2585 = vld [vmem:[%s27 + $0x18] sm:$0xff]
    %v2586 = vld [vmem:[#allocation17] sm:$0xff]
    %v2587 = vld [vmem:[#allocation17 + $0x8] sm:$0xff]
    %v2588 = vld [vmem:[#allocation17 + $0x10] sm:$0xff]
    %v2589 = vld [vmem:[#allocation17 + $0x18] sm:$0xff]
    %v2590 = vld [vmem:[#allocation19] sm:$0xff]
    %v2591 = vld [vmem:[#allocation19 + $0x8] sm:$0xff]
    %v2592 = vld [vmem:[#allocation19 + $0x10] sm:$0xff]
    %v2593 = vld [vmem:[#allocation19 + $0x18] sm:$0xff]
    %v2594 = vld [vmem:[#allocation20] sm:$0xff]
    %v2595 = vld [vmem:[#allocation20 + $0x8] sm:$0xff]
    %v2596 = vld [vmem:[#allocation20 + $0x10] sm:$0xff]
    %v2597 = vld [vmem:[#allocation20 + $0x18] sm:$0xff]
    %v2598 = vld [vmem:[#allocation22] sm:$0xff]
    %v2599 = vld [vmem:[#allocation22 + $0x8] sm:$0xff]
    %v2600 = vld [vmem:[#allocation22 + $0x10] sm:$0xff]
    %v2601 = vld [vmem:[#allocation22 + $0x18] sm:$0xff]
    %v2602 = vld [vmem:[#allocation23] sm:$0xff]
    %v2603 = vld [vmem:[#allocation23 + $0x8] sm:$0xff]
    %v2604 = vld [vmem:[#allocation23 + $0x10] sm:$0xff]
    %v2605 = vld [vmem:[#allocation23 + $0x18] sm:$0xff]
    %v2606 = vld [vmem:[%s39] sm:$0x1]
    %v2607 = vld [vmem:[%s41] sm:$0x1]
    %v2608 = vld [vmem:[#allocation25] sm:$0x1]
    %v2609 = vld [vmem:[%s45] sm:$0x1]
    %v2611 = vlaneseq
    %v2612 = vshrl.u32 %v2611, 7
    %v2613 = vsub.s32 0, %v2612
    %v2614 = vrot.slane %v2606, %v2613
    %v2617 = vsel %vm622, %v2578, 0
    %v2620 = vsel %vm622, %v2581, 0
    %2622 = vmatprep.subr.mxu0 0.0
    %2623 = vmatpush1.msra.mxu0 %v2582
    %2624 = vmatprep.subr.mxu0 0.0
    %2625 = vmatpush1.msra.mxu0 %v2583
    %2626 = vmatprep.subr.mxu0 0.0
    %2627 = vmatpush1.msra.mxu0 %v2584
    %2628 = vmatprep.subr.mxu0 0.0
    %2629 = vmatpush1.msra.mxu0 %v2585
    %2630 = vmatprep.subr.mxu0 0.0
    %2631 = vmatpush1.msra.mxu0 0.0
    %2632 = vmatprep.subr.mxu0 0.0
    %2633 = vmatpush1.msra.mxu0 0.0
    %2634 = vmatprep.subr.mxu0 0.0
    %2635 = vmatpush1.msra.mxu0 0.0
    %2636 = vmatprep.subr.mxu0 0.0
    %2637 = vmatpush1.msra.mxu0 0.0
    %2638 = vmatprep.subr.mxu0 0.0
    %2639 = vmatpush1.msra.mxu0 0.0
    %2640 = vmatprep.subr.mxu0 0.0
    %2641 = vmatpush1.msra.mxu0 0.0
    %2642 = vmatprep.subr.mxu0 0.0
    %2643 = vmatpush1.msra.mxu0 0.0
    %2644 = vmatprep.subr.mxu0 0.0
    %2645 = vmatpush1.msra.mxu0 0.0
    %2646 = vmatprep.subr.mxu0 0.0
    %2647 = vmatpush1.msra.mxu0 0.0
    %2648 = vmatprep.subr.mxu0 0.0
    %2649 = vmatpush1.msra.mxu0 0.0
    %2650 = vmatprep.subr.mxu0 0.0
    %2651 = vmatpush1.msra.mxu0 0.0
    %2652 = vmatprep.subr.mxu0 0.0
    %2653 = vmatpush1.msra.mxu0 0.0
    %2654 = vmatprep.subr.mxu0 0.0
    %2655 = vmatpush1.msra.mxu0 0.0
    %2656 = vmatprep.subr.mxu0 0.0
    %2657 = vmatpush1.msra.mxu0 0.0
    %2658 = vmatprep.subr.mxu0 0.0
    %2659 = vmatpush1.msra.mxu0 0.0
    %2660 = vmatprep.subr.mxu0 0.0
    %2661 = vmatpush1.msra.mxu0 0.0
    %2662 = vmatprep.subr.mxu0 0.0
    %2663 = vmatpush1.msra.mxu0 0.0
    %2664 = vmatprep.subr.mxu0 0.0
    %2665 = vmatpush1.msra.mxu0 0.0
    %2666 = vmatprep.subr.mxu0 0.0
    %2667 = vmatpush1.msra.mxu0 0.0
    %2668 = vmatprep.subr.mxu0 0.0
    %2669 = vmatpush1.msra.mxu0 0.0
    %2670 = vmatprep.subr.mxu0 0.0
    %2671 = vmatpush1.msra.mxu0 0.0
    %2672 = vmatprep.subr.mxu0 0.0
    %2673 = vmatpush1.msra.mxu0 0.0
    %2674 = vmatprep.subr.mxu0 0.0
    %2675 = vmatpush1.msra.mxu0 0.0
    %2676 = vmatprep.subr.mxu0 0.0
    %2677 = vmatpush1.msra.mxu0 0.0
    %2678 = vmatprep.subr.mxu0 0.0
    %2679 = vmatpush1.msra.mxu0 0.0
    %2680 = vmatprep.subr.mxu0 0.0
    %2681 = vmatpush1.msra.mxu0 0.0
    %2682 = vmatprep.subr.mxu0 0.0
    %2683 = vmatpush1.msra.mxu0 0.0
    %2684 = vmatprep.subr.mxu0 0.0
    %2685 = vmatpush1.msra.mxu0 0.0
    %2686 = vmatprep.mubr.f32.mxu0 0.0
    %2687 = vmatmul.mubr.f32.gmra.mrb[0].mxu0 %v2617
    %v2688 = vpop.f32.mrb[0].mxu0
    %v2689 = vadd.f32 %v2614, %v2688
    %v2690 = vpop.f32.mrb[0].mxu0
    %2691 = vmatprep.mubr.f32.mxu0 0.0
    %2692 = vmatmul.mubr.f32.gmra.mrb[0].mxu0 %v2620
    %v2693 = vpop.f32.mrb[0].mxu0
    %v2694 = vadd.f32 %v2614, %v2693
    %v2695 = vpop.f32.mrb[0].mxu0
    %2696 = vdwg.mxu0
    %v2698 = vlaneseq
    %v2699 = vshrl.u32 %v2698, 7
    %v2700 = vsub.s32 0, %v2699
    %v2701 = vrot.slane %v2607, %v2700
    %2703 = vmatprep.subr.mxu0 0.0
    %2704 = vmatpush1.msra.mxu0 %v2586
    %2705 = vmatprep.subr.mxu0 0.0
    %2706 = vmatpush1.msra.mxu0 %v2587
    %2707 = vmatprep.subr.mxu0 0.0
    %2708 = vmatpush1.msra.mxu0 %v2588
    %2709 = vmatprep.subr.mxu0 0.0
    %2710 = vmatpush1.msra.mxu0 %v2589
    %2711 = vmatprep.subr.mxu0 0.0
    %2712 = vmatpush1.msra.mxu0 0.0
    %2713 = vmatprep.subr.mxu0 0.0
    %2714 = vmatpush1.msra.mxu0 0.0
    %2715 = vmatprep.subr.mxu0 0.0
    %2716 = vmatpush1.msra.mxu0 0.0
    %2717 = vmatprep.subr.mxu0 0.0
    %2718 = vmatpush1.msra.mxu0 0.0
    %2719 = vmatprep.subr.mxu0 0.0
    %2720 = vmatpush1.msra.mxu0 0.0
    %2721 = vmatprep.subr.mxu0 0.0
    %2722 = vmatpush1.msra.mxu0 0.0
    %2723 = vmatprep.subr.mxu0 0.0
    %2724 = vmatpush1.msra.mxu0 0.0
    %2725 = vmatprep.subr.mxu0 0.0
    %2726 = vmatpush1.msra.mxu0 0.0
    %2727 = vmatprep.subr.mxu0 0.0
    %2728 = vmatpush1.msra.mxu0 0.0
    %2729 = vmatprep.subr.mxu0 0.0
    %2730 = vmatpush1.msra.mxu0 0.0
    %2731 = vmatprep.subr.mxu0 0.0
    %2732 = vmatpush1.msra.mxu0 0.0
    %2733 = vmatprep.subr.mxu0 0.0
    %2734 = vmatpush1.msra.mxu0 0.0
    %2735 = vmatprep.subr.mxu0 0.0
    %2736 = vmatpush1.msra.mxu0 0.0
    %2737 = vmatprep.subr.mxu0 0.0
    %2738 = vmatpush1.msra.mxu0 0.0
    %2739 = vmatprep.subr.mxu0 0.0
    %2740 = vmatpush1.msra.mxu0 0.0
    %2741 = vmatprep.subr.mxu0 0.0
    %2742 = vmatpush1.msra.mxu0 0.0
    %2743 = vmatprep.subr.mxu0 0.0
    %2744 = vmatpush1.msra.mxu0 0.0
    %2745 = vmatprep.subr.mxu0 0.0
    %2746 = vmatpush1.msra.mxu0 0.0
    %2747 = vmatprep.subr.mxu0 0.0
    %2748 = vmatpush1.msra.mxu0 0.0
    %2749 = vmatprep.subr.mxu0 0.0
    %2750 = vmatpush1.msra.mxu0 0.0
    %2751 = vmatprep.subr.mxu0 0.0
    %2752 = vmatpush1.msra.mxu0 0.0
    %2753 = vmatprep.subr.mxu0 0.0
    %2754 = vmatpush1.msra.mxu0 0.0
    %2755 = vmatprep.subr.mxu0 0.0
    %2756 = vmatpush1.msra.mxu0 0.0
    %2757 = vmatprep.subr.mxu0 0.0
    %2758 = vmatpush1.msra.mxu0 0.0
    %2759 = vmatprep.subr.mxu0 0.0
    %2760 = vmatpush1.msra.mxu0 0.0
    %2761 = vmatprep.subr.mxu0 0.0
    %2762 = vmatpush1.msra.mxu0 0.0
    %2763 = vmatprep.subr.mxu0 0.0
    %2764 = vmatpush1.msra.mxu0 0.0
    %2765 = vmatprep.subr.mxu0 0.0
    %2766 = vmatpush1.msra.mxu0 0.0
    %2767 = vmatprep.mubr.f32.mxu0 0.0
    %2768 = vmatmul.mubr.f32.gmra.mrb[0].mxu0 %v2617
    %v2769 = vpop.f32.mrb[0].mxu0
    %v2770 = vadd.f32 %v2701, %v2769
    %v2771 = vpop.f32.mrb[0].mxu0
    %2772 = vmatprep.mubr.f32.mxu0 0.0
    %2773 = vmatmul.mubr.f32.gmra.mrb[0].mxu0 %v2620
    %v2774 = vpop.f32.mrb[0].mxu0
    %v2775 = vadd.f32 %v2701, %v2774
    %v2776 = vpop.f32.mrb[0].mxu0
    %2777 = vdwg.mxu0
    %v2779 = vlaneseq
    %v2780 = vshrl.u32 %v2779, 7
    %v2781 = vsub.s32 0, %v2780
    %v2782 = vrot.slane %v2608, %v2781
    %2784 = vmatprep.subr.mxu0 0.0
    %2785 = vmatpush1.msra.mxu0 %v2590
    %2786 = vmatprep.subr.mxu0 0.0
    %2787 = vmatpush1.msra.mxu0 %v2591
    %2788 = vmatprep.subr.mxu0 0.0
    %2789 = vmatpush1.msra.mxu0 %v2592
    %2790 = vmatprep.subr.mxu0 0.0
    %2791 = vmatpush1.msra.mxu0 %v2593
    %2792 = vmatprep.subr.mxu0 0.0
    %2793 = vmatpush1.msra.mxu0 0.0
    %2794 = vmatprep.subr.mxu0 0.0
    %2795 = vmatpush1.msra.mxu0 0.0
    %2796 = vmatprep.subr.mxu0 0.0
    %2797 = vmatpush1.msra.mxu0 0.0
    %2798 = vmatprep.subr.mxu0 0.0
    %2799 = vmatpush1.msra.mxu0 0.0
    %2800 = vmatprep.subr.mxu0 0.0
    %2801 = vmatpush1.msra.mxu0 0.0
    %2802 = vmatprep.subr.mxu0 0.0
    %2803 = vmatpush1.msra.mxu0 0.0
    %2804 = vmatprep.subr.mxu0 0.0
    %2805 = vmatpush1.msra.mxu0 0.0
    %2806 = vmatprep.subr.mxu0 0.0
    %2807 = vmatpush1.msra.mxu0 0.0
    %2808 = vmatprep.subr.mxu0 0.0
    %2809 = vmatpush1.msra.mxu0 0.0
    %2810 = vmatprep.subr.mxu0 0.0
    %2811 = vmatpush1.msra.mxu0 0.0
    %2812 = vmatprep.subr.mxu0 0.0
    %2813 = vmatpush1.msra.mxu0 0.0
    %2814 = vmatprep.subr.mxu0 0.0
    %2815 = vmatpush1.msra.mxu0 0.0
    %2816 = vmatprep.subr.mxu0 0.0
    %2817 = vmatpush1.msra.mxu0 0.0
    %2818 = vmatprep.subr.mxu0 0.0
    %2819 = vmatpush1.msra.mxu0 0.0
    %2820 = vmatprep.subr.mxu0 0.0
    %2821 = vmatpush1.msra.mxu0 0.0
    %2822 = vmatprep.subr.mxu0 0.0
    %2823 = vmatpush1.msra.mxu0 0.0
    %2824 = vmatprep.subr.mxu0 0.0
    %2825 = vmatpush1.msra.mxu0 0.0
    %2826 = vmatprep.subr.mxu0 0.0
    %2827 = vmatpush1.msra.mxu0 0.0
    %2828 = vmatprep.subr.mxu0 0.0
    %2829 = vmatpush1.msra.mxu0 0.0
    %2830 = vmatprep.subr.mxu0 0.0
    %2831 = vmatpush1.msra.mxu0 0.0
    %2832 = vmatprep.subr.mxu0 0.0
    %2833 = vmatpush1.msra.mxu0 0.0
    %2834 = vmatprep.subr.mxu0 0.0
    %2835 = vmatpush1.msra.mxu0 0.0
    %2836 = vmatprep.subr.mxu0 0.0
    %2837 = vmatpush1.msra.mxu0 0.0
    %2838 = vmatprep.subr.mxu0 0.0
    %2839 = vmatpush1.msra.mxu0 0.0
    %2840 = vmatprep.subr.mxu0 0.0
    %2841 = vmatpush1.msra.mxu0 0.0
    %2842 = vmatprep.subr.mxu0 0.0
    %2843 = vmatpush1.msra.mxu0 0.0
    %2844 = vmatprep.subr.mxu0 0.0
    %2845 = vmatpush1.msra.mxu0 0.0
    %2846 = vmatprep.subr.mxu0 0.0
    %2847 = vmatpush1.msra.mxu0 0.0
    %2848 = vmatprep.mubr.f32.mxu0 0.0
    %2849 = vmatmul.mubr.f32.gmra.mrb[0].mxu0 %v2617
    %v2850 = vpop.f32.mrb[0].mxu0
    %v2851 = vadd.f32 %v2782, %v2850
    %v2852 = vpop.f32.mrb[0].mxu0
    %2853 = vmatprep.mubr.f32.mxu0 0.0
    %2854 = vmatmul.mubr.f32.gmra.mrb[0].mxu0 %v2620
    %v2855 = vpop.f32.mrb[0].mxu0
    %v2856 = vadd.f32 %v2782, %v2855
    %v2857 = vpop.f32.mrb[0].mxu0
    %2858 = vdwg.mxu0
    %s2859 = scalar_lea.vmem [#allocation5], 2
    %v2860 = vld [vmem:[%s2859] sm:$0x3]
    %v2862 = vsel %vm622, %v2860, 0
    %2864 = vmatprep.subr.mxu0 0.0
    %2865 = vmatpush1.msra.mxu0 %v2594
    %2866 = vmatprep.subr.mxu0 0.0
    %2867 = vmatpush1.msra.mxu0 %v2595
    %2868 = vmatprep.subr.mxu0 0.0
    %2869 = vmatpush1.msra.mxu0 %v2596
    %2870 = vmatprep.subr.mxu0 0.0
    %2871 = vmatpush1.msra.mxu0 %v2597
    %2872 = vmatprep.subr.mxu0 0.0
    %2873 = vmatpush1.msra.mxu0 0.0
    %2874 = vmatprep.subr.mxu0 0.0
    %2875 = vmatpush1.msra.mxu0 0.0
    %2876 = vmatprep.subr.mxu0 0.0
    %2877 = vmatpush1.msra.mxu0 0.0
    %2878 = vmatprep.subr.mxu0 0.0
    %2879 = vmatpush1.msra.mxu0 0.0
    %2880 = vmatprep.subr.mxu0 0.0
    %2881 = vmatpush1.msra.mxu0 0.0
    %2882 = vmatprep.subr.mxu0 0.0
    %2883 = vmatpush1.msra.mxu0 0.0
    %2884 = vmatprep.subr.mxu0 0.0
    %2885 = vmatpush1.msra.mxu0 0.0
    %2886 = vmatprep.subr.mxu0 0.0
    %2887 = vmatpush1.msra.mxu0 0.0
    %2888 = vmatprep.subr.mxu0 0.0
    %2889 = vmatpush1.msra.mxu0 0.0
    %2890 = vmatprep.subr.mxu0 0.0
    %2891 = vmatpush1.msra.mxu0 0.0
    %2892 = vmatprep.subr.mxu0 0.0
    %2893 = vmatpush1.msra.mxu0 0.0
    %2894 = vmatprep.subr.mxu0 0.0
    %2895 = vmatpush1.msra.mxu0 0.0
    %2896 = vmatprep.subr.mxu0 0.0
    %2897 = vmatpush1.msra.mxu0 0.0
    %2898 = vmatprep.subr.mxu0 0.0
    %2899 = vmatpush1.msra.mxu0 0.0
    %2900 = vmatprep.subr.mxu0 0.0
    %2901 = vmatpush1.msra.mxu0 0.0
    %2902 = vmatprep.subr.mxu0 0.0
    %2903 = vmatpush1.msra.mxu0 0.0
    %2904 = vmatprep.subr.mxu0 0.0
    %2905 = vmatpush1.msra.mxu0 0.0
    %2906 = vmatprep.subr.mxu0 0.0
    %2907 = vmatpush1.msra.mxu0 0.0
    %2908 = vmatprep.subr.mxu0 0.0
    %2909 = vmatpush1.msra.mxu0 0.0
    %2910 = vmatprep.subr.mxu0 0.0
    %2911 = vmatpush1.msra.mxu0 0.0
    %2912 = vmatprep.subr.mxu0 0.0
    %2913 = vmatpush1.msra.mxu0 0.0
    %2914 = vmatprep.subr.mxu0 0.0
    %2915 = vmatpush1.msra.mxu0 0.0
    %2916 = vmatprep.subr.mxu0 0.0
    %2917 = vmatpush1.msra.mxu0 0.0
    %2918 = vmatprep.subr.mxu0 0.0
    %2919 = vmatpush1.msra.mxu0 0.0
    %2920 = vmatprep.subr.mxu0 0.0
    %2921 = vmatpush1.msra.mxu0 0.0
    %2922 = vmatprep.subr.mxu0 0.0
    %2923 = vmatpush1.msra.mxu0 0.0
    %2924 = vmatprep.subr.mxu0 0.0
    %2925 = vmatpush1.msra.mxu0 0.0
    %2926 = vmatprep.subr.mxu0 0.0
    %2927 = vmatpush1.msra.mxu0 0.0
    %2928 = vmatprep.mubr.f32.mxu0 0.0
    %2929 = vmatmul.mubr.f32.gmra.mrb[0].mxu0 %v2862
    %v2930 = vpop.f32.mrb[0].mxu0
    %v2931 = vadd.f32 0.0, %v2930
    %v2932 = vpop.f32.mrb[0].mxu0
    %2933 = vdwg.mxu0
    %2934 = vmatprep.subr.mxu0 0.0
    %2935 = vmatpush1.msra.mxu0 %v2598
    %2936 = vmatprep.subr.mxu0 0.0
    %2937 = vmatpush1.msra.mxu0 %v2599
    %2938 = vmatprep.subr.mxu0 0.0
    %2939 = vmatpush1.msra.mxu0 %v2600
    %2940 = vmatprep.subr.mxu0 0.0
    %2941 = vmatpush1.msra.mxu0 %v2601
    %2942 = vmatprep.subr.mxu0 0.0
    %2943 = vmatpush1.msra.mxu0 0.0
    %2944 = vmatprep.subr.mxu0 0.0
    %2945 = vmatpush1.msra.mxu0 0.0
    %2946 = vmatprep.subr.mxu0 0.0
    %2947 = vmatpush1.msra.mxu0 0.0
    %2948 = vmatprep.subr.mxu0 0.0
    %2949 = vmatpush1.msra.mxu0 0.0
    %2950 = vmatprep.subr.mxu0 0.0
    %2951 = vmatpush1.msra.mxu0 0.0
    %2952 = vmatprep.subr.mxu0 0.0
    %2953 = vmatpush1.msra.mxu0 0.0
    %2954 = vmatprep.subr.mxu0 0.0
    %2955 = vmatpush1.msra.mxu0 0.0
    %2956 = vmatprep.subr.mxu0 0.0
    %2957 = vmatpush1.msra.mxu0 0.0
    %2958 = vmatprep.subr.mxu0 0.0
    %2959 = vmatpush1.msra.mxu0 0.0
    %2960 = vmatprep.subr.mxu0 0.0
    %2961 = vmatpush1.msra.mxu0 0.0
    %2962 = vmatprep.subr.mxu0 0.0
    %2963 = vmatpush1.msra.mxu0 0.0
    %2964 = vmatprep.subr.mxu0 0.0
    %2965 = vmatpush1.msra.mxu0 0.0
    %2966 = vmatprep.subr.mxu0 0.0
    %2967 = vmatpush1.msra.mxu0 0.0
    %2968 = vmatprep.subr.mxu0 0.0
    %2969 = vmatpush1.msra.mxu0 0.0
    %2970 = vmatprep.subr.mxu0 0.0
    %2971 = vmatpush1.msra.mxu0 0.0
    %2972 = vmatprep.subr.mxu0 0.0
    %2973 = vmatpush1.msra.mxu0 0.0
    %2974 = vmatprep.subr.mxu0 0.0
    %2975 = vmatpush1.msra.mxu0 0.0
    %2976 = vmatprep.subr.mxu0 0.0
    %2977 = vmatpush1.msra.mxu0 0.0
    %2978 = vmatprep.subr.mxu0 0.0
    %2979 = vmatpush1.msra.mxu0 0.0
    %2980 = vmatprep.subr.mxu0 0.0
    %2981 = vmatpush1.msra.mxu0 0.0
    %2982 = vmatprep.subr.mxu0 0.0
    %2983 = vmatpush1.msra.mxu0 0.0
    %2984 = vmatprep.subr.mxu0 0.0
    %2985 = vmatpush1.msra.mxu0 0.0
    %2986 = vmatprep.subr.mxu0 0.0
    %2987 = vmatpush1.msra.mxu0 0.0
    %2988 = vmatprep.subr.mxu0 0.0
    %2989 = vmatpush1.msra.mxu0 0.0
    %2990 = vmatprep.subr.mxu0 0.0
    %2991 = vmatpush1.msra.mxu0 0.0
    %2992 = vmatprep.subr.mxu0 0.0
    %2993 = vmatpush1.msra.mxu0 0.0
    %2994 = vmatprep.subr.mxu0 0.0
    %2995 = vmatpush1.msra.mxu0 0.0
    %2996 = vmatprep.subr.mxu0 0.0
    %2997 = vmatpush1.msra.mxu0 0.0
    %2998 = vmatprep.mubr.f32.mxu0 0.0
    %2999 = vmatmul.mubr.f32.gmra.mrb[0].mxu0 %v2862
    %v3000 = vpop.f32.mrb[0].mxu0
    %v3001 = vadd.f32 0.0, %v3000
    %v3002 = vpop.f32.mrb[0].mxu0
    %3003 = vdwg.mxu0
    %v3005 = vlaneseq
    %v3006 = vshrl.u32 %v3005, 7
    %v3007 = vsub.s32 0, %v3006
    %v3008 = vrot.slane %v2609, %v3007
    %3010 = vmatprep.subr.mxu0 0.0
    %3011 = vmatpush1.msra.mxu0 %v2602
    %3012 = vmatprep.subr.mxu0 0.0
    %3013 = vmatpush1.msra.mxu0 %v2603
    %3014 = vmatprep.subr.mxu0 0.0
    %3015 = vmatpush1.msra.mxu0 %v2604
    %3016 = vmatprep.subr.mxu0 0.0
    %3017 = vmatpush1.msra.mxu0 %v2605
    %3018 = vmatprep.subr.mxu0 0.0
    %3019 = vmatpush1.msra.mxu0 0.0
    %3020 = vmatprep.subr.mxu0 0.0
    %3021 = vmatpush1.msra.mxu0 0.0
    %3022 = vmatprep.subr.mxu0 0.0
    %3023 = vmatpush1.msra.mxu0 0.0
    %3024 = vmatprep.subr.mxu0 0.0
    %3025 = vmatpush1.msra.mxu0 0.0
    %3026 = vmatprep.subr.mxu0 0.0
    %3027 = vmatpush1.msra.mxu0 0.0
    %3028 = vmatprep.subr.mxu0 0.0
    %3029 = vmatpush1.msra.mxu0 0.0
    %3030 = vmatprep.subr.mxu0 0.0
    %3031 = vmatpush1.msra.mxu0 0.0
    %3032 = vmatprep.subr.mxu0 0.0
    %3033 = vmatpush1.msra.mxu0 0.0
    %3034 = vmatprep.subr.mxu0 0.0
    %3035 = vmatpush1.msra.mxu0 0.0
    %3036 = vmatprep.subr.mxu0 0.0
    %3037 = vmatpush1.msra.mxu0 0.0
    %3038 = vmatprep.subr.mxu0 0.0
    %3039 = vmatpush1.msra.mxu0 0.0
    %3040 = vmatprep.subr.mxu0 0.0
    %3041 = vmatpush1.msra.mxu0 0.0
    %3042 = vmatprep.subr.mxu0 0.0
    %3043 = vmatpush1.msra.mxu0 0.0
    %3044 = vmatprep.subr.mxu0 0.0
    %3045 = vmatpush1.msra.mxu0 0.0
    %3046 = vmatprep.subr.mxu0 0.0
    %3047 = vmatpush1.msra.mxu0 0.0
    %3048 = vmatprep.subr.mxu0 0.0
    %3049 = vmatpush1.msra.mxu0 0.0
    %3050 = vmatprep.subr.mxu0 0.0
    %3051 = vmatpush1.msra.mxu0 0.0
    %3052 = vmatprep.subr.mxu0 0.0
    %3053 = vmatpush1.msra.mxu0 0.0
    %3054 = vmatprep.subr.mxu0 0.0
    %3055 = vmatpush1.msra.mxu0 0.0
    %3056 = vmatprep.subr.mxu0 0.0
    %3057 = vmatpush1.msra.mxu0 0.0
    %3058 = vmatprep.subr.mxu0 0.0
    %3059 = vmatpush1.msra.mxu0 0.0
    %3060 = vmatprep.subr.mxu0 0.0
    %3061 = vmatpush1.msra.mxu0 0.0
    %3062 = vmatprep.subr.mxu0 0.0
    %3063 = vmatpush1.msra.mxu0 0.0
    %3064 = vmatprep.subr.mxu0 0.0
    %3065 = vmatpush1.msra.mxu0 0.0
    %3066 = vmatprep.subr.mxu0 0.0
    %3067 = vmatpush1.msra.mxu0 0.0
    %3068 = vmatprep.subr.mxu0 0.0
    %3069 = vmatpush1.msra.mxu0 0.0
    %3070 = vmatprep.subr.mxu0 0.0
    %3071 = vmatpush1.msra.mxu0 0.0
    %3072 = vmatprep.subr.mxu0 0.0
    %3073 = vmatpush1.msra.mxu0 0.0
    %3074 = vmatprep.mubr.f32.mxu0 0.0
    %3075 = vmatmul.mubr.f32.gmra.mrb[0].mxu0 %v2862
    %v3076 = vpop.f32.mrb[0].mxu0
    %v3077 = vadd.f32 %v3008, %v3076
    %v3078 = vpop.f32.mrb[0].mxu0
    %3079 = vdwg.mxu0
    %v3080 = vadd.f32 %v2689, %v2931
    %v3081 = vxor.u32 %v3080, 2147483648
    %v3082 = vmul.f32 %v3081, 1.442695
    %v3083 = vpow.pop %v3082
    %v3084 = vadd.f32 %v3083, 1.0
    %v3085 = vrcp.pop %v3084
    %v3086 = vmul.f32 1.0, %v3085
    %v3087 = vadd.f32 %v2770, %v3001
    %v3088 = vxor.u32 %v3087, 2147483648
    %v3089 = vmul.f32 %v3088, 1.442695
    %v3090 = vpow.pop %v3089
    %v3091 = vadd.f32 %v3090, 1.0
    %v3092 = vrcp.pop %v3091
    %v3093 = vmul.f32 1.0, %v3092
    %v3094 = vmul.f32 %v3086, %v3077
    %v3095 = vadd.f32 %v2851, %v3094
    %v3096 = vtanh.pop %v3095
    %v3097 = vsub.f32 1.0, %v3093
    %v3098 = vmul.f32 %v3097, %v3096
    %v3099 = vmul.f32 %v3093, %v2860
    %v3100 = vadd.f32 %v3098, %v3099
    %v3102 = vsel %vm622, %v3100, 0
    %3104 = vmatprep.subr.mxu0 0.0
    %3105 = vmatpush1.msra.mxu0 %v2594
    %3106 = vmatprep.subr.mxu0 0.0
    %3107 = vmatpush1.msra.mxu0 %v2595
    %3108 = vmatprep.subr.mxu0 0.0
    %3109 = vmatpush1.msra.mxu0 %v2596
    %3110 = vmatprep.subr.mxu0 0.0
    %3111 = vmatpush1.msra.mxu0 %v2597
    %3112 = vmatprep.subr.mxu0 0.0
    %3113 = vmatpush1.msra.mxu0 0.0
    %3114 = vmatprep.subr.mxu0 0.0
    %3115 = vmatpush1.msra.mxu0 0.0
    %3116 = vmatprep.subr.mxu0 0.0
    %3117 = vmatpush1.msra.mxu0 0.0
    %3118 = vmatprep.subr.mxu0 0.0
    %3119 = vmatpush1.msra.mxu0 0.0
    %3120 = vmatprep.subr.mxu0 0.0
    %3121 = vmatpush1.msra.mxu0 0.0
    %3122 = vmatprep.subr.mxu0 0.0
    %3123 = vmatpush1.msra.mxu0 0.0
    %3124 = vmatprep.subr.mxu0 0.0
    %3125 = vmatpush1.msra.mxu0 0.0
    %3126 = vmatprep.subr.mxu0 0.0
    %3127 = vmatpush1.msra.mxu0 0.0
    %3128 = vmatprep.subr.mxu0 0.0
    %3129 = vmatpush1.msra.mxu0 0.0
    %3130 = vmatprep.subr.mxu0 0.0
    %3131 = vmatpush1.msra.mxu0 0.0
    %3132 = vmatprep.subr.mxu0 0.0
    %3133 = vmatpush1.msra.mxu0 0.0
    %3134 = vmatprep.subr.mxu0 0.0
    %3135 = vmatpush1.msra.mxu0 0.0
    %3136 = vmatprep.subr.mxu0 0.0
    %3137 = vmatpush1.msra.mxu0 0.0
    %3138 = vmatprep.subr.mxu0 0.0
    %3139 = vmatpush1.msra.mxu0 0.0
    %3140 = vmatprep.subr.mxu0 0.0
    %3141 = vmatpush1.msra.mxu0 0.0
    %3142 = vmatprep.subr.mxu0 0.0
    %3143 = vmatpush1.msra.mxu0 0.0
    %3144 = vmatprep.subr.mxu0 0.0
    %3145 = vmatpush1.msra.mxu0 0.0
    %3146 = vmatprep.subr.mxu0 0.0
    %3147 = vmatpush1.msra.mxu0 0.0
    %3148 = vmatprep.subr.mxu0 0.0
    %3149 = vmatpush1.msra.mxu0 0.0
    %3150 = vmatprep.subr.mxu0 0.0
    %3151 = vmatpush1.msra.mxu0 0.0
    %3152 = vmatprep.subr.mxu0 0.0
    %3153 = vmatpush1.msra.mxu0 0.0
    %3154 = vmatprep.subr.mxu0 0.0
    %3155 = vmatpush1.msra.mxu0 0.0
    %3156 = vmatprep.subr.mxu0 0.0
    %3157 = vmatpush1.msra.mxu0 0.0
    %3158 = vmatprep.subr.mxu0 0.0
    %3159 = vmatpush1.msra.mxu0 0.0
    %3160 = vmatprep.subr.mxu0 0.0
    %3161 = vmatpush1.msra.mxu0 0.0
    %3162 = vmatprep.subr.mxu0 0.0
    %3163 = vmatpush1.msra.mxu0 0.0
    %3164 = vmatprep.subr.mxu0 0.0
    %3165 = vmatpush1.msra.mxu0 0.0
    %3166 = vmatprep.subr.mxu0 0.0
    %3167 = vmatpush1.msra.mxu0 0.0
    %3168 = vmatprep.mubr.f32.mxu0 0.0
    %3169 = vmatmul.mubr.f32.gmra.mrb[0].mxu0 %v3102
    %v3170 = vpop.f32.mrb[0].mxu0
    %v3171 = vadd.f32 0.0, %v3170
    %v3172 = vpop.f32.mrb[0].mxu0
    %3173 = vdwg.mxu0
    %3174 = vmatprep.subr.mxu0 0.0
    %3175 = vmatpush1.msra.mxu0 %v2598
    %3176 = vmatprep.subr.mxu0 0.0
    %3177 = vmatpush1.msra.mxu0 %v2599
    %3178 = vmatprep.subr.mxu0 0.0
    %3179 = vmatpush1.msra.mxu0 %v2600
    %3180 = vmatprep.subr.mxu0 0.0
    %3181 = vmatpush1.msra.mxu0 %v2601
    %3182 = vmatprep.subr.mxu0 0.0
    %3183 = vmatpush1.msra.mxu0 0.0
    %3184 = vmatprep.subr.mxu0 0.0
    %3185 = vmatpush1.msra.mxu0 0.0
    %3186 = vmatprep.subr.mxu0 0.0
    %3187 = vmatpush1.msra.mxu0 0.0
    %3188 = vmatprep.subr.mxu0 0.0
    %3189 = vmatpush1.msra.mxu0 0.0
    %3190 = vmatprep.subr.mxu0 0.0
    %3191 = vmatpush1.msra.mxu0 0.0
    %3192 = vmatprep.subr.mxu0 0.0
    %3193 = vmatpush1.msra.mxu0 0.0
    %3194 = vmatprep.subr.mxu0 0.0
    %3195 = vmatpush1.msra.mxu0 0.0
    %3196 = vmatprep.subr.mxu0 0.0
    %3197 = vmatpush1.msra.mxu0 0.0
    %3198 = vmatprep.subr.mxu0 0.0
    %3199 = vmatpush1.msra.mxu0 0.0
    %3200 = vmatprep.subr.mxu0 0.0
    %3201 = vmatpush1.msra.mxu0 0.0
    %3202 = vmatprep.subr.mxu0 0.0
    %3203 = vmatpush1.msra.mxu0 0.0
    %3204 = vmatprep.subr.mxu0 0.0
    %3205 = vmatpush1.msra.mxu0 0.0
    %3206 = vmatprep.subr.mxu0 0.0
    %3207 = vmatpush1.msra.mxu0 0.0
    %3208 = vmatprep.subr.mxu0 0.0
    %3209 = vmatpush1.msra.mxu0 0.0
    %3210 = vmatprep.subr.mxu0 0.0
    %3211 = vmatpush1.msra.mxu0 0.0
    %3212 = vmatprep.subr.mxu0 0.0
    %3213 = vmatpush1.msra.mxu0 0.0
    %3214 = vmatprep.subr.mxu0 0.0
    %3215 = vmatpush1.msra.mxu0 0.0
    %3216 = vmatprep.subr.mxu0 0.0
    %3217 = vmatpush1.msra.mxu0 0.0
    %3218 = vmatprep.subr.mxu0 0.0
    %3219 = vmatpush1.msra.mxu0 0.0
    %3220 = vmatprep.subr.mxu0 0.0
    %3221 = vmatpush1.msra.mxu0 0.0
    %3222 = vmatprep.subr.mxu0 0.0
    %3223 = vmatpush1.msra.mxu0 0.0
    %3224 = vmatprep.subr.mxu0 0.0
    %3225 = vmatpush1.msra.mxu0 0.0
    %3226 = vmatprep.subr.mxu0 0.0
    %3227 = vmatpush1.msra.mxu0 0.0
    %3228 = vmatprep.subr.mxu0 0.0
    %3229 = vmatpush1.msra.mxu0 0.0
    %3230 = vmatprep.subr.mxu0 0.0
    %3231 = vmatpush1.msra.mxu0 0.0
    %3232 = vmatprep.subr.mxu0 0.0
    %3233 = vmatpush1.msra.mxu0 0.0
    %3234 = vmatprep.subr.mxu0 0.0
    %3235 = vmatpush1.msra.mxu0 0.0
    %3236 = vmatprep.subr.mxu0 0.0
    %3237 = vmatpush1.msra.mxu0 0.0
    %3238 = vmatprep.mubr.f32.mxu0 0.0
    %3239 = vmatmul.mubr.f32.gmra.mrb[0].mxu0 %v3102
    %v3240 = vpop.f32.mrb[0].mxu0
    %v3241 = vadd.f32 0.0, %v3240
    %v3242 = vpop.f32.mrb[0].mxu0
    %3243 = vdwg.mxu0
    %3244 = vmatprep.subr.mxu0 0.0
    %3245 = vmatpush1.msra.mxu0 %v2602
    %3246 = vmatprep.subr.mxu0 0.0
    %3247 = vmatpush1.msra.mxu0 %v2603
    %3248 = vmatprep.subr.mxu0 0.0
    %3249 = vmatpush1.msra.mxu0 %v2604
    %3250 = vmatprep.subr.mxu0 0.0
    %3251 = vmatpush1.msra.mxu0 %v2605
    %3252 = vmatprep.subr.mxu0 0.0
    %3253 = vmatpush1.msra.mxu0 0.0
    %3254 = vmatprep.subr.mxu0 0.0
    %3255 = vmatpush1.msra.mxu0 0.0
    %3256 = vmatprep.subr.mxu0 0.0
    %3257 = vmatpush1.msra.mxu0 0.0
    %3258 = vmatprep.subr.mxu0 0.0
    %3259 = vmatpush1.msra.mxu0 0.0
    %3260 = vmatprep.subr.mxu0 0.0
    %3261 = vmatpush1.msra.mxu0 0.0
    %3262 = vmatprep.subr.mxu0 0.0
    %3263 = vmatpush1.msra.mxu0 0.0
    %3264 = vmatprep.subr.mxu0 0.0
    %3265 = vmatpush1.msra.mxu0 0.0
    %3266 = vmatprep.subr.mxu0 0.0
    %3267 = vmatpush1.msra.mxu0 0.0
    %3268 = vmatprep.subr.mxu0 0.0
    %3269 = vmatpush1.msra.mxu0 0.0
    %3270 = vmatprep.subr.mxu0 0.0
    %3271 = vmatpush1.msra.mxu0 0.0
    %3272 = vmatprep.subr.mxu0 0.0
    %3273 = vmatpush1.msra.mxu0 0.0
    %3274 = vmatprep.subr.mxu0 0.0
    %3275 = vmatpush1.msra.mxu0 0.0
    %3276 = vmatprep.subr.mxu0 0.0
    %3277 = vmatpush1.msra.mxu0 0.0
    %3278 = vmatprep.subr.mxu0 0.0
    %3279 = vmatpush1.msra.mxu0 0.0
    %3280 = vmatprep.subr.mxu0 0.0
    %3281 = vmatpush1.msra.mxu0 0.0
    %3282 = vmatprep.subr.mxu0 0.0
    %3283 = vmatpush1.msra.mxu0 0.0
    %3284 = vmatprep.subr.mxu0 0.0
    %3285 = vmatpush1.msra.mxu0 0.0
    %3286 = vmatprep.subr.mxu0 0.0
    %3287 = vmatpush1.msra.mxu0 0.0
    %3288 = vmatprep.subr.mxu0 0.0
    %3289 = vmatpush1.msra.mxu0 0.0
    %3290 = vmatprep.subr.mxu0 0.0
    %3291 = vmatpush1.msra.mxu0 0.0
    %3292 = vmatprep.subr.mxu0 0.0
    %3293 = vmatpush1.msra.mxu0 0.0
    %3294 = vmatprep.subr.mxu0 0.0
    %3295 = vmatpush1.msra.mxu0 0.0
    %3296 = vmatprep.subr.mxu0 0.0
    %3297 = vmatpush1.msra.mxu0 0.0
    %3298 = vmatprep.subr.mxu0 0.0
    %3299 = vmatpush1.msra.mxu0 0.0
    %3300 = vmatprep.subr.mxu0 0.0
    %3301 = vmatpush1.msra.mxu0 0.0
    %3302 = vmatprep.subr.mxu0 0.0
    %3303 = vmatpush1.msra.mxu0 0.0
    %3304 = vmatprep.subr.mxu0 0.0
    %3305 = vmatpush1.msra.mxu0 0.0
    %3306 = vmatprep.subr.mxu0 0.0
    %3307 = vmatpush1.msra.mxu0 0.0
    %3308 = vmatprep.mubr.f32.mxu0 0.0
    %3309 = vmatmul.mubr.f32.gmra.mrb[0].mxu0 %v3102
    %v3310 = vpop.f32.mrb[0].mxu0
    %v3311 = vadd.f32 %v3008, %v3310
    %v3312 = vpop.f32.mrb[0].mxu0
    %3313 = vdwg.mxu0
    %v3315 = vrot.slane %v3171, 6
    %v3317 = vadd.f32 %v2689, %v3315
    %v3318 = vxor.u32 %v3317, 2147483648
    %v3319 = vmul.f32 %v3318, 1.442695
    %v3320 = vpow.pop %v3319
    %v3321 = vadd.f32 %v3320, 1.0
    %v3322 = vrcp.pop %v3321
    %v3323 = vmul.f32 1.0, %v3322
    %v3325 = vrot.slane %v3241, 6
    %v3327 = vadd.f32 %v2770, %v3325
    %v3328 = vxor.u32 %v3327, 2147483648
    %v3329 = vmul.f32 %v3328, 1.442695
    %v3330 = vpow.pop %v3329
    %v3331 = vadd.f32 %v3330, 1.0
    %v3332 = vrcp.pop %v3331
    %v3333 = vmul.f32 1.0, %v3332
    %v3335 = vrot.slane %v3311, 6
    %v3337 = vmul.f32 %v3323, %v3335
    %v3338 = vadd.f32 %v2851, %v3337
    %v3339 = vtanh.pop %v3338
    %v3340 = vsub.f32 1.0, %v3333
    %v3341 = vmul.f32 %v3340, %v3339
    %v3342 = vrot.slane %v3100, 6
    %v3344 = vmul.f32 %v3333, %v3342
    %v3345 = vadd.f32 %v3341, %v3344
    %v3347 = vrot.slane %v3345, 2
    %v3348 = vsel %vm622, %v3347, 0
    %3350 = vmatprep.subr.mxu0 0.0
    %3351 = vmatpush1.msra.mxu0 %v2594
    %3352 = vmatprep.subr.mxu0 0.0
    %3353 = vmatpush1.msra.mxu0 %v2595
    %3354 = vmatprep.subr.mxu0 0.0
    %3355 = vmatpush1.msra.mxu0 %v2596
    %3356 = vmatprep.subr.mxu0 0.0
    %3357 = vmatpush1.msra.mxu0 %v2597
    %3358 = vmatprep.subr.mxu0 0.0
    %3359 = vmatpush1.msra.mxu0 0.0
    %3360 = vmatprep.subr.mxu0 0.0
    %3361 = vmatpush1.msra.mxu0 0.0
    %3362 = vmatprep.subr.mxu0 0.0
    %3363 = vmatpush1.msra.mxu0 0.0
    %3364 = vmatprep.subr.mxu0 0.0
    %3365 = vmatpush1.msra.mxu0 0.0
    %3366 = vmatprep.subr.mxu0 0.0
    %3367 = vmatpush1.msra.mxu0 0.0
    %3368 = vmatprep.subr.mxu0 0.0
    %3369 = vmatpush1.msra.mxu0 0.0
    %3370 = vmatprep.subr.mxu0 0.0
    %3371 = vmatpush1.msra.mxu0 0.0
    %3372 = vmatprep.subr.mxu0 0.0
    %3373 = vmatpush1.msra.mxu0 0.0
    %3374 = vmatprep.subr.mxu0 0.0
    %3375 = vmatpush1.msra.mxu0 0.0
    %3376 = vmatprep.subr.mxu0 0.0
    %3377 = vmatpush1.msra.mxu0 0.0
    %3378 = vmatprep.subr.mxu0 0.0
    %3379 = vmatpush1.msra.mxu0 0.0
    %3380 = vmatprep.subr.mxu0 0.0
    %3381 = vmatpush1.msra.mxu0 0.0
    %3382 = vmatprep.subr.mxu0 0.0
    %3383 = vmatpush1.msra.mxu0 0.0
    %3384 = vmatprep.subr.mxu0 0.0
    %3385 = vmatpush1.msra.mxu0 0.0
    %3386 = vmatprep.subr.mxu0 0.0
    %3387 = vmatpush1.msra.mxu0 0.0
    %3388 = vmatprep.subr.mxu0 0.0
    %3389 = vmatpush1.msra.mxu0 0.0
    %3390 = vmatprep.subr.mxu0 0.0
    %3391 = vmatpush1.msra.mxu0 0.0
    %3392 = vmatprep.subr.mxu0 0.0
    %3393 = vmatpush1.msra.mxu0 0.0
    %3394 = vmatprep.subr.mxu0 0.0
    %3395 = vmatpush1.msra.mxu0 0.0
    %3396 = vmatprep.subr.mxu0 0.0
    %3397 = vmatpush1.msra.mxu0 0.0
    %3398 = vmatprep.subr.mxu0 0.0
    %3399 = vmatpush1.msra.mxu0 0.0
    %3400 = vmatprep.subr.mxu0 0.0
    %3401 = vmatpush1.msra.mxu0 0.0
    %3402 = vmatprep.subr.mxu0 0.0
    %3403 = vmatpush1.msra.mxu0 0.0
    %3404 = vmatprep.subr.mxu0 0.0
    %3405 = vmatpush1.msra.mxu0 0.0
    %3406 = vmatprep.subr.mxu0 0.0
    %3407 = vmatpush1.msra.mxu0 0.0
    %3408 = vmatprep.subr.mxu0 0.0
    %3409 = vmatpush1.msra.mxu0 0.0
    %3410 = vmatprep.subr.mxu0 0.0
    %3411 = vmatpush1.msra.mxu0 0.0
    %3412 = vmatprep.subr.mxu0 0.0
    %3413 = vmatpush1.msra.mxu0 0.0
    %3414 = vmatprep.mubr.f32.mxu0 0.0
    %3415 = vmatmul.mubr.f32.gmra.mrb[0].mxu0 %v3348
    %v3416 = vpop.f32.mrb[0].mxu0
    %v3417 = vadd.f32 0.0, %v3416
    %v3418 = vpop.f32.mrb[0].mxu0
    %3419 = vdwg.mxu0
    %3420 = vmatprep.subr.mxu0 0.0
    %3421 = vmatpush1.msra.mxu0 %v2598
    %3422 = vmatprep.subr.mxu0 0.0
    %3423 = vmatpush1.msra.mxu0 %v2599
    %3424 = vmatprep.subr.mxu0 0.0
    %3425 = vmatpush1.msra.mxu0 %v2600
    %3426 = vmatprep.subr.mxu0 0.0
    %3427 = vmatpush1.msra.mxu0 %v2601
    %3428 = vmatprep.subr.mxu0 0.0
    %3429 = vmatpush1.msra.mxu0 0.0
    %3430 = vmatprep.subr.mxu0 0.0
    %3431 = vmatpush1.msra.mxu0 0.0
    %3432 = vmatprep.subr.mxu0 0.0
    %3433 = vmatpush1.msra.mxu0 0.0
    %3434 = vmatprep.subr.mxu0 0.0
    %3435 = vmatpush1.msra.mxu0 0.0
    %3436 = vmatprep.subr.mxu0 0.0
    %3437 = vmatpush1.msra.mxu0 0.0
    %3438 = vmatprep.subr.mxu0 0.0
    %3439 = vmatpush1.msra.mxu0 0.0
    %3440 = vmatprep.subr.mxu0 0.0
    %3441 = vmatpush1.msra.mxu0 0.0
    %3442 = vmatprep.subr.mxu0 0.0
    %3443 = vmatpush1.msra.mxu0 0.0
    %3444 = vmatprep.subr.mxu0 0.0
    %3445 = vmatpush1.msra.mxu0 0.0
    %3446 = vmatprep.subr.mxu0 0.0
    %3447 = vmatpush1.msra.mxu0 0.0
    %3448 = vmatprep.subr.mxu0 0.0
    %3449 = vmatpush1.msra.mxu0 0.0
    %3450 = vmatprep.subr.mxu0 0.0
    %3451 = vmatpush1.msra.mxu0 0.0
    %3452 = vmatprep.subr.mxu0 0.0
    %3453 = vmatpush1.msra.mxu0 0.0
    %3454 = vmatprep.subr.mxu0 0.0
    %3455 = vmatpush1.msra.mxu0 0.0
    %3456 = vmatprep.subr.mxu0 0.0
    %3457 = vmatpush1.msra.mxu0 0.0
    %3458 = vmatprep.subr.mxu0 0.0
    %3459 = vmatpush1.msra.mxu0 0.0
    %3460 = vmatprep.subr.mxu0 0.0
    %3461 = vmatpush1.msra.mxu0 0.0
    %3462 = vmatprep.subr.mxu0 0.0
    %3463 = vmatpush1.msra.mxu0 0.0
    %3464 = vmatprep.subr.mxu0 0.0
    %3465 = vmatpush1.msra.mxu0 0.0
    %3466 = vmatprep.subr.mxu0 0.0
    %3467 = vmatpush1.msra.mxu0 0.0
    %3468 = vmatprep.subr.mxu0 0.0
    %3469 = vmatpush1.msra.mxu0 0.0
    %3470 = vmatprep.subr.mxu0 0.0
    %3471 = vmatpush1.msra.mxu0 0.0
    %3472 = vmatprep.subr.mxu0 0.0
    %3473 = vmatpush1.msra.mxu0 0.0
    %3474 = vmatprep.subr.mxu0 0.0
    %3475 = vmatpush1.msra.mxu0 0.0
    %3476 = vmatprep.subr.mxu0 0.0
    %3477 = vmatpush1.msra.mxu0 0.0
    %3478 = vmatprep.subr.mxu0 0.0
    %3479 = vmatpush1.msra.mxu0 0.0
    %3480 = vmatprep.subr.mxu0 0.0
    %3481 = vmatpush1.msra.mxu0 0.0
    %3482 = vmatprep.subr.mxu0 0.0
    %3483 = vmatpush1.msra.mxu0 0.0
    %3484 = vmatprep.mubr.f32.mxu0 0.0
    %3485 = vmatmul.mubr.f32.gmra.mrb[0].mxu0 %v3348
    %v3486 = vpop.f32.mrb[0].mxu0
    %v3487 = vadd.f32 0.0, %v3486
    %v3488 = vpop.f32.mrb[0].mxu0
    %3489 = vdwg.mxu0
    %3490 = vmatprep.subr.mxu0 0.0
    %3491 = vmatpush1.msra.mxu0 %v2602
    %3492 = vmatprep.subr.mxu0 0.0
    %3493 = vmatpush1.msra.mxu0 %v2603
    %3494 = vmatprep.subr.mxu0 0.0
    %3495 = vmatpush1.msra.mxu0 %v2604
    %3496 = vmatprep.subr.mxu0 0.0
    %3497 = vmatpush1.msra.mxu0 %v2605
    %3498 = vmatprep.subr.mxu0 0.0
    %3499 = vmatpush1.msra.mxu0 0.0
    %3500 = vmatprep.subr.mxu0 0.0
    %3501 = vmatpush1.msra.mxu0 0.0
    %3502 = vmatprep.subr.mxu0 0.0
    %3503 = vmatpush1.msra.mxu0 0.0
    %3504 = vmatprep.subr.mxu0 0.0
    %3505 = vmatpush1.msra.mxu0 0.0
    %3506 = vmatprep.subr.mxu0 0.0
    %3507 = vmatpush1.msra.mxu0 0.0
    %3508 = vmatprep.subr.mxu0 0.0
    %3509 = vmatpush1.msra.mxu0 0.0
    %3510 = vmatprep.subr.mxu0 0.0
    %3511 = vmatpush1.msra.mxu0 0.0
    %3512 = vmatprep.subr.mxu0 0.0
    %3513 = vmatpush1.msra.mxu0 0.0
    %3514 = vmatprep.subr.mxu0 0.0
    %3515 = vmatpush1.msra.mxu0 0.0
    %3516 = vmatprep.subr.mxu0 0.0
    %3517 = vmatpush1.msra.mxu0 0.0
    %3518 = vmatprep.subr.mxu0 0.0
    %3519 = vmatpush1.msra.mxu0 0.0
    %3520 = vmatprep.subr.mxu0 0.0
    %3521 = vmatpush1.msra.mxu0 0.0
    %3522 = vmatprep.subr.mxu0 0.0
    %3523 = vmatpush1.msra.mxu0 0.0
    %3524 = vmatprep.subr.mxu0 0.0
    %3525 = vmatpush1.msra.mxu0 0.0
    %3526 = vmatprep.subr.mxu0 0.0
    %3527 = vmatpush1.msra.mxu0 0.0
    %3528 = vmatprep.subr.mxu0 0.0
    %3529 = vmatpush1.msra.mxu0 0.0
    %3530 = vmatprep.subr.mxu0 0.0
    %3531 = vmatpush1.msra.mxu0 0.0
    %3532 = vmatprep.subr.mxu0 0.0
    %3533 = vmatpush1.msra.mxu0 0.0
    %3534 = vmatprep.subr.mxu0 0.0
    %3535 = vmatpush1.msra.mxu0 0.0
    %3536 = vmatprep.subr.mxu0 0.0
    %3537 = vmatpush1.msra.mxu0 0.0
    %3538 = vmatprep.subr.mxu0 0.0
    %3539 = vmatpush1.msra.mxu0 0.0
    %3540 = vmatprep.subr.mxu0 0.0
    %3541 = vmatpush1.msra.mxu0 0.0
    %3542 = vmatprep.subr.mxu0 0.0
    %3543 = vmatpush1.msra.mxu0 0.0
    %3544 = vmatprep.subr.mxu0 0.0
    %3545 = vmatpush1.msra.mxu0 0.0
    %3546 = vmatprep.subr.mxu0 0.0
    %3547 = vmatpush1.msra.mxu0 0.0
    %3548 = vmatprep.subr.mxu0 0.0
    %3549 = vmatpush1.msra.mxu0 0.0
    %3550 = vmatprep.subr.mxu0 0.0
    %3551 = vmatpush1.msra.mxu0 0.0
    %3552 = vmatprep.subr.mxu0 0.0
    %3553 = vmatpush1.msra.mxu0 0.0
    %3554 = vmatprep.mubr.f32.mxu0 0.0
    %3555 = vmatmul.mubr.f32.gmra.mrb[0].mxu0 %v3348
    %v3556 = vpop.f32.mrb[0].mxu0
    %v3557 = vadd.f32 %v3008, %v3556
    %v3558 = vpop.f32.mrb[0].mxu0
    %3559 = vdwg.mxu0
    %v3561 = vrot.slane %v3417, 4
    %v3563 = vadd.f32 %v2689, %v3561
    %v3564 = vxor.u32 %v3563, 2147483648
    %v3565 = vmul.f32 %v3564, 1.442695
    %v3566 = vpow.pop %v3565
    %v3567 = vadd.f32 %v3566, 1.0
    %v3568 = vrcp.pop %v3567
    %v3569 = vmul.f32 1.0, %v3568
    %v3571 = vrot.slane %v3487, 4
    %v3573 = vadd.f32 %v2770, %v3571
    %v3574 = vxor.u32 %v3573, 2147483648
    %v3575 = vmul.f32 %v3574, 1.442695
    %v3576 = vpow.pop %v3575
    %v3577 = vadd.f32 %v3576, 1.0
    %v3578 = vrcp.pop %v3577
    %v3579 = vmul.f32 1.0, %v3578
    %v3581 = vrot.slane %v3557, 4
    %v3583 = vmul.f32 %v3569, %v3581
    %v3584 = vadd.f32 %v2851, %v3583
    %v3585 = vtanh.pop %v3584
    %v3586 = vsub.f32 1.0, %v3579
    %v3587 = vmul.f32 %v3586, %v3585
    %v3588 = vrot.slane %v3345, 6
    %v3590 = vmul.f32 %v3579, %v3588
    %v3591 = vadd.f32 %v3587, %v3590
    %v3593 = vrot.slane %v3591, 4
    %v3594 = vsel %vm622, %v3593, 0
    %3596 = vmatprep.subr.mxu0 0.0
    %3597 = vmatpush1.msra.mxu0 %v2594
    %3598 = vmatprep.subr.mxu0 0.0
    %3599 = vmatpush1.msra.mxu0 %v2595
    %3600 = vmatprep.subr.mxu0 0.0
    %3601 = vmatpush1.msra.mxu0 %v2596
    %3602 = vmatprep.subr.mxu0 0.0
    %3603 = vmatpush1.msra.mxu0 %v2597
    %3604 = vmatprep.subr.mxu0 0.0
    %3605 = vmatpush1.msra.mxu0 0.0
    %3606 = vmatprep.subr.mxu0 0.0
    %3607 = vmatpush1.msra.mxu0 0.0
    %3608 = vmatprep.subr.mxu0 0.0
    %3609 = vmatpush1.msra.mxu0 0.0
    %3610 = vmatprep.subr.mxu0 0.0
    %3611 = vmatpush1.msra.mxu0 0.0
    %3612 = vmatprep.subr.mxu0 0.0
    %3613 = vmatpush1.msra.mxu0 0.0
    %3614 = vmatprep.subr.mxu0 0.0
    %3615 = vmatpush1.msra.mxu0 0.0
    %3616 = vmatprep.subr.mxu0 0.0
    %3617 = vmatpush1.msra.mxu0 0.0
    %3618 = vmatprep.subr.mxu0 0.0
    %3619 = vmatpush1.msra.mxu0 0.0
    %3620 = vmatprep.subr.mxu0 0.0
    %3621 = vmatpush1.msra.mxu0 0.0
    %3622 = vmatprep.subr.mxu0 0.0
    %3623 = vmatpush1.msra.mxu0 0.0
    %3624 = vmatprep.subr.mxu0 0.0
    %3625 = vmatpush1.msra.mxu0 0.0
    %3626 = vmatprep.subr.mxu0 0.0
    %3627 = vmatpush1.msra.mxu0 0.0
    %3628 = vmatprep.subr.mxu0 0.0
    %3629 = vmatpush1.msra.mxu0 0.0
    %3630 = vmatprep.subr.mxu0 0.0
    %3631 = vmatpush1.msra.mxu0 0.0
    %3632 = vmatprep.subr.mxu0 0.0
    %3633 = vmatpush1.msra.mxu0 0.0
    %3634 = vmatprep.subr.mxu0 0.0
    %3635 = vmatpush1.msra.mxu0 0.0
    %3636 = vmatprep.subr.mxu0 0.0
    %3637 = vmatpush1.msra.mxu0 0.0
    %3638 = vmatprep.subr.mxu0 0.0
    %3639 = vmatpush1.msra.mxu0 0.0
    %3640 = vmatprep.subr.mxu0 0.0
    %3641 = vmatpush1.msra.mxu0 0.0
    %3642 = vmatprep.subr.mxu0 0.0
    %3643 = vmatpush1.msra.mxu0 0.0
    %3644 = vmatprep.subr.mxu0 0.0
    %3645 = vmatpush1.msra.mxu0 0.0
    %3646 = vmatprep.subr.mxu0 0.0
    %3647 = vmatpush1.msra.mxu0 0.0
    %3648 = vmatprep.subr.mxu0 0.0
    %3649 = vmatpush1.msra.mxu0 0.0
    %3650 = vmatprep.subr.mxu0 0.0
    %3651 = vmatpush1.msra.mxu0 0.0
    %3652 = vmatprep.subr.mxu0 0.0
    %3653 = vmatpush1.msra.mxu0 0.0
    %3654 = vmatprep.subr.mxu0 0.0
    %3655 = vmatpush1.msra.mxu0 0.0
    %3656 = vmatprep.subr.mxu0 0.0
    %3657 = vmatpush1.msra.mxu0 0.0
    %3658 = vmatprep.subr.mxu0 0.0
    %3659 = vmatpush1.msra.mxu0 0.0
    %3660 = vmatprep.mubr.f32.mxu0 0.0
    %3661 = vmatmul.mubr.f32.gmra.mrb[0].mxu0 %v3594
    %v3662 = vpop.f32.mrb[0].mxu0
    %v3663 = vadd.f32 0.0, %v3662
    %v3664 = vpop.f32.mrb[0].mxu0
    %3665 = vdwg.mxu0
    %3666 = vmatprep.subr.mxu0 0.0
    %3667 = vmatpush1.msra.mxu0 %v2598
    %3668 = vmatprep.subr.mxu0 0.0
    %3669 = vmatpush1.msra.mxu0 %v2599
    %3670 = vmatprep.subr.mxu0 0.0
    %3671 = vmatpush1.msra.mxu0 %v2600
    %3672 = vmatprep.subr.mxu0 0.0
    %3673 = vmatpush1.msra.mxu0 %v2601
    %3674 = vmatprep.subr.mxu0 0.0
    %3675 = vmatpush1.msra.mxu0 0.0
    %3676 = vmatprep.subr.mxu0 0.0
    %3677 = vmatpush1.msra.mxu0 0.0
    %3678 = vmatprep.subr.mxu0 0.0
    %3679 = vmatpush1.msra.mxu0 0.0
    %3680 = vmatprep.subr.mxu0 0.0
    %3681 = vmatpush1.msra.mxu0 0.0
    %3682 = vmatprep.subr.mxu0 0.0
    %3683 = vmatpush1.msra.mxu0 0.0
    %3684 = vmatprep.subr.mxu0 0.0
    %3685 = vmatpush1.msra.mxu0 0.0
    %3686 = vmatprep.subr.mxu0 0.0
    %3687 = vmatpush1.msra.mxu0 0.0
    %3688 = vmatprep.subr.mxu0 0.0
    %3689 = vmatpush1.msra.mxu0 0.0
    %3690 = vmatprep.subr.mxu0 0.0
    %3691 = vmatpush1.msra.mxu0 0.0
    %3692 = vmatprep.subr.mxu0 0.0
    %3693 = vmatpush1.msra.mxu0 0.0
    %3694 = vmatprep.subr.mxu0 0.0
    %3695 = vmatpush1.msra.mxu0 0.0
    %3696 = vmatprep.subr.mxu0 0.0
    %3697 = vmatpush1.msra.mxu0 0.0
    %3698 = vmatprep.subr.mxu0 0.0
    %3699 = vmatpush1.msra.mxu0 0.0
    %3700 = vmatprep.subr.mxu0 0.0
    %3701 = vmatpush1.msra.mxu0 0.0
    %3702 = vmatprep.subr.mxu0 0.0
    %3703 = vmatpush1.msra.mxu0 0.0
    %3704 = vmatprep.subr.mxu0 0.0
    %3705 = vmatpush1.msra.mxu0 0.0
    %3706 = vmatprep.subr.mxu0 0.0
    %3707 = vmatpush1.msra.mxu0 0.0
    %3708 = vmatprep.subr.mxu0 0.0
    %3709 = vmatpush1.msra.mxu0 0.0
    %3710 = vmatprep.subr.mxu0 0.0
    %3711 = vmatpush1.msra.mxu0 0.0
    %3712 = vmatprep.subr.mxu0 0.0
    %3713 = vmatpush1.msra.mxu0 0.0
    %3714 = vmatprep.subr.mxu0 0.0
    %3715 = vmatpush1.msra.mxu0 0.0
    %3716 = vmatprep.subr.mxu0 0.0
    %3717 = vmatpush1.msra.mxu0 0.0
    %3718 = vmatprep.subr.mxu0 0.0
    %3719 = vmatpush1.msra.mxu0 0.0
    %3720 = vmatprep.subr.mxu0 0.0
    %3721 = vmatpush1.msra.mxu0 0.0
    %3722 = vmatprep.subr.mxu0 0.0
    %3723 = vmatpush1.msra.mxu0 0.0
    %3724 = vmatprep.subr.mxu0 0.0
    %3725 = vmatpush1.msra.mxu0 0.0
    %3726 = vmatprep.subr.mxu0 0.0
    %3727 = vmatpush1.msra.mxu0 0.0
    %3728 = vmatprep.subr.mxu0 0.0
    %3729 = vmatpush1.msra.mxu0 0.0
    %3730 = vmatprep.mubr.f32.mxu0 0.0
    %3731 = vmatmul.mubr.f32.gmra.mrb[0].mxu0 %v3594
    %v3732 = vpop.f32.mrb[0].mxu0
    %v3733 = vadd.f32 0.0, %v3732
    %v3734 = vpop.f32.mrb[0].mxu0
    %3735 = vdwg.mxu0
    %3736 = vmatprep.subr.mxu0 0.0
    %3737 = vmatpush1.msra.mxu0 %v2602
    %3738 = vmatprep.subr.mxu0 0.0
    %3739 = vmatpush1.msra.mxu0 %v2603
    %3740 = vmatprep.subr.mxu0 0.0
    %3741 = vmatpush1.msra.mxu0 %v2604
    %3742 = vmatprep.subr.mxu0 0.0
    %3743 = vmatpush1.msra.mxu0 %v2605
    %3744 = vmatprep.subr.mxu0 0.0
    %3745 = vmatpush1.msra.mxu0 0.0
    %3746 = vmatprep.subr.mxu0 0.0
    %3747 = vmatpush1.msra.mxu0 0.0
    %3748 = vmatprep.subr.mxu0 0.0
    %3749 = vmatpush1.msra.mxu0 0.0
    %3750 = vmatprep.subr.mxu0 0.0
    %3751 = vmatpush1.msra.mxu0 0.0
    %3752 = vmatprep.subr.mxu0 0.0
    %3753 = vmatpush1.msra.mxu0 0.0
    %3754 = vmatprep.subr.mxu0 0.0
    %3755 = vmatpush1.msra.mxu0 0.0
    %3756 = vmatprep.subr.mxu0 0.0
    %3757 = vmatpush1.msra.mxu0 0.0
    %3758 = vmatprep.subr.mxu0 0.0
    %3759 = vmatpush1.msra.mxu0 0.0
    %3760 = vmatprep.subr.mxu0 0.0
    %3761 = vmatpush1.msra.mxu0 0.0
    %3762 = vmatprep.subr.mxu0 0.0
    %3763 = vmatpush1.msra.mxu0 0.0
    %3764 = vmatprep.subr.mxu0 0.0
    %3765 = vmatpush1.msra.mxu0 0.0
    %3766 = vmatprep.subr.mxu0 0.0
    %3767 = vmatpush1.msra.mxu0 0.0
    %3768 = vmatprep.subr.mxu0 0.0
    %3769 = vmatpush1.msra.mxu0 0.0
    %3770 = vmatprep.subr.mxu0 0.0
    %3771 = vmatpush1.msra.mxu0 0.0
    %3772 = vmatprep.subr.mxu0 0.0
    %3773 = vmatpush1.msra.mxu0 0.0
    %3774 = vmatprep.subr.mxu0 0.0
    %3775 = vmatpush1.msra.mxu0 0.0
    %3776 = vmatprep.subr.mxu0 0.0
    %3777 = vmatpush1.msra.mxu0 0.0
    %3778 = vmatprep.subr.mxu0 0.0
    %3779 = vmatpush1.msra.mxu0 0.0
    %3780 = vmatprep.subr.mxu0 0.0
    %3781 = vmatpush1.msra.mxu0 0.0
    %3782 = vmatprep.subr.mxu0 0.0
    %3783 = vmatpush1.msra.mxu0 0.0
    %3784 = vmatprep.subr.mxu0 0.0
    %3785 = vmatpush1.msra.mxu0 0.0
    %3786 = vmatprep.subr.mxu0 0.0
    %3787 = vmatpush1.msra.mxu0 0.0
    %3788 = vmatprep.subr.mxu0 0.0
    %3789 = vmatpush1.msra.mxu0 0.0
    %3790 = vmatprep.subr.mxu0 0.0
    %3791 = vmatpush1.msra.mxu0 0.0
    %3792 = vmatprep.subr.mxu0 0.0
    %3793 = vmatpush1.msra.mxu0 0.0
    %3794 = vmatprep.subr.mxu0 0.0
    %3795 = vmatpush1.msra.mxu0 0.0
    %3796 = vmatprep.subr.mxu0 0.0
    %3797 = vmatpush1.msra.mxu0 0.0
    %3798 = vmatprep.subr.mxu0 0.0
    %3799 = vmatpush1.msra.mxu0 0.0
    %3800 = vmatprep.mubr.f32.mxu0 0.0
    %3801 = vmatmul.mubr.f32.gmra.mrb[0].mxu0 %v3594
    %v3802 = vpop.f32.mrb[0].mxu0
    %v3803 = vadd.f32 %v3008, %v3802
    %v3804 = vpop.f32.mrb[0].mxu0
    %3805 = vdwg.mxu0
    %v3807 = vrot.slane %v3663, 2
    %v3809 = vadd.f32 %v2689, %v3807
    %v3810 = vxor.u32 %v3809, 2147483648
    %v3811 = vmul.f32 %v3810, 1.442695
    %v3812 = vpow.pop %v3811
    %v3813 = vadd.f32 %v3812, 1.0
    %v3814 = vrcp.pop %v3813
    %v3815 = vmul.f32 1.0, %v3814
    %v3817 = vrot.slane %v3733, 2
    %v3819 = vadd.f32 %v2770, %v3817
    %v3820 = vxor.u32 %v3819, 2147483648
    %v3821 = vmul.f32 %v3820, 1.442695
    %v3822 = vpow.pop %v3821
    %v3823 = vadd.f32 %v3822, 1.0
    %v3824 = vrcp.pop %v3823
    %v3825 = vmul.f32 1.0, %v3824
    %v3827 = vrot.slane %v3803, 2
    %v3829 = vmul.f32 %v3815, %v3827
    %v3830 = vadd.f32 %v2851, %v3829
    %v3831 = vtanh.pop %v3830
    %v3832 = vsub.f32 1.0, %v3825
    %v3833 = vmul.f32 %v3832, %v3831
    %v3834 = vrot.slane %v3591, 6
    %v3836 = vmul.f32 %v3825, %v3834
    %v3837 = vadd.f32 %v3833, %v3836
    %v3839 = vrot.slane %v3837, 6
    %v3840 = vsel %vm622, %v3839, 0
    %3842 = vmatprep.subr.mxu0 0.0
    %3843 = vmatpush1.msra.mxu0 %v2594
    %3844 = vmatprep.subr.mxu0 0.0
    %3845 = vmatpush1.msra.mxu0 %v2595
    %3846 = vmatprep.subr.mxu0 0.0
    %3847 = vmatpush1.msra.mxu0 %v2596
    %3848 = vmatprep.subr.mxu0 0.0
    %3849 = vmatpush1.msra.mxu0 %v2597
    %3850 = vmatprep.subr.mxu0 0.0
    %3851 = vmatpush1.msra.mxu0 0.0
    %3852 = vmatprep.subr.mxu0 0.0
    %3853 = vmatpush1.msra.mxu0 0.0
    %3854 = vmatprep.subr.mxu0 0.0
    %3855 = vmatpush1.msra.mxu0 0.0
    %3856 = vmatprep.subr.mxu0 0.0
    %3857 = vmatpush1.msra.mxu0 0.0
    %3858 = vmatprep.subr.mxu0 0.0
    %3859 = vmatpush1.msra.mxu0 0.0
    %3860 = vmatprep.subr.mxu0 0.0
    %3861 = vmatpush1.msra.mxu0 0.0
    %3862 = vmatprep.subr.mxu0 0.0
    %3863 = vmatpush1.msra.mxu0 0.0
    %3864 = vmatprep.subr.mxu0 0.0
    %3865 = vmatpush1.msra.mxu0 0.0
    %3866 = vmatprep.subr.mxu0 0.0
    %3867 = vmatpush1.msra.mxu0 0.0
    %3868 = vmatprep.subr.mxu0 0.0
    %3869 = vmatpush1.msra.mxu0 0.0
    %3870 = vmatprep.subr.mxu0 0.0
    %3871 = vmatpush1.msra.mxu0 0.0
    %3872 = vmatprep.subr.mxu0 0.0
    %3873 = vmatpush1.msra.mxu0 0.0
    %3874 = vmatprep.subr.mxu0 0.0
    %3875 = vmatpush1.msra.mxu0 0.0
    %3876 = vmatprep.subr.mxu0 0.0
    %3877 = vmatpush1.msra.mxu0 0.0
    %3878 = vmatprep.subr.mxu0 0.0
    %3879 = vmatpush1.msra.mxu0 0.0
    %3880 = vmatprep.subr.mxu0 0.0
    %3881 = vmatpush1.msra.mxu0 0.0
    %3882 = vmatprep.subr.mxu0 0.0
    %3883 = vmatpush1.msra.mxu0 0.0
    %3884 = vmatprep.subr.mxu0 0.0
    %3885 = vmatpush1.msra.mxu0 0.0
    %3886 = vmatprep.subr.mxu0 0.0
    %3887 = vmatpush1.msra.mxu0 0.0
    %3888 = vmatprep.subr.mxu0 0.0
    %3889 = vmatpush1.msra.mxu0 0.0
    %3890 = vmatprep.subr.mxu0 0.0
    %3891 = vmatpush1.msra.mxu0 0.0
    %3892 = vmatprep.subr.mxu0 0.0
    %3893 = vmatpush1.msra.mxu0 0.0
    %3894 = vmatprep.subr.mxu0 0.0
    %3895 = vmatpush1.msra.mxu0 0.0
    %3896 = vmatprep.subr.mxu0 0.0
    %3897 = vmatpush1.msra.mxu0 0.0
    %3898 = vmatprep.subr.mxu0 0.0
    %3899 = vmatpush1.msra.mxu0 0.0
    %3900 = vmatprep.subr.mxu0 0.0
    %3901 = vmatpush1.msra.mxu0 0.0
    %3902 = vmatprep.subr.mxu0 0.0
    %3903 = vmatpush1.msra.mxu0 0.0
    %3904 = vmatprep.subr.mxu0 0.0
    %3905 = vmatpush1.msra.mxu0 0.0
    %3906 = vmatprep.mubr.f32.mxu0 0.0
    %3907 = vmatmul.mubr.f32.gmra.mrb[0].mxu0 %v3840
    %v3908 = vpop.f32.mrb[0].mxu0
    %v3909 = vadd.f32 0.0, %v3908
    %v3910 = vpop.f32.mrb[0].mxu0
    %3911 = vdwg.mxu0
    %3912 = vmatprep.subr.mxu0 0.0
    %3913 = vmatpush1.msra.mxu0 %v2598
    %3914 = vmatprep.subr.mxu0 0.0
    %3915 = vmatpush1.msra.mxu0 %v2599
    %3916 = vmatprep.subr.mxu0 0.0
    %3917 = vmatpush1.msra.mxu0 %v2600
    %3918 = vmatprep.subr.mxu0 0.0
    %3919 = vmatpush1.msra.mxu0 %v2601
    %3920 = vmatprep.subr.mxu0 0.0
    %3921 = vmatpush1.msra.mxu0 0.0
    %3922 = vmatprep.subr.mxu0 0.0
    %3923 = vmatpush1.msra.mxu0 0.0
    %3924 = vmatprep.subr.mxu0 0.0
    %3925 = vmatpush1.msra.mxu0 0.0
    %3926 = vmatprep.subr.mxu0 0.0
    %3927 = vmatpush1.msra.mxu0 0.0
    %3928 = vmatprep.subr.mxu0 0.0
    %3929 = vmatpush1.msra.mxu0 0.0
    %3930 = vmatprep.subr.mxu0 0.0
    %3931 = vmatpush1.msra.mxu0 0.0
    %3932 = vmatprep.subr.mxu0 0.0
    %3933 = vmatpush1.msra.mxu0 0.0
    %3934 = vmatprep.subr.mxu0 0.0
    %3935 = vmatpush1.msra.mxu0 0.0
    %3936 = vmatprep.subr.mxu0 0.0
    %3937 = vmatpush1.msra.mxu0 0.0
    %3938 = vmatprep.subr.mxu0 0.0
    %3939 = vmatpush1.msra.mxu0 0.0
    %3940 = vmatprep.subr.mxu0 0.0
    %3941 = vmatpush1.msra.mxu0 0.0
    %3942 = vmatprep.subr.mxu0 0.0
    %3943 = vmatpush1.msra.mxu0 0.0
    %3944 = vmatprep.subr.mxu0 0.0
    %3945 = vmatpush1.msra.mxu0 0.0
    %3946 = vmatprep.subr.mxu0 0.0
    %3947 = vmatpush1.msra.mxu0 0.0
    %3948 = vmatprep.subr.mxu0 0.0
    %3949 = vmatpush1.msra.mxu0 0.0
    %3950 = vmatprep.subr.mxu0 0.0
    %3951 = vmatpush1.msra.mxu0 0.0
    %3952 = vmatprep.subr.mxu0 0.0
    %3953 = vmatpush1.msra.mxu0 0.0
    %3954 = vmatprep.subr.mxu0 0.0
    %3955 = vmatpush1.msra.mxu0 0.0
    %3956 = vmatprep.subr.mxu0 0.0
    %3957 = vmatpush1.msra.mxu0 0.0
    %3958 = vmatprep.subr.mxu0 0.0
    %3959 = vmatpush1.msra.mxu0 0.0
    %3960 = vmatprep.subr.mxu0 0.0
    %3961 = vmatpush1.msra.mxu0 0.0
    %3962 = vmatprep.subr.mxu0 0.0
    %3963 = vmatpush1.msra.mxu0 0.0
    %3964 = vmatprep.subr.mxu0 0.0
    %3965 = vmatpush1.msra.mxu0 0.0
    %3966 = vmatprep.subr.mxu0 0.0
    %3967 = vmatpush1.msra.mxu0 0.0
    %3968 = vmatprep.subr.mxu0 0.0
    %3969 = vmatpush1.msra.mxu0 0.0
    %3970 = vmatprep.subr.mxu0 0.0
    %3971 = vmatpush1.msra.mxu0 0.0
    %3972 = vmatprep.subr.mxu0 0.0
    %3973 = vmatpush1.msra.mxu0 0.0
    %3974 = vmatprep.subr.mxu0 0.0
    %3975 = vmatpush1.msra.mxu0 0.0
    %3976 = vmatprep.mubr.f32.mxu0 0.0
    %3977 = vmatmul.mubr.f32.gmra.mrb[0].mxu0 %v3840
    %v3978 = vpop.f32.mrb[0].mxu0
    %v3979 = vadd.f32 0.0, %v3978
    %v3980 = vpop.f32.mrb[0].mxu0
    %3981 = vdwg.mxu0
    %3982 = vmatprep.subr.mxu0 0.0
    %3983 = vmatpush1.msra.mxu0 %v2602
    %3984 = vmatprep.subr.mxu0 0.0
    %3985 = vmatpush1.msra.mxu0 %v2603
    %3986 = vmatprep.subr.mxu0 0.0
    %3987 = vmatpush1.msra.mxu0 %v2604
    %3988 = vmatprep.subr.mxu0 0.0
    %3989 = vmatpush1.msra.mxu0 %v2605
    %3990 = vmatprep.subr.mxu0 0.0
    %3991 = vmatpush1.msra.mxu0 0.0
    %3992 = vmatprep.subr.mxu0 0.0
    %3993 = vmatpush1.msra.mxu0 0.0
    %3994 = vmatprep.subr.mxu0 0.0
    %3995 = vmatpush1.msra.mxu0 0.0
    %3996 = vmatprep.subr.mxu0 0.0
    %3997 = vmatpush1.msra.mxu0 0.0
    %3998 = vmatprep.subr.mxu0 0.0
    %3999 = vmatpush1.msra.mxu0 0.0
    %4000 = vmatprep.subr.mxu0 0.0
    %4001 = vmatpush1.msra.mxu0 0.0
    %4002 = vmatprep.subr.mxu0 0.0
    %4003 = vmatpush1.msra.mxu0 0.0
    %4004 = vmatprep.subr.mxu0 0.0
    %4005 = vmatpush1.msra.mxu0 0.0
    %4006 = vmatprep.subr.mxu0 0.0
    %4007 = vmatpush1.msra.mxu0 0.0
    %4008 = vmatprep.subr.mxu0 0.0
    %4009 = vmatpush1.msra.mxu0 0.0
    %4010 = vmatprep.subr.mxu0 0.0
    %4011 = vmatpush1.msra.mxu0 0.0
    %4012 = vmatprep.subr.mxu0 0.0
    %4013 = vmatpush1.msra.mxu0 0.0
    %4014 = vmatprep.subr.mxu0 0.0
    %4015 = vmatpush1.msra.mxu0 0.0
    %4016 = vmatprep.subr.mxu0 0.0
    %4017 = vmatpush1.msra.mxu0 0.0
    %4018 = vmatprep.subr.mxu0 0.0
    %4019 = vmatpush1.msra.mxu0 0.0
    %4020 = vmatprep.subr.mxu0 0.0
    %4021 = vmatpush1.msra.mxu0 0.0
    %4022 = vmatprep.subr.mxu0 0.0
    %4023 = vmatpush1.msra.mxu0 0.0
    %4024 = vmatprep.subr.mxu0 0.0
    %4025 = vmatpush1.msra.mxu0 0.0
    %4026 = vmatprep.subr.mxu0 0.0
    %4027 = vmatpush1.msra.mxu0 0.0
    %4028 = vmatprep.subr.mxu0 0.0
    %4029 = vmatpush1.msra.mxu0 0.0
    %4030 = vmatprep.subr.mxu0 0.0
    %4031 = vmatpush1.msra.mxu0 0.0
    %4032 = vmatprep.subr.mxu0 0.0
    %4033 = vmatpush1.msra.mxu0 0.0
    %4034 = vmatprep.subr.mxu0 0.0
    %4035 = vmatpush1.msra.mxu0 0.0
    %4036 = vmatprep.subr.mxu0 0.0
    %4037 = vmatpush1.msra.mxu0 0.0
    %4038 = vmatprep.subr.mxu0 0.0
    %4039 = vmatpush1.msra.mxu0 0.0
    %4040 = vmatprep.subr.mxu0 0.0
    %4041 = vmatpush1.msra.mxu0 0.0
    %4042 = vmatprep.subr.mxu0 0.0
    %4043 = vmatpush1.msra.mxu0 0.0
    %4044 = vmatprep.subr.mxu0 0.0
    %4045 = vmatpush1.msra.mxu0 0.0
    %4046 = vmatprep.mubr.f32.mxu0 0.0
    %4047 = vmatmul.mubr.f32.gmra.mrb[0].mxu0 %v3840
    %v4048 = vpop.f32.mrb[0].mxu0
    %v4049 = vadd.f32 %v3008, %v4048
    %v4050 = vpop.f32.mrb[0].mxu0
    %4051 = vdwg.mxu0
    %v4052 = vadd.f32 %v2694, %v3909
    %v4053 = vxor.u32 %v4052, 2147483648
    %v4054 = vmul.f32 %v4053, 1.442695
    %v4055 = vpow.pop %v4054
    %v4056 = vadd.f32 %v4055, 1.0
    %v4057 = vrcp.pop %v4056
    %v4058 = vmul.f32 1.0, %v4057
    %v4059 = vadd.f32 %v2775, %v3979
    %v4060 = vxor.u32 %v4059, 2147483648
    %v4061 = vmul.f32 %v4060, 1.442695
    %v4062 = vpow.pop %v4061
    %v4063 = vadd.f32 %v4062, 1.0
    %v4064 = vrcp.pop %v4063
    %v4065 = vmul.f32 1.0, %v4064
    %v4066 = vmul.f32 %v4058, %v4049
    %v4067 = vadd.f32 %v2856, %v4066
    %v4068 = vtanh.pop %v4067
    %v4069 = vsub.f32 1.0, %v4065
    %v4070 = vmul.f32 %v4069, %v4068
    %v4072 = vmul.f32 %v4065, %v3839
    %v4073 = vadd.f32 %v4070, %v4072
    %v4075 = vsel %vm622, %v4073, 0
    %4077 = vmatprep.subr.mxu0 0.0
    %4078 = vmatpush1.msra.mxu0 %v2594
    %4079 = vmatprep.subr.mxu0 0.0
    %4080 = vmatpush1.msra.mxu0 %v2595
    %4081 = vmatprep.subr.mxu0 0.0
    %4082 = vmatpush1.msra.mxu0 %v2596
    %4083 = vmatprep.subr.mxu0 0.0
    %4084 = vmatpush1.msra.mxu0 %v2597
    %4085 = vmatprep.subr.mxu0 0.0
    %4086 = vmatpush1.msra.mxu0 0.0
    %4087 = vmatprep.subr.mxu0 0.0
    %4088 = vmatpush1.msra.mxu0 0.0
    %4089 = vmatprep.subr.mxu0 0.0
    %4090 = vmatpush1.msra.mxu0 0.0
    %4091 = vmatprep.subr.mxu0 0.0
    %4092 = vmatpush1.msra.mxu0 0.0
    %4093 = vmatprep.subr.mxu0 0.0
    %4094 = vmatpush1.msra.mxu0 0.0
    %4095 = vmatprep.subr.mxu0 0.0
    %4096 = vmatpush1.msra.mxu0 0.0
    %4097 = vmatprep.subr.mxu0 0.0
    %4098 = vmatpush1.msra.mxu0 0.0
    %4099 = vmatprep.subr.mxu0 0.0
    %4100 = vmatpush1.msra.mxu0 0.0
    %4101 = vmatprep.subr.mxu0 0.0
    %4102 = vmatpush1.msra.mxu0 0.0
    %4103 = vmatprep.subr.mxu0 0.0
    %4104 = vmatpush1.msra.mxu0 0.0
    %4105 = vmatprep.subr.mxu0 0.0
    %4106 = vmatpush1.msra.mxu0 0.0
    %4107 = vmatprep.subr.mxu0 0.0
    %4108 = vmatpush1.msra.mxu0 0.0
    %4109 = vmatprep.subr.mxu0 0.0
    %4110 = vmatpush1.msra.mxu0 0.0
    %4111 = vmatprep.subr.mxu0 0.0
    %4112 = vmatpush1.msra.mxu0 0.0
    %4113 = vmatprep.subr.mxu0 0.0
    %4114 = vmatpush1.msra.mxu0 0.0
    %4115 = vmatprep.subr.mxu0 0.0
    %4116 = vmatpush1.msra.mxu0 0.0
    %4117 = vmatprep.subr.mxu0 0.0
    %4118 = vmatpush1.msra.mxu0 0.0
    %4119 = vmatprep.subr.mxu0 0.0
    %4120 = vmatpush1.msra.mxu0 0.0
    %4121 = vmatprep.subr.mxu0 0.0
    %4122 = vmatpush1.msra.mxu0 0.0
    %4123 = vmatprep.subr.mxu0 0.0
    %4124 = vmatpush1.msra.mxu0 0.0
    %4125 = vmatprep.subr.mxu0 0.0
    %4126 = vmatpush1.msra.mxu0 0.0
    %4127 = vmatprep.subr.mxu0 0.0
    %4128 = vmatpush1.msra.mxu0 0.0
    %4129 = vmatprep.subr.mxu0 0.0
    %4130 = vmatpush1.msra.mxu0 0.0
    %4131 = vmatprep.subr.mxu0 0.0
    %4132 = vmatpush1.msra.mxu0 0.0
    %4133 = vmatprep.subr.mxu0 0.0
    %4134 = vmatpush1.msra.mxu0 0.0
    %4135 = vmatprep.subr.mxu0 0.0
    %4136 = vmatpush1.msra.mxu0 0.0
    %4137 = vmatprep.subr.mxu0 0.0
    %4138 = vmatpush1.msra.mxu0 0.0
    %4139 = vmatprep.subr.mxu0 0.0
    %4140 = vmatpush1.msra.mxu0 0.0
    %4141 = vmatprep.mubr.f32.mxu0 0.0
    %4142 = vmatmul.mubr.f32.gmra.mrb[0].mxu0 %v4075
    %v4143 = vpop.f32.mrb[0].mxu0
    %v4144 = vadd.f32 0.0, %v4143
    %v4145 = vpop.f32.mrb[0].mxu0
    %4146 = vdwg.mxu0
    %4147 = vmatprep.subr.mxu0 0.0
    %4148 = vmatpush1.msra.mxu0 %v2598
    %4149 = vmatprep.subr.mxu0 0.0
    %4150 = vmatpush1.msra.mxu0 %v2599
    %4151 = vmatprep.subr.mxu0 0.0
    %4152 = vmatpush1.msra.mxu0 %v2600
    %4153 = vmatprep.subr.mxu0 0.0
    %4154 = vmatpush1.msra.mxu0 %v2601
    %4155 = vmatprep.subr.mxu0 0.0
    %4156 = vmatpush1.msra.mxu0 0.0
    %4157 = vmatprep.subr.mxu0 0.0
    %4158 = vmatpush1.msra.mxu0 0.0
    %4159 = vmatprep.subr.mxu0 0.0
    %4160 = vmatpush1.msra.mxu0 0.0
    %4161 = vmatprep.subr.mxu0 0.0
    %4162 = vmatpush1.msra.mxu0 0.0
    %4163 = vmatprep.subr.mxu0 0.0
    %4164 = vmatpush1.msra.mxu0 0.0
    %4165 = vmatprep.subr.mxu0 0.0
    %4166 = vmatpush1.msra.mxu0 0.0
    %4167 = vmatprep.subr.mxu0 0.0
    %4168 = vmatpush1.msra.mxu0 0.0
    %4169 = vmatprep.subr.mxu0 0.0
    %4170 = vmatpush1.msra.mxu0 0.0
    %4171 = vmatprep.subr.mxu0 0.0
    %4172 = vmatpush1.msra.mxu0 0.0
    %4173 = vmatprep.subr.mxu0 0.0
    %4174 = vmatpush1.msra.mxu0 0.0
    %4175 = vmatprep.subr.mxu0 0.0
    %4176 = vmatpush1.msra.mxu0 0.0
    %4177 = vmatprep.subr.mxu0 0.0
    %4178 = vmatpush1.msra.mxu0 0.0
    %4179 = vmatprep.subr.mxu0 0.0
    %4180 = vmatpush1.msra.mxu0 0.0
    %4181 = vmatprep.subr.mxu0 0.0
    %4182 = vmatpush1.msra.mxu0 0.0
    %4183 = vmatprep.subr.mxu0 0.0
    %4184 = vmatpush1.msra.mxu0 0.0
    %4185 = vmatprep.subr.mxu0 0.0
    %4186 = vmatpush1.msra.mxu0 0.0
    %4187 = vmatprep.subr.mxu0 0.0
    %4188 = vmatpush1.msra.mxu0 0.0
    %4189 = vmatprep.subr.mxu0 0.0
    %4190 = vmatpush1.msra.mxu0 0.0
    %4191 = vmatprep.subr.mxu0 0.0
    %4192 = vmatpush1.msra.mxu0 0.0
    %4193 = vmatprep.subr.mxu0 0.0
    %4194 = vmatpush1.msra.mxu0 0.0
    %4195 = vmatprep.subr.mxu0 0.0
    %4196 = vmatpush1.msra.mxu0 0.0
    %4197 = vmatprep.subr.mxu0 0.0
    %4198 = vmatpush1.msra.mxu0 0.0
    %4199 = vmatprep.subr.mxu0 0.0
    %4200 = vmatpush1.msra.mxu0 0.0
    %4201 = vmatprep.subr.mxu0 0.0
    %4202 = vmatpush1.msra.mxu0 0.0
    %4203 = vmatprep.subr.mxu0 0.0
    %4204 = vmatpush1.msra.mxu0 0.0
    %4205 = vmatprep.subr.mxu0 0.0
    %4206 = vmatpush1.msra.mxu0 0.0
    %4207 = vmatprep.subr.mxu0 0.0
    %4208 = vmatpush1.msra.mxu0 0.0
    %4209 = vmatprep.subr.mxu0 0.0
    %4210 = vmatpush1.msra.mxu0 0.0
    %4211 = vmatprep.mubr.f32.mxu0 0.0
    %4212 = vmatmul.mubr.f32.gmra.mrb[0].mxu0 %v4075
    %v4213 = vpop.f32.mrb[0].mxu0
    %v4214 = vadd.f32 0.0, %v4213
    %v4215 = vpop.f32.mrb[0].mxu0
    %4216 = vdwg.mxu0
    %4217 = vmatprep.subr.mxu0 0.0
    %4218 = vmatpush1.msra.mxu0 %v2602
    %4219 = vmatprep.subr.mxu0 0.0
    %4220 = vmatpush1.msra.mxu0 %v2603
    %4221 = vmatprep.subr.mxu0 0.0
    %4222 = vmatpush1.msra.mxu0 %v2604
    %4223 = vmatprep.subr.mxu0 0.0
    %4224 = vmatpush1.msra.mxu0 %v2605
    %4225 = vmatprep.subr.mxu0 0.0
    %4226 = vmatpush1.msra.mxu0 0.0
    %4227 = vmatprep.subr.mxu0 0.0
    %4228 = vmatpush1.msra.mxu0 0.0
    %4229 = vmatprep.subr.mxu0 0.0
    %4230 = vmatpush1.msra.mxu0 0.0
    %4231 = vmatprep.subr.mxu0 0.0
    %4232 = vmatpush1.msra.mxu0 0.0
    %4233 = vmatprep.subr.mxu0 0.0
    %4234 = vmatpush1.msra.mxu0 0.0
    %4235 = vmatprep.subr.mxu0 0.0
    %4236 = vmatpush1.msra.mxu0 0.0
    %4237 = vmatprep.subr.mxu0 0.0
    %4238 = vmatpush1.msra.mxu0 0.0
    %4239 = vmatprep.subr.mxu0 0.0
    %4240 = vmatpush1.msra.mxu0 0.0
    %4241 = vmatprep.subr.mxu0 0.0
    %4242 = vmatpush1.msra.mxu0 0.0
    %4243 = vmatprep.subr.mxu0 0.0
    %4244 = vmatpush1.msra.mxu0 0.0
    %4245 = vmatprep.subr.mxu0 0.0
    %4246 = vmatpush1.msra.mxu0 0.0
    %4247 = vmatprep.subr.mxu0 0.0
    %4248 = vmatpush1.msra.mxu0 0.0
    %4249 = vmatprep.subr.mxu0 0.0
    %4250 = vmatpush1.msra.mxu0 0.0
    %4251 = vmatprep.subr.mxu0 0.0
    %4252 = vmatpush1.msra.mxu0 0.0
    %4253 = vmatprep.subr.mxu0 0.0
    %4254 = vmatpush1.msra.mxu0 0.0
    %4255 = vmatprep.subr.mxu0 0.0
    %4256 = vmatpush1.msra.mxu0 0.0
    %4257 = vmatprep.subr.mxu0 0.0
    %4258 = vmatpush1.msra.mxu0 0.0
    %4259 = vmatprep.subr.mxu0 0.0
    %4260 = vmatpush1.msra.mxu0 0.0
    %4261 = vmatprep.subr.mxu0 0.0
    %4262 = vmatpush1.msra.mxu0 0.0
    %4263 = vmatprep.subr.mxu0 0.0
    %4264 = vmatpush1.msra.mxu0 0.0
    %4265 = vmatprep.subr.mxu0 0.0
    %4266 = vmatpush1.msra.mxu0 0.0
    %4267 = vmatprep.subr.mxu0 0.0
    %4268 = vmatpush1.msra.mxu0 0.0
    %4269 = vmatprep.subr.mxu0 0.0
    %4270 = vmatpush1.msra.mxu0 0.0
    %4271 = vmatprep.subr.mxu0 0.0
    %4272 = vmatpush1.msra.mxu0 0.0
    %4273 = vmatprep.subr.mxu0 0.0
    %4274 = vmatpush1.msra.mxu0 0.0
    %4275 = vmatprep.subr.mxu0 0.0
    %4276 = vmatpush1.msra.mxu0 0.0
    %4277 = vmatprep.subr.mxu0 0.0
    %4278 = vmatpush1.msra.mxu0 0.0
    %4279 = vmatprep.subr.mxu0 0.0
    %4280 = vmatpush1.msra.mxu0 0.0
    %4281 = vmatprep.mubr.f32.mxu0 0.0
    %4282 = vmatmul.mubr.f32.gmra.mrb[0].mxu0 %v4075
    %v4283 = vpop.f32.mrb[0].mxu0
    %v4284 = vadd.f32 %v3008, %v4283
    %v4285 = vpop.f32.mrb[0].mxu0
    %4286 = vdwg.mxu0
    %v4288 = vrot.slane %v4144, 6
    %v4290 = vadd.f32 %v2694, %v4288
    %v4291 = vxor.u32 %v4290, 2147483648
    %v4292 = vmul.f32 %v4291, 1.442695
    %v4293 = vpow.pop %v4292
    %v4294 = vadd.f32 %v4293, 1.0
    %v4295 = vrcp.pop %v4294
    %v4296 = vmul.f32 1.0, %v4295
    %v4298 = vrot.slane %v4214, 6
    %v4300 = vadd.f32 %v2775, %v4298
    %v4301 = vxor.u32 %v4300, 2147483648
    %v4302 = vmul.f32 %v4301, 1.442695
    %v4303 = vpow.pop %v4302
    %v4304 = vadd.f32 %v4303, 1.0
    %v4305 = vrcp.pop %v4304
    %v4306 = vmul.f32 1.0, %v4305
    %v4308 = vrot.slane %v4284, 6
    %v4310 = vmul.f32 %v4296, %v4308
    %v4311 = vadd.f32 %v2856, %v4310
    %v4312 = vtanh.pop %v4311
    %v4313 = vsub.f32 1.0, %v4306
    %v4314 = vmul.f32 %v4313, %v4312
    %v4315 = vrot.slane %v4073, 6
    %v4317 = vmul.f32 %v4306, %v4315
    %v4318 = vadd.f32 %v4314, %v4317
    %v4320 = vrot.slane %v4318, 2
    %v4321 = vsel %vm622, %v4320, 0
    %4323 = vmatprep.subr.mxu0 0.0
    %4324 = vmatpush1.msra.mxu0 %v2594
    %4325 = vmatprep.subr.mxu0 0.0
    %4326 = vmatpush1.msra.mxu0 %v2595
    %4327 = vmatprep.subr.mxu0 0.0
    %4328 = vmatpush1.msra.mxu0 %v2596
    %4329 = vmatprep.subr.mxu0 0.0
    %4330 = vmatpush1.msra.mxu0 %v2597
    %4331 = vmatprep.subr.mxu0 0.0
    %4332 = vmatpush1.msra.mxu0 0.0
    %4333 = vmatprep.subr.mxu0 0.0
    %4334 = vmatpush1.msra.mxu0 0.0
    %4335 = vmatprep.subr.mxu0 0.0
    %4336 = vmatpush1.msra.mxu0 0.0
    %4337 = vmatprep.subr.mxu0 0.0
    %4338 = vmatpush1.msra.mxu0 0.0
    %4339 = vmatprep.subr.mxu0 0.0
    %4340 = vmatpush1.msra.mxu0 0.0
    %4341 = vmatprep.subr.mxu0 0.0
    %4342 = vmatpush1.msra.mxu0 0.0
    %4343 = vmatprep.subr.mxu0 0.0
    %4344 = vmatpush1.msra.mxu0 0.0
    %4345 = vmatprep.subr.mxu0 0.0
    %4346 = vmatpush1.msra.mxu0 0.0
    %4347 = vmatprep.subr.mxu0 0.0
    %4348 = vmatpush1.msra.mxu0 0.0
    %4349 = vmatprep.subr.mxu0 0.0
    %4350 = vmatpush1.msra.mxu0 0.0
    %4351 = vmatprep.subr.mxu0 0.0
    %4352 = vmatpush1.msra.mxu0 0.0
    %4353 = vmatprep.subr.mxu0 0.0
    %4354 = vmatpush1.msra.mxu0 0.0
    %4355 = vmatprep.subr.mxu0 0.0
    %4356 = vmatpush1.msra.mxu0 0.0
    %4357 = vmatprep.subr.mxu0 0.0
    %4358 = vmatpush1.msra.mxu0 0.0
    %4359 = vmatprep.subr.mxu0 0.0
    %4360 = vmatpush1.msra.mxu0 0.0
    %4361 = vmatprep.subr.mxu0 0.0
    %4362 = vmatpush1.msra.mxu0 0.0
    %4363 = vmatprep.subr.mxu0 0.0
    %4364 = vmatpush1.msra.mxu0 0.0
    %4365 = vmatprep.subr.mxu0 0.0
    %4366 = vmatpush1.msra.mxu0 0.0
    %4367 = vmatprep.subr.mxu0 0.0
    %4368 = vmatpush1.msra.mxu0 0.0
    %4369 = vmatprep.subr.mxu0 0.0
    %4370 = vmatpush1.msra.mxu0 0.0
    %4371 = vmatprep.subr.mxu0 0.0
    %4372 = vmatpush1.msra.mxu0 0.0
    %4373 = vmatprep.subr.mxu0 0.0
    %4374 = vmatpush1.msra.mxu0 0.0
    %4375 = vmatprep.subr.mxu0 0.0
    %4376 = vmatpush1.msra.mxu0 0.0
    %4377 = vmatprep.subr.mxu0 0.0
    %4378 = vmatpush1.msra.mxu0 0.0
    %4379 = vmatprep.subr.mxu0 0.0
    %4380 = vmatpush1.msra.mxu0 0.0
    %4381 = vmatprep.subr.mxu0 0.0
    %4382 = vmatpush1.msra.mxu0 0.0
    %4383 = vmatprep.subr.mxu0 0.0
    %4384 = vmatpush1.msra.mxu0 0.0
    %4385 = vmatprep.subr.mxu0 0.0
    %4386 = vmatpush1.msra.mxu0 0.0
    %4387 = vmatprep.mubr.f32.mxu0 0.0
    %4388 = vmatmul.mubr.f32.gmra.mrb[0].mxu0 %v4321
    %v4389 = vpop.f32.mrb[0].mxu0
    %v4390 = vadd.f32 0.0, %v4389
    %v4391 = vpop.f32.mrb[0].mxu0
    %4392 = vdwg.mxu0
    %4393 = vmatprep.subr.mxu0 0.0
    %4394 = vmatpush1.msra.mxu0 %v2598
    %4395 = vmatprep.subr.mxu0 0.0
    %4396 = vmatpush1.msra.mxu0 %v2599
    %4397 = vmatprep.subr.mxu0 0.0
    %4398 = vmatpush1.msra.mxu0 %v2600
    %4399 = vmatprep.subr.mxu0 0.0
    %4400 = vmatpush1.msra.mxu0 %v2601
    %4401 = vmatprep.subr.mxu0 0.0
    %4402 = vmatpush1.msra.mxu0 0.0
    %4403 = vmatprep.subr.mxu0 0.0
    %4404 = vmatpush1.msra.mxu0 0.0
    %4405 = vmatprep.subr.mxu0 0.0
    %4406 = vmatpush1.msra.mxu0 0.0
    %4407 = vmatprep.subr.mxu0 0.0
    %4408 = vmatpush1.msra.mxu0 0.0
    %4409 = vmatprep.subr.mxu0 0.0
    %4410 = vmatpush1.msra.mxu0 0.0
    %4411 = vmatprep.subr.mxu0 0.0
    %4412 = vmatpush1.msra.mxu0 0.0
    %4413 = vmatprep.subr.mxu0 0.0
    %4414 = vmatpush1.msra.mxu0 0.0
    %4415 = vmatprep.subr.mxu0 0.0
    %4416 = vmatpush1.msra.mxu0 0.0
    %4417 = vmatprep.subr.mxu0 0.0
    %4418 = vmatpush1.msra.mxu0 0.0
    %4419 = vmatprep.subr.mxu0 0.0
    %4420 = vmatpush1.msra.mxu0 0.0
    %4421 = vmatprep.subr.mxu0 0.0
    %4422 = vmatpush1.msra.mxu0 0.0
    %4423 = vmatprep.subr.mxu0 0.0
    %4424 = vmatpush1.msra.mxu0 0.0
    %4425 = vmatprep.subr.mxu0 0.0
    %4426 = vmatpush1.msra.mxu0 0.0
    %4427 = vmatprep.subr.mxu0 0.0
    %4428 = vmatpush1.msra.mxu0 0.0
    %4429 = vmatprep.subr.mxu0 0.0
    %4430 = vmatpush1.msra.mxu0 0.0
    %4431 = vmatprep.subr.mxu0 0.0
    %4432 = vmatpush1.msra.mxu0 0.0
    %4433 = vmatprep.subr.mxu0 0.0
    %4434 = vmatpush1.msra.mxu0 0.0
    %4435 = vmatprep.subr.mxu0 0.0
    %4436 = vmatpush1.msra.mxu0 0.0
    %4437 = vmatprep.subr.mxu0 0.0
    %4438 = vmatpush1.msra.mxu0 0.0
    %4439 = vmatprep.subr.mxu0 0.0
    %4440 = vmatpush1.msra.mxu0 0.0
    %4441 = vmatprep.subr.mxu0 0.0
    %4442 = vmatpush1.msra.mxu0 0.0
    %4443 = vmatprep.subr.mxu0 0.0
    %4444 = vmatpush1.msra.mxu0 0.0
    %4445 = vmatprep.subr.mxu0 0.0
    %4446 = vmatpush1.msra.mxu0 0.0
    %4447 = vmatprep.subr.mxu0 0.0
    %4448 = vmatpush1.msra.mxu0 0.0
    %4449 = vmatprep.subr.mxu0 0.0
    %4450 = vmatpush1.msra.mxu0 0.0
    %4451 = vmatprep.subr.mxu0 0.0
    %4452 = vmatpush1.msra.mxu0 0.0
    %4453 = vmatprep.subr.mxu0 0.0
    %4454 = vmatpush1.msra.mxu0 0.0
    %4455 = vmatprep.subr.mxu0 0.0
    %4456 = vmatpush1.msra.mxu0 0.0
    %4457 = vmatprep.mubr.f32.mxu0 0.0
    %4458 = vmatmul.mubr.f32.gmra.mrb[0].mxu0 %v4321
    %v4459 = vpop.f32.mrb[0].mxu0
    %v4460 = vadd.f32 0.0, %v4459
    %v4461 = vpop.f32.mrb[0].mxu0
    %4462 = vdwg.mxu0
    %4463 = vmatprep.subr.mxu0 0.0
    %4464 = vmatpush1.msra.mxu0 %v2602
    %4465 = vmatprep.subr.mxu0 0.0
    %4466 = vmatpush1.msra.mxu0 %v2603
    %4467 = vmatprep.subr.mxu0 0.0
    %4468 = vmatpush1.msra.mxu0 %v2604
    %4469 = vmatprep.subr.mxu0 0.0
    %4470 = vmatpush1.msra.mxu0 %v2605
    %4471 = vmatprep.subr.mxu0 0.0
    %4472 = vmatpush1.msra.mxu0 0.0
    %4473 = vmatprep.subr.mxu0 0.0
    %4474 = vmatpush1.msra.mxu0 0.0
    %4475 = vmatprep.subr.mxu0 0.0
    %4476 = vmatpush1.msra.mxu0 0.0
    %4477 = vmatprep.subr.mxu0 0.0
    %4478 = vmatpush1.msra.mxu0 0.0
    %4479 = vmatprep.subr.mxu0 0.0
    %4480 = vmatpush1.msra.mxu0 0.0
    %4481 = vmatprep.subr.mxu0 0.0
    %4482 = vmatpush1.msra.mxu0 0.0
    %4483 = vmatprep.subr.mxu0 0.0
    %4484 = vmatpush1.msra.mxu0 0.0
    %4485 = vmatprep.subr.mxu0 0.0
    %4486 = vmatpush1.msra.mxu0 0.0
    %4487 = vmatprep.subr.mxu0 0.0
    %4488 = vmatpush1.msra.mxu0 0.0
    %4489 = vmatprep.subr.mxu0 0.0
    %4490 = vmatpush1.msra.mxu0 0.0
    %4491 = vmatprep.subr.mxu0 0.0
    %4492 = vmatpush1.msra.mxu0 0.0
    %4493 = vmatprep.subr.mxu0 0.0
    %4494 = vmatpush1.msra.mxu0 0.0
    %4495 = vmatprep.subr.mxu0 0.0
    %4496 = vmatpush1.msra.mxu0 0.0
    %4497 = vmatprep.subr.mxu0 0.0
    %4498 = vmatpush1.msra.mxu0 0.0
    %4499 = vmatprep.subr.mxu0 0.0
    %4500 = vmatpush1.msra.mxu0 0.0
    %4501 = vmatprep.subr.mxu0 0.0
    %4502 = vmatpush1.msra.mxu0 0.0
    %4503 = vmatprep.subr.mxu0 0.0
    %4504 = vmatpush1.msra.mxu0 0.0
    %4505 = vmatprep.subr.mxu0 0.0
    %4506 = vmatpush1.msra.mxu0 0.0
    %4507 = vmatprep.subr.mxu0 0.0
    %4508 = vmatpush1.msra.mxu0 0.0
    %4509 = vmatprep.subr.mxu0 0.0
    %4510 = vmatpush1.msra.mxu0 0.0
    %4511 = vmatprep.subr.mxu0 0.0
    %4512 = vmatpush1.msra.mxu0 0.0
    %4513 = vmatprep.subr.mxu0 0.0
    %4514 = vmatpush1.msra.mxu0 0.0
    %4515 = vmatprep.subr.mxu0 0.0
    %4516 = vmatpush1.msra.mxu0 0.0
    %4517 = vmatprep.subr.mxu0 0.0
    %4518 = vmatpush1.msra.mxu0 0.0
    %4519 = vmatprep.subr.mxu0 0.0
    %4520 = vmatpush1.msra.mxu0 0.0
    %4521 = vmatprep.subr.mxu0 0.0
    %4522 = vmatpush1.msra.mxu0 0.0
    %4523 = vmatprep.subr.mxu0 0.0
    %4524 = vmatpush1.msra.mxu0 0.0
    %4525 = vmatprep.subr.mxu0 0.0
    %4526 = vmatpush1.msra.mxu0 0.0
    %4527 = vmatprep.mubr.f32.mxu0 0.0
    %4528 = vmatmul.mubr.f32.gmra.mrb[0].mxu0 %v4321
    %v4529 = vpop.f32.mrb[0].mxu0
    %v4530 = vadd.f32 %v3008, %v4529
    %v4531 = vpop.f32.mrb[0].mxu0
    %4532 = vdwg.mxu0
    %v4534 = vrot.slane %v4390, 4
    %v4536 = vadd.f32 %v2694, %v4534
    %v4537 = vxor.u32 %v4536, 2147483648
    %v4538 = vmul.f32 %v4537, 1.442695
    %v4539 = vpow.pop %v4538
    %v4540 = vadd.f32 %v4539, 1.0
    %v4541 = vrcp.pop %v4540
    %v4542 = vmul.f32 1.0, %v4541
    %v4544 = vrot.slane %v4460, 4
    %v4546 = vadd.f32 %v2775, %v4544
    %v4547 = vxor.u32 %v4546, 2147483648
    %v4548 = vmul.f32 %v4547, 1.442695
    %v4549 = vpow.pop %v4548
    %v4550 = vadd.f32 %v4549, 1.0
    %v4551 = vrcp.pop %v4550
    %v4552 = vmul.f32 1.0, %v4551
    %v4554 = vrot.slane %v4530, 4
    %v4556 = vmul.f32 %v4542, %v4554
    %v4557 = vadd.f32 %v2856, %v4556
    %v4558 = vtanh.pop %v4557
    %v4559 = vsub.f32 1.0, %v4552
    %v4560 = vmul.f32 %v4559, %v4558
    %v4561 = vrot.slane %v4318, 6
    %v4563 = vmul.f32 %v4552, %v4561
    %v4564 = vadd.f32 %v4560, %v4563
    %v4566 = vrot.slane %v4564, 4
    %v4567 = vsel %vm622, %v4566, 0
    %4569 = vmatprep.subr.mxu0 0.0
    %4570 = vmatpush1.msra.mxu0 %v2594
    %4571 = vmatprep.subr.mxu0 0.0
    %4572 = vmatpush1.msra.mxu0 %v2595
    %4573 = vmatprep.subr.mxu0 0.0
    %4574 = vmatpush1.msra.mxu0 %v2596
    %4575 = vmatprep.subr.mxu0 0.0
    %4576 = vmatpush1.msra.mxu0 %v2597
    %4577 = vmatprep.subr.mxu0 0.0
    %4578 = vmatpush1.msra.mxu0 0.0
    %4579 = vmatprep.subr.mxu0 0.0
    %4580 = vmatpush1.msra.mxu0 0.0
    %4581 = vmatprep.subr.mxu0 0.0
    %4582 = vmatpush1.msra.mxu0 0.0
    %4583 = vmatprep.subr.mxu0 0.0
    %4584 = vmatpush1.msra.mxu0 0.0
    %4585 = vmatprep.subr.mxu0 0.0
    %4586 = vmatpush1.msra.mxu0 0.0
    %4587 = vmatprep.subr.mxu0 0.0
    %4588 = vmatpush1.msra.mxu0 0.0
    %4589 = vmatprep.subr.mxu0 0.0
    %4590 = vmatpush1.msra.mxu0 0.0
    %4591 = vmatprep.subr.mxu0 0.0
    %4592 = vmatpush1.msra.mxu0 0.0
    %4593 = vmatprep.subr.mxu0 0.0
    %4594 = vmatpush1.msra.mxu0 0.0
    %4595 = vmatprep.subr.mxu0 0.0
    %4596 = vmatpush1.msra.mxu0 0.0
    %4597 = vmatprep.subr.mxu0 0.0
    %4598 = vmatpush1.msra.mxu0 0.0
    %4599 = vmatprep.subr.mxu0 0.0
    %4600 = vmatpush1.msra.mxu0 0.0
    %4601 = vmatprep.subr.mxu0 0.0
    %4602 = vmatpush1.msra.mxu0 0.0
    %4603 = vmatprep.subr.mxu0 0.0
    %4604 = vmatpush1.msra.mxu0 0.0
    %4605 = vmatprep.subr.mxu0 0.0
    %4606 = vmatpush1.msra.mxu0 0.0
    %4607 = vmatprep.subr.mxu0 0.0
    %4608 = vmatpush1.msra.mxu0 0.0
    %4609 = vmatprep.subr.mxu0 0.0
    %4610 = vmatpush1.msra.mxu0 0.0
    %4611 = vmatprep.subr.mxu0 0.0
    %4612 = vmatpush1.msra.mxu0 0.0
    %4613 = vmatprep.subr.mxu0 0.0
    %4614 = vmatpush1.msra.mxu0 0.0
    %4615 = vmatprep.subr.mxu0 0.0
    %4616 = vmatpush1.msra.mxu0 0.0
    %4617 = vmatprep.subr.mxu0 0.0
    %4618 = vmatpush1.msra.mxu0 0.0
    %4619 = vmatprep.subr.mxu0 0.0
    %4620 = vmatpush1.msra.mxu0 0.0
    %4621 = vmatprep.subr.mxu0 0.0
    %4622 = vmatpush1.msra.mxu0 0.0
    %4623 = vmatprep.subr.mxu0 0.0
    %4624 = vmatpush1.msra.mxu0 0.0
    %4625 = vmatprep.subr.mxu0 0.0
    %4626 = vmatpush1.msra.mxu0 0.0
    %4627 = vmatprep.subr.mxu0 0.0
    %4628 = vmatpush1.msra.mxu0 0.0
    %4629 = vmatprep.subr.mxu0 0.0
    %4630 = vmatpush1.msra.mxu0 0.0
    %4631 = vmatprep.subr.mxu0 0.0
    %4632 = vmatpush1.msra.mxu0 0.0
    %4633 = vmatprep.mubr.f32.mxu0 0.0
    %4634 = vmatmul.mubr.f32.gmra.mrb[0].mxu0 %v4567
    %v4635 = vpop.f32.mrb[0].mxu0
    %v4636 = vadd.f32 0.0, %v4635
    %v4637 = vpop.f32.mrb[0].mxu0
    %4638 = vdwg.mxu0
    %4639 = vmatprep.subr.mxu0 0.0
    %4640 = vmatpush1.msra.mxu0 %v2598
    %4641 = vmatprep.subr.mxu0 0.0
    %4642 = vmatpush1.msra.mxu0 %v2599
    %4643 = vmatprep.subr.mxu0 0.0
    %4644 = vmatpush1.msra.mxu0 %v2600
    %4645 = vmatprep.subr.mxu0 0.0
    %4646 = vmatpush1.msra.mxu0 %v2601
    %4647 = vmatprep.subr.mxu0 0.0
    %4648 = vmatpush1.msra.mxu0 0.0
    %4649 = vmatprep.subr.mxu0 0.0
    %4650 = vmatpush1.msra.mxu0 0.0
    %4651 = vmatprep.subr.mxu0 0.0
    %4652 = vmatpush1.msra.mxu0 0.0
    %4653 = vmatprep.subr.mxu0 0.0
    %4654 = vmatpush1.msra.mxu0 0.0
    %4655 = vmatprep.subr.mxu0 0.0
    %4656 = vmatpush1.msra.mxu0 0.0
    %4657 = vmatprep.subr.mxu0 0.0
    %4658 = vmatpush1.msra.mxu0 0.0
    %4659 = vmatprep.subr.mxu0 0.0
    %4660 = vmatpush1.msra.mxu0 0.0
    %4661 = vmatprep.subr.mxu0 0.0
    %4662 = vmatpush1.msra.mxu0 0.0
    %4663 = vmatprep.subr.mxu0 0.0
    %4664 = vmatpush1.msra.mxu0 0.0
    %4665 = vmatprep.subr.mxu0 0.0
    %4666 = vmatpush1.msra.mxu0 0.0
    %4667 = vmatprep.subr.mxu0 0.0
    %4668 = vmatpush1.msra.mxu0 0.0
    %4669 = vmatprep.subr.mxu0 0.0
    %4670 = vmatpush1.msra.mxu0 0.0
    %4671 = vmatprep.subr.mxu0 0.0
    %4672 = vmatpush1.msra.mxu0 0.0
    %4673 = vmatprep.subr.mxu0 0.0
    %4674 = vmatpush1.msra.mxu0 0.0
    %4675 = vmatprep.subr.mxu0 0.0
    %4676 = vmatpush1.msra.mxu0 0.0
    %4677 = vmatprep.subr.mxu0 0.0
    %4678 = vmatpush1.msra.mxu0 0.0
    %4679 = vmatprep.subr.mxu0 0.0
    %4680 = vmatpush1.msra.mxu0 0.0
    %4681 = vmatprep.subr.mxu0 0.0
    %4682 = vmatpush1.msra.mxu0 0.0
    %4683 = vmatprep.subr.mxu0 0.0
    %4684 = vmatpush1.msra.mxu0 0.0
    %4685 = vmatprep.subr.mxu0 0.0
    %4686 = vmatpush1.msra.mxu0 0.0
    %4687 = vmatprep.subr.mxu0 0.0
    %4688 = vmatpush1.msra.mxu0 0.0
    %4689 = vmatprep.subr.mxu0 0.0
    %4690 = vmatpush1.msra.mxu0 0.0
    %4691 = vmatprep.subr.mxu0 0.0
    %4692 = vmatpush1.msra.mxu0 0.0
    %4693 = vmatprep.subr.mxu0 0.0
    %4694 = vmatpush1.msra.mxu0 0.0
    %4695 = vmatprep.subr.mxu0 0.0
    %4696 = vmatpush1.msra.mxu0 0.0
    %4697 = vmatprep.subr.mxu0 0.0
    %4698 = vmatpush1.msra.mxu0 0.0
    %4699 = vmatprep.subr.mxu0 0.0
    %4700 = vmatpush1.msra.mxu0 0.0
    %4701 = vmatprep.subr.mxu0 0.0
    %4702 = vmatpush1.msra.mxu0 0.0
    %4703 = vmatprep.mubr.f32.mxu0 0.0
    %4704 = vmatmul.mubr.f32.gmra.mrb[0].mxu0 %v4567
    %v4705 = vpop.f32.mrb[0].mxu0
    %v4706 = vadd.f32 0.0, %v4705
    %v4707 = vpop.f32.mrb[0].mxu0
    %4708 = vdwg.mxu0
    %4709 = vmatprep.subr.mxu0 0.0
    %4710 = vmatpush1.msra.mxu0 %v2602
    %4711 = vmatprep.subr.mxu0 0.0
    %4712 = vmatpush1.msra.mxu0 %v2603
    %4713 = vmatprep.subr.mxu0 0.0
    %4714 = vmatpush1.msra.mxu0 %v2604
    %4715 = vmatprep.subr.mxu0 0.0
    %4716 = vmatpush1.msra.mxu0 %v2605
    %4717 = vmatprep.subr.mxu0 0.0
    %4718 = vmatpush1.msra.mxu0 0.0
    %4719 = vmatprep.subr.mxu0 0.0
    %4720 = vmatpush1.msra.mxu0 0.0
    %4721 = vmatprep.subr.mxu0 0.0
    %4722 = vmatpush1.msra.mxu0 0.0
    %4723 = vmatprep.subr.mxu0 0.0
    %4724 = vmatpush1.msra.mxu0 0.0
    %4725 = vmatprep.subr.mxu0 0.0
    %4726 = vmatpush1.msra.mxu0 0.0
    %4727 = vmatprep.subr.mxu0 0.0
    %4728 = vmatpush1.msra.mxu0 0.0
    %4729 = vmatprep.subr.mxu0 0.0
    %4730 = vmatpush1.msra.mxu0 0.0
    %4731 = vmatprep.subr.mxu0 0.0
    %4732 = vmatpush1.msra.mxu0 0.0
    %4733 = vmatprep.subr.mxu0 0.0
    %4734 = vmatpush1.msra.mxu0 0.0
    %4735 = vmatprep.subr.mxu0 0.0
    %4736 = vmatpush1.msra.mxu0 0.0
    %4737 = vmatprep.subr.mxu0 0.0
    %4738 = vmatpush1.msra.mxu0 0.0
    %4739 = vmatprep.subr.mxu0 0.0
    %4740 = vmatpush1.msra.mxu0 0.0
    %4741 = vmatprep.subr.mxu0 0.0
    %4742 = vmatpush1.msra.mxu0 0.0
    %4743 = vmatprep.subr.mxu0 0.0
    %4744 = vmatpush1.msra.mxu0 0.0
    %4745 = vmatprep.subr.mxu0 0.0
    %4746 = vmatpush1.msra.mxu0 0.0
    %4747 = vmatprep.subr.mxu0 0.0
    %4748 = vmatpush1.msra.mxu0 0.0
    %4749 = vmatprep.subr.mxu0 0.0
    %4750 = vmatpush1.msra.mxu0 0.0
    %4751 = vmatprep.subr.mxu0 0.0
    %4752 = vmatpush1.msra.mxu0 0.0
    %4753 = vmatprep.subr.mxu0 0.0
    %4754 = vmatpush1.msra.mxu0 0.0
    %4755 = vmatprep.subr.mxu0 0.0
    %4756 = vmatpush1.msra.mxu0 0.0
    %4757 = vmatprep.subr.mxu0 0.0
    %4758 = vmatpush1.msra.mxu0 0.0
    %4759 = vmatprep.subr.mxu0 0.0
    %4760 = vmatpush1.msra.mxu0 0.0
    %4761 = vmatprep.subr.mxu0 0.0
    %4762 = vmatpush1.msra.mxu0 0.0
    %4763 = vmatprep.subr.mxu0 0.0
    %4764 = vmatpush1.msra.mxu0 0.0
    %4765 = vmatprep.subr.mxu0 0.0
    %4766 = vmatpush1.msra.mxu0 0.0
    %4767 = vmatprep.subr.mxu0 0.0
    %4768 = vmatpush1.msra.mxu0 0.0
    %4769 = vmatprep.subr.mxu0 0.0
    %4770 = vmatpush1.msra.mxu0 0.0
    %4771 = vmatprep.subr.mxu0 0.0
    %4772 = vmatpush1.msra.mxu0 0.0
    %4773 = vmatprep.mubr.f32.mxu0 0.0
    %4774 = vmatmul.mubr.f32.gmra.mrb[0].mxu0 %v4567
    %v4775 = vpop.f32.mrb[0].mxu0
    %v4776 = vadd.f32 %v3008, %v4775
    %v4777 = vpop.f32.mrb[0].mxu0
    %4778 = vdwg.mxu0
    %v4780 = vrot.slane %v4636, 2
    %v4782 = vadd.f32 %v2694, %v4780
    %v4783 = vxor.u32 %v4782, 2147483648
    %v4784 = vmul.f32 %v4783, 1.442695
    %v4785 = vpow.pop %v4784
    %v4786 = vadd.f32 %v4785, 1.0
    %v4787 = vrcp.pop %v4786
    %v4788 = vmul.f32 1.0, %v4787
    %v4790 = vrot.slane %v4706, 2
    %v4792 = vadd.f32 %v2775, %v4790
    %v4793 = vxor.u32 %v4792, 2147483648
    %v4794 = vmul.f32 %v4793, 1.442695
    %v4795 = vpow.pop %v4794
    %v4796 = vadd.f32 %v4795, 1.0
    %v4797 = vrcp.pop %v4796
    %v4798 = vmul.f32 1.0, %v4797
    %v4800 = vrot.slane %v4776, 2
    %v4802 = vmul.f32 %v4788, %v4800
    %v4803 = vadd.f32 %v2856, %v4802
    %v4804 = vtanh.pop %v4803
    %v4805 = vsub.f32 1.0, %v4798
    %v4806 = vmul.f32 %v4805, %v4804
    %v4807 = vrot.slane %v4564, 6
    %v4809 = vmul.f32 %v4798, %v4807
    %v4810 = vadd.f32 %v4806, %v4809
    %vm4811 = vcmask 261126
    %4812 = vst.msk [vmem:[#allocation30 - $0x6] sm:$0xc0] %vm4811, %v2572
    %4813 = vst.msk [vmem:[#allocation30 - $0x4] sm:$0xc0] %vm4811, %v4810
    %v4815 = vunpack.c.l.s4 1966171168
    %v4816 = vunpack.c.0.s8 %v4815
    %v4817 = vlaneseq
    %v4818 = vshrl.u32 %v4817, 7
    %v4819 = vsub.s32 %v4816, %v4818
    %v4820 = vrot.slane %v3100, %v4819
    %v4821 = vcombine.high %v4820, %v4820
    %v4823 = vunpack.c.l.s4 1966171168
    %v4824 = vunpack.c.0.s8 %v4823
    %v4825 = vlaneseq
    %v4826 = vshrl.u32 %v4825, 7
    %v4827 = vsub.s32 %v4824, %v4826
    %v4828 = vrot.slane %v4820, %v4827
    %v4830 = vunpack.c.l.s4 1966171168
    %v4831 = vunpack.c.0.s8 %v4830
    %v4832 = vlaneseq
    %v4833 = vshrl.u32 %v4832, 7
    %v4834 = vsub.s32 %v4831, %v4833
    %v4835 = vrot.slane %v4821, %v4834
    %v4839 = vunpack.c.l.s4 1966171168
    %v4840 = vunpack.c.0.s8 %v4839
    %v4841 = vlaneseq
    %v4842 = vshrl.u32 %v4841, 7
    %v4843 = vsub.s32 %v4840, %v4842
    %v4844 = vrot.slane %v3345, %v4843
    %v4845 = vcombine.high %v4844, %v4844
    %v4847 = vunpack.c.l.s4 1966171168
    %v4848 = vunpack.c.0.s8 %v4847
    %v4849 = vlaneseq
    %v4850 = vshrl.u32 %v4849, 7
    %v4851 = vsub.s32 %v4848, %v4850
    %v4852 = vrot.slane %v4844, %v4851
    %v4854 = vunpack.c.l.s4 1966171168
    %v4855 = vunpack.c.0.s8 %v4854
    %v4856 = vlaneseq
    %v4857 = vshrl.u32 %v4856, 7
    %v4858 = vsub.s32 %v4855, %v4857
    %v4859 = vrot.slane %v4845, %v4858
    %v4860 = vcombine.high %v4852, %v4852
    %v4861 = vcombine.high %v4859, %v4859
    %v4862 = vcombine.high %v3591, %v3591
    %v4864 = vunpack.c.l.s4 1966171168
    %v4865 = vunpack.c.0.s8 %v4864
    %v4866 = vlaneseq
    %v4867 = vshrl.u32 %v4866, 7
    %v4868 = vsub.s32 %v4865, %v4867
    %v4869 = vrot.slane %v4862, %v4868
    %v4870 = vcombine.high %v4869, %v4869
    %v4872 = vunpack.c.l.s4 1966171168
    %v4873 = vunpack.c.0.s8 %v4872
    %v4874 = vlaneseq
    %v4875 = vshrl.u32 %v4874, 7
    %v4876 = vsub.s32 %v4873, %v4875
    %v4877 = vrot.slane %v4869, %v4876
    %v4879 = vunpack.c.l.s4 1966171168
    %v4880 = vunpack.c.0.s8 %v4879
    %v4881 = vlaneseq
    %v4882 = vshrl.u32 %v4881, 7
    %v4883 = vsub.s32 %v4880, %v4882
    %v4884 = vrot.slane %v4870, %v4883
    %v4885 = vcombine.high %v3837, %v3837
    %v4887 = vunpack.c.l.s4 1966171168
    %v4888 = vunpack.c.0.s8 %v4887
    %v4889 = vlaneseq
    %v4890 = vshrl.u32 %v4889, 7
    %v4891 = vsub.s32 %v4888, %v4890
    %v4892 = vrot.slane %v4885, %v4891
    %v4893 = vcombine.high %v4892, %v4892
    %v4895 = vunpack.c.l.s4 1966171168
    %v4896 = vunpack.c.0.s8 %v4895
    %v4897 = vlaneseq
    %v4898 = vshrl.u32 %v4897, 7
    %v4899 = vsub.s32 %v4896, %v4898
    %v4900 = vrot.slane %v4892, %v4899
    %v4902 = vunpack.c.l.s4 1966171168
    %v4903 = vunpack.c.0.s8 %v4902
    %v4904 = vlaneseq
    %v4905 = vshrl.u32 %v4904, 7
    %v4906 = vsub.s32 %v4903, %v4905
    %v4907 = vrot.slane %v4893, %v4906
    %v4908 = vcombine.high %v4900, %v4900
    %v4909 = vcombine.high %v4907, %v4907
    %v4911 = vunpack.c.l.s4 1966171168
    %v4912 = vunpack.c.0.s8 %v4911
    %v4913 = vlaneseq
    %v4914 = vshrl.u32 %v4913, 7
    %v4915 = vsub.s32 %v4912, %v4914
    %v4916 = vrot.slane %v4073, %v4915
    %v4917 = vcombine.high %v4916, %v4916
    %v4919 = vunpack.c.l.s4 1966171168
    %v4920 = vunpack.c.0.s8 %v4919
    %v4921 = vlaneseq
    %v4922 = vshrl.u32 %v4921, 7
    %v4923 = vsub.s32 %v4920, %v4922
    %v4924 = vrot.slane %v4916, %v4923
    %v4926 = vunpack.c.l.s4 1966171168
    %v4927 = vunpack.c.0.s8 %v4926
    %v4928 = vlaneseq
    %v4929 = vshrl.u32 %v4928, 7
    %v4930 = vsub.s32 %v4927, %v4929
    %v4931 = vrot.slane %v4917, %v4930
    %v4933 = vunpack.c.l.s4 1966171168
    %v4934 = vunpack.c.0.s8 %v4933
    %v4935 = vlaneseq
    %v4936 = vshrl.u32 %v4935, 7
    %v4937 = vsub.s32 %v4934, %v4936
    %v4938 = vrot.slane %v4318, %v4937
    %v4939 = vcombine.high %v4938, %v4938
    %v4941 = vunpack.c.l.s4 1966171168
    %v4942 = vunpack.c.0.s8 %v4941
    %v4943 = vlaneseq
    %v4944 = vshrl.u32 %v4943, 7
    %v4945 = vsub.s32 %v4942, %v4944
    %v4946 = vrot.slane %v4938, %v4945
    %v4948 = vunpack.c.l.s4 1966171168
    %v4949 = vunpack.c.0.s8 %v4948
    %v4950 = vlaneseq
    %v4951 = vshrl.u32 %v4950, 7
    %v4952 = vsub.s32 %v4949, %v4951
    %v4953 = vrot.slane %v4939, %v4952
    %v4954 = vcombine.high %v4946, %v4946
    %v4955 = vcombine.high %v4953, %v4953
    %v4956 = vcombine.high %v4564, %v4564
    %v4958 = vunpack.c.l.s4 1966171168
    %v4959 = vunpack.c.0.s8 %v4958
    %v4960 = vlaneseq
    %v4961 = vshrl.u32 %v4960, 7
    %v4962 = vsub.s32 %v4959, %v4961
    %v4963 = vrot.slane %v4956, %v4962
    %v4964 = vcombine.high %v4963, %v4963
    %v4966 = vunpack.c.l.s4 1966171168
    %v4967 = vunpack.c.0.s8 %v4966
    %v4968 = vlaneseq
    %v4969 = vshrl.u32 %v4968, 7
    %v4970 = vsub.s32 %v4967, %v4969
    %v4971 = vrot.slane %v4963, %v4970
    %v4973 = vunpack.c.l.s4 1966171168
    %v4974 = vunpack.c.0.s8 %v4973
    %v4975 = vlaneseq
    %v4976 = vshrl.u32 %v4975, 7
    %v4977 = vsub.s32 %v4974, %v4976
    %v4978 = vrot.slane %v4964, %v4977
    %v4980 = vcombine.high %v4810, %v4810
    %v4982 = vunpack.c.l.s4 1966171168
    %v4983 = vunpack.c.0.s8 %v4982
    %v4984 = vlaneseq
    %v4985 = vshrl.u32 %v4984, 7
    %v4986 = vsub.s32 %v4983, %v4985
    %v4987 = vrot.slane %v4980, %v4986
    %v4988 = vcombine.high %v4987, %v4987
    %v4990 = vunpack.c.l.s4 1966171168
    %v4991 = vunpack.c.0.s8 %v4990
    %v4992 = vlaneseq
    %v4993 = vshrl.u32 %v4992, 7
    %v4994 = vsub.s32 %v4991, %v4993
    %v4995 = vrot.slane %v4987, %v4994
    %v4997 = vunpack.c.l.s4 1966171168
    %v4998 = vunpack.c.0.s8 %v4997
    %v4999 = vlaneseq
    %v5000 = vshrl.u32 %v4999, 7
    %v5001 = vsub.s32 %v4998, %v5000
    %v5002 = vrot.slane %v4988, %v5001
    %v5003 = vcombine.high %v4995, %v4995
    %v5004 = vcombine.high %v5002, %v5002
    %v5005 = vlaneseq
    %v5006 = vshrl.u32 %v5005, 7
    %v5007 = vsub.s32 0, %v5006
    %v5008 = vrot.slane %v4860, %v5007
    %v5009 = vlaneseq
    %v5010 = vshrl.u32 %v5009, 7
    %v5011 = vsub.s32 0, %v5010
    %v5012 = vrot.slane %v4861, %v5011
    %v5015 = vlaneseq
    %v5016 = vshrl.u32 %v5015, 7
    %v5017 = vsub.s32 0, %v5016
    %v5018 = vrot.slane %v4877, %v5017
    %v5019 = vlaneseq
    %v5020 = vshrl.u32 %v5019, 7
    %v5021 = vsub.s32 0, %v5020
    %v5022 = vrot.slane %v4884, %v5021
    %v5025 = vlaneseq
    %v5026 = vshrl.u32 %v5025, 7
    %v5027 = vsub.s32 0, %v5026
    %v5028 = vrot.slane %v4908, %v5027
    %v5029 = vlaneseq
    %v5030 = vshrl.u32 %v5029, 7
    %v5031 = vsub.s32 0, %v5030
    %v5032 = vrot.slane %v4909, %v5031
    %v5035 = vlaneseq
    %v5036 = vshrl.u32 %v5035, 7
    %v5037 = vsub.s32 0, %v5036
    %v5038 = vrot.slane %v4924, %v5037
    %v5039 = vlaneseq
    %v5040 = vshrl.u32 %v5039, 7
    %v5041 = vsub.s32 0, %v5040
    %v5042 = vrot.slane %v4931, %v5041
    %v5045 = vlaneseq
    %v5046 = vshrl.u32 %v5045, 7
    %v5047 = vsub.s32 0, %v5046
    %v5048 = vrot.slane %v4954, %v5047
    %v5049 = vlaneseq
    %v5050 = vshrl.u32 %v5049, 7
    %v5051 = vsub.s32 0, %v5050
    %v5052 = vrot.slane %v4955, %v5051
    %v5055 = vlaneseq
    %v5056 = vshrl.u32 %v5055, 7
    %v5057 = vsub.s32 0, %v5056
    %v5058 = vrot.slane %v4971, %v5057
    %v5059 = vlaneseq
    %v5060 = vshrl.u32 %v5059, 7
    %v5061 = vsub.s32 0, %v5060
    %v5062 = vrot.slane %v4978, %v5061
    %v5065 = vlaneseq
    %v5066 = vshrl.u32 %v5065, 7
    %v5067 = vsub.s32 0, %v5066
    %v5068 = vrot.slane %v5003, %v5067
    %v5069 = vlaneseq
    %v5070 = vshrl.u32 %v5069, 7
    %v5071 = vsub.s32 0, %v5070
    %v5072 = vrot.slane %v5004, %v5071
    %vm5075 = vcmask 1040384
    %v5076 = vsel %vm5075, %v4828, %v5008
    %v5077 = vsel %vm5075, %v4835, %v5012
    %v5078 = vsel %vm2573, %v5076, %v5018
    %v5079 = vsel %vm2573, %v5077, %v5022
    %vm5080 = vcmask 1042432
    %v5081 = vsel %vm5080, %v5078, %v5028
    %v5082 = vsel %vm5080, %v5079, %v5032
    %v5083 = vsel %vm2575, %v5081, %v5038
    %v5084 = vsel %vm2575, %v5082, %v5042
    %vm5085 = vcmask 1044480
    %v5086 = vsel %vm5085, %v5083, %v5048
    %v5087 = vsel %vm5085, %v5084, %v5052
    %v5088 = vsel %vm2577, %v5086, %v5058
    %v5089 = vsel %vm2577, %v5087, %v5062
    %vm5090 = vcmask 1046528
    %v5091 = vsel %vm5090, %v5088, %v5068
    %v5092 = vsel %vm5090, %v5089, %v5072
    %v5093 = vld [vmem:[%s5] sm:$0xff]
    %v5094 = vld [vmem:[%s5 + $0x8] sm:$0x3]
    %v5095 = vld [vmem:[%s5 + $0x10] sm:$0xff]
    %v5096 = vld [vmem:[%s5 + $0x18] sm:$0x3]
    %v5098 = vsel %vm622, %v5091, 0
    %v5101 = vsel %vm622, %v5093, 0
    %v5104 = vsel %vm622, %v5094, 0
    %5106 = vmatprep.subr.mxu0 0.0
    %5107 = vmatpush1.xpose.msra.mxu0 %v5101
    %5108 = vmatprep.subr.mxu0 0.0
    %5109 = vmatpush1.xpose.msra.mxu0 %v5104
    %5110 = vmatprep.subr.mxu0 0.0
    %5111 = vmatpush1.xpose.msra.mxu0 0.0
    %5112 = vmatprep.subr.mxu0 0.0
    %5113 = vmatpush1.xpose.msra.mxu0 0.0
    %5114 = vmatprep.subr.mxu0 0.0
    %5115 = vmatpush1.xpose.msra.mxu0 0.0
    %5116 = vmatprep.subr.mxu0 0.0
    %5117 = vmatpush1.xpose.msra.mxu0 0.0
    %5118 = vmatprep.subr.mxu0 0.0
    %5119 = vmatpush1.xpose.msra.mxu0 0.0
    %5120 = vmatprep.subr.mxu0 0.0
    %5121 = vmatpush1.xpose.msra.mxu0 0.0
    %5122 = vmatprep.subr.mxu0 0.0
    %5123 = vmatpush1.xpose.msra.mxu0 0.0
    %5124 = vmatprep.subr.mxu0 0.0
    %5125 = vmatpush1.xpose.msra.mxu0 0.0
    %5126 = vmatprep.subr.mxu0 0.0
    %5127 = vmatpush1.xpose.msra.mxu0 0.0
    %5128 = vmatprep.subr.mxu0 0.0
    %5129 = vmatpush1.xpose.msra.mxu0 0.0
    %5130 = vmatprep.subr.mxu0 0.0
    %5131 = vmatpush1.xpose.msra.mxu0 0.0
    %5132 = vmatprep.subr.mxu0 0.0
    %5133 = vmatpush1.xpose.msra.mxu0 0.0
    %5134 = vmatprep.subr.mxu0 0.0
    %5135 = vmatpush1.xpose.msra.mxu0 0.0
    %5136 = vmatprep.subr.mxu0 0.0
    %5137 = vmatpush1.xpose.msra.mxu0 0.0
    %5138 = vmatprep.subr.mxu0 0.0
    %5139 = vmatpush1.xpose.msra.mxu0 0.0
    %5140 = vmatprep.subr.mxu0 0.0
    %5141 = vmatpush1.xpose.msra.mxu0 0.0
    %5142 = vmatprep.subr.mxu0 0.0
    %5143 = vmatpush1.xpose.msra.mxu0 0.0
    %5144 = vmatprep.subr.mxu0 0.0
    %5145 = vmatpush1.xpose.msra.mxu0 0.0
    %5146 = vmatprep.subr.mxu0 0.0
    %5147 = vmatpush1.xpose.msra.mxu0 0.0
    %5148 = vmatprep.subr.mxu0 0.0
    %5149 = vmatpush1.xpose.msra.mxu0 0.0
    %5150 = vmatprep.subr.mxu0 0.0
    %5151 = vmatpush1.xpose.msra.mxu0 0.0
    %5152 = vmatprep.subr.mxu0 0.0
    %5153 = vmatpush1.xpose.msra.mxu0 0.0
    %5154 = vmatprep.subr.mxu0 0.0
    %5155 = vmatpush1.xpose.msra.mxu0 0.0
    %5156 = vmatprep.subr.mxu0 0.0
    %5157 = vmatpush1.xpose.msra.mxu0 0.0
    %5158 = vmatprep.subr.mxu0 0.0
    %5159 = vmatpush1.xpose.msra.mxu0 0.0
    %5160 = vmatprep.subr.mxu0 0.0
    %5161 = vmatpush1.xpose.msra.mxu0 0.0
    %5162 = vmatprep.subr.mxu0 0.0
    %5163 = vmatpush1.xpose.msra.mxu0 0.0
    %5164 = vmatprep.subr.mxu0 0.0
    %5165 = vmatpush1.xpose.msra.mxu0 0.0
    %5166 = vmatprep.subr.mxu0 0.0
    %5167 = vmatpush1.xpose.msra.mxu0 0.0
    %5168 = vmatprep.subr.mxu0 0.0
    %5169 = vmatpush1.xpose.msra.mxu0 0.0
    %5170 = vmatprep.mubr.f32.mxu0 0.0
    %5171 = vmatmul.mubr.f32.gmra.mrb[0].mxu0 %v5098
    %v5172 = vpop.f32.mrb[0].mxu0
    %v5173 = vadd.f32 0.0, %v5172
    %v5174 = vpop.f32.mrb[0].mxu0
    %5175 = vdwg.mxu0
    %v5177 = vsel %vm622, %v5092, 0
    %v5180 = vsel %vm622, %v5095, 0
    %v5183 = vsel %vm622, %v5096, 0
    %5185 = vmatprep.subr.mxu0 0.0
    %5186 = vmatpush1.xpose.msra.mxu0 %v5180
    %5187 = vmatprep.subr.mxu0 0.0
    %5188 = vmatpush1.xpose.msra.mxu0 %v5183
    %5189 = vmatprep.subr.mxu0 0.0
    %5190 = vmatpush1.xpose.msra.mxu0 0.0
    %5191 = vmatprep.subr.mxu0 0.0
    %5192 = vmatpush1.xpose.msra.mxu0 0.0
    %5193 = vmatprep.subr.mxu0 0.0
    %5194 = vmatpush1.xpose.msra.mxu0 0.0
    %5195 = vmatprep.subr.mxu0 0.0
    %5196 = vmatpush1.xpose.msra.mxu0 0.0
    %5197 = vmatprep.subr.mxu0 0.0
    %5198 = vmatpush1.xpose.msra.mxu0 0.0
    %5199 = vmatprep.subr.mxu0 0.0
    %5200 = vmatpush1.xpose.msra.mxu0 0.0
    %5201 = vmatprep.subr.mxu0 0.0
    %5202 = vmatpush1.xpose.msra.mxu0 0.0
    %5203 = vmatprep.subr.mxu0 0.0
    %5204 = vmatpush1.xpose.msra.mxu0 0.0
    %5205 = vmatprep.subr.mxu0 0.0
    %5206 = vmatpush1.xpose.msra.mxu0 0.0
    %5207 = vmatprep.subr.mxu0 0.0
    %5208 = vmatpush1.xpose.msra.mxu0 0.0
    %5209 = vmatprep.subr.mxu0 0.0
    %5210 = vmatpush1.xpose.msra.mxu0 0.0
    %5211 = vmatprep.subr.mxu0 0.0
    %5212 = vmatpush1.xpose.msra.mxu0 0.0
    %5213 = vmatprep.subr.mxu0 0.0
    %5214 = vmatpush1.xpose.msra.mxu0 0.0
    %5215 = vmatprep.subr.mxu0 0.0
    %5216 = vmatpush1.xpose.msra.mxu0 0.0
    %5217 = vmatprep.subr.mxu0 0.0
    %5218 = vmatpush1.xpose.msra.mxu0 0.0
    %5219 = vmatprep.subr.mxu0 0.0
    %5220 = vmatpush1.xpose.msra.mxu0 0.0
    %5221 = vmatprep.subr.mxu0 0.0
    %5222 = vmatpush1.xpose.msra.mxu0 0.0
    %5223 = vmatprep.subr.mxu0 0.0
    %5224 = vmatpush1.xpose.msra.mxu0 0.0
    %5225 = vmatprep.subr.mxu0 0.0
    %5226 = vmatpush1.xpose.msra.mxu0 0.0
    %5227 = vmatprep.subr.mxu0 0.0
    %5228 = vmatpush1.xpose.msra.mxu0 0.0
    %5229 = vmatprep.subr.mxu0 0.0
    %5230 = vmatpush1.xpose.msra.mxu0 0.0
    %5231 = vmatprep.subr.mxu0 0.0
    %5232 = vmatpush1.xpose.msra.mxu0 0.0
    %5233 = vmatprep.subr.mxu0 0.0
    %5234 = vmatpush1.xpose.msra.mxu0 0.0
    %5235 = vmatprep.subr.mxu0 0.0
    %5236 = vmatpush1.xpose.msra.mxu0 0.0
    %5237 = vmatprep.subr.mxu0 0.0
    %5238 = vmatpush1.xpose.msra.mxu0 0.0
    %5239 = vmatprep.subr.mxu0 0.0
    %5240 = vmatpush1.xpose.msra.mxu0 0.0
    %5241 = vmatprep.subr.mxu0 0.0
    %5242 = vmatpush1.xpose.msra.mxu0 0.0
    %5243 = vmatprep.subr.mxu0 0.0
    %5244 = vmatpush1.xpose.msra.mxu0 0.0
    %5245 = vmatprep.subr.mxu0 0.0
    %5246 = vmatpush1.xpose.msra.mxu0 0.0
    %5247 = vmatprep.subr.mxu0 0.0
    %5248 = vmatpush1.xpose.msra.mxu0 0.0
    %5249 = vmatprep.mubr.f32.mxu0 0.0
    %5250 = vmatmul.mubr.f32.gmra.mrb[0].mxu0 %v5177
    %v5251 = vpop.f32.mrb[0].mxu0
    %v5252 = vadd.f32 0.0, %v5251
    %v5253 = vpop.f32.mrb[0].mxu0
    %5254 = vdwg.mxu0
    %vm5255 = vcmask 80896
    %v5256 = vsel %vm5255, %v5173, -inf
    %5257 = vmax.xlane.f32.xlu0 %v5256
    %v5258 = vpop.xlane.xlu0 %5257
    %v5259 = vsel %vm5255, %v5252, -inf
    %5260 = vmax.xlane.f32.xlu0 %v5259
    %v5261 = vpop.xlane.xlu0 %5260
    %v5262 = vsub.f32 %v5173, %v5258
    %v5263 = vsub.f32 %v5252, %v5261
    %v5264 = vmul.f32 %v5262, 1.442695
    %v5265 = vpow.pop %v5264
    %v5266 = vmul.f32 %v5263, 1.442695
    %v5267 = vpow.pop %v5266
    %v5268 = vsel %vm5255, %v5265, 0.0
    %5269 = vadd.xlane.f32.xlu0 %v5268
    %v5270 = vpop.xlane.xlu0 %5269
    %v5271 = vsel %vm5255, %v5267, 0.0
    %5272 = vadd.xlane.f32.xlu0 %v5271
    %v5273 = vpop.xlane.xlu0 %5272
    %v5274 = vrcp.pop %v5270
    %v5275 = vrcp.pop %v5273
    %v5276 = vmul.f32 %v5265, %v5274
    %v5277 = vmul.f32 %v5267, %v5275
    %v5279 = vsel %vm5255, %v5276, 0
    %v5281 = vsel %vm2573, %v5094, 0
    %5283 = vmatprep.subr.mxu0 0.0
    %5284 = vmatpush1.msra.mxu0 %v5093
    %5285 = vmatprep.subr.mxu0 0.0
    %5286 = vmatpush1.msra.mxu0 %v5281
    %5287 = vmatprep.subr.mxu0 0.0
    %5288 = vmatpush1.msra.mxu0 0.0
    %5289 = vmatprep.subr.mxu0 0.0
    %5290 = vmatpush1.msra.mxu0 0.0
    %5291 = vmatprep.subr.mxu0 0.0
    %5292 = vmatpush1.msra.mxu0 0.0
    %5293 = vmatprep.subr.mxu0 0.0
    %5294 = vmatpush1.msra.mxu0 0.0
    %5295 = vmatprep.subr.mxu0 0.0
    %5296 = vmatpush1.msra.mxu0 0.0
    %5297 = vmatprep.subr.mxu0 0.0
    %5298 = vmatpush1.msra.mxu0 0.0
    %5299 = vmatprep.subr.mxu0 0.0
    %5300 = vmatpush1.msra.mxu0 0.0
    %5301 = vmatprep.subr.mxu0 0.0
    %5302 = vmatpush1.msra.mxu0 0.0
    %5303 = vmatprep.subr.mxu0 0.0
    %5304 = vmatpush1.msra.mxu0 0.0
    %5305 = vmatprep.subr.mxu0 0.0
    %5306 = vmatpush1.msra.mxu0 0.0
    %5307 = vmatprep.subr.mxu0 0.0
    %5308 = vmatpush1.msra.mxu0 0.0
    %5309 = vmatprep.subr.mxu0 0.0
    %5310 = vmatpush1.msra.mxu0 0.0
    %5311 = vmatprep.subr.mxu0 0.0
    %5312 = vmatpush1.msra.mxu0 0.0
    %5313 = vmatprep.subr.mxu0 0.0
    %5314 = vmatpush1.msra.mxu0 0.0
    %5315 = vmatprep.subr.mxu0 0.0
    %5316 = vmatpush1.msra.mxu0 0.0
    %5317 = vmatprep.subr.mxu0 0.0
    %5318 = vmatpush1.msra.mxu0 0.0
    %5319 = vmatprep.subr.mxu0 0.0
    %5320 = vmatpush1.msra.mxu0 0.0
    %5321 = vmatprep.subr.mxu0 0.0
    %5322 = vmatpush1.msra.mxu0 0.0
    %5323 = vmatprep.subr.mxu0 0.0
    %5324 = vmatpush1.msra.mxu0 0.0
    %5325 = vmatprep.subr.mxu0 0.0
    %5326 = vmatpush1.msra.mxu0 0.0
    %5327 = vmatprep.subr.mxu0 0.0
    %5328 = vmatpush1.msra.mxu0 0.0
    %5329 = vmatprep.subr.mxu0 0.0
    %5330 = vmatpush1.msra.mxu0 0.0
    %5331 = vmatprep.subr.mxu0 0.0
    %5332 = vmatpush1.msra.mxu0 0.0
    %5333 = vmatprep.subr.mxu0 0.0
    %5334 = vmatpush1.msra.mxu0 0.0
    %5335 = vmatprep.subr.mxu0 0.0
    %5336 = vmatpush1.msra.mxu0 0.0
    %5337 = vmatprep.subr.mxu0 0.0
    %5338 = vmatpush1.msra.mxu0 0.0
    %5339 = vmatprep.subr.mxu0 0.0
    %5340 = vmatpush1.msra.mxu0 0.0
    %5341 = vmatprep.subr.mxu0 0.0
    %5342 = vmatpush1.msra.mxu0 0.0
    %5343 = vmatprep.subr.mxu0 0.0
    %5344 = vmatpush1.msra.mxu0 0.0
    %5345 = vmatprep.subr.mxu0 0.0
    %5346 = vmatpush1.msra.mxu0 0.0
    %5347 = vmatprep.mubr.f32.mxu0 0.0
    %5348 = vmatmul.mubr.f32.gmra.mrb[0].mxu0 %v5279
    %v5349 = vpop.f32.mrb[0].mxu0
    %v5350 = vadd.f32 0.0, %v5349
    %v5351 = vpop.f32.mrb[0].mxu0
    %5352 = vdwg.mxu0
    %v5354 = vsel %vm5255, %v5277, 0
    %v5356 = vsel %vm2573, %v5096, 0
    %5358 = vmatprep.subr.mxu0 0.0
    %5359 = vmatpush1.msra.mxu0 %v5095
    %5360 = vmatprep.subr.mxu0 0.0
    %5361 = vmatpush1.msra.mxu0 %v5356
    %5362 = vmatprep.subr.mxu0 0.0
    %5363 = vmatpush1.msra.mxu0 0.0
    %5364 = vmatprep.subr.mxu0 0.0
    %5365 = vmatpush1.msra.mxu0 0.0
    %5366 = vmatprep.subr.mxu0 0.0
    %5367 = vmatpush1.msra.mxu0 0.0
    %5368 = vmatprep.subr.mxu0 0.0
    %5369 = vmatpush1.msra.mxu0 0.0
    %5370 = vmatprep.subr.mxu0 0.0
    %5371 = vmatpush1.msra.mxu0 0.0
    %5372 = vmatprep.subr.mxu0 0.0
    %5373 = vmatpush1.msra.mxu0 0.0
    %5374 = vmatprep.subr.mxu0 0.0
    %5375 = vmatpush1.msra.mxu0 0.0
    %5376 = vmatprep.subr.mxu0 0.0
    %5377 = vmatpush1.msra.mxu0 0.0
    %5378 = vmatprep.subr.mxu0 0.0
    %5379 = vmatpush1.msra.mxu0 0.0
    %5380 = vmatprep.subr.mxu0 0.0
    %5381 = vmatpush1.msra.mxu0 0.0
    %5382 = vmatprep.subr.mxu0 0.0
    %5383 = vmatpush1.msra.mxu0 0.0
    %5384 = vmatprep.subr.mxu0 0.0
    %5385 = vmatpush1.msra.mxu0 0.0
    %5386 = vmatprep.subr.mxu0 0.0
    %5387 = vmatpush1.msra.mxu0 0.0
    %5388 = vmatprep.subr.mxu0 0.0
    %5389 = vmatpush1.msra.mxu0 0.0
    %5390 = vmatprep.subr.mxu0 0.0
    %5391 = vmatpush1.msra.mxu0 0.0
    %5392 = vmatprep.subr.mxu0 0.0
    %5393 = vmatpush1.msra.mxu0 0.0
    %5394 = vmatprep.subr.mxu0 0.0
    %5395 = vmatpush1.msra.mxu0 0.0
    %5396 = vmatprep.subr.mxu0 0.0
    %5397 = vmatpush1.msra.mxu0 0.0
    %5398 = vmatprep.subr.mxu0 0.0
    %5399 = vmatpush1.msra.mxu0 0.0
    %5400 = vmatprep.subr.mxu0 0.0
    %5401 = vmatpush1.msra.mxu0 0.0
    %5402 = vmatprep.subr.mxu0 0.0
    %5403 = vmatpush1.msra.mxu0 0.0
    %5404 = vmatprep.subr.mxu0 0.0
    %5405 = vmatpush1.msra.mxu0 0.0
    %5406 = vmatprep.subr.mxu0 0.0
    %5407 = vmatpush1.msra.mxu0 0.0
    %5408 = vmatprep.subr.mxu0 0.0
    %5409 = vmatpush1.msra.mxu0 0.0
    %5410 = vmatprep.subr.mxu0 0.0
    %5411 = vmatpush1.msra.mxu0 0.0
    %5412 = vmatprep.subr.mxu0 0.0
    %5413 = vmatpush1.msra.mxu0 0.0
    %5414 = vmatprep.subr.mxu0 0.0
    %5415 = vmatpush1.msra.mxu0 0.0
    %5416 = vmatprep.subr.mxu0 0.0
    %5417 = vmatpush1.msra.mxu0 0.0
    %5418 = vmatprep.subr.mxu0 0.0
    %5419 = vmatpush1.msra.mxu0 0.0
    %5420 = vmatprep.subr.mxu0 0.0
    %5421 = vmatpush1.msra.mxu0 0.0
    %5422 = vmatprep.mubr.f32.mxu0 0.0
    %5423 = vmatmul.mubr.f32.gmra.mrb[0].mxu0 %v5354
    %v5424 = vpop.f32.mrb[0].mxu0
    %v5425 = vadd.f32 0.0, %v5424
    %v5426 = vpop.f32.mrb[0].mxu0
    %5427 = vdwg.mxu0
    %v5428 = vld [vmem:[%s47] sm:$0xff]
    %v5429 = vld [vmem:[%s47 + $0x8] sm:$0xff]
    %v5430 = vld [vmem:[%s47 + $0x10] sm:$0xff]
    %v5431 = vld [vmem:[%s47 + $0x18] sm:$0xff]
    %v5432 = vld [vmem:[#allocation26] sm:$0xff]
    %v5433 = vld [vmem:[#allocation26 + $0x8] sm:$0xff]
    %v5434 = vld [vmem:[#allocation26 + $0x10] sm:$0xff]
    %v5435 = vld [vmem:[#allocation26 + $0x18] sm:$0xff]
    %v5437 = vsel %vm622, %v5350, 0
    %v5440 = vsel %vm622, %v5425, 0
    %5442 = vmatprep.subr.mxu0 0.0
    %5443 = vmatpush1.msra.mxu0 %v5432
    %5444 = vmatprep.subr.mxu0 0.0
    %5445 = vmatpush1.msra.mxu0 %v5433
    %5446 = vmatprep.subr.mxu0 0.0
    %5447 = vmatpush1.msra.mxu0 %v5434
    %5448 = vmatprep.subr.mxu0 0.0
    %5449 = vmatpush1.msra.mxu0 %v5435
    %5450 = vmatprep.subr.mxu0 0.0
    %5451 = vmatpush1.msra.mxu0 0.0
    %5452 = vmatprep.subr.mxu0 0.0
    %5453 = vmatpush1.msra.mxu0 0.0
    %5454 = vmatprep.subr.mxu0 0.0
    %5455 = vmatpush1.msra.mxu0 0.0
    %5456 = vmatprep.subr.mxu0 0.0
    %5457 = vmatpush1.msra.mxu0 0.0
    %5458 = vmatprep.subr.mxu0 0.0
    %5459 = vmatpush1.msra.mxu0 0.0
    %5460 = vmatprep.subr.mxu0 0.0
    %5461 = vmatpush1.msra.mxu0 0.0
    %5462 = vmatprep.subr.mxu0 0.0
    %5463 = vmatpush1.msra.mxu0 0.0
    %5464 = vmatprep.subr.mxu0 0.0
    %5465 = vmatpush1.msra.mxu0 0.0
    %5466 = vmatprep.subr.mxu0 0.0
    %5467 = vmatpush1.msra.mxu0 0.0
    %5468 = vmatprep.subr.mxu0 0.0
    %5469 = vmatpush1.msra.mxu0 0.0
    %5470 = vmatprep.subr.mxu0 0.0
    %5471 = vmatpush1.msra.mxu0 0.0
    %5472 = vmatprep.subr.mxu0 0.0
    %5473 = vmatpush1.msra.mxu0 0.0
    %5474 = vmatprep.subr.mxu0 0.0
    %5475 = vmatpush1.msra.mxu0 0.0
    %5476 = vmatprep.subr.mxu0 0.0
    %5477 = vmatpush1.msra.mxu0 0.0
    %5478 = vmatprep.subr.mxu0 0.0
    %5479 = vmatpush1.msra.mxu0 0.0
    %5480 = vmatprep.subr.mxu0 0.0
    %5481 = vmatpush1.msra.mxu0 0.0
    %5482 = vmatprep.subr.mxu0 0.0
    %5483 = vmatpush1.msra.mxu0 0.0
    %5484 = vmatprep.subr.mxu0 0.0
    %5485 = vmatpush1.msra.mxu0 0.0
    %5486 = vmatprep.subr.mxu0 0.0
    %5487 = vmatpush1.msra.mxu0 0.0
    %5488 = vmatprep.subr.mxu0 0.0
    %5489 = vmatpush1.msra.mxu0 0.0
    %5490 = vmatprep.subr.mxu0 0.0
    %5491 = vmatpush1.msra.mxu0 0.0
    %5492 = vmatprep.subr.mxu0 0.0
    %5493 = vmatpush1.msra.mxu0 0.0
    %5494 = vmatprep.subr.mxu0 0.0
    %5495 = vmatpush1.msra.mxu0 0.0
    %5496 = vmatprep.subr.mxu0 0.0
    %5497 = vmatpush1.msra.mxu0 0.0
    %5498 = vmatprep.subr.mxu0 0.0
    %5499 = vmatpush1.msra.mxu0 0.0
    %5500 = vmatprep.subr.mxu0 0.0
    %5501 = vmatpush1.msra.mxu0 0.0
    %5502 = vmatprep.subr.mxu0 0.0
    %5503 = vmatpush1.msra.mxu0 0.0
    %5504 = vmatprep.subr.mxu0 0.0
    %5505 = vmatpush1.msra.mxu0 0.0
    %5506 = vmatprep.mubr.f32.mxu0 0.0
    %5507 = vmatmul.mubr.f32.gmra.mrb[0].mxu0 %v5437
    %v5508 = vpop.f32.mrb[0].mxu0
    %v5509 = vadd.f32 0.0, %v5508
    %v5510 = vpop.f32.mrb[0].mxu0
    %5511 = vmatprep.mubr.f32.mxu0 0.0
    %5512 = vmatmul.mubr.f32.gmra.mrb[0].mxu0 %v5440
    %v5513 = vpop.f32.mrb[0].mxu0
    %v5514 = vadd.f32 0.0, %v5513
    %v5515 = vpop.f32.mrb[0].mxu0
    %5516 = vdwg.mxu0
    %5517 = vmatprep.subr.mxu0 0.0
    %5518 = vmatpush1.msra.mxu0 %v5428
    %5519 = vmatprep.subr.mxu0 0.0
    %5520 = vmatpush1.msra.mxu0 %v5429
    %5521 = vmatprep.subr.mxu0 0.0
    %5522 = vmatpush1.msra.mxu0 %v5430
    %5523 = vmatprep.subr.mxu0 0.0
    %5524 = vmatpush1.msra.mxu0 %v5431
    %5525 = vmatprep.subr.mxu0 0.0
    %5526 = vmatpush1.msra.mxu0 0.0
    %5527 = vmatprep.subr.mxu0 0.0
    %5528 = vmatpush1.msra.mxu0 0.0
    %5529 = vmatprep.subr.mxu0 0.0
    %5530 = vmatpush1.msra.mxu0 0.0
    %5531 = vmatprep.subr.mxu0 0.0
    %5532 = vmatpush1.msra.mxu0 0.0
    %5533 = vmatprep.subr.mxu0 0.0
    %5534 = vmatpush1.msra.mxu0 0.0
    %5535 = vmatprep.subr.mxu0 0.0
    %5536 = vmatpush1.msra.mxu0 0.0
    %5537 = vmatprep.subr.mxu0 0.0
    %5538 = vmatpush1.msra.mxu0 0.0
    %5539 = vmatprep.subr.mxu0 0.0
    %5540 = vmatpush1.msra.mxu0 0.0
    %5541 = vmatprep.subr.mxu0 0.0
    %5542 = vmatpush1.msra.mxu0 0.0
    %5543 = vmatprep.subr.mxu0 0.0
    %5544 = vmatpush1.msra.mxu0 0.0
    %5545 = vmatprep.subr.mxu0 0.0
    %5546 = vmatpush1.msra.mxu0 0.0
    %5547 = vmatprep.subr.mxu0 0.0
    %5548 = vmatpush1.msra.mxu0 0.0
    %5549 = vmatprep.subr.mxu0 0.0
    %5550 = vmatpush1.msra.mxu0 0.0
    %5551 = vmatprep.subr.mxu0 0.0
    %5552 = vmatpush1.msra.mxu0 0.0
    %5553 = vmatprep.subr.mxu0 0.0
    %5554 = vmatpush1.msra.mxu0 0.0
    %5555 = vmatprep.subr.mxu0 0.0
    %5556 = vmatpush1.msra.mxu0 0.0
    %5557 = vmatprep.subr.mxu0 0.0
    %5558 = vmatpush1.msra.mxu0 0.0
    %5559 = vmatprep.subr.mxu0 0.0
    %5560 = vmatpush1.msra.mxu0 0.0
    %5561 = vmatprep.subr.mxu0 0.0
    %5562 = vmatpush1.msra.mxu0 0.0
    %5563 = vmatprep.subr.mxu0 0.0
    %5564 = vmatpush1.msra.mxu0 0.0
    %5565 = vmatprep.subr.mxu0 0.0
    %5566 = vmatpush1.msra.mxu0 0.0
    %5567 = vmatprep.subr.mxu0 0.0
    %5568 = vmatpush1.msra.mxu0 0.0
    %5569 = vmatprep.subr.mxu0 0.0
    %5570 = vmatpush1.msra.mxu0 0.0
    %5571 = vmatprep.subr.mxu0 0.0
    %5572 = vmatpush1.msra.mxu0 0.0
    %5573 = vmatprep.subr.mxu0 0.0
    %5574 = vmatpush1.msra.mxu0 0.0
    %5575 = vmatprep.subr.mxu0 0.0
    %5576 = vmatpush1.msra.mxu0 0.0
    %5577 = vmatprep.subr.mxu0 0.0
    %5578 = vmatpush1.msra.mxu0 0.0
    %5579 = vmatprep.subr.mxu0 0.0
    %5580 = vmatpush1.msra.mxu0 0.0
    %5581 = vmatprep.mubr.f32.mxu0 0.0
    %5582 = vmatmul.mubr.f32.gmra.mrb[0].mxu0 %v5098
    %v5583 = vpop.f32.mrb[0].mxu0
    %v5584 = vadd.f32 %v5509, %v5583
    %v5585 = vpop.f32.mrb[0].mxu0
    %5586 = vmatprep.mubr.f32.mxu0 0.0
    %5587 = vmatmul.mubr.f32.gmra.mrb[0].mxu0 %v5177
    %v5588 = vpop.f32.mrb[0].mxu0
    %v5589 = vadd.f32 %v5514, %v5588
    %v5590 = vpop.f32.mrb[0].mxu0
    %5591 = vdwg.mxu0
    %v5592 = vld [vmem:[%s51] sm:$0x1]
    %v5594 = vlaneseq
    %v5595 = vshrl.u32 %v5594, 7
    %v5596 = vsub.s32 0, %v5595
    %v5597 = vrot.slane %v5592, %v5596
    %v5599 = vadd.f32 %v5584, %v5597
    %v5600 = vadd.f32 %v5589, %v5597
    %v5601 = vtanh.pop %v5599
    %v5602 = vtanh.pop %v5600
    %v5603 = vld [vmem:[#allocation28] sm:$0xff]
    %v5604 = vld [vmem:[#allocation28 + $0x8] sm:$0xff]
    %v5605 = vld [vmem:[#allocation28 + $0x10] sm:$0xff]
    %v5606 = vld [vmem:[#allocation28 + $0x18] sm:$0xff]
    %v5607 = vld [vmem:[%s55] sm:$0x1]
    %v5609 = vlaneseq
    %v5610 = vshrl.u32 %v5609, 7
    %v5611 = vsub.s32 0, %v5610
    %v5612 = vrot.slane %v5607, %v5611
    %v5615 = vsel %vm622, %v5601, 0
    %v5618 = vsel %vm622, %v5602, 0
    %5620 = vmatprep.subr.mxu0 0.0
    %5621 = vmatpush1.msra.mxu0 %v5603
    %5622 = vmatprep.subr.mxu0 0.0
    %5623 = vmatpush1.msra.mxu0 %v5604
    %5624 = vmatprep.subr.mxu0 0.0
    %5625 = vmatpush1.msra.mxu0 %v5605
    %5626 = vmatprep.subr.mxu0 0.0
    %5627 = vmatpush1.msra.mxu0 %v5606
    %5628 = vmatprep.subr.mxu0 0.0
    %5629 = vmatpush1.msra.mxu0 0.0
    %5630 = vmatprep.subr.mxu0 0.0
    %5631 = vmatpush1.msra.mxu0 0.0
    %5632 = vmatprep.subr.mxu0 0.0
    %5633 = vmatpush1.msra.mxu0 0.0
    %5634 = vmatprep.subr.mxu0 0.0
    %5635 = vmatpush1.msra.mxu0 0.0
    %5636 = vmatprep.subr.mxu0 0.0
    %5637 = vmatpush1.msra.mxu0 0.0
    %5638 = vmatprep.subr.mxu0 0.0
    %5639 = vmatpush1.msra.mxu0 0.0
    %5640 = vmatprep.subr.mxu0 0.0
    %5641 = vmatpush1.msra.mxu0 0.0
    %5642 = vmatprep.subr.mxu0 0.0
    %5643 = vmatpush1.msra.mxu0 0.0
    %5644 = vmatprep.subr.mxu0 0.0
    %5645 = vmatpush1.msra.mxu0 0.0
    %5646 = vmatprep.subr.mxu0 0.0
    %5647 = vmatpush1.msra.mxu0 0.0
    %5648 = vmatprep.subr.mxu0 0.0
    %5649 = vmatpush1.msra.mxu0 0.0
    %5650 = vmatprep.subr.mxu0 0.0
    %5651 = vmatpush1.msra.mxu0 0.0
    %5652 = vmatprep.subr.mxu0 0.0
    %5653 = vmatpush1.msra.mxu0 0.0
    %5654 = vmatprep.subr.mxu0 0.0
    %5655 = vmatpush1.msra.mxu0 0.0
    %5656 = vmatprep.subr.mxu0 0.0
    %5657 = vmatpush1.msra.mxu0 0.0
    %5658 = vmatprep.subr.mxu0 0.0
    %5659 = vmatpush1.msra.mxu0 0.0
    %5660 = vmatprep.subr.mxu0 0.0
    %5661 = vmatpush1.msra.mxu0 0.0
    %5662 = vmatprep.subr.mxu0 0.0
    %5663 = vmatpush1.msra.mxu0 0.0
    %5664 = vmatprep.subr.mxu0 0.0
    %5665 = vmatpush1.msra.mxu0 0.0
    %5666 = vmatprep.subr.mxu0 0.0
    %5667 = vmatpush1.msra.mxu0 0.0
    %5668 = vmatprep.subr.mxu0 0.0
    %5669 = vmatpush1.msra.mxu0 0.0
    %5670 = vmatprep.subr.mxu0 0.0
    %5671 = vmatpush1.msra.mxu0 0.0
    %5672 = vmatprep.subr.mxu0 0.0
    %5673 = vmatpush1.msra.mxu0 0.0
    %5674 = vmatprep.subr.mxu0 0.0
    %5675 = vmatpush1.msra.mxu0 0.0
    %5676 = vmatprep.subr.mxu0 0.0
    %5677 = vmatpush1.msra.mxu0 0.0
    %5678 = vmatprep.subr.mxu0 0.0
    %5679 = vmatpush1.msra.mxu0 0.0
    %5680 = vmatprep.subr.mxu0 0.0
    %5681 = vmatpush1.msra.mxu0 0.0
    %5682 = vmatprep.subr.mxu0 0.0
    %5683 = vmatpush1.msra.mxu0 0.0
    %5684 = vmatprep.mubr.f32.mxu0 0.0
    %5685 = vmatmul.mubr.f32.gmra.mrb[0].mxu0 %v5615
    %v5686 = vpop.f32.mrb[0].mxu0
    %v5687 = vadd.f32 %v5612, %v5686
    %v5688 = vpop.f32.mrb[0].mxu0
    %5689 = vmatprep.mubr.f32.mxu0 0.0
    %5690 = vmatmul.mubr.f32.gmra.mrb[0].mxu0 %v5618
    %v5691 = vpop.f32.mrb[0].mxu0
    %v5692 = vadd.f32 %v5612, %v5691
    %v5693 = vpop.f32.mrb[0].mxu0
    %5694 = vdwg.mxu0
    %5695 = vst.msk [vmem:[#allocation32] sm:$0xff] %vm622, %v5599
    %5696 = vst.msk [vmem:[#allocation32 + $0x8] sm:$0xff] %vm622, %v5600
    %vm5697 = vcmask 523264
    %5698 = vst.msk [vmem:[#allocation29] sm:$0xff] %vm5697, %v5687
    %5699 = vst.msk [vmem:[#allocation29 + $0x8] sm:$0xff] %vm5697, %v5692
    // Predicated region
    $region182: #{tpu_custom_call.1} parent=1 // pred_check
      _
    $region183: #{tpu_custom_call.1} parent=1 // pred_check_branch
      %5701 = sbr.rel (0) target = $region185
    $region184: #{tpu_custom_call.1} parent=1 // pred_region
      %s5703 = ssub.s32 256, 256
      %5704 = vsyncadd [#allocation4], %s5703
      %s5705 = sshll.u32 [#allocation29], 4
      %s5706 = int_to_ptr.vmem [resolvable:$true] %s5705
      %5711 = dma.vmem_to_hbm [thread:$0]  %s5706, 256, %s57, [#allocation4], 128, 128, 8
    $region185: #{tpu_custom_call.1} parent=1 // pred_fallthru
      _
    // Predicated region
    $region186: #{tpu_custom_call.1} parent=1 // pred_check
      _
    $region187: #{tpu_custom_call.1} parent=1 // pred_check_branch
      %5713 = sbr.rel (0) target = $region189
    $region188: #{tpu_custom_call.1} parent=1 // pred_region
      %s5715 = ssub.s32 64, 64
      %5716 = vsyncadd [#allocation31], %s5715
      %s5717 = sshll.u32 [#allocation30], 4
      %s5718 = int_to_ptr.vmem [resolvable:$true] %s5717
      %5723 = dma.vmem_to_hbm [thread:$0]  %s5718, 64, %s59, [#allocation31], 32, 32, 2
    $region189: #{tpu_custom_call.1} parent=1 // pred_fallthru
      _
    // Predicated region
    $region190: #{tpu_custom_call.1} parent=1 // pred_check
      _
    $region191: #{tpu_custom_call.1} parent=1 // pred_check_branch
      %5725 = sbr.rel (0) target = $region193
    $region192: #{tpu_custom_call.1} parent=1 // pred_region
      %s5727 = ssub.s32 256, 256
      %5728 = vsyncadd [#allocation31], %s5727
      %s5729 = sshll.u32 [#allocation32], 4
      %s5730 = int_to_ptr.vmem [resolvable:$true] %s5729
      %5735 = dma.vmem_to_hbm [thread:$0]  %s5730, 256, %s61, [#allocation31], 128, 128, 8
    $region193: #{tpu_custom_call.1} parent=1 // pred_fallthru
      _
    // Predicated region
    $region194: #{tpu_custom_call.1} parent=1 // pred_check
      _
    $region195: #{tpu_custom_call.1} parent=1 // pred_check_branch
      %5737 = sbr.rel (0) target = $region197
    $region196: #{tpu_custom_call.1} parent=1 // pred_region
      %5738 = dma.done [#allocation4], 256
    $region197: #{tpu_custom_call.1} parent=1 // pred_fallthru
      _
    // Predicated region
    $region198: #{tpu_custom_call.1} parent=1 // pred_check
      _
    $region199: #{tpu_custom_call.1} parent=1 // pred_check_branch
      %5740 = sbr.rel (0) target = $region201
    $region200: #{tpu_custom_call.1} parent=1 // pred_region
      %5741 = dma.done [#allocation31], 64
    $region201: #{tpu_custom_call.1} parent=1 // pred_fallthru
      _
    // Predicated region
    $region202: #{tpu_custom_call.1} parent=1 // pred_check
      _
    $region203: #{tpu_custom_call.1} parent=1 // pred_check_branch
      %5743 = sbr.rel (0) target = $region205
    $region204: #{tpu_custom_call.1} parent=1 // pred_region
      %5744 = dma.done [#allocation31], 256
    $region205: #{tpu_custom_call.1} parent=1 // pred_fallthru
      _
    %5745 = vsyncpa [#allocation3], 1
    %5746 = vsyncpa [#allocation6], 1
    %5747 = vsyncpa [#allocation9], 1
    %5748 = vsyncpa [#allocation12], 1
    %5749 = vsyncpa [#allocation15], 1
    %5750 = vsyncpa [#allocation18], 1
    %5751 = vsyncpa [#allocation21], 1
    %5752 = vsyncpa [#allocation24], 1
    %5753 = vsyncpa [#allocation27], 1
    %5754 = vsyncpa [#allocation4], 1
    %5755 = vsyncpa [#allocation31], 1

</llo_original>
